<compile_context>
chip_gen: v5e
topology: v5e:2x2
jax: 0.10.0
libtpu: 0.0.40
codegen_flags: <defaults>
</compile_context>

<pallas_src>
import functools
import math

import jax
import jax.numpy as jnp
from jax.experimental import pallas as pl
from jax.experimental.pallas import tpu as pltpu

EPS = 1e-6                    # LayerNorm eps (Annotated Transformer: std + eps)
COMPUTE_DTYPE = jnp.float32   # set to jnp.bfloat16 on v6e/v7x (f32 accumulation kept)
ROW_BLOCK_CAP = 256           # row-tile cap for FFN / LayerNorm kernels
# Note (v7x): for very large d_ff the FFN weights/intermediate should be
# K-tiled (grid over dff) to stay under 64 MiB VMEM; at the sizes exercised
# here the whole-weight blocks fit comfortably under the scoped default.


# --------------------------- in-kernel helpers ------------------------------

def _layer_norm(x, a, b):
    """Annotated-Transformer LayerNorm: a*(x-mean)/(std+eps)+b, unbiased std."""
    d = x.shape[-1]
    mean = jnp.mean(x, axis=-1, keepdims=True)
    xc = x - mean
    var = jnp.sum(xc * xc, axis=-1, keepdims=True) / (d - 1)   # torch.std (n-1)
    return a * xc / (jnp.sqrt(var) + EPS) + b


def _proj(x, w, b):
    """x @ w + b with f32 accumulation; operands cast to COMPUTE_DTYPE."""
    return jnp.dot(x.astype(COMPUTE_DTYPE), w.astype(COMPUTE_DTYPE),
                   preferred_element_type=jnp.float32) + b


def _mha_core(q_src, kv_src, mask, wq, bq, wk, bk, wv, bv, wo, bo, nheads):
    """Multi-head attention for one (T, D) query slab vs one (S, D) kv slab."""
    T, D = q_src.shape
    dk = D // nheads
    scale = 1.0 / math.sqrt(dk)

    q = _proj(q_src, wq, bq) * scale          # fold 1/sqrt(dk) into q
    k = _proj(kv_src, wk, bk)
    v = _proj(kv_src, wv, bv)

    out = jnp.zeros((T, D), jnp.float32)
    for h in range(nheads):                   # static unroll over heads
        sl = slice(h * dk, (h + 1) * dk)
        s = jax.lax.dot_general(q[:, sl], k[:, sl],
                                (((1,), (1,)), ((), ())),
                                preferred_element_type=jnp.float32)   # (T, S)
        s = jnp.where(mask != 0.0, s, -1e9)   # mask broadcasts over rows/heads
        s = s - jnp.max(s, axis=-1, keepdims=True)
        p = jnp.exp(s)
        p = p * pl.reciprocal(jnp.sum(p, axis=-1, keepdims=True), approx=True)
        ctx = jnp.dot(p.astype(COMPUTE_DTYPE), v[:, sl].astype(COMPUTE_DTYPE),
                      preferred_element_type=jnp.float32)             # (T, dk)
        # concat(ctx_h) @ Wo  ==  sum_h ctx_h @ Wo[h*dk:(h+1)*dk, :]
        out = out + jnp.dot(ctx.astype(COMPUTE_DTYPE),
                            wo[sl, :].astype(COMPUTE_DTYPE),
                            preferred_element_type=jnp.float32)
    return out + bo


# ------------------------------ fused kernels --------------------------------

def _self_attn_sublayer_kernel(x_ref, mask_ref, a_ref, b_ref,
                               wq_ref, bq_ref, wk_ref, bk_ref,
                               wv_ref, bv_ref, wo_ref, bo_ref,
                               o_ref, *, nheads):
    x = x_ref[0]                                            # (T, D)
    y = _layer_norm(x, a_ref[...], b_ref[...])
    attn = _mha_core(y, y, mask_ref[0],
                     wq_ref[...], bq_ref[...], wk_ref[...], bk_ref[...],
                     wv_ref[...], bv_ref[...], wo_ref[...], bo_ref[...], nheads)
    o_ref[0] = x + attn                                     # fused residual


def _cross_attn_sublayer_kernel(x_ref, mem_ref, mask_ref, a_ref, b_ref,
                                wq_ref, bq_ref, wk_ref, bk_ref,
                                wv_ref, bv_ref, wo_ref, bo_ref,
                                o_ref, *, nheads):
    x = x_ref[0]                                            # (T, D)
    y = _layer_norm(x, a_ref[...], b_ref[...])
    attn = _mha_core(y, mem_ref[0], mask_ref[0],            # K/V from raw memory
                     wq_ref[...], bq_ref[...], wk_ref[...], bk_ref[...],
                     wv_ref[...], bv_ref[...], wo_ref[...], bo_ref[...], nheads)
    o_ref[0] = x + attn                                     # fused residual


def _ffn_sublayer_kernel(x_ref, a_ref, b_ref, w1_ref, b1_ref, w2_ref, b2_ref,
                         o_ref):
    x = x_ref[...]                                          # (bm, D)
    y = _layer_norm(x, a_ref[...], b_ref[...])
    h = jnp.maximum(_proj(y, w1_ref[...], b1_ref[...]), 0.0)  # ReLU; dropout=id
    o_ref[...] = x + _proj(h, w2_ref[...], b2_ref[...])     # fused residual


def _layernorm_kernel(x_ref, a_ref, b_ref, o_ref):
    o_ref[...] = _layer_norm(x_ref[...], a_ref[...], b_ref[...])


# ----------------------------- Pallas wrappers ------------------------------

def _row_block(rows):
    return rows if rows <= ROW_BLOCK_CAP else ROW_BLOCK_CAP


def attention_sublayer(x, kv, mask, ln_a, ln_b, p, nheads, *, self_attention):
    """x + MHA(LN(x), kv, kv, mask), one pallas_call, grid over batch."""
    B, T, D = x.shape
    S = kv.shape[1]
    Tm = mask.shape[1]            # 1 (src_mask) or T (tgt_mask)

    w_spec = pl.BlockSpec((D, D), lambda b: (0, 0))
    r_spec = pl.BlockSpec((1, D), lambda b: (0, 0))

    in_specs = [pl.BlockSpec((1, T, D), lambda b: (b, 0, 0))]
    args = [x]
    if not self_attention:
        in_specs.append(pl.BlockSpec((1, S, D), lambda b: (b, 0, 0)))
        args.append(kv)
    in_specs += [pl.BlockSpec((1, Tm, S), lambda b: (b, 0, 0)),
                 r_spec, r_spec,
                 w_spec, r_spec, w_spec, r_spec, w_spec, r_spec, w_spec, r_spec]
    args += [mask,
             ln_a.reshape(1, D), ln_b.reshape(1, D),
             p["wq"], p["bq"].reshape(1, D),
             p["wk"], p["bk"].reshape(1, D),
             p["wv"], p["bv"].reshape(1, D),
             p["wo"], p["bo"].reshape(1, D)]

    kernel = functools.partial(
        _self_attn_sublayer_kernel if self_attention else _cross_attn_sublayer_kernel,
        nheads=nheads)

    flops = B * (2 * T * D * D + 4 * S * D * D + 4 * T * S * D + 2 * T * D * D)
    bytes_accessed = 4 * (2 * B * T * D + (0 if self_attention else B * S * D)
                          + B * Tm * S + 4 * D * D + 6 * D)

    return pl.pallas_call(
        kernel,
        out_shape=jax.ShapeDtypeStruct((B, T, D), jnp.float32),
        grid=(B,),
        in_specs=in_specs,
        out_specs=pl.BlockSpec((1, T, D), lambda b: (b, 0, 0)),
        compiler_params=pltpu.CompilerParams(dimension_semantics=("parallel",)),
        cost_estimate=pl.CostEstimate(flops=flops,
                                      transcendentals=B * nheads * T * S,
                                      bytes_accessed=bytes_accessed),
    )(*args)


def ffn_sublayer(x, ln_a, ln_b, p):
    """x + W2(relu(W1(LN(x)))), one pallas_call, row-tiled grid."""
    B, T, D = x.shape
    dff = p["w1"].shape[1]
    R = B * T
    bm = _row_block(R)

    out = pl.pallas_call(
        _ffn_sublayer_kernel,
        out_shape=jax.ShapeDtypeStruct((R, D), jnp.float32),
        grid=(pl.cdiv(R, bm),),
        in_specs=[pl.BlockSpec((bm, D), lambda i: (i, 0)),
                  pl.BlockSpec((1, D), lambda i: (0, 0)),
                  pl.BlockSpec((1, D), lambda i: (0, 0)),
                  pl.BlockSpec((D, dff), lambda i: (0, 0)),
                  pl.BlockSpec((1, dff), lambda i: (0, 0)),
                  pl.BlockSpec((dff, D), lambda i: (0, 0)),
                  pl.BlockSpec((1, D), lambda i: (0, 0))],
        out_specs=pl.BlockSpec((bm, D), lambda i: (i, 0)),
        compiler_params=pltpu.CompilerParams(dimension_semantics=("parallel",)),
        cost_estimate=pl.CostEstimate(
            flops=4 * R * D * dff, transcendentals=0,
            bytes_accessed=4 * (2 * R * D + 2 * D * dff + dff + 3 * D)),
    )(x.reshape(R, D), ln_a.reshape(1, D), ln_b.reshape(1, D),
      p["w1"], p["b1"].reshape(1, dff), p["w2"], p["b2"].reshape(1, D))
    return out.reshape(B, T, D)


def layer_norm(x, a, b):
    """Final LayerNorm, row-tiled."""
    B, T, D = x.shape
    R = B * T
    bm = _row_block(R)
    out = pl.pallas_call(
        _layernorm_kernel,
        out_shape=jax.ShapeDtypeStruct((R, D), jnp.float32),
        grid=(pl.cdiv(R, bm),),
        in_specs=[pl.BlockSpec((bm, D), lambda i: (i, 0)),
                  pl.BlockSpec((1, D), lambda i: (0, 0)),
                  pl.BlockSpec((1, D), lambda i: (0, 0))],
        out_specs=pl.BlockSpec((bm, D), lambda i: (i, 0)),
        compiler_params=pltpu.CompilerParams(dimension_semantics=("parallel",)),
    )(x.reshape(R, D), a.reshape(1, D), b.reshape(1, D))
    return out.reshape(B, T, D)


def decoder_layer(p, x, memory, src_mask, tgt_mask, nheads):
    x = attention_sublayer(x, x, tgt_mask, p["ln0_a"], p["ln0_b"],
                           p["self_attn"], nheads, self_attention=True)
    x = attention_sublayer(x, memory, src_mask, p["ln1_a"], p["ln1_b"],
                           p["src_attn"], nheads, self_attention=False)
    x = ffn_sublayer(x, p["ln2_a"], p["ln2_b"], p["ffn"])
    return x


def decoder_forward(params, x, memory, src_mask, tgt_mask, nheads):
    for lp in params["layers"]:
        x = decoder_layer(lp, x, memory, src_mask, tgt_mask, nheads)
    return layer_norm(x, params["final_a"], params["final_b"])


# ------------------------- pure-JAX reference (check) -----------------------

def _ref_ln(x, a, b):
    d = x.shape[-1]
    mean = jnp.mean(x, axis=-1, keepdims=True)
    xc = x - mean
    std = jnp.sqrt(jnp.sum(xc * xc, axis=-1, keepdims=True) / (d - 1))
    return a * xc / (std + EPS) + b


def _ref_mha(p, q, k, v, mask, h):
    B, T, D = q.shape
    S = k.shape[1]
    dk = D // h
    qp = (q.reshape(-1, D) @ p["wq"] + p["bq"]).reshape(B, T, h, dk).transpose(0, 2, 1, 3)
    kp = (k.reshape(-1, D) @ p["wk"] + p["bk"]).reshape(B, S, h, dk).transpose(0, 2, 1, 3)
    vp = (v.reshape(-1, D) @ p["wv"] + p["bv"]).reshape(B, S, h, dk).transpose(0, 2, 1, 3)
    scores = jnp.einsum("bhtd,bhsd->bhts", qp, kp) / math.sqrt(dk)
    scores = jnp.where(mask[:, None, :, :] != 0.0, scores, -1e9)
    pattn = jax.nn.softmax(scores, axis=-1)
    out = jnp.einsum("bhts,bhsd->bhtd", pattn, vp)
    out = out.transpose(0, 2, 1, 3).reshape(B * T, D)
    return (out @ p["wo"] + p["bo"]).reshape(B, T, D)


def _ref_decoder(params, x, memory, src_mask, tgt_mask, h):
    for p in params["layers"]:
        y = _ref_ln(x, p["ln0_a"], p["ln0_b"])
        x = x + _ref_mha(p["self_attn"], y, y, y, tgt_mask, h)
        y = _ref_ln(x, p["ln1_a"], p["ln1_b"])
        x = x + _ref_mha(p["src_attn"], y, memory, memory, src_mask, h)
        y = _ref_ln(x, p["ln2_a"], p["ln2_b"])
        ffn = p["ffn"]
        hdd = jnp.maximum(y.reshape(-1, y.shape[-1]) @ ffn["w1"] + ffn["b1"], 0.0)
        x = x + (hdd @ ffn["w2"] + ffn["b2"]).reshape(x.shape)
    return _ref_ln(x, params["final_a"], params["final_b"])


# ------------------------------ param init ----------------------------------

def init_params(key, n_layers, d_model, d_ff, h):
    def dense(k, din, dout):
        return 0.05 * jax.random.normal(k, (din, dout), jnp.float32)

    def mha_params(k):
        ks = jax.random.split(k, 4)
        return {"wq": dense(ks[0], d_model, d_model), "bq": jnp.zeros((d_model,), jnp.float32),
                "wk": dense(ks[1], d_model, d_model), "bk": jnp.zeros((d_model,), jnp.float32),
                "wv": dense(ks[2], d_model, d_model), "bv": jnp.zeros((d_model,), jnp.float32),
                "wo": dense(ks[3], d_model, d_model), "bo": jnp.zeros((d_model,), jnp.float32)}

    layers = []
    keys = jax.random.split(key, n_layers + 1)
    for lk in keys[:-1]:
        k1, k2, k3, k4 = jax.random.split(lk, 4)
        layers.append({
            "self_attn": mha_params(k1),
            "src_attn": mha_params(k2),
            "ffn": {"w1": dense(k3, d_model, d_ff), "b1": jnp.zeros((d_ff,), jnp.float32),
                    "w2": dense(k4, d_ff, d_model), "b2": jnp.zeros((d_model,), jnp.float32)},
            "ln0_a": jnp.ones((d_model,), jnp.float32), "ln0_b": jnp.zeros((d_model,), jnp.float32),
            "ln1_a": jnp.ones((d_model,), jnp.float32), "ln1_b": jnp.zeros((d_model,), jnp.float32),
            "ln2_a": jnp.ones((d_model,), jnp.float32), "ln2_b": jnp.zeros((d_model,), jnp.float32),
        })
    return {"layers": layers,
            "final_a": jnp.ones((d_model,), jnp.float32),
            "final_b": jnp.zeros((d_model,), jnp.float32)}


# --------------------------------- main --------------------------------------

if __name__ == "__main__":
    B, T, S, D, H, DFF, N = 2, 8, 8, 32, 4, 64, 2

    root = jax.random.PRNGKey(0)
    kx, km, kp = jax.random.split(root, 3)
    x = jax.random.normal(kx, (B, T, D), jnp.float32)
    memory = jax.random.normal(km, (B, S, D), jnp.float32)
    # tgt_mask: causal (B, T, T); src_mask: all-ones (B, 1, S)
    tgt_mask = jnp.broadcast_to(
        jnp.tril(jnp.ones((T, T), jnp.float32))[None], (B, T, T))
    src_mask = jnp.ones((B, 1, S), jnp.float32)

    params = init_params(kp, N, D, DFF, H)

    fwd = jax.jit(functools.partial(decoder_forward, nheads=H))
    out = fwd(params, x, memory, src_mask, tgt_mask)
    out = jax.block_until_ready(out)

    ref = _ref_decoder(params, x, memory, src_mask, tgt_mask, H)
    max_diff = float(jnp.max(jnp.abs(out - ref)))
    assert out.shape == (B, T, D)
    assert bool(jnp.all(jnp.isfinite(out)))
    assert max_diff < 5e-2, f"mismatch vs reference: {max_diff}"

    print("KERNEL_OK")
</pallas_src>

<mosaic_0001>
module attributes {stable_mosaic.version = 11 : i64} {
  func.func @_cross_attn_sublayer_kernel(%arg0: i32, %arg1: memref<1x8x32xf32, #tpu.memory_space<vmem>>, %arg2: memref<1x8x32xf32, #tpu.memory_space<vmem>>, %arg3: memref<1x1x8xf32, #tpu.memory_space<vmem>>, %arg4: memref<1x32xf32, #tpu.memory_space<vmem>>, %arg5: memref<1x32xf32, #tpu.memory_space<vmem>>, %arg6: memref<32x32xf32, #tpu.memory_space<vmem>>, %arg7: memref<1x32xf32, #tpu.memory_space<vmem>>, %arg8: memref<32x32xf32, #tpu.memory_space<vmem>>, %arg9: memref<1x32xf32, #tpu.memory_space<vmem>>, %arg10: memref<32x32xf32, #tpu.memory_space<vmem>>, %arg11: memref<1x32xf32, #tpu.memory_space<vmem>>, %arg12: memref<32x32xf32, #tpu.memory_space<vmem>>, %arg13: memref<1x32xf32, #tpu.memory_space<vmem>>, %arg14: memref<1x8x32xf32, #tpu.memory_space<vmem>>) attributes {dimension_semantics = [#tpu.dimension_semantics<parallel>], iteration_bounds = array<i64: 2>, scalar_prefetch = 0 : i64, scratch_operands = 0 : i64, tpu.core_type = #tpu.core_type<tc>, window_params = [{transform_indices = @transform_0, window_bounds = array<i64: 1, 8, 32>}, {transform_indices = @transform_1, window_bounds = array<i64: 1, 8, 32>}, {transform_indices = @transform_2, window_bounds = array<i64: 1, 1, 8>}, {pipeline_mode = #tpu.pipeline_mode<synchronous>, transform_indices = @transform_3, window_bounds = array<i64: 1, 32>}, {pipeline_mode = #tpu.pipeline_mode<synchronous>, transform_indices = @transform_4, window_bounds = array<i64: 1, 32>}, {pipeline_mode = #tpu.pipeline_mode<synchronous>, transform_indices = @transform_5, window_bounds = array<i64: 32, 32>}, {pipeline_mode = #tpu.pipeline_mode<synchronous>, transform_indices = @transform_6, window_bounds = array<i64: 1, 32>}, {pipeline_mode = #tpu.pipeline_mode<synchronous>, transform_indices = @transform_7, window_bounds = array<i64: 32, 32>}, {pipeline_mode = #tpu.pipeline_mode<synchronous>, transform_indices = @transform_8, window_bounds = array<i64: 1, 32>}, {pipeline_mode = #tpu.pipeline_mode<synchronous>, transform_indices = @transform_9, window_bounds = array<i64: 32, 32>}, {pipeline_mode = #tpu.pipeline_mode<synchronous>, transform_indices = @transform_10, window_bounds = array<i64: 1, 32>}, {pipeline_mode = #tpu.pipeline_mode<synchronous>, transform_indices = @transform_11, window_bounds = array<i64: 32, 32>}, {pipeline_mode = #tpu.pipeline_mode<synchronous>, transform_indices = @transform_12, window_bounds = array<i64: 1, 32>}, {transform_indices = @transform_13, window_bounds = array<i64: 1, 8, 32>}]} {
    %c0 = arith.constant 0 : index
    %c0_0 = arith.constant 0 : index
    %c0_1 = arith.constant 0 : index
    %0 = vector.load %arg1[%c0, %c0_0, %c0_1] : memref<1x8x32xf32, #tpu.memory_space<vmem>>, vector<1x8x32xf32>
    %1 = vector.shape_cast %0 : vector<1x8x32xf32> to vector<8x32xf32>
    %c0_2 = arith.constant 0 : index
    %c0_3 = arith.constant 0 : index
    %2 = vector.load %arg4[%c0_2, %c0_3] : memref<1x32xf32, #tpu.memory_space<vmem>>, vector<1x32xf32>
    %c0_4 = arith.constant 0 : index
    %c0_5 = arith.constant 0 : index
    %3 = vector.load %arg5[%c0_4, %c0_5] : memref<1x32xf32, #tpu.memory_space<vmem>>, vector<1x32xf32>
    %cst = arith.constant dense<0.000000e+00> : vector<8xf32>
    %4 = vector.multi_reduction <add>, %1, %cst [1] : vector<8x32xf32> to vector<8xf32>
    %5 = vector.shape_cast %4 : vector<8xf32> to vector<8x1xf32>
    %cst_6 = arith.constant 3.200000e+01 : f32
    %6 = vector.broadcast %cst_6 : f32 to vector<8x1xf32>
    %7 = arith.divf %5, %6 : vector<8x1xf32>
    %8 = vector.broadcast %7 : vector<8x1xf32> to vector<8x32xf32>
    %9 = arith.subf %1, %8 : vector<8x32xf32>
    %10 = arith.mulf %9, %9 : vector<8x32xf32>
    %cst_7 = arith.constant dense<0.000000e+00> : vector<8xf32>
    %11 = vector.multi_reduction <add>, %10, %cst_7 [1] : vector<8x32xf32> to vector<8xf32>
    %12 = vector.shape_cast %11 : vector<8xf32> to vector<8x1xf32>
    %cst_8 = arith.constant 3.100000e+01 : f32
    %13 = vector.broadcast %cst_8 : f32 to vector<8x1xf32>
    %14 = arith.divf %12, %13 : vector<8x1xf32>
    %15 = vector.broadcast %2 : vector<1x32xf32> to vector<8x32xf32>
    %16 = arith.mulf %15, %9 : vector<8x32xf32>
    %17 = math.sqrt %14 : vector<8x1xf32>
    %cst_9 = arith.constant 9.99999997E-7 : f32
    %18 = vector.broadcast %cst_9 : f32 to vector<8x1xf32>
    %19 = arith.addf %17, %18 : vector<8x1xf32>
    %20 = vector.broadcast %19 : vector<8x1xf32> to vector<8x32xf32>
    %21 = arith.divf %16, %20 : vector<8x32xf32>
    %22 = vector.broadcast %3 : vector<1x32xf32> to vector<8x32xf32>
    %23 = arith.addf %21, %22 : vector<8x32xf32>
    %c0_10 = arith.constant 0 : index
    %c0_11 = arith.constant 0 : index
    %c0_12 = arith.constant 0 : index
    %24 = vector.load %arg2[%c0_10, %c0_11, %c0_12] : memref<1x8x32xf32, #tpu.memory_space<vmem>>, vector<1x8x32xf32>
    %25 = vector.shape_cast %24 : vector<1x8x32xf32> to vector<8x32xf32>
    %c0_13 = arith.constant 0 : index
    %c0_14 = arith.constant 0 : index
    %c0_15 = arith.constant 0 : index
    %26 = vector.load %arg3[%c0_13, %c0_14, %c0_15] : memref<1x1x8xf32, #tpu.memory_space<vmem>>, vector<1x1x8xf32>
    %27 = vector.shape_cast %26 : vector<1x1x8xf32> to vector<1x8xf32>
    %c0_16 = arith.constant 0 : index
    %c0_17 = arith.constant 0 : index
    %28 = vector.load %arg6[%c0_16, %c0_17] : memref<32x32xf32, #tpu.memory_space<vmem>>, vector<32x32xf32>
    %c0_18 = arith.constant 0 : index
    %c0_19 = arith.constant 0 : index
    %29 = vector.load %arg7[%c0_18, %c0_19] : memref<1x32xf32, #tpu.memory_space<vmem>>, vector<1x32xf32>
    %c0_20 = arith.constant 0 : index
    %c0_21 = arith.constant 0 : index
    %30 = vector.load %arg8[%c0_20, %c0_21] : memref<32x32xf32, #tpu.memory_space<vmem>>, vector<32x32xf32>
    %c0_22 = arith.constant 0 : index
    %c0_23 = arith.constant 0 : index
    %31 = vector.load %arg9[%c0_22, %c0_23] : memref<1x32xf32, #tpu.memory_space<vmem>>, vector<1x32xf32>
    %c0_24 = arith.constant 0 : index
    %c0_25 = arith.constant 0 : index
    %32 = vector.load %arg10[%c0_24, %c0_25] : memref<32x32xf32, #tpu.memory_space<vmem>>, vector<32x32xf32>
    %c0_26 = arith.constant 0 : index
    %c0_27 = arith.constant 0 : index
    %33 = vector.load %arg11[%c0_26, %c0_27] : memref<1x32xf32, #tpu.memory_space<vmem>>, vector<1x32xf32>
    %c0_28 = arith.constant 0 : index
    %c0_29 = arith.constant 0 : index
    %34 = vector.load %arg12[%c0_28, %c0_29] : memref<32x32xf32, #tpu.memory_space<vmem>>, vector<32x32xf32>
    %c0_30 = arith.constant 0 : index
    %c0_31 = arith.constant 0 : index
    %35 = vector.load %arg13[%c0_30, %c0_31] : memref<1x32xf32, #tpu.memory_space<vmem>>, vector<1x32xf32>
    %cst_32 = arith.constant dense<0.000000e+00> : vector<8x32xf32>
    %36 = tpu.matmul %23, %28, %cst_32 {dimension_numbers = #tpu.dot_dimension_numbers<[1], [0], [0], [1], [0, 0, 1, 1], [], []>} : vector<8x32xf32>, vector<32x32xf32>, vector<8x32xf32> -> vector<8x32xf32>
    %37 = vector.broadcast %29 : vector<1x32xf32> to vector<8x32xf32>
    %38 = arith.addf %36, %37 : vector<8x32xf32>
    %cst_33 = arith.constant 0.353553385 : f32
    %39 = vector.broadcast %cst_33 : f32 to vector<8x32xf32>
    %40 = arith.mulf %38, %39 : vector<8x32xf32>
    %cst_34 = arith.constant dense<0.000000e+00> : vector<8x32xf32>
    %41 = tpu.matmul %25, %30, %cst_34 {dimension_numbers = #tpu.dot_dimension_numbers<[1], [0], [0], [1], [0, 0, 1, 1], [], []>} : vector<8x32xf32>, vector<32x32xf32>, vector<8x32xf32> -> vector<8x32xf32>
    %42 = vector.broadcast %31 : vector<1x32xf32> to vector<8x32xf32>
    %43 = arith.addf %41, %42 : vector<8x32xf32>
    %cst_35 = arith.constant dense<0.000000e+00> : vector<8x32xf32>
    %44 = tpu.matmul %25, %32, %cst_35 {dimension_numbers = #tpu.dot_dimension_numbers<[1], [0], [0], [1], [0, 0, 1, 1], [], []>} : vector<8x32xf32>, vector<32x32xf32>, vector<8x32xf32> -> vector<8x32xf32>
    %45 = vector.broadcast %33 : vector<1x32xf32> to vector<8x32xf32>
    %46 = arith.addf %44, %45 : vector<8x32xf32>
    %cst_36 = arith.constant 0.000000e+00 : f32
    %47 = vector.broadcast %cst_36 : f32 to vector<8x32xf32>
    %48 = vector.extract_strided_slice %40 {offsets = [0, 0], sizes = [8, 8], strides = [1, 1]} : vector<8x32xf32> to vector<8x8xf32>
    %49 = vector.extract_strided_slice %43 {offsets = [0, 0], sizes = [8, 8], strides = [1, 1]} : vector<8x32xf32> to vector<8x8xf32>
    %cst_37 = arith.constant dense<0.000000e+00> : vector<8x8xf32>
    %50 = tpu.matmul %48, %49, %cst_37 {dimension_numbers = #tpu.dot_dimension_numbers<[1], [1], [0], [0], [0, 0, 1, 0], [], []>} : vector<8x8xf32>, vector<8x8xf32>, vector<8x8xf32> -> vector<8x8xf32>
    %cst_38 = arith.constant 0.000000e+00 : f32
    %51 = vector.broadcast %cst_38 : f32 to vector<1x8xf32>
    %52 = arith.cmpf one, %27, %51 : vector<1x8xf32>
    %cst_39 = arith.constant -1.000000e+09 : f32
    %53 = vector.shape_cast %52 : vector<1x8xi1> to vector<1x8xi1>
    %54 = vector.broadcast %53 : vector<1x8xi1> to vector<8x8xi1>
    %55 = vector.broadcast %cst_39 : f32 to vector<8x8xf32>
    %56 = arith.select %54, %50, %55 : vector<8x8xi1>, vector<8x8xf32>
    %cst_40 = arith.constant dense<0xFF800000> : vector<8xf32>
    %57 = vector.multi_reduction <maximumf>, %56, %cst_40 [1] : vector<8x8xf32> to vector<8xf32>
    %58 = vector.shape_cast %57 : vector<8xf32> to vector<8x1xf32>
    %59 = vector.broadcast %58 : vector<8x1xf32> to vector<8x8xf32>
    %60 = arith.subf %56, %59 : vector<8x8xf32>
    %61 = math.exp %60 : vector<8x8xf32>
    %cst_41 = arith.constant dense<0.000000e+00> : vector<8xf32>
    %62 = vector.multi_reduction <add>, %61, %cst_41 [1] : vector<8x8xf32> to vector<8xf32>
    %63 = vector.shape_cast %62 : vector<8xf32> to vector<8x1xf32>
    %64 = tpu.reciprocal %63 {approx = true} : vector<8x1xf32> -> vector<8x1xf32>
    %65 = vector.broadcast %64 : vector<8x1xf32> to vector<8x8xf32>
    %66 = arith.mulf %61, %65 : vector<8x8xf32>
    %67 = vector.extract_strided_slice %46 {offsets = [0, 0], sizes = [8, 8], strides = [1, 1]} : vector<8x32xf32> to vector<8x8xf32>
    %cst_42 = arith.constant dense<0.000000e+00> : vector<8x8xf32>
    %68 = tpu.matmul %66, %67, %cst_42 {dimension_numbers = #tpu.dot_dimension_numbers<[1], [0], [0], [1], [0, 0, 1, 1], [], []>} : vector<8x8xf32>, vector<8x8xf32>, vector<8x8xf32> -> vector<8x8xf32>
    %69 = vector.extract_strided_slice %34 {offsets = [0, 0], sizes = [8, 32], strides = [1, 1]} : vector<32x32xf32> to vector<8x32xf32>
    %cst_43 = arith.constant dense<0.000000e+00> : vector<8x32xf32>
    %70 = tpu.matmul %68, %69, %cst_43 {dimension_numbers = #tpu.dot_dimension_numbers<[1], [0], [0], [1], [0, 0, 1, 1], [], []>} : vector<8x8xf32>, vector<8x32xf32>, vector<8x32xf32> -> vector<8x32xf32>
    %71 = arith.addf %47, %70 : vector<8x32xf32>
    %72 = vector.extract_strided_slice %40 {offsets = [0, 8], sizes = [8, 8], strides = [1, 1]} : vector<8x32xf32> to vector<8x8xf32>
    %73 = vector.extract_strided_slice %43 {offsets = [0, 8], sizes = [8, 8], strides = [1, 1]} : vector<8x32xf32> to vector<8x8xf32>
    %cst_44 = arith.constant dense<0.000000e+00> : vector<8x8xf32>
    %74 = tpu.matmul %72, %73, %cst_44 {dimension_numbers = #tpu.dot_dimension_numbers<[1], [1], [0], [0], [0, 0, 1, 0], [], []>} : vector<8x8xf32>, vector<8x8xf32>, vector<8x8xf32> -> vector<8x8xf32>
    %cst_45 = arith.constant 0.000000e+00 : f32
    %75 = vector.broadcast %cst_45 : f32 to vector<1x8xf32>
    %76 = arith.cmpf one, %27, %75 : vector<1x8xf32>
    %cst_46 = arith.constant -1.000000e+09 : f32
    %77 = vector.shape_cast %76 : vector<1x8xi1> to vector<1x8xi1>
    %78 = vector.broadcast %77 : vector<1x8xi1> to vector<8x8xi1>
    %79 = vector.broadcast %cst_46 : f32 to vector<8x8xf32>
    %80 = arith.select %78, %74, %79 : vector<8x8xi1>, vector<8x8xf32>
    %cst_47 = arith.constant dense<0xFF800000> : vector<8xf32>
    %81 = vector.multi_reduction <maximumf>, %80, %cst_47 [1] : vector<8x8xf32> to vector<8xf32>
    %82 = vector.shape_cast %81 : vector<8xf32> to vector<8x1xf32>
    %83 = vector.broadcast %82 : vector<8x1xf32> to vector<8x8xf32>
    %84 = arith.subf %80, %83 : vector<8x8xf32>
    %85 = math.exp %84 : vector<8x8xf32>
    %cst_48 = arith.constant dense<0.000000e+00> : vector<8xf32>
    %86 = vector.multi_reduction <add>, %85, %cst_48 [1] : vector<8x8xf32> to vector<8xf32>
    %87 = vector.shape_cast %86 : vector<8xf32> to vector<8x1xf32>
    %88 = tpu.reciprocal %87 {approx = true} : vector<8x1xf32> -> vector<8x1xf32>
    %89 = vector.broadcast %88 : vector<8x1xf32> to vector<8x8xf32>
    %90 = arith.mulf %85, %89 : vector<8x8xf32>
    %91 = vector.extract_strided_slice %46 {offsets = [0, 8], sizes = [8, 8], strides = [1, 1]} : vector<8x32xf32> to vector<8x8xf32>
    %cst_49 = arith.constant dense<0.000000e+00> : vector<8x8xf32>
    %92 = tpu.matmul %90, %91, %cst_49 {dimension_numbers = #tpu.dot_dimension_numbers<[1], [0], [0], [1], [0, 0, 1, 1], [], []>} : vector<8x8xf32>, vector<8x8xf32>, vector<8x8xf32> -> vector<8x8xf32>
    %93 = vector.extract_strided_slice %34 {offsets = [8, 0], sizes = [8, 32], strides = [1, 1]} : vector<32x32xf32> to vector<8x32xf32>
    %cst_50 = arith.constant dense<0.000000e+00> : vector<8x32xf32>
    %94 = tpu.matmul %92, %93, %cst_50 {dimension_numbers = #tpu.dot_dimension_numbers<[1], [0], [0], [1], [0, 0, 1, 1], [], []>} : vector<8x8xf32>, vector<8x32xf32>, vector<8x32xf32> -> vector<8x32xf32>
    %95 = arith.addf %71, %94 : vector<8x32xf32>
    %96 = vector.extract_strided_slice %40 {offsets = [0, 16], sizes = [8, 8], strides = [1, 1]} : vector<8x32xf32> to vector<8x8xf32>
    %97 = vector.extract_strided_slice %43 {offsets = [0, 16], sizes = [8, 8], strides = [1, 1]} : vector<8x32xf32> to vector<8x8xf32>
    %cst_51 = arith.constant dense<0.000000e+00> : vector<8x8xf32>
    %98 = tpu.matmul %96, %97, %cst_51 {dimension_numbers = #tpu.dot_dimension_numbers<[1], [1], [0], [0], [0, 0, 1, 0], [], []>} : vector<8x8xf32>, vector<8x8xf32>, vector<8x8xf32> -> vector<8x8xf32>
    %cst_52 = arith.constant 0.000000e+00 : f32
    %99 = vector.broadcast %cst_52 : f32 to vector<1x8xf32>
    %100 = arith.cmpf one, %27, %99 : vector<1x8xf32>
    %cst_53 = arith.constant -1.000000e+09 : f32
    %101 = vector.shape_cast %100 : vector<1x8xi1> to vector<1x8xi1>
    %102 = vector.broadcast %101 : vector<1x8xi1> to vector<8x8xi1>
    %103 = vector.broadcast %cst_53 : f32 to vector<8x8xf32>
    %104 = arith.select %102, %98, %103 : vector<8x8xi1>, vector<8x8xf32>
    %cst_54 = arith.constant dense<0xFF800000> : vector<8xf32>
    %105 = vector.multi_reduction <maximumf>, %104, %cst_54 [1] : vector<8x8xf32> to vector<8xf32>
    %106 = vector.shape_cast %105 : vector<8xf32> to vector<8x1xf32>
    %107 = vector.broadcast %106 : vector<8x1xf32> to vector<8x8xf32>
    %108 = arith.subf %104, %107 : vector<8x8xf32>
    %109 = math.exp %108 : vector<8x8xf32>
    %cst_55 = arith.constant dense<0.000000e+00> : vector<8xf32>
    %110 = vector.multi_reduction <add>, %109, %cst_55 [1] : vector<8x8xf32> to vector<8xf32>
    %111 = vector.shape_cast %110 : vector<8xf32> to vector<8x1xf32>
    %112 = tpu.reciprocal %111 {approx = true} : vector<8x1xf32> -> vector<8x1xf32>
    %113 = vector.broadcast %112 : vector<8x1xf32> to vector<8x8xf32>
    %114 = arith.mulf %109, %113 : vector<8x8xf32>
    %115 = vector.extract_strided_slice %46 {offsets = [0, 16], sizes = [8, 8], strides = [1, 1]} : vector<8x32xf32> to vector<8x8xf32>
    %cst_56 = arith.constant dense<0.000000e+00> : vector<8x8xf32>
    %116 = tpu.matmul %114, %115, %cst_56 {dimension_numbers = #tpu.dot_dimension_numbers<[1], [0], [0], [1], [0, 0, 1, 1], [], []>} : vector<8x8xf32>, vector<8x8xf32>, vector<8x8xf32> -> vector<8x8xf32>
    %117 = vector.extract_strided_slice %34 {offsets = [16, 0], sizes = [8, 32], strides = [1, 1]} : vector<32x32xf32> to vector<8x32xf32>
    %cst_57 = arith.constant dense<0.000000e+00> : vector<8x32xf32>
    %118 = tpu.matmul %116, %117, %cst_57 {dimension_numbers = #tpu.dot_dimension_numbers<[1], [0], [0], [1], [0, 0, 1, 1], [], []>} : vector<8x8xf32>, vector<8x32xf32>, vector<8x32xf32> -> vector<8x32xf32>
    %119 = arith.addf %95, %118 : vector<8x32xf32>
    %120 = vector.extract_strided_slice %40 {offsets = [0, 24], sizes = [8, 8], strides = [1, 1]} : vector<8x32xf32> to vector<8x8xf32>
    %121 = vector.extract_strided_slice %43 {offsets = [0, 24], sizes = [8, 8], strides = [1, 1]} : vector<8x32xf32> to vector<8x8xf32>
    %cst_58 = arith.constant dense<0.000000e+00> : vector<8x8xf32>
    %122 = tpu.matmul %120, %121, %cst_58 {dimension_numbers = #tpu.dot_dimension_numbers<[1], [1], [0], [0], [0, 0, 1, 0], [], []>} : vector<8x8xf32>, vector<8x8xf32>, vector<8x8xf32> -> vector<8x8xf32>
    %cst_59 = arith.constant 0.000000e+00 : f32
    %123 = vector.broadcast %cst_59 : f32 to vector<1x8xf32>
    %124 = arith.cmpf one, %27, %123 : vector<1x8xf32>
    %cst_60 = arith.constant -1.000000e+09 : f32
    %125 = vector.shape_cast %124 : vector<1x8xi1> to vector<1x8xi1>
    %126 = vector.broadcast %125 : vector<1x8xi1> to vector<8x8xi1>
    %127 = vector.broadcast %cst_60 : f32 to vector<8x8xf32>
    %128 = arith.select %126, %122, %127 : vector<8x8xi1>, vector<8x8xf32>
    %cst_61 = arith.constant dense<0xFF800000> : vector<8xf32>
    %129 = vector.multi_reduction <maximumf>, %128, %cst_61 [1] : vector<8x8xf32> to vector<8xf32>
    %130 = vector.shape_cast %129 : vector<8xf32> to vector<8x1xf32>
    %131 = vector.broadcast %130 : vector<8x1xf32> to vector<8x8xf32>
    %132 = arith.subf %128, %131 : vector<8x8xf32>
    %133 = math.exp %132 : vector<8x8xf32>
    %cst_62 = arith.constant dense<0.000000e+00> : vector<8xf32>
    %134 = vector.multi_reduction <add>, %133, %cst_62 [1] : vector<8x8xf32> to vector<8xf32>
    %135 = vector.shape_cast %134 : vector<8xf32> to vector<8x1xf32>
    %136 = tpu.reciprocal %135 {approx = true} : vector<8x1xf32> -> vector<8x1xf32>
    %137 = vector.broadcast %136 : vector<8x1xf32> to vector<8x8xf32>
    %138 = arith.mulf %133, %137 : vector<8x8xf32>
    %139 = vector.extract_strided_slice %46 {offsets = [0, 24], sizes = [8, 8], strides = [1, 1]} : vector<8x32xf32> to vector<8x8xf32>
    %cst_63 = arith.constant dense<0.000000e+00> : vector<8x8xf32>
    %140 = tpu.matmul %138, %139, %cst_63 {dimension_numbers = #tpu.dot_dimension_numbers<[1], [0], [0], [1], [0, 0, 1, 1], [], []>} : vector<8x8xf32>, vector<8x8xf32>, vector<8x8xf32> -> vector<8x8xf32>
    %141 = vector.extract_strided_slice %34 {offsets = [24, 0], sizes = [8, 32], strides = [1, 1]} : vector<32x32xf32> to vector<8x32xf32>
    %cst_64 = arith.constant dense<0.000000e+00> : vector<8x32xf32>
    %142 = tpu.matmul %140, %141, %cst_64 {dimension_numbers = #tpu.dot_dimension_numbers<[1], [0], [0], [1], [0, 0, 1, 1], [], []>} : vector<8x8xf32>, vector<8x32xf32>, vector<8x32xf32> -> vector<8x32xf32>
    %143 = arith.addf %119, %142 : vector<8x32xf32>
    %144 = vector.broadcast %35 : vector<1x32xf32> to vector<8x32xf32>
    %145 = arith.addf %143, %144 : vector<8x32xf32>
    %146 = arith.addf %1, %145 : vector<8x32xf32>
    %c0_65 = arith.constant 0 : index
    %c0_66 = arith.constant 0 : index
    %c0_67 = arith.constant 0 : index
    %147 = vector.load %arg14[%c0_65, %c0_66, %c0_67] : memref<1x8x32xf32, #tpu.memory_space<vmem>>, vector<1x8x32xf32>
    %148 = vector.shape_cast %147 : vector<1x8x32xf32> to vector<8x32xf32>
    %149 = vector.shape_cast %146 : vector<8x32xf32> to vector<1x8x32xf32>
    tpu.vector_store %arg14[%c0_65, %c0_66, %c0_67], %149 {strides = array<i32>} : memref<1x8x32xf32, #tpu.memory_space<vmem>>, vector<1x8x32xf32>,
    return
  }
  func.func @transform_0(%arg0: i32) -> (i32, i32, i32) {
    %c0_i32 = arith.constant 0 : i32
    %c0_i32_0 = arith.constant 0 : i32
    %c0_i32_1 = arith.constant 0 : i32
    return %arg0, %c0_i32, %c0_i32_0 : i32, i32, i32
  }
  func.func @transform_1(%arg0: i32) -> (i32, i32, i32) {
    %c0_i32 = arith.constant 0 : i32
    %c0_i32_0 = arith.constant 0 : i32
    %c0_i32_1 = arith.constant 0 : i32
    return %arg0, %c0_i32, %c0_i32_0 : i32, i32, i32
  }
  func.func @transform_2(%arg0: i32) -> (i32, i32, i32) {
    %c0_i32 = arith.constant 0 : i32
    %c0_i32_0 = arith.constant 0 : i32
    %c0_i32_1 = arith.constant 0 : i32
    return %arg0, %c0_i32, %c0_i32_0 : i32, i32, i32
  }
  func.func @transform_3(%arg0: i32) -> (i32, i32) {
    %c0_i32 = arith.constant 0 : i32
    %c0_i32_0 = arith.constant 0 : i32
    %c0_i32_1 = arith.constant 0 : i32
    return %c0_i32, %c0_i32_0 : i32, i32
  }
  func.func @transform_4(%arg0: i32) -> (i32, i32) {
    %c0_i32 = arith.constant 0 : i32
    %c0_i32_0 = arith.constant 0 : i32
    %c0_i32_1 = arith.constant 0 : i32
    return %c0_i32, %c0_i32_0 : i32, i32
  }
  func.func @transform_5(%arg0: i32) -> (i32, i32) {
    %c0_i32 = arith.constant 0 : i32
    %c0_i32_0 = arith.constant 0 : i32
    %c0_i32_1 = arith.constant 0 : i32
    return %c0_i32, %c0_i32_0 : i32, i32
  }
  func.func @transform_6(%arg0: i32) -> (i32, i32) {
    %c0_i32 = arith.constant 0 : i32
    %c0_i32_0 = arith.constant 0 : i32
    %c0_i32_1 = arith.constant 0 : i32
    return %c0_i32, %c0_i32_0 : i32, i32
  }
  func.func @transform_7(%arg0: i32) -> (i32, i32) {
    %c0_i32 = arith.constant 0 : i32
    %c0_i32_0 = arith.constant 0 : i32
    %c0_i32_1 = arith.constant 0 : i32
    return %c0_i32, %c0_i32_0 : i32, i32
  }
  func.func @transform_8(%arg0: i32) -> (i32, i32) {
    %c0_i32 = arith.constant 0 : i32
    %c0_i32_0 = arith.constant 0 : i32
    %c0_i32_1 = arith.constant 0 : i32
    return %c0_i32, %c0_i32_0 : i32, i32
  }
  func.func @transform_9(%arg0: i32) -> (i32, i32) {
    %c0_i32 = arith.constant 0 : i32
    %c0_i32_0 = arith.constant 0 : i32
    %c0_i32_1 = arith.constant 0 : i32
    return %c0_i32, %c0_i32_0 : i32, i32
  }
  func.func @transform_10(%arg0: i32) -> (i32, i32) {
    %c0_i32 = arith.constant 0 : i32
    %c0_i32_0 = arith.constant 0 : i32
    %c0_i32_1 = arith.constant 0 : i32
    return %c0_i32, %c0_i32_0 : i32, i32
  }
  func.func @transform_11(%arg0: i32) -> (i32, i32) {
    %c0_i32 = arith.constant 0 : i32
    %c0_i32_0 = arith.constant 0 : i32
    %c0_i32_1 = arith.constant 0 : i32
    return %c0_i32, %c0_i32_0 : i32, i32
  }
  func.func @transform_12(%arg0: i32) -> (i32, i32) {
    %c0_i32 = arith.constant 0 : i32
    %c0_i32_0 = arith.constant 0 : i32
    %c0_i32_1 = arith.constant 0 : i32
    return %c0_i32, %c0_i32_0 : i32, i32
  }
  func.func @transform_13(%arg0: i32) -> (i32, i32, i32) {
    %c0_i32 = arith.constant 0 : i32
    %c0_i32_0 = arith.constant 0 : i32
    %c0_i32_1 = arith.constant 0 : i32
    return %arg0, %c0_i32, %c0_i32_0 : i32, i32, i32
  }
}

module attributes {stable_mosaic.version = 11 : i64} {
  func.func @_ffn_sublayer_kernel(%arg0: i32, %arg1: memref<16x32xf32, #tpu.memory_space<vmem>>, %arg2: memref<1x32xf32, #tpu.memory_space<vmem>>, %arg3: memref<1x32xf32, #tpu.memory_space<vmem>>, %arg4: memref<32x64xf32, #tpu.memory_space<vmem>>, %arg5: memref<1x64xf32, #tpu.memory_space<vmem>>, %arg6: memref<64x32xf32, #tpu.memory_space<vmem>>, %arg7: memref<1x32xf32, #tpu.memory_space<vmem>>, %arg8: memref<16x32xf32, #tpu.memory_space<vmem>>) attributes {dimension_semantics = [#tpu.dimension_semantics<parallel>], iteration_bounds = array<i64: 1>, scalar_prefetch = 0 : i64, scratch_operands = 0 : i64, tpu.core_type = #tpu.core_type<tc>, window_params = [{transform_indices = @transform_0, window_bounds = array<i64: 16, 32>}, {pipeline_mode = #tpu.pipeline_mode<synchronous>, transform_indices = @transform_1, window_bounds = array<i64: 1, 32>}, {pipeline_mode = #tpu.pipeline_mode<synchronous>, transform_indices = @transform_2, window_bounds = array<i64: 1, 32>}, {pipeline_mode = #tpu.pipeline_mode<synchronous>, transform_indices = @transform_3, window_bounds = array<i64: 32, 64>}, {pipeline_mode = #tpu.pipeline_mode<synchronous>, transform_indices = @transform_4, window_bounds = array<i64: 1, 64>}, {pipeline_mode = #tpu.pipeline_mode<synchronous>, transform_indices = @transform_5, window_bounds = array<i64: 64, 32>}, {pipeline_mode = #tpu.pipeline_mode<synchronous>, transform_indices = @transform_6, window_bounds = array<i64: 1, 32>}, {transform_indices = @transform_7, window_bounds = array<i64: 16, 32>}]} {
    %c0 = arith.constant 0 : index
    %c0_0 = arith.constant 0 : index
    %0 = vector.load %arg1[%c0, %c0_0] : memref<16x32xf32, #tpu.memory_space<vmem>>, vector<16x32xf32>
    %c0_1 = arith.constant 0 : index
    %c0_2 = arith.constant 0 : index
    %1 = vector.load %arg2[%c0_1, %c0_2] : memref<1x32xf32, #tpu.memory_space<vmem>>, vector<1x32xf32>
    %c0_3 = arith.constant 0 : index
    %c0_4 = arith.constant 0 : index
    %2 = vector.load %arg3[%c0_3, %c0_4] : memref<1x32xf32, #tpu.memory_space<vmem>>, vector<1x32xf32>
    %cst = arith.constant dense<0.000000e+00> : vector<16xf32>
    %3 = vector.multi_reduction <add>, %0, %cst [1] : vector<16x32xf32> to vector<16xf32>
    %4 = vector.shape_cast %3 : vector<16xf32> to vector<16x1xf32>
    %cst_5 = arith.constant 3.200000e+01 : f32
    %5 = vector.broadcast %cst_5 : f32 to vector<16x1xf32>
    %6 = arith.divf %4, %5 : vector<16x1xf32>
    %7 = vector.broadcast %6 : vector<16x1xf32> to vector<16x32xf32>
    %8 = arith.subf %0, %7 : vector<16x32xf32>
    %9 = arith.mulf %8, %8 : vector<16x32xf32>
    %cst_6 = arith.constant dense<0.000000e+00> : vector<16xf32>
    %10 = vector.multi_reduction <add>, %9, %cst_6 [1] : vector<16x32xf32> to vector<16xf32>
    %11 = vector.shape_cast %10 : vector<16xf32> to vector<16x1xf32>
    %cst_7 = arith.constant 3.100000e+01 : f32
    %12 = vector.broadcast %cst_7 : f32 to vector<16x1xf32>
    %13 = arith.divf %11, %12 : vector<16x1xf32>
    %14 = vector.broadcast %1 : vector<1x32xf32> to vector<16x32xf32>
    %15 = arith.mulf %14, %8 : vector<16x32xf32>
    %16 = math.sqrt %13 : vector<16x1xf32>
    %cst_8 = arith.constant 9.99999997E-7 : f32
    %17 = vector.broadcast %cst_8 : f32 to vector<16x1xf32>
    %18 = arith.addf %16, %17 : vector<16x1xf32>
    %19 = vector.broadcast %18 : vector<16x1xf32> to vector<16x32xf32>
    %20 = arith.divf %15, %19 : vector<16x32xf32>
    %21 = vector.broadcast %2 : vector<1x32xf32> to vector<16x32xf32>
    %22 = arith.addf %20, %21 : vector<16x32xf32>
    %c0_9 = arith.constant 0 : index
    %c0_10 = arith.constant 0 : index
    %23 = vector.load %arg4[%c0_9, %c0_10] : memref<32x64xf32, #tpu.memory_space<vmem>>, vector<32x64xf32>
    %c0_11 = arith.constant 0 : index
    %c0_12 = arith.constant 0 : index
    %24 = vector.load %arg5[%c0_11, %c0_12] : memref<1x64xf32, #tpu.memory_space<vmem>>, vector<1x64xf32>
    %cst_13 = arith.constant dense<0.000000e+00> : vector<16x64xf32>
    %25 = tpu.matmul %22, %23, %cst_13 {dimension_numbers = #tpu.dot_dimension_numbers<[1], [0], [0], [1], [0, 0, 1, 1], [], []>} : vector<16x32xf32>, vector<32x64xf32>, vector<16x64xf32> -> vector<16x64xf32>
    %26 = vector.broadcast %24 : vector<1x64xf32> to vector<16x64xf32>
    %27 = arith.addf %25, %26 : vector<16x64xf32>
    %cst_14 = arith.constant 0.000000e+00 : f32
    %28 = vector.broadcast %cst_14 : f32 to vector<16x64xf32>
    %29 = arith.maximumf %27, %28 : vector<16x64xf32>
    %c0_15 = arith.constant 0 : index
    %c0_16 = arith.constant 0 : index
    %30 = vector.load %arg6[%c0_15, %c0_16] : memref<64x32xf32, #tpu.memory_space<vmem>>, vector<64x32xf32>
    %c0_17 = arith.constant 0 : index
    %c0_18 = arith.constant 0 : index
    %31 = vector.load %arg7[%c0_17, %c0_18] : memref<1x32xf32, #tpu.memory_space<vmem>>, vector<1x32xf32>
    %cst_19 = arith.constant dense<0.000000e+00> : vector<16x32xf32>
    %32 = tpu.matmul %29, %30, %cst_19 {dimension_numbers = #tpu.dot_dimension_numbers<[1], [0], [0], [1], [0, 0, 1, 1], [], []>} : vector<16x64xf32>, vector<64x32xf32>, vector<16x32xf32> -> vector<16x32xf32>
    %33 = vector.broadcast %31 : vector<1x32xf32> to vector<16x32xf32>
    %34 = arith.addf %32, %33 : vector<16x32xf32>
    %35 = arith.addf %0, %34 : vector<16x32xf32>
    %c0_20 = arith.constant 0 : index
    %c0_21 = arith.constant 0 : index
    %36 = vector.load %arg8[%c0_20, %c0_21] : memref<16x32xf32, #tpu.memory_space<vmem>>, vector<16x32xf32>
    tpu.vector_store %arg8[%c0_20, %c0_21], %35 {strides = array<i32>} : memref<16x32xf32, #tpu.memory_space<vmem>>, vector<16x32xf32>,
    return
  }
  func.func @transform_0(%arg0: i32) -> (i32, i32) {
    %c0_i32 = arith.constant 0 : i32
    %c0_i32_0 = arith.constant 0 : i32
    return %arg0, %c0_i32 : i32, i32
  }
  func.func @transform_1(%arg0: i32) -> (i32, i32) {
    %c0_i32 = arith.constant 0 : i32
    %c0_i32_0 = arith.constant 0 : i32
    %c0_i32_1 = arith.constant 0 : i32
    return %c0_i32, %c0_i32_0 : i32, i32
  }
  func.func @transform_2(%arg0: i32) -> (i32, i32) {
    %c0_i32 = arith.constant 0 : i32
    %c0_i32_0 = arith.constant 0 : i32
    %c0_i32_1 = arith.constant 0 : i32
    return %c0_i32, %c0_i32_0 : i32, i32
  }
  func.func @transform_3(%arg0: i32) -> (i32, i32) {
    %c0_i32 = arith.constant 0 : i32
    %c0_i32_0 = arith.constant 0 : i32
    %c0_i32_1 = arith.constant 0 : i32
    return %c0_i32, %c0_i32_0 : i32, i32
  }
  func.func @transform_4(%arg0: i32) -> (i32, i32) {
    %c0_i32 = arith.constant 0 : i32
    %c0_i32_0 = arith.constant 0 : i32
    %c0_i32_1 = arith.constant 0 : i32
    return %c0_i32, %c0_i32_0 : i32, i32
  }
  func.func @transform_5(%arg0: i32) -> (i32, i32) {
    %c0_i32 = arith.constant 0 : i32
    %c0_i32_0 = arith.constant 0 : i32
    %c0_i32_1 = arith.constant 0 : i32
    return %c0_i32, %c0_i32_0 : i32, i32
  }
  func.func @transform_6(%arg0: i32) -> (i32, i32) {
    %c0_i32 = arith.constant 0 : i32
    %c0_i32_0 = arith.constant 0 : i32
    %c0_i32_1 = arith.constant 0 : i32
    return %c0_i32, %c0_i32_0 : i32, i32
  }
  func.func @transform_7(%arg0: i32) -> (i32, i32) {
    %c0_i32 = arith.constant 0 : i32
    %c0_i32_0 = arith.constant 0 : i32
    return %arg0, %c0_i32 : i32, i32
  }
}

module attributes {stable_mosaic.version = 11 : i64} {
  func.func @_self_attn_sublayer_kernel(%arg0: i32, %arg1: memref<1x8x32xf32, #tpu.memory_space<vmem>>, %arg2: memref<1x8x8xf32, #tpu.memory_space<vmem>>, %arg3: memref<1x32xf32, #tpu.memory_space<vmem>>, %arg4: memref<1x32xf32, #tpu.memory_space<vmem>>, %arg5: memref<32x32xf32, #tpu.memory_space<vmem>>, %arg6: memref<1x32xf32, #tpu.memory_space<vmem>>, %arg7: memref<32x32xf32, #tpu.memory_space<vmem>>, %arg8: memref<1x32xf32, #tpu.memory_space<vmem>>, %arg9: memref<32x32xf32, #tpu.memory_space<vmem>>, %arg10: memref<1x32xf32, #tpu.memory_space<vmem>>, %arg11: memref<32x32xf32, #tpu.memory_space<vmem>>, %arg12: memref<1x32xf32, #tpu.memory_space<vmem>>, %arg13: memref<1x8x32xf32, #tpu.memory_space<vmem>>) attributes {dimension_semantics = [#tpu.dimension_semantics<parallel>], iteration_bounds = array<i64: 2>, scalar_prefetch = 0 : i64, scratch_operands = 0 : i64, tpu.core_type = #tpu.core_type<tc>, window_params = [{transform_indices = @transform_0, window_bounds = array<i64: 1, 8, 32>}, {transform_indices = @transform_1, window_bounds = array<i64: 1, 8, 8>}, {pipeline_mode = #tpu.pipeline_mode<synchronous>, transform_indices = @transform_2, window_bounds = array<i64: 1, 32>}, {pipeline_mode = #tpu.pipeline_mode<synchronous>, transform_indices = @transform_3, window_bounds = array<i64: 1, 32>}, {pipeline_mode = #tpu.pipeline_mode<synchronous>, transform_indices = @transform_4, window_bounds = array<i64: 32, 32>}, {pipeline_mode = #tpu.pipeline_mode<synchronous>, transform_indices = @transform_5, window_bounds = array<i64: 1, 32>}, {pipeline_mode = #tpu.pipeline_mode<synchronous>, transform_indices = @transform_6, window_bounds = array<i64: 32, 32>}, {pipeline_mode = #tpu.pipeline_mode<synchronous>, transform_indices = @transform_7, window_bounds = array<i64: 1, 32>}, {pipeline_mode = #tpu.pipeline_mode<synchronous>, transform_indices = @transform_8, window_bounds = array<i64: 32, 32>}, {pipeline_mode = #tpu.pipeline_mode<synchronous>, transform_indices = @transform_9, window_bounds = array<i64: 1, 32>}, {pipeline_mode = #tpu.pipeline_mode<synchronous>, transform_indices = @transform_10, window_bounds = array<i64: 32, 32>}, {pipeline_mode = #tpu.pipeline_mode<synchronous>, transform_indices = @transform_11, window_bounds = array<i64: 1, 32>}, {transform_indices = @transform_12, window_bounds = array<i64: 1, 8, 32>}]} {
    %c0 = arith.constant 0 : index
    %c0_0 = arith.constant 0 : index
    %c0_1 = arith.constant 0 : index
    %0 = vector.load %arg1[%c0, %c0_0, %c0_1] : memref<1x8x32xf32, #tpu.memory_space<vmem>>, vector<1x8x32xf32>
    %1 = vector.shape_cast %0 : vector<1x8x32xf32> to vector<8x32xf32>
    %c0_2 = arith.constant 0 : index
    %c0_3 = arith.constant 0 : index
    %2 = vector.load %arg3[%c0_2, %c0_3] : memref<1x32xf32, #tpu.memory_space<vmem>>, vector<1x32xf32>
    %c0_4 = arith.constant 0 : index
    %c0_5 = arith.constant 0 : index
    %3 = vector.load %arg4[%c0_4, %c0_5] : memref<1x32xf32, #tpu.memory_space<vmem>>, vector<1x32xf32>
    %cst = arith.constant dense<0.000000e+00> : vector<8xf32>
    %4 = vector.multi_reduction <add>, %1, %cst [1] : vector<8x32xf32> to vector<8xf32>
    %5 = vector.shape_cast %4 : vector<8xf32> to vector<8x1xf32>
    %cst_6 = arith.constant 3.200000e+01 : f32
    %6 = vector.broadcast %cst_6 : f32 to vector<8x1xf32>
    %7 = arith.divf %5, %6 : vector<8x1xf32>
    %8 = vector.broadcast %7 : vector<8x1xf32> to vector<8x32xf32>
    %9 = arith.subf %1, %8 : vector<8x32xf32>
    %10 = arith.mulf %9, %9 : vector<8x32xf32>
    %cst_7 = arith.constant dense<0.000000e+00> : vector<8xf32>
    %11 = vector.multi_reduction <add>, %10, %cst_7 [1] : vector<8x32xf32> to vector<8xf32>
    %12 = vector.shape_cast %11 : vector<8xf32> to vector<8x1xf32>
    %cst_8 = arith.constant 3.100000e+01 : f32
    %13 = vector.broadcast %cst_8 : f32 to vector<8x1xf32>
    %14 = arith.divf %12, %13 : vector<8x1xf32>
    %15 = vector.broadcast %2 : vector<1x32xf32> to vector<8x32xf32>
    %16 = arith.mulf %15, %9 : vector<8x32xf32>
    %17 = math.sqrt %14 : vector<8x1xf32>
    %cst_9 = arith.constant 9.99999997E-7 : f32
    %18 = vector.broadcast %cst_9 : f32 to vector<8x1xf32>
    %19 = arith.addf %17, %18 : vector<8x1xf32>
    %20 = vector.broadcast %19 : vector<8x1xf32> to vector<8x32xf32>
    %21 = arith.divf %16, %20 : vector<8x32xf32>
    %22 = vector.broadcast %3 : vector<1x32xf32> to vector<8x32xf32>
    %23 = arith.addf %21, %22 : vector<8x32xf32>
    %c0_10 = arith.constant 0 : index
    %c0_11 = arith.constant 0 : index
    %c0_12 = arith.constant 0 : index
    %24 = vector.load %arg2[%c0_10, %c0_11, %c0_12] : memref<1x8x8xf32, #tpu.memory_space<vmem>>, vector<1x8x8xf32>
    %25 = vector.shape_cast %24 : vector<1x8x8xf32> to vector<8x8xf32>
    %c0_13 = arith.constant 0 : index
    %c0_14 = arith.constant 0 : index
    %26 = vector.load %arg5[%c0_13, %c0_14] : memref<32x32xf32, #tpu.memory_space<vmem>>, vector<32x32xf32>
    %c0_15 = arith.constant 0 : index
    %c0_16 = arith.constant 0 : index
    %27 = vector.load %arg6[%c0_15, %c0_16] : memref<1x32xf32, #tpu.memory_space<vmem>>, vector<1x32xf32>
    %c0_17 = arith.constant 0 : index
    %c0_18 = arith.constant 0 : index
    %28 = vector.load %arg7[%c0_17, %c0_18] : memref<32x32xf32, #tpu.memory_space<vmem>>, vector<32x32xf32>
    %c0_19 = arith.constant 0 : index
    %c0_20 = arith.constant 0 : index
    %29 = vector.load %arg8[%c0_19, %c0_20] : memref<1x32xf32, #tpu.memory_space<vmem>>, vector<1x32xf32>
    %c0_21 = arith.constant 0 : index
    %c0_22 = arith.constant 0 : index
    %30 = vector.load %arg9[%c0_21, %c0_22] : memref<32x32xf32, #tpu.memory_space<vmem>>, vector<32x32xf32>
    %c0_23 = arith.constant 0 : index
    %c0_24 = arith.constant 0 : index
    %31 = vector.load %arg10[%c0_23, %c0_24] : memref<1x32xf32, #tpu.memory_space<vmem>>, vector<1x32xf32>
    %c0_25 = arith.constant 0 : index
    %c0_26 = arith.constant 0 : index
    %32 = vector.load %arg11[%c0_25, %c0_26] : memref<32x32xf32, #tpu.memory_space<vmem>>, vector<32x32xf32>
    %c0_27 = arith.constant 0 : index
    %c0_28 = arith.constant 0 : index
    %33 = vector.load %arg12[%c0_27, %c0_28] : memref<1x32xf32, #tpu.memory_space<vmem>>, vector<1x32xf32>
    %cst_29 = arith.constant dense<0.000000e+00> : vector<8x32xf32>
    %34 = tpu.matmul %23, %26, %cst_29 {dimension_numbers = #tpu.dot_dimension_numbers<[1], [0], [0], [1], [0, 0, 1, 1], [], []>} : vector<8x32xf32>, vector<32x32xf32>, vector<8x32xf32> -> vector<8x32xf32>
    %35 = vector.broadcast %27 : vector<1x32xf32> to vector<8x32xf32>
    %36 = arith.addf %34, %35 : vector<8x32xf32>
    %cst_30 = arith.constant 0.353553385 : f32
    %37 = vector.broadcast %cst_30 : f32 to vector<8x32xf32>
    %38 = arith.mulf %36, %37 : vector<8x32xf32>
    %cst_31 = arith.constant dense<0.000000e+00> : vector<8x32xf32>
    %39 = tpu.matmul %23, %28, %cst_31 {dimension_numbers = #tpu.dot_dimension_numbers<[1], [0], [0], [1], [0, 0, 1, 1], [], []>} : vector<8x32xf32>, vector<32x32xf32>, vector<8x32xf32> -> vector<8x32xf32>
    %40 = vector.broadcast %29 : vector<1x32xf32> to vector<8x32xf32>
    %41 = arith.addf %39, %40 : vector<8x32xf32>
    %cst_32 = arith.constant dense<0.000000e+00> : vector<8x32xf32>
    %42 = tpu.matmul %23, %30, %cst_32 {dimension_numbers = #tpu.dot_dimension_numbers<[1], [0], [0], [1], [0, 0, 1, 1], [], []>} : vector<8x32xf32>, vector<32x32xf32>, vector<8x32xf32> -> vector<8x32xf32>
    %43 = vector.broadcast %31 : vector<1x32xf32> to vector<8x32xf32>
    %44 = arith.addf %42, %43 : vector<8x32xf32>
    %cst_33 = arith.constant 0.000000e+00 : f32
    %45 = vector.broadcast %cst_33 : f32 to vector<8x32xf32>
    %46 = vector.extract_strided_slice %38 {offsets = [0, 0], sizes = [8, 8], strides = [1, 1]} : vector<8x32xf32> to vector<8x8xf32>
    %47 = vector.extract_strided_slice %41 {offsets = [0, 0], sizes = [8, 8], strides = [1, 1]} : vector<8x32xf32> to vector<8x8xf32>
    %cst_34 = arith.constant dense<0.000000e+00> : vector<8x8xf32>
    %48 = tpu.matmul %46, %47, %cst_34 {dimension_numbers = #tpu.dot_dimension_numbers<[1], [1], [0], [0], [0, 0, 1, 0], [], []>} : vector<8x8xf32>, vector<8x8xf32>, vector<8x8xf32> -> vector<8x8xf32>
    %cst_35 = arith.constant 0.000000e+00 : f32
    %49 = vector.broadcast %cst_35 : f32 to vector<8x8xf32>
    %50 = arith.cmpf one, %25, %49 : vector<8x8xf32>
    %cst_36 = arith.constant -1.000000e+09 : f32
    %51 = vector.broadcast %cst_36 : f32 to vector<8x8xf32>
    %52 = arith.select %50, %48, %51 : vector<8x8xi1>, vector<8x8xf32>
    %cst_37 = arith.constant dense<0xFF800000> : vector<8xf32>
    %53 = vector.multi_reduction <maximumf>, %52, %cst_37 [1] : vector<8x8xf32> to vector<8xf32>
    %54 = vector.shape_cast %53 : vector<8xf32> to vector<8x1xf32>
    %55 = vector.broadcast %54 : vector<8x1xf32> to vector<8x8xf32>
    %56 = arith.subf %52, %55 : vector<8x8xf32>
    %57 = math.exp %56 : vector<8x8xf32>
    %cst_38 = arith.constant dense<0.000000e+00> : vector<8xf32>
    %58 = vector.multi_reduction <add>, %57, %cst_38 [1] : vector<8x8xf32> to vector<8xf32>
    %59 = vector.shape_cast %58 : vector<8xf32> to vector<8x1xf32>
    %60 = tpu.reciprocal %59 {approx = true} : vector<8x1xf32> -> vector<8x1xf32>
    %61 = vector.broadcast %60 : vector<8x1xf32> to vector<8x8xf32>
    %62 = arith.mulf %57, %61 : vector<8x8xf32>
    %63 = vector.extract_strided_slice %44 {offsets = [0, 0], sizes = [8, 8], strides = [1, 1]} : vector<8x32xf32> to vector<8x8xf32>
    %cst_39 = arith.constant dense<0.000000e+00> : vector<8x8xf32>
    %64 = tpu.matmul %62, %63, %cst_39 {dimension_numbers = #tpu.dot_dimension_numbers<[1], [0], [0], [1], [0, 0, 1, 1], [], []>} : vector<8x8xf32>, vector<8x8xf32>, vector<8x8xf32> -> vector<8x8xf32>
    %65 = vector.extract_strided_slice %32 {offsets = [0, 0], sizes = [8, 32], strides = [1, 1]} : vector<32x32xf32> to vector<8x32xf32>
    %cst_40 = arith.constant dense<0.000000e+00> : vector<8x32xf32>
    %66 = tpu.matmul %64, %65, %cst_40 {dimension_numbers = #tpu.dot_dimension_numbers<[1], [0], [0], [1], [0, 0, 1, 1], [], []>} : vector<8x8xf32>, vector<8x32xf32>, vector<8x32xf32> -> vector<8x32xf32>
    %67 = arith.addf %45, %66 : vector<8x32xf32>
    %68 = vector.extract_strided_slice %38 {offsets = [0, 8], sizes = [8, 8], strides = [1, 1]} : vector<8x32xf32> to vector<8x8xf32>
    %69 = vector.extract_strided_slice %41 {offsets = [0, 8], sizes = [8, 8], strides = [1, 1]} : vector<8x32xf32> to vector<8x8xf32>
    %cst_41 = arith.constant dense<0.000000e+00> : vector<8x8xf32>
    %70 = tpu.matmul %68, %69, %cst_41 {dimension_numbers = #tpu.dot_dimension_numbers<[1], [1], [0], [0], [0, 0, 1, 0], [], []>} : vector<8x8xf32>, vector<8x8xf32>, vector<8x8xf32> -> vector<8x8xf32>
    %cst_42 = arith.constant 0.000000e+00 : f32
    %71 = vector.broadcast %cst_42 : f32 to vector<8x8xf32>
    %72 = arith.cmpf one, %25, %71 : vector<8x8xf32>
    %cst_43 = arith.constant -1.000000e+09 : f32
    %73 = vector.broadcast %cst_43 : f32 to vector<8x8xf32>
    %74 = arith.select %72, %70, %73 : vector<8x8xi1>, vector<8x8xf32>
    %cst_44 = arith.constant dense<0xFF800000> : vector<8xf32>
    %75 = vector.multi_reduction <maximumf>, %74, %cst_44 [1] : vector<8x8xf32> to vector<8xf32>
    %76 = vector.shape_cast %75 : vector<8xf32> to vector<8x1xf32>
    %77 = vector.broadcast %76 : vector<8x1xf32> to vector<8x8xf32>
    %78 = arith.subf %74, %77 : vector<8x8xf32>
    %79 = math.exp %78 : vector<8x8xf32>
    %cst_45 = arith.constant dense<0.000000e+00> : vector<8xf32>
    %80 = vector.multi_reduction <add>, %79, %cst_45 [1] : vector<8x8xf32> to vector<8xf32>
    %81 = vector.shape_cast %80 : vector<8xf32> to vector<8x1xf32>
    %82 = tpu.reciprocal %81 {approx = true} : vector<8x1xf32> -> vector<8x1xf32>
    %83 = vector.broadcast %82 : vector<8x1xf32> to vector<8x8xf32>
    %84 = arith.mulf %79, %83 : vector<8x8xf32>
    %85 = vector.extract_strided_slice %44 {offsets = [0, 8], sizes = [8, 8], strides = [1, 1]} : vector<8x32xf32> to vector<8x8xf32>
    %cst_46 = arith.constant dense<0.000000e+00> : vector<8x8xf32>
    %86 = tpu.matmul %84, %85, %cst_46 {dimension_numbers = #tpu.dot_dimension_numbers<[1], [0], [0], [1], [0, 0, 1, 1], [], []>} : vector<8x8xf32>, vector<8x8xf32>, vector<8x8xf32> -> vector<8x8xf32>
    %87 = vector.extract_strided_slice %32 {offsets = [8, 0], sizes = [8, 32], strides = [1, 1]} : vector<32x32xf32> to vector<8x32xf32>
    %cst_47 = arith.constant dense<0.000000e+00> : vector<8x32xf32>
    %88 = tpu.matmul %86, %87, %cst_47 {dimension_numbers = #tpu.dot_dimension_numbers<[1], [0], [0], [1], [0, 0, 1, 1], [], []>} : vector<8x8xf32>, vector<8x32xf32>, vector<8x32xf32> -> vector<8x32xf32>
    %89 = arith.addf %67, %88 : vector<8x32xf32>
    %90 = vector.extract_strided_slice %38 {offsets = [0, 16], sizes = [8, 8], strides = [1, 1]} : vector<8x32xf32> to vector<8x8xf32>
    %91 = vector.extract_strided_slice %41 {offsets = [0, 16], sizes = [8, 8], strides = [1, 1]} : vector<8x32xf32> to vector<8x8xf32>
    %cst_48 = arith.constant dense<0.000000e+00> : vector<8x8xf32>
    %92 = tpu.matmul %90, %91, %cst_48 {dimension_numbers = #tpu.dot_dimension_numbers<[1], [1], [0], [0], [0, 0, 1, 0], [], []>} : vector<8x8xf32>, vector<8x8xf32>, vector<8x8xf32> -> vector<8x8xf32>
    %cst_49 = arith.constant 0.000000e+00 : f32
    %93 = vector.broadcast %cst_49 : f32 to vector<8x8xf32>
    %94 = arith.cmpf one, %25, %93 : vector<8x8xf32>
    %cst_50 = arith.constant -1.000000e+09 : f32
    %95 = vector.broadcast %cst_50 : f32 to vector<8x8xf32>
    %96 = arith.select %94, %92, %95 : vector<8x8xi1>, vector<8x8xf32>
    %cst_51 = arith.constant dense<0xFF800000> : vector<8xf32>
    %97 = vector.multi_reduction <maximumf>, %96, %cst_51 [1] : vector<8x8xf32> to vector<8xf32>
    %98 = vector.shape_cast %97 : vector<8xf32> to vector<8x1xf32>
    %99 = vector.broadcast %98 : vector<8x1xf32> to vector<8x8xf32>
    %100 = arith.subf %96, %99 : vector<8x8xf32>
    %101 = math.exp %100 : vector<8x8xf32>
    %cst_52 = arith.constant dense<0.000000e+00> : vector<8xf32>
    %102 = vector.multi_reduction <add>, %101, %cst_52 [1] : vector<8x8xf32> to vector<8xf32>
    %103 = vector.shape_cast %102 : vector<8xf32> to vector<8x1xf32>
    %104 = tpu.reciprocal %103 {approx = true} : vector<8x1xf32> -> vector<8x1xf32>
    %105 = vector.broadcast %104 : vector<8x1xf32> to vector<8x8xf32>
    %106 = arith.mulf %101, %105 : vector<8x8xf32>
    %107 = vector.extract_strided_slice %44 {offsets = [0, 16], sizes = [8, 8], strides = [1, 1]} : vector<8x32xf32> to vector<8x8xf32>
    %cst_53 = arith.constant dense<0.000000e+00> : vector<8x8xf32>
    %108 = tpu.matmul %106, %107, %cst_53 {dimension_numbers = #tpu.dot_dimension_numbers<[1], [0], [0], [1], [0, 0, 1, 1], [], []>} : vector<8x8xf32>, vector<8x8xf32>, vector<8x8xf32> -> vector<8x8xf32>
    %109 = vector.extract_strided_slice %32 {offsets = [16, 0], sizes = [8, 32], strides = [1, 1]} : vector<32x32xf32> to vector<8x32xf32>
    %cst_54 = arith.constant dense<0.000000e+00> : vector<8x32xf32>
    %110 = tpu.matmul %108, %109, %cst_54 {dimension_numbers = #tpu.dot_dimension_numbers<[1], [0], [0], [1], [0, 0, 1, 1], [], []>} : vector<8x8xf32>, vector<8x32xf32>, vector<8x32xf32> -> vector<8x32xf32>
    %111 = arith.addf %89, %110 : vector<8x32xf32>
    %112 = vector.extract_strided_slice %38 {offsets = [0, 24], sizes = [8, 8], strides = [1, 1]} : vector<8x32xf32> to vector<8x8xf32>
    %113 = vector.extract_strided_slice %41 {offsets = [0, 24], sizes = [8, 8], strides = [1, 1]} : vector<8x32xf32> to vector<8x8xf32>
    %cst_55 = arith.constant dense<0.000000e+00> : vector<8x8xf32>
    %114 = tpu.matmul %112, %113, %cst_55 {dimension_numbers = #tpu.dot_dimension_numbers<[1], [1], [0], [0], [0, 0, 1, 0], [], []>} : vector<8x8xf32>, vector<8x8xf32>, vector<8x8xf32> -> vector<8x8xf32>
    %cst_56 = arith.constant 0.000000e+00 : f32
    %115 = vector.broadcast %cst_56 : f32 to vector<8x8xf32>
    %116 = arith.cmpf one, %25, %115 : vector<8x8xf32>
    %cst_57 = arith.constant -1.000000e+09 : f32
    %117 = vector.broadcast %cst_57 : f32 to vector<8x8xf32>
    %118 = arith.select %116, %114, %117 : vector<8x8xi1>, vector<8x8xf32>
    %cst_58 = arith.constant dense<0xFF800000> : vector<8xf32>
    %119 = vector.multi_reduction <maximumf>, %118, %cst_58 [1] : vector<8x8xf32> to vector<8xf32>
    %120 = vector.shape_cast %119 : vector<8xf32> to vector<8x1xf32>
    %121 = vector.broadcast %120 : vector<8x1xf32> to vector<8x8xf32>
    %122 = arith.subf %118, %121 : vector<8x8xf32>
    %123 = math.exp %122 : vector<8x8xf32>
    %cst_59 = arith.constant dense<0.000000e+00> : vector<8xf32>
    %124 = vector.multi_reduction <add>, %123, %cst_59 [1] : vector<8x8xf32> to vector<8xf32>
    %125 = vector.shape_cast %124 : vector<8xf32> to vector<8x1xf32>
    %126 = tpu.reciprocal %125 {approx = true} : vector<8x1xf32> -> vector<8x1xf32>
    %127 = vector.broadcast %126 : vector<8x1xf32> to vector<8x8xf32>
    %128 = arith.mulf %123, %127 : vector<8x8xf32>
    %129 = vector.extract_strided_slice %44 {offsets = [0, 24], sizes = [8, 8], strides = [1, 1]} : vector<8x32xf32> to vector<8x8xf32>
    %cst_60 = arith.constant dense<0.000000e+00> : vector<8x8xf32>
    %130 = tpu.matmul %128, %129, %cst_60 {dimension_numbers = #tpu.dot_dimension_numbers<[1], [0], [0], [1], [0, 0, 1, 1], [], []>} : vector<8x8xf32>, vector<8x8xf32>, vector<8x8xf32> -> vector<8x8xf32>
    %131 = vector.extract_strided_slice %32 {offsets = [24, 0], sizes = [8, 32], strides = [1, 1]} : vector<32x32xf32> to vector<8x32xf32>
    %cst_61 = arith.constant dense<0.000000e+00> : vector<8x32xf32>
    %132 = tpu.matmul %130, %131, %cst_61 {dimension_numbers = #tpu.dot_dimension_numbers<[1], [0], [0], [1], [0, 0, 1, 1], [], []>} : vector<8x8xf32>, vector<8x32xf32>, vector<8x32xf32> -> vector<8x32xf32>
    %133 = arith.addf %111, %132 : vector<8x32xf32>
    %134 = vector.broadcast %33 : vector<1x32xf32> to vector<8x32xf32>
    %135 = arith.addf %133, %134 : vector<8x32xf32>
    %136 = arith.addf %1, %135 : vector<8x32xf32>
    %c0_62 = arith.constant 0 : index
    %c0_63 = arith.constant 0 : index
    %c0_64 = arith.constant 0 : index
    %137 = vector.load %arg13[%c0_62, %c0_63, %c0_64] : memref<1x8x32xf32, #tpu.memory_space<vmem>>, vector<1x8x32xf32>
    %138 = vector.shape_cast %137 : vector<1x8x32xf32> to vector<8x32xf32>
    %139 = vector.shape_cast %136 : vector<8x32xf32> to vector<1x8x32xf32>
    tpu.vector_store %arg13[%c0_62, %c0_63, %c0_64], %139 {strides = array<i32>} : memref<1x8x32xf32, #tpu.memory_space<vmem>>, vector<1x8x32xf32>,
    return
  }
  func.func @transform_0(%arg0: i32) -> (i32, i32, i32) {
    %c0_i32 = arith.constant 0 : i32
    %c0_i32_0 = arith.constant 0 : i32
    %c0_i32_1 = arith.constant 0 : i32
    return %arg0, %c0_i32, %c0_i32_0 : i32, i32, i32
  }
  func.func @transform_1(%arg0: i32) -> (i32, i32, i32) {
    %c0_i32 = arith.constant 0 : i32
    %c0_i32_0 = arith.constant 0 : i32
    %c0_i32_1 = arith.constant 0 : i32
    return %arg0, %c0_i32, %c0_i32_0 : i32, i32, i32
  }
  func.func @transform_2(%arg0: i32) -> (i32, i32) {
    %c0_i32 = arith.constant 0 : i32
    %c0_i32_0 = arith.constant 0 : i32
    %c0_i32_1 = arith.constant 0 : i32
    return %c0_i32, %c0_i32_0 : i32, i32
  }
  func.func @transform_3(%arg0: i32) -> (i32, i32) {
    %c0_i32 = arith.constant 0 : i32
    %c0_i32_0 = arith.constant 0 : i32
    %c0_i32_1 = arith.constant 0 : i32
    return %c0_i32, %c0_i32_0 : i32, i32
  }
  func.func @transform_4(%arg0: i32) -> (i32, i32) {
    %c0_i32 = arith.constant 0 : i32
    %c0_i32_0 = arith.constant 0 : i32
    %c0_i32_1 = arith.constant 0 : i32
    return %c0_i32, %c0_i32_0 : i32, i32
  }
  func.func @transform_5(%arg0: i32) -> (i32, i32) {
    %c0_i32 = arith.constant 0 : i32
    %c0_i32_0 = arith.constant 0 : i32
    %c0_i32_1 = arith.constant 0 : i32
    return %c0_i32, %c0_i32_0 : i32, i32
  }
  func.func @transform_6(%arg0: i32) -> (i32, i32) {
    %c0_i32 = arith.constant 0 : i32
    %c0_i32_0 = arith.constant 0 : i32
    %c0_i32_1 = arith.constant 0 : i32
    return %c0_i32, %c0_i32_0 : i32, i32
  }
  func.func @transform_7(%arg0: i32) -> (i32, i32) {
    %c0_i32 = arith.constant 0 : i32
    %c0_i32_0 = arith.constant 0 : i32
    %c0_i32_1 = arith.constant 0 : i32
    return %c0_i32, %c0_i32_0 : i32, i32
  }
  func.func @transform_8(%arg0: i32) -> (i32, i32) {
    %c0_i32 = arith.constant 0 : i32
    %c0_i32_0 = arith.constant 0 : i32
    %c0_i32_1 = arith.constant 0 : i32
    return %c0_i32, %c0_i32_0 : i32, i32
  }
  func.func @transform_9(%arg0: i32) -> (i32, i32) {
    %c0_i32 = arith.constant 0 : i32
    %c0_i32_0 = arith.constant 0 : i32
    %c0_i32_1 = arith.constant 0 : i32
    return %c0_i32, %c0_i32_0 : i32, i32
  }
  func.func @transform_10(%arg0: i32) -> (i32, i32) {
    %c0_i32 = arith.constant 0 : i32
    %c0_i32_0 = arith.constant 0 : i32
    %c0_i32_1 = arith.constant 0 : i32
    return %c0_i32, %c0_i32_0 : i32, i32
  }
  func.func @transform_11(%arg0: i32) -> (i32, i32) {
    %c0_i32 = arith.constant 0 : i32
    %c0_i32_0 = arith.constant 0 : i32
    %c0_i32_1 = arith.constant 0 : i32
    return %c0_i32, %c0_i32_0 : i32, i32
  }
  func.func @transform_12(%arg0: i32) -> (i32, i32, i32) {
    %c0_i32 = arith.constant 0 : i32
    %c0_i32_0 = arith.constant 0 : i32
    %c0_i32_1 = arith.constant 0 : i32
    return %arg0, %c0_i32, %c0_i32_0 : i32, i32, i32
  }
}

module attributes {stable_mosaic.version = 11 : i64} {
  func.func @_self_attn_sublayer_kernel(%arg0: i32, %arg1: memref<1x8x32xf32, #tpu.memory_space<vmem>>, %arg2: memref<1x8x8xf32, #tpu.memory_space<vmem>>, %arg3: memref<1x32xf32, #tpu.memory_space<vmem>>, %arg4: memref<1x32xf32, #tpu.memory_space<vmem>>, %arg5: memref<32x32xf32, #tpu.memory_space<vmem>>, %arg6: memref<1x32xf32, #tpu.memory_space<vmem>>, %arg7: memref<32x32xf32, #tpu.memory_space<vmem>>, %arg8: memref<1x32xf32, #tpu.memory_space<vmem>>, %arg9: memref<32x32xf32, #tpu.memory_space<vmem>>, %arg10: memref<1x32xf32, #tpu.memory_space<vmem>>, %arg11: memref<32x32xf32, #tpu.memory_space<vmem>>, %arg12: memref<1x32xf32, #tpu.memory_space<vmem>>, %arg13: memref<1x8x32xf32, #tpu.memory_space<vmem>>) attributes {dimension_semantics = [#tpu.dimension_semantics<parallel>], iteration_bounds = array<i64: 2>, scalar_prefetch = 0 : i64, scratch_operands = 0 : i64, tpu.core_type = #tpu.core_type<tc>, window_params = [{transform_indices = @transform_0, window_bounds = array<i64: 1, 8, 32>}, {transform_indices = @transform_1, window_bounds = array<i64: 1, 8, 8>}, {pipeline_mode = #tpu.pipeline_mode<synchronous>, transform_indices = @transform_2, window_bounds = array<i64: 1, 32>}, {pipeline_mode = #tpu.pipeline_mode<synchronous>, transform_indices = @transform_3, window_bounds = array<i64: 1, 32>}, {pipeline_mode = #tpu.pipeline_mode<synchronous>, transform_indices = @transform_4, window_bounds = array<i64: 32, 32>}, {pipeline_mode = #tpu.pipeline_mode<synchronous>, transform_indices = @transform_5, window_bounds = array<i64: 1, 32>}, {pipeline_mode = #tpu.pipeline_mode<synchronous>, transform_indices = @transform_6, window_bounds = array<i64: 32, 32>}, {pipeline_mode = #tpu.pipeline_mode<synchronous>, transform_indices = @transform_7, window_bounds = array<i64: 1, 32>}, {pipeline_mode = #tpu.pipeline_mode<synchronous>, transform_indices = @transform_8, window_bounds = array<i64: 32, 32>}, {pipeline_mode = #tpu.pipeline_mode<synchronous>, transform_indices = @transform_9, window_bounds = array<i64: 1, 32>}, {pipeline_mode = #tpu.pipeline_mode<synchronous>, transform_indices = @transform_10, window_bounds = array<i64: 32, 32>}, {pipeline_mode = #tpu.pipeline_mode<synchronous>, transform_indices = @transform_11, window_bounds = array<i64: 1, 32>}, {transform_indices = @transform_12, window_bounds = array<i64: 1, 8, 32>}]} {
    %c0 = arith.constant 0 : index
    %c0_0 = arith.constant 0 : index
    %c0_1 = arith.constant 0 : index
    %0 = vector.load %arg1[%c0, %c0_0, %c0_1] : memref<1x8x32xf32, #tpu.memory_space<vmem>>, vector<1x8x32xf32>
    %1 = vector.shape_cast %0 : vector<1x8x32xf32> to vector<8x32xf32>
    %c0_2 = arith.constant 0 : index
    %c0_3 = arith.constant 0 : index
    %2 = vector.load %arg3[%c0_2, %c0_3] : memref<1x32xf32, #tpu.memory_space<vmem>>, vector<1x32xf32>
    %c0_4 = arith.constant 0 : index
    %c0_5 = arith.constant 0 : index
    %3 = vector.load %arg4[%c0_4, %c0_5] : memref<1x32xf32, #tpu.memory_space<vmem>>, vector<1x32xf32>
    %cst = arith.constant dense<0.000000e+00> : vector<8xf32>
    %4 = vector.multi_reduction <add>, %1, %cst [1] : vector<8x32xf32> to vector<8xf32>
    %5 = vector.shape_cast %4 : vector<8xf32> to vector<8x1xf32>
    %cst_6 = arith.constant 3.200000e+01 : f32
    %6 = vector.broadcast %cst_6 : f32 to vector<8x1xf32>
    %7 = arith.divf %5, %6 : vector<8x1xf32>
    %8 = vector.broadcast %7 : vector<8x1xf32> to vector<8x32xf32>
    %9 = arith.subf %1, %8 : vector<8x32xf32>
    %10 = arith.mulf %9, %9 : vector<8x32xf32>
    %cst_7 = arith.constant dense<0.000000e+00> : vector<8xf32>
    %11 = vector.multi_reduction <add>, %10, %cst_7 [1] : vector<8x32xf32> to vector<8xf32>
    %12 = vector.shape_cast %11 : vector<8xf32> to vector<8x1xf32>
    %cst_8 = arith.constant 3.100000e+01 : f32
    %13 = vector.broadcast %cst_8 : f32 to vector<8x1xf32>
    %14 = arith.divf %12, %13 : vector<8x1xf32>
    %15 = vector.broadcast %2 : vector<1x32xf32> to vector<8x32xf32>
    %16 = arith.mulf %15, %9 : vector<8x32xf32>
    %17 = math.sqrt %14 : vector<8x1xf32>
    %cst_9 = arith.constant 9.99999997E-7 : f32
    %18 = vector.broadcast %cst_9 : f32 to vector<8x1xf32>
    %19 = arith.addf %17, %18 : vector<8x1xf32>
    %20 = vector.broadcast %19 : vector<8x1xf32> to vector<8x32xf32>
    %21 = arith.divf %16, %20 : vector<8x32xf32>
    %22 = vector.broadcast %3 : vector<1x32xf32> to vector<8x32xf32>
    %23 = arith.addf %21, %22 : vector<8x32xf32>
    %c0_10 = arith.constant 0 : index
    %c0_11 = arith.constant 0 : index
    %c0_12 = arith.constant 0 : index
    %24 = vector.load %arg2[%c0_10, %c0_11, %c0_12] : memref<1x8x8xf32, #tpu.memory_space<vmem>>, vector<1x8x8xf32>
    %25 = vector.shape_cast %24 : vector<1x8x8xf32> to vector<8x8xf32>
    %c0_13 = arith.constant 0 : index
    %c0_14 = arith.constant 0 : index
    %26 = vector.load %arg5[%c0_13, %c0_14] : memref<32x32xf32, #tpu.memory_space<vmem>>, vector<32x32xf32>
    %c0_15 = arith.constant 0 : index
    %c0_16 = arith.constant 0 : index
    %27 = vector.load %arg6[%c0_15, %c0_16] : memref<1x32xf32, #tpu.memory_space<vmem>>, vector<1x32xf32>
    %c0_17 = arith.constant 0 : index
    %c0_18 = arith.constant 0 : index
    %28 = vector.load %arg7[%c0_17, %c0_18] : memref<32x32xf32, #tpu.memory_space<vmem>>, vector<32x32xf32>
    %c0_19 = arith.constant 0 : index
    %c0_20 = arith.constant 0 : index
    %29 = vector.load %arg8[%c0_19, %c0_20] : memref<1x32xf32, #tpu.memory_space<vmem>>, vector<1x32xf32>
    %c0_21 = arith.constant 0 : index
    %c0_22 = arith.constant 0 : index
    %30 = vector.load %arg9[%c0_21, %c0_22] : memref<32x32xf32, #tpu.memory_space<vmem>>, vector<32x32xf32>
    %c0_23 = arith.constant 0 : index
    %c0_24 = arith.constant 0 : index
    %31 = vector.load %arg10[%c0_23, %c0_24] : memref<1x32xf32, #tpu.memory_space<vmem>>, vector<1x32xf32>
    %c0_25 = arith.constant 0 : index
    %c0_26 = arith.constant 0 : index
    %32 = vector.load %arg11[%c0_25, %c0_26] : memref<32x32xf32, #tpu.memory_space<vmem>>, vector<32x32xf32>
    %c0_27 = arith.constant 0 : index
    %c0_28 = arith.constant 0 : index
    %33 = vector.load %arg12[%c0_27, %c0_28] : memref<1x32xf32, #tpu.memory_space<vmem>>, vector<1x32xf32>
    %cst_29 = arith.constant dense<0.000000e+00> : vector<8x32xf32>
    %34 = tpu.matmul %23, %26, %cst_29 {dimension_numbers = #tpu.dot_dimension_numbers<[1], [0], [0], [1], [0, 0, 1, 1], [], []>} : vector<8x32xf32>, vector<32x32xf32>, vector<8x32xf32> -> vector<8x32xf32>
    %35 = vector.broadcast %27 : vector<1x32xf32> to vector<8x32xf32>
    %36 = arith.addf %34, %35 : vector<8x32xf32>
    %cst_30 = arith.constant 0.353553385 : f32
    %37 = vector.broadcast %cst_30 : f32 to vector<8x32xf32>
    %38 = arith.mulf %36, %37 : vector<8x32xf32>
    %cst_31 = arith.constant dense<0.000000e+00> : vector<8x32xf32>
    %39 = tpu.matmul %23, %28, %cst_31 {dimension_numbers = #tpu.dot_dimension_numbers<[1], [0], [0], [1], [0, 0, 1, 1], [], []>} : vector<8x32xf32>, vector<32x32xf32>, vector<8x32xf32> -> vector<8x32xf32>
    %40 = vector.broadcast %29 : vector<1x32xf32> to vector<8x32xf32>
    %41 = arith.addf %39, %40 : vector<8x32xf32>
    %cst_32 = arith.constant dense<0.000000e+00> : vector<8x32xf32>
    %42 = tpu.matmul %23, %30, %cst_32 {dimension_numbers = #tpu.dot_dimension_numbers<[1], [0], [0], [1], [0, 0, 1, 1], [], []>} : vector<8x32xf32>, vector<32x32xf32>, vector<8x32xf32> -> vector<8x32xf32>
    %43 = vector.broadcast %31 : vector<1x32xf32> to vector<8x32xf32>
    %44 = arith.addf %42, %43 : vector<8x32xf32>
    %cst_33 = arith.constant 0.000000e+00 : f32
    %45 = vector.broadcast %cst_33 : f32 to vector<8x32xf32>
    %46 = vector.extract_strided_slice %38 {offsets = [0, 0], sizes = [8, 8], strides = [1, 1]} : vector<8x32xf32> to vector<8x8xf32>
    %47 = vector.extract_strided_slice %41 {offsets = [0, 0], sizes = [8, 8], strides = [1, 1]} : vector<8x32xf32> to vector<8x8xf32>
    %cst_34 = arith.constant dense<0.000000e+00> : vector<8x8xf32>
    %48 = tpu.matmul %46, %47, %cst_34 {dimension_numbers = #tpu.dot_dimension_numbers<[1], [1], [0], [0], [0, 0, 1, 0], [], []>} : vector<8x8xf32>, vector<8x8xf32>, vector<8x8xf32> -> vector<8x8xf32>
    %cst_35 = arith.constant 0.000000e+00 : f32
    %49 = vector.broadcast %cst_35 : f32 to vector<8x8xf32>
    %50 = arith.cmpf one, %25, %49 : vector<8x8xf32>
    %cst_36 = arith.constant -1.000000e+09 : f32
    %51 = vector.broadcast %cst_36 : f32 to vector<8x8xf32>
    %52 = arith.select %50, %48, %51 : vector<8x8xi1>, vector<8x8xf32>
    %cst_37 = arith.constant dense<0xFF800000> : vector<8xf32>
    %53 = vector.multi_reduction <maximumf>, %52, %cst_37 [1] : vector<8x8xf32> to vector<8xf32>
    %54 = vector.shape_cast %53 : vector<8xf32> to vector<8x1xf32>
    %55 = vector.broadcast %54 : vector<8x1xf32> to vector<8x8xf32>
    %56 = arith.subf %52, %55 : vector<8x8xf32>
    %57 = math.exp %56 : vector<8x8xf32>
    %cst_38 = arith.constant dense<0.000000e+00> : vector<8xf32>
    %58 = vector.multi_reduction <add>, %57, %cst_38 [1] : vector<8x8xf32> to vector<8xf32>
    %59 = vector.shape_cast %58 : vector<8xf32> to vector<8x1xf32>
    %60 = tpu.reciprocal %59 {approx = true} : vector<8x1xf32> -> vector<8x1xf32>
    %61 = vector.broadcast %60 : vector<8x1xf32> to vector<8x8xf32>
    %62 = arith.mulf %57, %61 : vector<8x8xf32>
    %63 = vector.extract_strided_slice %44 {offsets = [0, 0], sizes = [8, 8], strides = [1, 1]} : vector<8x32xf32> to vector<8x8xf32>
    %cst_39 = arith.constant dense<0.000000e+00> : vector<8x8xf32>
    %64 = tpu.matmul %62, %63, %cst_39 {dimension_numbers = #tpu.dot_dimension_numbers<[1], [0], [0], [1], [0, 0, 1, 1], [], []>} : vector<8x8xf32>, vector<8x8xf32>, vector<8x8xf32> -> vector<8x8xf32>
    %65 = vector.extract_strided_slice %32 {offsets = [0, 0], sizes = [8, 32], strides = [1, 1]} : vector<32x32xf32> to vector<8x32xf32>
    %cst_40 = arith.constant dense<0.000000e+00> : vector<8x32xf32>
    %66 = tpu.matmul %64, %65, %cst_40 {dimension_numbers = #tpu.dot_dimension_numbers<[1], [0], [0], [1], [0, 0, 1, 1], [], []>} : vector<8x8xf32>, vector<8x32xf32>, vector<8x32xf32> -> vector<8x32xf32>
    %67 = arith.addf %45, %66 : vector<8x32xf32>
    %68 = vector.extract_strided_slice %38 {offsets = [0, 8], sizes = [8, 8], strides = [1, 1]} : vector<8x32xf32> to vector<8x8xf32>
    %69 = vector.extract_strided_slice %41 {offsets = [0, 8], sizes = [8, 8], strides = [1, 1]} : vector<8x32xf32> to vector<8x8xf32>
    %cst_41 = arith.constant dense<0.000000e+00> : vector<8x8xf32>
    %70 = tpu.matmul %68, %69, %cst_41 {dimension_numbers = #tpu.dot_dimension_numbers<[1], [1], [0], [0], [0, 0, 1, 0], [], []>} : vector<8x8xf32>, vector<8x8xf32>, vector<8x8xf32> -> vector<8x8xf32>
    %cst_42 = arith.constant 0.000000e+00 : f32
    %71 = vector.broadcast %cst_42 : f32 to vector<8x8xf32>
    %72 = arith.cmpf one, %25, %71 : vector<8x8xf32>
    %cst_43 = arith.constant -1.000000e+09 : f32
    %73 = vector.broadcast %cst_43 : f32 to vector<8x8xf32>
    %74 = arith.select %72, %70, %73 : vector<8x8xi1>, vector<8x8xf32>
    %cst_44 = arith.constant dense<0xFF800000> : vector<8xf32>
    %75 = vector.multi_reduction <maximumf>, %74, %cst_44 [1] : vector<8x8xf32> to vector<8xf32>
    %76 = vector.shape_cast %75 : vector<8xf32> to vector<8x1xf32>
    %77 = vector.broadcast %76 : vector<8x1xf32> to vector<8x8xf32>
    %78 = arith.subf %74, %77 : vector<8x8xf32>
    %79 = math.exp %78 : vector<8x8xf32>
    %cst_45 = arith.constant dense<0.000000e+00> : vector<8xf32>
    %80 = vector.multi_reduction <add>, %79, %cst_45 [1] : vector<8x8xf32> to vector<8xf32>
    %81 = vector.shape_cast %80 : vector<8xf32> to vector<8x1xf32>
    %82 = tpu.reciprocal %81 {approx = true} : vector<8x1xf32> -> vector<8x1xf32>
    %83 = vector.broadcast %82 : vector<8x1xf32> to vector<8x8xf32>
    %84 = arith.mulf %79, %83 : vector<8x8xf32>
    %85 = vector.extract_strided_slice %44 {offsets = [0, 8], sizes = [8, 8], strides = [1, 1]} : vector<8x32xf32> to vector<8x8xf32>
    %cst_46 = arith.constant dense<0.000000e+00> : vector<8x8xf32>
    %86 = tpu.matmul %84, %85, %cst_46 {dimension_numbers = #tpu.dot_dimension_numbers<[1], [0], [0], [1], [0, 0, 1, 1], [], []>} : vector<8x8xf32>, vector<8x8xf32>, vector<8x8xf32> -> vector<8x8xf32>
    %87 = vector.extract_strided_slice %32 {offsets = [8, 0], sizes = [8, 32], strides = [1, 1]} : vector<32x32xf32> to vector<8x32xf32>
    %cst_47 = arith.constant dense<0.000000e+00> : vector<8x32xf32>
    %88 = tpu.matmul %86, %87, %cst_47 {dimension_numbers = #tpu.dot_dimension_numbers<[1], [0], [0], [1], [0, 0, 1, 1], [], []>} : vector<8x8xf32>, vector<8x32xf32>, vector<8x32xf32> -> vector<8x32xf32>
    %89 = arith.addf %67, %88 : vector<8x32xf32>
    %90 = vector.extract_strided_slice %38 {offsets = [0, 16], sizes = [8, 8], strides = [1, 1]} : vector<8x32xf32> to vector<8x8xf32>
    %91 = vector.extract_strided_slice %41 {offsets = [0, 16], sizes = [8, 8], strides = [1, 1]} : vector<8x32xf32> to vector<8x8xf32>
    %cst_48 = arith.constant dense<0.000000e+00> : vector<8x8xf32>
    %92 = tpu.matmul %90, %91, %cst_48 {dimension_numbers = #tpu.dot_dimension_numbers<[1], [1], [0], [0], [0, 0, 1, 0], [], []>} : vector<8x8xf32>, vector<8x8xf32>, vector<8x8xf32> -> vector<8x8xf32>
    %cst_49 = arith.constant 0.000000e+00 : f32
    %93 = vector.broadcast %cst_49 : f32 to vector<8x8xf32>
    %94 = arith.cmpf one, %25, %93 : vector<8x8xf32>
    %cst_50 = arith.constant -1.000000e+09 : f32
    %95 = vector.broadcast %cst_50 : f32 to vector<8x8xf32>
    %96 = arith.select %94, %92, %95 : vector<8x8xi1>, vector<8x8xf32>
    %cst_51 = arith.constant dense<0xFF800000> : vector<8xf32>
    %97 = vector.multi_reduction <maximumf>, %96, %cst_51 [1] : vector<8x8xf32> to vector<8xf32>
    %98 = vector.shape_cast %97 : vector<8xf32> to vector<8x1xf32>
    %99 = vector.broadcast %98 : vector<8x1xf32> to vector<8x8xf32>
    %100 = arith.subf %96, %99 : vector<8x8xf32>
    %101 = math.exp %100 : vector<8x8xf32>
    %cst_52 = arith.constant dense<0.000000e+00> : vector<8xf32>
    %102 = vector.multi_reduction <add>, %101, %cst_52 [1] : vector<8x8xf32> to vector<8xf32>
    %103 = vector.shape_cast %102 : vector<8xf32> to vector<8x1xf32>
    %104 = tpu.reciprocal %103 {approx = true} : vector<8x1xf32> -> vector<8x1xf32>
    %105 = vector.broadcast %104 : vector<8x1xf32> to vector<8x8xf32>
    %106 = arith.mulf %101, %105 : vector<8x8xf32>
    %107 = vector.extract_strided_slice %44 {offsets = [0, 16], sizes = [8, 8], strides = [1, 1]} : vector<8x32xf32> to vector<8x8xf32>
    %cst_53 = arith.constant dense<0.000000e+00> : vector<8x8xf32>
    %108 = tpu.matmul %106, %107, %cst_53 {dimension_numbers = #tpu.dot_dimension_numbers<[1], [0], [0], [1], [0, 0, 1, 1], [], []>} : vector<8x8xf32>, vector<8x8xf32>, vector<8x8xf32> -> vector<8x8xf32>
    %109 = vector.extract_strided_slice %32 {offsets = [16, 0], sizes = [8, 32], strides = [1, 1]} : vector<32x32xf32> to vector<8x32xf32>
    %cst_54 = arith.constant dense<0.000000e+00> : vector<8x32xf32>
    %110 = tpu.matmul %108, %109, %cst_54 {dimension_numbers = #tpu.dot_dimension_numbers<[1], [0], [0], [1], [0, 0, 1, 1], [], []>} : vector<8x8xf32>, vector<8x32xf32>, vector<8x32xf32> -> vector<8x32xf32>
    %111 = arith.addf %89, %110 : vector<8x32xf32>
    %112 = vector.extract_strided_slice %38 {offsets = [0, 24], sizes = [8, 8], strides = [1, 1]} : vector<8x32xf32> to vector<8x8xf32>
    %113 = vector.extract_strided_slice %41 {offsets = [0, 24], sizes = [8, 8], strides = [1, 1]} : vector<8x32xf32> to vector<8x8xf32>
    %cst_55 = arith.constant dense<0.000000e+00> : vector<8x8xf32>
    %114 = tpu.matmul %112, %113, %cst_55 {dimension_numbers = #tpu.dot_dimension_numbers<[1], [1], [0], [0], [0, 0, 1, 0], [], []>} : vector<8x8xf32>, vector<8x8xf32>, vector<8x8xf32> -> vector<8x8xf32>
    %cst_56 = arith.constant 0.000000e+00 : f32
    %115 = vector.broadcast %cst_56 : f32 to vector<8x8xf32>
    %116 = arith.cmpf one, %25, %115 : vector<8x8xf32>
    %cst_57 = arith.constant -1.000000e+09 : f32
    %117 = vector.broadcast %cst_57 : f32 to vector<8x8xf32>
    %118 = arith.select %116, %114, %117 : vector<8x8xi1>, vector<8x8xf32>
    %cst_58 = arith.constant dense<0xFF800000> : vector<8xf32>
    %119 = vector.multi_reduction <maximumf>, %118, %cst_58 [1] : vector<8x8xf32> to vector<8xf32>
    %120 = vector.shape_cast %119 : vector<8xf32> to vector<8x1xf32>
    %121 = vector.broadcast %120 : vector<8x1xf32> to vector<8x8xf32>
    %122 = arith.subf %118, %121 : vector<8x8xf32>
    %123 = math.exp %122 : vector<8x8xf32>
    %cst_59 = arith.constant dense<0.000000e+00> : vector<8xf32>
    %124 = vector.multi_reduction <add>, %123, %cst_59 [1] : vector<8x8xf32> to vector<8xf32>
    %125 = vector.shape_cast %124 : vector<8xf32> to vector<8x1xf32>
    %126 = tpu.reciprocal %125 {approx = true} : vector<8x1xf32> -> vector<8x1xf32>
    %127 = vector.broadcast %126 : vector<8x1xf32> to vector<8x8xf32>
    %128 = arith.mulf %123, %127 : vector<8x8xf32>
    %129 = vector.extract_strided_slice %44 {offsets = [0, 24], sizes = [8, 8], strides = [1, 1]} : vector<8x32xf32> to vector<8x8xf32>
    %cst_60 = arith.constant dense<0.000000e+00> : vector<8x8xf32>
    %130 = tpu.matmul %128, %129, %cst_60 {dimension_numbers = #tpu.dot_dimension_numbers<[1], [0], [0], [1], [0, 0, 1, 1], [], []>} : vector<8x8xf32>, vector<8x8xf32>, vector<8x8xf32> -> vector<8x8xf32>
    %131 = vector.extract_strided_slice %32 {offsets = [24, 0], sizes = [8, 32], strides = [1, 1]} : vector<32x32xf32> to vector<8x32xf32>
    %cst_61 = arith.constant dense<0.000000e+00> : vector<8x32xf32>
    %132 = tpu.matmul %130, %131, %cst_61 {dimension_numbers = #tpu.dot_dimension_numbers<[1], [0], [0], [1], [0, 0, 1, 1], [], []>} : vector<8x8xf32>, vector<8x32xf32>, vector<8x32xf32> -> vector<8x32xf32>
    %133 = arith.addf %111, %132 : vector<8x32xf32>
    %134 = vector.broadcast %33 : vector<1x32xf32> to vector<8x32xf32>
    %135 = arith.addf %133, %134 : vector<8x32xf32>
    %136 = arith.addf %1, %135 : vector<8x32xf32>
    %c0_62 = arith.constant 0 : index
    %c0_63 = arith.constant 0 : index
    %c0_64 = arith.constant 0 : index
    %137 = vector.load %arg13[%c0_62, %c0_63, %c0_64] : memref<1x8x32xf32, #tpu.memory_space<vmem>>, vector<1x8x32xf32>
    %138 = vector.shape_cast %137 : vector<1x8x32xf32> to vector<8x32xf32>
    %139 = vector.shape_cast %136 : vector<8x32xf32> to vector<1x8x32xf32>
    tpu.vector_store %arg13[%c0_62, %c0_63, %c0_64], %139 {strides = array<i32>} : memref<1x8x32xf32, #tpu.memory_space<vmem>>, vector<1x8x32xf32>,
    return
  }
  func.func @transform_0(%arg0: i32) -> (i32, i32, i32) {
    %c0_i32 = arith.constant 0 : i32
    %c0_i32_0 = arith.constant 0 : i32
    %c0_i32_1 = arith.constant 0 : i32
    return %arg0, %c0_i32, %c0_i32_0 : i32, i32, i32
  }
  func.func @transform_1(%arg0: i32) -> (i32, i32, i32) {
    %c0_i32 = arith.constant 0 : i32
    %c0_i32_0 = arith.constant 0 : i32
    %c0_i32_1 = arith.constant 0 : i32
    return %arg0, %c0_i32, %c0_i32_0 : i32, i32, i32
  }
  func.func @transform_2(%arg0: i32) -> (i32, i32) {
    %c0_i32 = arith.constant 0 : i32
    %c0_i32_0 = arith.constant 0 : i32
    %c0_i32_1 = arith.constant 0 : i32
    return %c0_i32, %c0_i32_0 : i32, i32
  }
  func.func @transform_3(%arg0: i32) -> (i32, i32) {
    %c0_i32 = arith.constant 0 : i32
    %c0_i32_0 = arith.constant 0 : i32
    %c0_i32_1 = arith.constant 0 : i32
    return %c0_i32, %c0_i32_0 : i32, i32
  }
  func.func @transform_4(%arg0: i32) -> (i32, i32) {
    %c0_i32 = arith.constant 0 : i32
    %c0_i32_0 = arith.constant 0 : i32
    %c0_i32_1 = arith.constant 0 : i32
    return %c0_i32, %c0_i32_0 : i32, i32
  }
  func.func @transform_5(%arg0: i32) -> (i32, i32) {
    %c0_i32 = arith.constant 0 : i32
    %c0_i32_0 = arith.constant 0 : i32
    %c0_i32_1 = arith.constant 0 : i32
    return %c0_i32, %c0_i32_0 : i32, i32
  }
  func.func @transform_6(%arg0: i32) -> (i32, i32) {
    %c0_i32 = arith.constant 0 : i32
    %c0_i32_0 = arith.constant 0 : i32
    %c0_i32_1 = arith.constant 0 : i32
    return %c0_i32, %c0_i32_0 : i32, i32
  }
  func.func @transform_7(%arg0: i32) -> (i32, i32) {
    %c0_i32 = arith.constant 0 : i32
    %c0_i32_0 = arith.constant 0 : i32
    %c0_i32_1 = arith.constant 0 : i32
    return %c0_i32, %c0_i32_0 : i32, i32
  }
  func.func @transform_8(%arg0: i32) -> (i32, i32) {
    %c0_i32 = arith.constant 0 : i32
    %c0_i32_0 = arith.constant 0 : i32
    %c0_i32_1 = arith.constant 0 : i32
    return %c0_i32, %c0_i32_0 : i32, i32
  }
  func.func @transform_9(%arg0: i32) -> (i32, i32) {
    %c0_i32 = arith.constant 0 : i32
    %c0_i32_0 = arith.constant 0 : i32
    %c0_i32_1 = arith.constant 0 : i32
    return %c0_i32, %c0_i32_0 : i32, i32
  }
  func.func @transform_10(%arg0: i32) -> (i32, i32) {
    %c0_i32 = arith.constant 0 : i32
    %c0_i32_0 = arith.constant 0 : i32
    %c0_i32_1 = arith.constant 0 : i32
    return %c0_i32, %c0_i32_0 : i32, i32
  }
  func.func @transform_11(%arg0: i32) -> (i32, i32) {
    %c0_i32 = arith.constant 0 : i32
    %c0_i32_0 = arith.constant 0 : i32
    %c0_i32_1 = arith.constant 0 : i32
    return %c0_i32, %c0_i32_0 : i32, i32
  }
  func.func @transform_12(%arg0: i32) -> (i32, i32, i32) {
    %c0_i32 = arith.constant 0 : i32
    %c0_i32_0 = arith.constant 0 : i32
    %c0_i32_1 = arith.constant 0 : i32
    return %arg0, %c0_i32, %c0_i32_0 : i32, i32, i32
  }
}

module attributes {stable_mosaic.version = 11 : i64} {
  func.func @_cross_attn_sublayer_kernel(%arg0: i32, %arg1: memref<1x8x32xf32, #tpu.memory_space<vmem>>, %arg2: memref<1x8x32xf32, #tpu.memory_space<vmem>>, %arg3: memref<1x1x8xf32, #tpu.memory_space<vmem>>, %arg4: memref<1x32xf32, #tpu.memory_space<vmem>>, %arg5: memref<1x32xf32, #tpu.memory_space<vmem>>, %arg6: memref<32x32xf32, #tpu.memory_space<vmem>>, %arg7: memref<1x32xf32, #tpu.memory_space<vmem>>, %arg8: memref<32x32xf32, #tpu.memory_space<vmem>>, %arg9: memref<1x32xf32, #tpu.memory_space<vmem>>, %arg10: memref<32x32xf32, #tpu.memory_space<vmem>>, %arg11: memref<1x32xf32, #tpu.memory_space<vmem>>, %arg12: memref<32x32xf32, #tpu.memory_space<vmem>>, %arg13: memref<1x32xf32, #tpu.memory_space<vmem>>, %arg14: memref<1x8x32xf32, #tpu.memory_space<vmem>>) attributes {dimension_semantics = [#tpu.dimension_semantics<parallel>], iteration_bounds = array<i64: 2>, scalar_prefetch = 0 : i64, scratch_operands = 0 : i64, tpu.core_type = #tpu.core_type<tc>, window_params = [{transform_indices = @transform_0, window_bounds = array<i64: 1, 8, 32>}, {transform_indices = @transform_1, window_bounds = array<i64: 1, 8, 32>}, {transform_indices = @transform_2, window_bounds = array<i64: 1, 1, 8>}, {pipeline_mode = #tpu.pipeline_mode<synchronous>, transform_indices = @transform_3, window_bounds = array<i64: 1, 32>}, {pipeline_mode = #tpu.pipeline_mode<synchronous>, transform_indices = @transform_4, window_bounds = array<i64: 1, 32>}, {pipeline_mode = #tpu.pipeline_mode<synchronous>, transform_indices = @transform_5, window_bounds = array<i64: 32, 32>}, {pipeline_mode = #tpu.pipeline_mode<synchronous>, transform_indices = @transform_6, window_bounds = array<i64: 1, 32>}, {pipeline_mode = #tpu.pipeline_mode<synchronous>, transform_indices = @transform_7, window_bounds = array<i64: 32, 32>}, {pipeline_mode = #tpu.pipeline_mode<synchronous>, transform_indices = @transform_8, window_bounds = array<i64: 1, 32>}, {pipeline_mode = #tpu.pipeline_mode<synchronous>, transform_indices = @transform_9, window_bounds = array<i64: 32, 32>}, {pipeline_mode = #tpu.pipeline_mode<synchronous>, transform_indices = @transform_10, window_bounds = array<i64: 1, 32>}, {pipeline_mode = #tpu.pipeline_mode<synchronous>, transform_indices = @transform_11, window_bounds = array<i64: 32, 32>}, {pipeline_mode = #tpu.pipeline_mode<synchronous>, transform_indices = @transform_12, window_bounds = array<i64: 1, 32>}, {transform_indices = @transform_13, window_bounds = array<i64: 1, 8, 32>}]} {
    %c0 = arith.constant 0 : index
    %c0_0 = arith.constant 0 : index
    %c0_1 = arith.constant 0 : index
    %0 = vector.load %arg1[%c0, %c0_0, %c0_1] : memref<1x8x32xf32, #tpu.memory_space<vmem>>, vector<1x8x32xf32>
    %1 = vector.shape_cast %0 : vector<1x8x32xf32> to vector<8x32xf32>
    %c0_2 = arith.constant 0 : index
    %c0_3 = arith.constant 0 : index
    %2 = vector.load %arg4[%c0_2, %c0_3] : memref<1x32xf32, #tpu.memory_space<vmem>>, vector<1x32xf32>
    %c0_4 = arith.constant 0 : index
    %c0_5 = arith.constant 0 : index
    %3 = vector.load %arg5[%c0_4, %c0_5] : memref<1x32xf32, #tpu.memory_space<vmem>>, vector<1x32xf32>
    %cst = arith.constant dense<0.000000e+00> : vector<8xf32>
    %4 = vector.multi_reduction <add>, %1, %cst [1] : vector<8x32xf32> to vector<8xf32>
    %5 = vector.shape_cast %4 : vector<8xf32> to vector<8x1xf32>
    %cst_6 = arith.constant 3.200000e+01 : f32
    %6 = vector.broadcast %cst_6 : f32 to vector<8x1xf32>
    %7 = arith.divf %5, %6 : vector<8x1xf32>
    %8 = vector.broadcast %7 : vector<8x1xf32> to vector<8x32xf32>
    %9 = arith.subf %1, %8 : vector<8x32xf32>
    %10 = arith.mulf %9, %9 : vector<8x32xf32>
    %cst_7 = arith.constant dense<0.000000e+00> : vector<8xf32>
    %11 = vector.multi_reduction <add>, %10, %cst_7 [1] : vector<8x32xf32> to vector<8xf32>
    %12 = vector.shape_cast %11 : vector<8xf32> to vector<8x1xf32>
    %cst_8 = arith.constant 3.100000e+01 : f32
    %13 = vector.broadcast %cst_8 : f32 to vector<8x1xf32>
    %14 = arith.divf %12, %13 : vector<8x1xf32>
    %15 = vector.broadcast %2 : vector<1x32xf32> to vector<8x32xf32>
    %16 = arith.mulf %15, %9 : vector<8x32xf32>
    %17 = math.sqrt %14 : vector<8x1xf32>
    %cst_9 = arith.constant 9.99999997E-7 : f32
    %18 = vector.broadcast %cst_9 : f32 to vector<8x1xf32>
    %19 = arith.addf %17, %18 : vector<8x1xf32>
    %20 = vector.broadcast %19 : vector<8x1xf32> to vector<8x32xf32>
    %21 = arith.divf %16, %20 : vector<8x32xf32>
    %22 = vector.broadcast %3 : vector<1x32xf32> to vector<8x32xf32>
    %23 = arith.addf %21, %22 : vector<8x32xf32>
    %c0_10 = arith.constant 0 : index
    %c0_11 = arith.constant 0 : index
    %c0_12 = arith.constant 0 : index
    %24 = vector.load %arg2[%c0_10, %c0_11, %c0_12] : memref<1x8x32xf32, #tpu.memory_space<vmem>>, vector<1x8x32xf32>
    %25 = vector.shape_cast %24 : vector<1x8x32xf32> to vector<8x32xf32>
    %c0_13 = arith.constant 0 : index
    %c0_14 = arith.constant 0 : index
    %c0_15 = arith.constant 0 : index
    %26 = vector.load %arg3[%c0_13, %c0_14, %c0_15] : memref<1x1x8xf32, #tpu.memory_space<vmem>>, vector<1x1x8xf32>
    %27 = vector.shape_cast %26 : vector<1x1x8xf32> to vector<1x8xf32>
    %c0_16 = arith.constant 0 : index
    %c0_17 = arith.constant 0 : index
    %28 = vector.load %arg6[%c0_16, %c0_17] : memref<32x32xf32, #tpu.memory_space<vmem>>, vector<32x32xf32>
    %c0_18 = arith.constant 0 : index
    %c0_19 = arith.constant 0 : index
    %29 = vector.load %arg7[%c0_18, %c0_19] : memref<1x32xf32, #tpu.memory_space<vmem>>, vector<1x32xf32>
    %c0_20 = arith.constant 0 : index
    %c0_21 = arith.constant 0 : index
    %30 = vector.load %arg8[%c0_20, %c0_21] : memref<32x32xf32, #tpu.memory_space<vmem>>, vector<32x32xf32>
    %c0_22 = arith.constant 0 : index
    %c0_23 = arith.constant 0 : index
    %31 = vector.load %arg9[%c0_22, %c0_23] : memref<1x32xf32, #tpu.memory_space<vmem>>, vector<1x32xf32>
    %c0_24 = arith.constant 0 : index
    %c0_25 = arith.constant 0 : index
    %32 = vector.load %arg10[%c0_24, %c0_25] : memref<32x32xf32, #tpu.memory_space<vmem>>, vector<32x32xf32>
    %c0_26 = arith.constant 0 : index
    %c0_27 = arith.constant 0 : index
    %33 = vector.load %arg11[%c0_26, %c0_27] : memref<1x32xf32, #tpu.memory_space<vmem>>, vector<1x32xf32>
    %c0_28 = arith.constant 0 : index
    %c0_29 = arith.constant 0 : index
    %34 = vector.load %arg12[%c0_28, %c0_29] : memref<32x32xf32, #tpu.memory_space<vmem>>, vector<32x32xf32>
    %c0_30 = arith.constant 0 : index
    %c0_31 = arith.constant 0 : index
    %35 = vector.load %arg13[%c0_30, %c0_31] : memref<1x32xf32, #tpu.memory_space<vmem>>, vector<1x32xf32>
    %cst_32 = arith.constant dense<0.000000e+00> : vector<8x32xf32>
    %36 = tpu.matmul %23, %28, %cst_32 {dimension_numbers = #tpu.dot_dimension_numbers<[1], [0], [0], [1], [0, 0, 1, 1], [], []>} : vector<8x32xf32>, vector<32x32xf32>, vector<8x32xf32> -> vector<8x32xf32>
    %37 = vector.broadcast %29 : vector<1x32xf32> to vector<8x32xf32>
    %38 = arith.addf %36, %37 : vector<8x32xf32>
    %cst_33 = arith.constant 0.353553385 : f32
    %39 = vector.broadcast %cst_33 : f32 to vector<8x32xf32>
    %40 = arith.mulf %38, %39 : vector<8x32xf32>
    %cst_34 = arith.constant dense<0.000000e+00> : vector<8x32xf32>
    %41 = tpu.matmul %25, %30, %cst_34 {dimension_numbers = #tpu.dot_dimension_numbers<[1], [0], [0], [1], [0, 0, 1, 1], [], []>} : vector<8x32xf32>, vector<32x32xf32>, vector<8x32xf32> -> vector<8x32xf32>
    %42 = vector.broadcast %31 : vector<1x32xf32> to vector<8x32xf32>
    %43 = arith.addf %41, %42 : vector<8x32xf32>
    %cst_35 = arith.constant dense<0.000000e+00> : vector<8x32xf32>
    %44 = tpu.matmul %25, %32, %cst_35 {dimension_numbers = #tpu.dot_dimension_numbers<[1], [0], [0], [1], [0, 0, 1, 1], [], []>} : vector<8x32xf32>, vector<32x32xf32>, vector<8x32xf32> -> vector<8x32xf32>
    %45 = vector.broadcast %33 : vector<1x32xf32> to vector<8x32xf32>
    %46 = arith.addf %44, %45 : vector<8x32xf32>
    %cst_36 = arith.constant 0.000000e+00 : f32
    %47 = vector.broadcast %cst_36 : f32 to vector<8x32xf32>
    %48 = vector.extract_strided_slice %40 {offsets = [0, 0], sizes = [8, 8], strides = [1, 1]} : vector<8x32xf32> to vector<8x8xf32>
    %49 = vector.extract_strided_slice %43 {offsets = [0, 0], sizes = [8, 8], strides = [1, 1]} : vector<8x32xf32> to vector<8x8xf32>
    %cst_37 = arith.constant dense<0.000000e+00> : vector<8x8xf32>
    %50 = tpu.matmul %48, %49, %cst_37 {dimension_numbers = #tpu.dot_dimension_numbers<[1], [1], [0], [0], [0, 0, 1, 0], [], []>} : vector<8x8xf32>, vector<8x8xf32>, vector<8x8xf32> -> vector<8x8xf32>
    %cst_38 = arith.constant 0.000000e+00 : f32
    %51 = vector.broadcast %cst_38 : f32 to vector<1x8xf32>
    %52 = arith.cmpf one, %27, %51 : vector<1x8xf32>
    %cst_39 = arith.constant -1.000000e+09 : f32
    %53 = vector.shape_cast %52 : vector<1x8xi1> to vector<1x8xi1>
    %54 = vector.broadcast %53 : vector<1x8xi1> to vector<8x8xi1>
    %55 = vector.broadcast %cst_39 : f32 to vector<8x8xf32>
    %56 = arith.select %54, %50, %55 : vector<8x8xi1>, vector<8x8xf32>
    %cst_40 = arith.constant dense<0xFF800000> : vector<8xf32>
    %57 = vector.multi_reduction <maximumf>, %56, %cst_40 [1] : vector<8x8xf32> to vector<8xf32>
    %58 = vector.shape_cast %57 : vector<8xf32> to vector<8x1xf32>
    %59 = vector.broadcast %58 : vector<8x1xf32> to vector<8x8xf32>
    %60 = arith.subf %56, %59 : vector<8x8xf32>
    %61 = math.exp %60 : vector<8x8xf32>
    %cst_41 = arith.constant dense<0.000000e+00> : vector<8xf32>
    %62 = vector.multi_reduction <add>, %61, %cst_41 [1] : vector<8x8xf32> to vector<8xf32>
    %63 = vector.shape_cast %62 : vector<8xf32> to vector<8x1xf32>
    %64 = tpu.reciprocal %63 {approx = true} : vector<8x1xf32> -> vector<8x1xf32>
    %65 = vector.broadcast %64 : vector<8x1xf32> to vector<8x8xf32>
    %66 = arith.mulf %61, %65 : vector<8x8xf32>
    %67 = vector.extract_strided_slice %46 {offsets = [0, 0], sizes = [8, 8], strides = [1, 1]} : vector<8x32xf32> to vector<8x8xf32>
    %cst_42 = arith.constant dense<0.000000e+00> : vector<8x8xf32>
    %68 = tpu.matmul %66, %67, %cst_42 {dimension_numbers = #tpu.dot_dimension_numbers<[1], [0], [0], [1], [0, 0, 1, 1], [], []>} : vector<8x8xf32>, vector<8x8xf32>, vector<8x8xf32> -> vector<8x8xf32>
    %69 = vector.extract_strided_slice %34 {offsets = [0, 0], sizes = [8, 32], strides = [1, 1]} : vector<32x32xf32> to vector<8x32xf32>
    %cst_43 = arith.constant dense<0.000000e+00> : vector<8x32xf32>
    %70 = tpu.matmul %68, %69, %cst_43 {dimension_numbers = #tpu.dot_dimension_numbers<[1], [0], [0], [1], [0, 0, 1, 1], [], []>} : vector<8x8xf32>, vector<8x32xf32>, vector<8x32xf32> -> vector<8x32xf32>
    %71 = arith.addf %47, %70 : vector<8x32xf32>
    %72 = vector.extract_strided_slice %40 {offsets = [0, 8], sizes = [8, 8], strides = [1, 1]} : vector<8x32xf32> to vector<8x8xf32>
    %73 = vector.extract_strided_slice %43 {offsets = [0, 8], sizes = [8, 8], strides = [1, 1]} : vector<8x32xf32> to vector<8x8xf32>
    %cst_44 = arith.constant dense<0.000000e+00> : vector<8x8xf32>
    %74 = tpu.matmul %72, %73, %cst_44 {dimension_numbers = #tpu.dot_dimension_numbers<[1], [1], [0], [0], [0, 0, 1, 0], [], []>} : vector<8x8xf32>, vector<8x8xf32>, vector<8x8xf32> -> vector<8x8xf32>
    %cst_45 = arith.constant 0.000000e+00 : f32
    %75 = vector.broadcast %cst_45 : f32 to vector<1x8xf32>
    %76 = arith.cmpf one, %27, %75 : vector<1x8xf32>
    %cst_46 = arith.constant -1.000000e+09 : f32
    %77 = vector.shape_cast %76 : vector<1x8xi1> to vector<1x8xi1>
    %78 = vector.broadcast %77 : vector<1x8xi1> to vector<8x8xi1>
    %79 = vector.broadcast %cst_46 : f32 to vector<8x8xf32>
    %80 = arith.select %78, %74, %79 : vector<8x8xi1>, vector<8x8xf32>
    %cst_47 = arith.constant dense<0xFF800000> : vector<8xf32>
    %81 = vector.multi_reduction <maximumf>, %80, %cst_47 [1] : vector<8x8xf32> to vector<8xf32>
    %82 = vector.shape_cast %81 : vector<8xf32> to vector<8x1xf32>
    %83 = vector.broadcast %82 : vector<8x1xf32> to vector<8x8xf32>
    %84 = arith.subf %80, %83 : vector<8x8xf32>
    %85 = math.exp %84 : vector<8x8xf32>
    %cst_48 = arith.constant dense<0.000000e+00> : vector<8xf32>
    %86 = vector.multi_reduction <add>, %85, %cst_48 [1] : vector<8x8xf32> to vector<8xf32>
    %87 = vector.shape_cast %86 : vector<8xf32> to vector<8x1xf32>
    %88 = tpu.reciprocal %87 {approx = true} : vector<8x1xf32> -> vector<8x1xf32>
    %89 = vector.broadcast %88 : vector<8x1xf32> to vector<8x8xf32>
    %90 = arith.mulf %85, %89 : vector<8x8xf32>
    %91 = vector.extract_strided_slice %46 {offsets = [0, 8], sizes = [8, 8], strides = [1, 1]} : vector<8x32xf32> to vector<8x8xf32>
    %cst_49 = arith.constant dense<0.000000e+00> : vector<8x8xf32>
    %92 = tpu.matmul %90, %91, %cst_49 {dimension_numbers = #tpu.dot_dimension_numbers<[1], [0], [0], [1], [0, 0, 1, 1], [], []>} : vector<8x8xf32>, vector<8x8xf32>, vector<8x8xf32> -> vector<8x8xf32>
    %93 = vector.extract_strided_slice %34 {offsets = [8, 0], sizes = [8, 32], strides = [1, 1]} : vector<32x32xf32> to vector<8x32xf32>
    %cst_50 = arith.constant dense<0.000000e+00> : vector<8x32xf32>
    %94 = tpu.matmul %92, %93, %cst_50 {dimension_numbers = #tpu.dot_dimension_numbers<[1], [0], [0], [1], [0, 0, 1, 1], [], []>} : vector<8x8xf32>, vector<8x32xf32>, vector<8x32xf32> -> vector<8x32xf32>
    %95 = arith.addf %71, %94 : vector<8x32xf32>
    %96 = vector.extract_strided_slice %40 {offsets = [0, 16], sizes = [8, 8], strides = [1, 1]} : vector<8x32xf32> to vector<8x8xf32>
    %97 = vector.extract_strided_slice %43 {offsets = [0, 16], sizes = [8, 8], strides = [1, 1]} : vector<8x32xf32> to vector<8x8xf32>
    %cst_51 = arith.constant dense<0.000000e+00> : vector<8x8xf32>
    %98 = tpu.matmul %96, %97, %cst_51 {dimension_numbers = #tpu.dot_dimension_numbers<[1], [1], [0], [0], [0, 0, 1, 0], [], []>} : vector<8x8xf32>, vector<8x8xf32>, vector<8x8xf32> -> vector<8x8xf32>
    %cst_52 = arith.constant 0.000000e+00 : f32
    %99 = vector.broadcast %cst_52 : f32 to vector<1x8xf32>
    %100 = arith.cmpf one, %27, %99 : vector<1x8xf32>
    %cst_53 = arith.constant -1.000000e+09 : f32
    %101 = vector.shape_cast %100 : vector<1x8xi1> to vector<1x8xi1>
    %102 = vector.broadcast %101 : vector<1x8xi1> to vector<8x8xi1>
    %103 = vector.broadcast %cst_53 : f32 to vector<8x8xf32>
    %104 = arith.select %102, %98, %103 : vector<8x8xi1>, vector<8x8xf32>
    %cst_54 = arith.constant dense<0xFF800000> : vector<8xf32>
    %105 = vector.multi_reduction <maximumf>, %104, %cst_54 [1] : vector<8x8xf32> to vector<8xf32>
    %106 = vector.shape_cast %105 : vector<8xf32> to vector<8x1xf32>
    %107 = vector.broadcast %106 : vector<8x1xf32> to vector<8x8xf32>
    %108 = arith.subf %104, %107 : vector<8x8xf32>
    %109 = math.exp %108 : vector<8x8xf32>
    %cst_55 = arith.constant dense<0.000000e+00> : vector<8xf32>
    %110 = vector.multi_reduction <add>, %109, %cst_55 [1] : vector<8x8xf32> to vector<8xf32>
    %111 = vector.shape_cast %110 : vector<8xf32> to vector<8x1xf32>
    %112 = tpu.reciprocal %111 {approx = true} : vector<8x1xf32> -> vector<8x1xf32>
    %113 = vector.broadcast %112 : vector<8x1xf32> to vector<8x8xf32>
    %114 = arith.mulf %109, %113 : vector<8x8xf32>
    %115 = vector.extract_strided_slice %46 {offsets = [0, 16], sizes = [8, 8], strides = [1, 1]} : vector<8x32xf32> to vector<8x8xf32>
    %cst_56 = arith.constant dense<0.000000e+00> : vector<8x8xf32>
    %116 = tpu.matmul %114, %115, %cst_56 {dimension_numbers = #tpu.dot_dimension_numbers<[1], [0], [0], [1], [0, 0, 1, 1], [], []>} : vector<8x8xf32>, vector<8x8xf32>, vector<8x8xf32> -> vector<8x8xf32>
    %117 = vector.extract_strided_slice %34 {offsets = [16, 0], sizes = [8, 32], strides = [1, 1]} : vector<32x32xf32> to vector<8x32xf32>
    %cst_57 = arith.constant dense<0.000000e+00> : vector<8x32xf32>
    %118 = tpu.matmul %116, %117, %cst_57 {dimension_numbers = #tpu.dot_dimension_numbers<[1], [0], [0], [1], [0, 0, 1, 1], [], []>} : vector<8x8xf32>, vector<8x32xf32>, vector<8x32xf32> -> vector<8x32xf32>
    %119 = arith.addf %95, %118 : vector<8x32xf32>
    %120 = vector.extract_strided_slice %40 {offsets = [0, 24], sizes = [8, 8], strides = [1, 1]} : vector<8x32xf32> to vector<8x8xf32>
    %121 = vector.extract_strided_slice %43 {offsets = [0, 24], sizes = [8, 8], strides = [1, 1]} : vector<8x32xf32> to vector<8x8xf32>
    %cst_58 = arith.constant dense<0.000000e+00> : vector<8x8xf32>
    %122 = tpu.matmul %120, %121, %cst_58 {dimension_numbers = #tpu.dot_dimension_numbers<[1], [1], [0], [0], [0, 0, 1, 0], [], []>} : vector<8x8xf32>, vector<8x8xf32>, vector<8x8xf32> -> vector<8x8xf32>
    %cst_59 = arith.constant 0.000000e+00 : f32
    %123 = vector.broadcast %cst_59 : f32 to vector<1x8xf32>
    %124 = arith.cmpf one, %27, %123 : vector<1x8xf32>
    %cst_60 = arith.constant -1.000000e+09 : f32
    %125 = vector.shape_cast %124 : vector<1x8xi1> to vector<1x8xi1>
    %126 = vector.broadcast %125 : vector<1x8xi1> to vector<8x8xi1>
    %127 = vector.broadcast %cst_60 : f32 to vector<8x8xf32>
    %128 = arith.select %126, %122, %127 : vector<8x8xi1>, vector<8x8xf32>
    %cst_61 = arith.constant dense<0xFF800000> : vector<8xf32>
    %129 = vector.multi_reduction <maximumf>, %128, %cst_61 [1] : vector<8x8xf32> to vector<8xf32>
    %130 = vector.shape_cast %129 : vector<8xf32> to vector<8x1xf32>
    %131 = vector.broadcast %130 : vector<8x1xf32> to vector<8x8xf32>
    %132 = arith.subf %128, %131 : vector<8x8xf32>
    %133 = math.exp %132 : vector<8x8xf32>
    %cst_62 = arith.constant dense<0.000000e+00> : vector<8xf32>
    %134 = vector.multi_reduction <add>, %133, %cst_62 [1] : vector<8x8xf32> to vector<8xf32>
    %135 = vector.shape_cast %134 : vector<8xf32> to vector<8x1xf32>
    %136 = tpu.reciprocal %135 {approx = true} : vector<8x1xf32> -> vector<8x1xf32>
    %137 = vector.broadcast %136 : vector<8x1xf32> to vector<8x8xf32>
    %138 = arith.mulf %133, %137 : vector<8x8xf32>
    %139 = vector.extract_strided_slice %46 {offsets = [0, 24], sizes = [8, 8], strides = [1, 1]} : vector<8x32xf32> to vector<8x8xf32>
    %cst_63 = arith.constant dense<0.000000e+00> : vector<8x8xf32>
    %140 = tpu.matmul %138, %139, %cst_63 {dimension_numbers = #tpu.dot_dimension_numbers<[1], [0], [0], [1], [0, 0, 1, 1], [], []>} : vector<8x8xf32>, vector<8x8xf32>, vector<8x8xf32> -> vector<8x8xf32>
    %141 = vector.extract_strided_slice %34 {offsets = [24, 0], sizes = [8, 32], strides = [1, 1]} : vector<32x32xf32> to vector<8x32xf32>
    %cst_64 = arith.constant dense<0.000000e+00> : vector<8x32xf32>
    %142 = tpu.matmul %140, %141, %cst_64 {dimension_numbers = #tpu.dot_dimension_numbers<[1], [0], [0], [1], [0, 0, 1, 1], [], []>} : vector<8x8xf32>, vector<8x32xf32>, vector<8x32xf32> -> vector<8x32xf32>
    %143 = arith.addf %119, %142 : vector<8x32xf32>
    %144 = vector.broadcast %35 : vector<1x32xf32> to vector<8x32xf32>
    %145 = arith.addf %143, %144 : vector<8x32xf32>
    %146 = arith.addf %1, %145 : vector<8x32xf32>
    %c0_65 = arith.constant 0 : index
    %c0_66 = arith.constant 0 : index
    %c0_67 = arith.constant 0 : index
    %147 = vector.load %arg14[%c0_65, %c0_66, %c0_67] : memref<1x8x32xf32, #tpu.memory_space<vmem>>, vector<1x8x32xf32>
    %148 = vector.shape_cast %147 : vector<1x8x32xf32> to vector<8x32xf32>
    %149 = vector.shape_cast %146 : vector<8x32xf32> to vector<1x8x32xf32>
    tpu.vector_store %arg14[%c0_65, %c0_66, %c0_67], %149 {strides = array<i32>} : memref<1x8x32xf32, #tpu.memory_space<vmem>>, vector<1x8x32xf32>,
    return
  }
  func.func @transform_0(%arg0: i32) -> (i32, i32, i32) {
    %c0_i32 = arith.constant 0 : i32
    %c0_i32_0 = arith.constant 0 : i32
    %c0_i32_1 = arith.constant 0 : i32
    return %arg0, %c0_i32, %c0_i32_0 : i32, i32, i32
  }
  func.func @transform_1(%arg0: i32) -> (i32, i32, i32) {
    %c0_i32 = arith.constant 0 : i32
    %c0_i32_0 = arith.constant 0 : i32
    %c0_i32_1 = arith.constant 0 : i32
    return %arg0, %c0_i32, %c0_i32_0 : i32, i32, i32
  }
  func.func @transform_2(%arg0: i32) -> (i32, i32, i32) {
    %c0_i32 = arith.constant 0 : i32
    %c0_i32_0 = arith.constant 0 : i32
    %c0_i32_1 = arith.constant 0 : i32
    return %arg0, %c0_i32, %c0_i32_0 : i32, i32, i32
  }
  func.func @transform_3(%arg0: i32) -> (i32, i32) {
    %c0_i32 = arith.constant 0 : i32
    %c0_i32_0 = arith.constant 0 : i32
    %c0_i32_1 = arith.constant 0 : i32
    return %c0_i32, %c0_i32_0 : i32, i32
  }
  func.func @transform_4(%arg0: i32) -> (i32, i32) {
    %c0_i32 = arith.constant 0 : i32
    %c0_i32_0 = arith.constant 0 : i32
    %c0_i32_1 = arith.constant 0 : i32
    return %c0_i32, %c0_i32_0 : i32, i32
  }
  func.func @transform_5(%arg0: i32) -> (i32, i32) {
    %c0_i32 = arith.constant 0 : i32
    %c0_i32_0 = arith.constant 0 : i32
    %c0_i32_1 = arith.constant 0 : i32
    return %c0_i32, %c0_i32_0 : i32, i32
  }
  func.func @transform_6(%arg0: i32) -> (i32, i32) {
    %c0_i32 = arith.constant 0 : i32
    %c0_i32_0 = arith.constant 0 : i32
    %c0_i32_1 = arith.constant 0 : i32
    return %c0_i32, %c0_i32_0 : i32, i32
  }
  func.func @transform_7(%arg0: i32) -> (i32, i32) {
    %c0_i32 = arith.constant 0 : i32
    %c0_i32_0 = arith.constant 0 : i32
    %c0_i32_1 = arith.constant 0 : i32
    return %c0_i32, %c0_i32_0 : i32, i32
  }
  func.func @transform_8(%arg0: i32) -> (i32, i32) {
    %c0_i32 = arith.constant 0 : i32
    %c0_i32_0 = arith.constant 0 : i32
    %c0_i32_1 = arith.constant 0 : i32
    return %c0_i32, %c0_i32_0 : i32, i32
  }
  func.func @transform_9(%arg0: i32) -> (i32, i32) {
    %c0_i32 = arith.constant 0 : i32
    %c0_i32_0 = arith.constant 0 : i32
    %c0_i32_1 = arith.constant 0 : i32
    return %c0_i32, %c0_i32_0 : i32, i32
  }
  func.func @transform_10(%arg0: i32) -> (i32, i32) {
    %c0_i32 = arith.constant 0 : i32
    %c0_i32_0 = arith.constant 0 : i32
    %c0_i32_1 = arith.constant 0 : i32
    return %c0_i32, %c0_i32_0 : i32, i32
  }
  func.func @transform_11(%arg0: i32) -> (i32, i32) {
    %c0_i32 = arith.constant 0 : i32
    %c0_i32_0 = arith.constant 0 : i32
    %c0_i32_1 = arith.constant 0 : i32
    return %c0_i32, %c0_i32_0 : i32, i32
  }
  func.func @transform_12(%arg0: i32) -> (i32, i32) {
    %c0_i32 = arith.constant 0 : i32
    %c0_i32_0 = arith.constant 0 : i32
    %c0_i32_1 = arith.constant 0 : i32
    return %c0_i32, %c0_i32_0 : i32, i32
  }
  func.func @transform_13(%arg0: i32) -> (i32, i32, i32) {
    %c0_i32 = arith.constant 0 : i32
    %c0_i32_0 = arith.constant 0 : i32
    %c0_i32_1 = arith.constant 0 : i32
    return %arg0, %c0_i32, %c0_i32_0 : i32, i32, i32
  }
}

module attributes {stable_mosaic.version = 11 : i64} {
  func.func @_layernorm_kernel(%arg0: i32, %arg1: memref<16x32xf32, #tpu.memory_space<vmem>>, %arg2: memref<1x32xf32, #tpu.memory_space<vmem>>, %arg3: memref<1x32xf32, #tpu.memory_space<vmem>>, %arg4: memref<16x32xf32, #tpu.memory_space<vmem>>) attributes {dimension_semantics = [#tpu.dimension_semantics<parallel>], iteration_bounds = array<i64: 1>, scalar_prefetch = 0 : i64, scratch_operands = 0 : i64, tpu.core_type = #tpu.core_type<tc>, window_params = [{transform_indices = @transform_0, window_bounds = array<i64: 16, 32>}, {pipeline_mode = #tpu.pipeline_mode<synchronous>, transform_indices = @transform_1, window_bounds = array<i64: 1, 32>}, {pipeline_mode = #tpu.pipeline_mode<synchronous>, transform_indices = @transform_2, window_bounds = array<i64: 1, 32>}, {transform_indices = @transform_3, window_bounds = array<i64: 16, 32>}]} {
    %c0 = arith.constant 0 : index
    %c0_0 = arith.constant 0 : index
    %0 = vector.load %arg1[%c0, %c0_0] : memref<16x32xf32, #tpu.memory_space<vmem>>, vector<16x32xf32>
    %c0_1 = arith.constant 0 : index
    %c0_2 = arith.constant 0 : index
    %1 = vector.load %arg2[%c0_1, %c0_2] : memref<1x32xf32, #tpu.memory_space<vmem>>, vector<1x32xf32>
    %c0_3 = arith.constant 0 : index
    %c0_4 = arith.constant 0 : index
    %2 = vector.load %arg3[%c0_3, %c0_4] : memref<1x32xf32, #tpu.memory_space<vmem>>, vector<1x32xf32>
    %cst = arith.constant dense<0.000000e+00> : vector<16xf32>
    %3 = vector.multi_reduction <add>, %0, %cst [1] : vector<16x32xf32> to vector<16xf32>
    %4 = vector.shape_cast %3 : vector<16xf32> to vector<16x1xf32>
    %cst_5 = arith.constant 3.200000e+01 : f32
    %5 = vector.broadcast %cst_5 : f32 to vector<16x1xf32>
    %6 = arith.divf %4, %5 : vector<16x1xf32>
    %7 = vector.broadcast %6 : vector<16x1xf32> to vector<16x32xf32>
    %8 = arith.subf %0, %7 : vector<16x32xf32>
    %9 = arith.mulf %8, %8 : vector<16x32xf32>
    %cst_6 = arith.constant dense<0.000000e+00> : vector<16xf32>
    %10 = vector.multi_reduction <add>, %9, %cst_6 [1] : vector<16x32xf32> to vector<16xf32>
    %11 = vector.shape_cast %10 : vector<16xf32> to vector<16x1xf32>
    %cst_7 = arith.constant 3.100000e+01 : f32
    %12 = vector.broadcast %cst_7 : f32 to vector<16x1xf32>
    %13 = arith.divf %11, %12 : vector<16x1xf32>
    %14 = vector.broadcast %1 : vector<1x32xf32> to vector<16x32xf32>
    %15 = arith.mulf %14, %8 : vector<16x32xf32>
    %16 = math.sqrt %13 : vector<16x1xf32>
    %cst_8 = arith.constant 9.99999997E-7 : f32
    %17 = vector.broadcast %cst_8 : f32 to vector<16x1xf32>
    %18 = arith.addf %16, %17 : vector<16x1xf32>
    %19 = vector.broadcast %18 : vector<16x1xf32> to vector<16x32xf32>
    %20 = arith.divf %15, %19 : vector<16x32xf32>
    %21 = vector.broadcast %2 : vector<1x32xf32> to vector<16x32xf32>
    %22 = arith.addf %20, %21 : vector<16x32xf32>
    %c0_9 = arith.constant 0 : index
    %c0_10 = arith.constant 0 : index
    %23 = vector.load %arg4[%c0_9, %c0_10] : memref<16x32xf32, #tpu.memory_space<vmem>>, vector<16x32xf32>
    tpu.vector_store %arg4[%c0_9, %c0_10], %22 {strides = array<i32>} : memref<16x32xf32, #tpu.memory_space<vmem>>, vector<16x32xf32>,
    return
  }
  func.func @transform_0(%arg0: i32) -> (i32, i32) {
    %c0_i32 = arith.constant 0 : i32
    %c0_i32_0 = arith.constant 0 : i32
    return %arg0, %c0_i32 : i32, i32
  }
  func.func @transform_1(%arg0: i32) -> (i32, i32) {
    %c0_i32 = arith.constant 0 : i32
    %c0_i32_0 = arith.constant 0 : i32
    %c0_i32_1 = arith.constant 0 : i32
    return %c0_i32, %c0_i32_0 : i32, i32
  }
  func.func @transform_2(%arg0: i32) -> (i32, i32) {
    %c0_i32 = arith.constant 0 : i32
    %c0_i32_0 = arith.constant 0 : i32
    %c0_i32_1 = arith.constant 0 : i32
    return %c0_i32, %c0_i32_0 : i32, i32
  }
  func.func @transform_3(%arg0: i32) -> (i32, i32) {
    %c0_i32 = arith.constant 0 : i32
    %c0_i32_0 = arith.constant 0 : i32
    return %arg0, %c0_i32 : i32, i32
  }
}

</mosaic_0001>

<llo_original>
// kernel: decoder_forward.9
$region0: #{decoder_forward.9}
  #allocation0 [shape = 'u32[]', space=smem, size = 0x4, offset = 0x4, fixed_abs, tag = 'smem constant byte address 0x4 - core index']
  #allocation1 [shape = 'u32[72,128]{1,0:T(1,128)}', space=vmem, size = 0x9000, scoped, tag = 'internal scratch']
  %s0 = inlined_call_operand.vmem [shape: f32[16,32], index: 0, kind: input, shape index: {}]
  %s1 = inlined_call_operand.vmem [shape: f32[1,32], index: 1, kind: input, shape index: {}]
  %s2 = inlined_call_operand.vmem [shape: f32[1,32], index: 2, kind: input, shape index: {}]
  %s3 = inlined_call_operand.vmem [shape: f32[32,64], index: 3, kind: input, shape index: {}]
  %s4 = inlined_call_operand.vmem [shape: f32[1,64], index: 4, kind: input, shape index: {}]
  %s5 = inlined_call_operand.vmem [shape: f32[64,32], index: 5, kind: input, shape index: {}]
  %s6 = inlined_call_operand.vmem [shape: f32[1,32], index: 6, kind: input, shape index: {}]
  %s7 = inlined_call_operand.vmem [shape: f32[16,32], index: 7, kind: output, shape index: {}]
  %s8 = sld [smem:[#allocation0]]
  $region38: #{decoder_forward.9} parent=0
    _
  %s10 = ssub.s32 1, %s8
  %s11 = scalar_select 0, %s10, %s8
  // Predicated region
  $region2: #{decoder_forward.9} parent=0 // pred_check
    _
  $region3: #{decoder_forward.9} parent=0 // pred_check_branch
    %13 = sbr.rel (0) target = $region5
  $region4: #{decoder_forward.9} parent=0 // pred_region
    _
  $region5: #{decoder_forward.9} parent=0 // pred_fallthru
    _
  // Predicated region
  $region6: #{decoder_forward.9} parent=0 // pred_check
    _
  $region7: #{decoder_forward.9} parent=0 // pred_check_branch
    %15 = sbr.rel (0) target = $region9
  $region8: #{decoder_forward.9} parent=0 // pred_region
    _
  $region9: #{decoder_forward.9} parent=0 // pred_fallthru
    _
  // Predicated region
  $region10: #{decoder_forward.9} parent=0 // pred_check
    _
  $region11: #{decoder_forward.9} parent=0 // pred_check_branch
    %17 = sbr.rel (0) target = $region13
  $region12: #{decoder_forward.9} parent=0 // pred_region
    _
  $region13: #{decoder_forward.9} parent=0 // pred_fallthru
    _
  // Predicated region
  $region14: #{decoder_forward.9} parent=0 // pred_check
    _
  $region15: #{decoder_forward.9} parent=0 // pred_check_branch
    %19 = sbr.rel (0) target = $region17
  $region16: #{decoder_forward.9} parent=0 // pred_region
    _
  $region17: #{decoder_forward.9} parent=0 // pred_fallthru
    _
  // Predicated region
  $region18: #{decoder_forward.9} parent=0 // pred_check
    _
  $region19: #{decoder_forward.9} parent=0 // pred_check_branch
    %21 = sbr.rel (0) target = $region21
  $region20: #{decoder_forward.9} parent=0 // pred_region
    _
  $region21: #{decoder_forward.9} parent=0 // pred_fallthru
    _
  // Predicated region
  $region22: #{decoder_forward.9} parent=0 // pred_check
    _
  $region23: #{decoder_forward.9} parent=0 // pred_check_branch
    %23 = sbr.rel (0) target = $region25
  $region24: #{decoder_forward.9} parent=0 // pred_region
    _
  $region25: #{decoder_forward.9} parent=0 // pred_fallthru
    _
  // Predicated region
  $region26: #{decoder_forward.9} parent=0 // pred_check
    _
  $region27: #{decoder_forward.9} parent=0 // pred_check_branch
    %25 = sbr.rel (0) target = $region29
  $region28: #{decoder_forward.9} parent=0 // pred_region
    _
  $region29: #{decoder_forward.9} parent=0 // pred_fallthru
    _
  %v26 = vld [vmem:[%s0] sm:$0xff]
  %v27 = vld [vmem:[%s0 + $0x8] sm:$0xff]
  %v28 = vld [vmem:[%s1] sm:$0x1]
  %v29 = vld [vmem:[%s2] sm:$0x1]
  %vm30 = vcmask 261120
  %v31 = vsel %vm30, %v26, 0.0
  %32 = vadd.xlane.f32.xlu0 %v31
  %v33 = vpop.xlane.xlu0 %32
  %v34 = vsel %vm30, %v27, 0.0
  %35 = vadd.xlane.f32.xlu0 %v34
  %v36 = vpop.xlane.xlu0 %35
  %v37 = vrcp.pop 32.0
  %v38 = vmul.f32 32.0, %v37
  %v39 = vsub.f32 1.0, %v38
  %v40 = vmul.f32 %v37, %v39
  %v41 = vadd.f32 %v37, %v40
  %vm42 = vweird.f32 %v37
  %v43 = vsel %vm42, %v37, %v41
  %v44 = vmul.f32 %v33, %v43
  %v45 = vmul.f32 %v36, %v43
  %v46 = vsub.f32 %v26, %v44
  %v47 = vsub.f32 %v27, %v45
  %v48 = vmul.f32 %v46, %v46
  %v49 = vmul.f32 %v47, %v47
  %v50 = vsel %vm30, %v48, 0.0
  %51 = vadd.xlane.f32.xlu0 %v50
  %v52 = vpop.xlane.xlu0 %51
  %v53 = vsel %vm30, %v49, 0.0
  %54 = vadd.xlane.f32.xlu0 %v53
  %v55 = vpop.xlane.xlu0 %54
  %v56 = vrcp.pop 31.0
  %v57 = vmul.f32 31.0, %v56
  %v58 = vsub.f32 1.0, %v57
  %v59 = vmul.f32 %v56, %v58
  %v60 = vadd.f32 %v56, %v59
  %vm61 = vweird.f32 %v56
  %v62 = vsel %vm61, %v56, %v60
  %v63 = vmul.f32 %v52, %v62
  %v64 = vmul.f32 %v55, %v62
  %v66 = vperm.slane %v28, 0
  %v68 = vmul.f32 %v66, %v46
  %v69 = vmul.f32 %v66, %v47
  %v70 = vrsqrt.pop %v63
  %v71 = vmul.f32 %v70, %v63
  %v72 = vmul.f32 %v71, %v70
  %v73 = vmul.f32 0.5, %v72
  %v74 = vsub.f32 1.5, %v73
  %v75 = vmul.f32 %v70, %v74
  %v76 = vmul.f32 %v63, %v75
  %vm77 = vcmp.eq.f32.partialorder %v63, inf
  %v78 = vsel %vm77, %v63, %v76
  %vm79 = vcmp.eq.f32.partialorder %v63, 0.0
  %v80 = vand.u32 %v63, 2147483648
  %v81 = vsel %vm79, %v80, %v78
  %v82 = vrsqrt.pop %v64
  %v83 = vmul.f32 %v82, %v64
  %v84 = vmul.f32 %v83, %v82
  %v85 = vmul.f32 0.5, %v84
  %v86 = vsub.f32 1.5, %v85
  %v87 = vmul.f32 %v82, %v86
  %v88 = vmul.f32 %v64, %v87
  %vm89 = vcmp.eq.f32.partialorder %v64, inf
  %v90 = vsel %vm89, %v64, %v88
  %vm91 = vcmp.eq.f32.partialorder %v64, 0.0
  %v92 = vand.u32 %v64, 2147483648
  %v93 = vsel %vm91, %v92, %v90
  %v94 = vadd.f32 %v81, 1e-06
  %v95 = vadd.f32 %v93, 1e-06
  %v96 = vrcp.pop %v94
  %v97 = vmul.f32 %v94, %v96
  %v98 = vsub.f32 1.0, %v97
  %v99 = vmul.f32 %v96, %v98
  %v100 = vadd.f32 %v96, %v99
  %vm101 = vweird.f32 %v94
  %vm102 = vweird.f32 %v96
  %vm103 = vmor %vm101, %vm102
  %v104 = vsel %vm103, %v96, %v100
  %v105 = vand.u32 2147483647, %v94
  %vm106 = vcmp.eq.f32.partialorder %v105, 8.507059e+37
  %v107 = vand.u32 %v94, 2147483648
  %v108 = vor.u32 1.1754944e-38, %v107
  %v109 = vsel %vm106, %v108, %v104
  %v110 = vmul.f32 %v68, %v109
  %v111 = vrcp.pop %v95
  %v112 = vmul.f32 %v95, %v111
  %v113 = vsub.f32 1.0, %v112
  %v114 = vmul.f32 %v111, %v113
  %v115 = vadd.f32 %v111, %v114
  %vm116 = vweird.f32 %v95
  %vm117 = vweird.f32 %v111
  %vm118 = vmor %vm116, %vm117
  %v119 = vsel %vm118, %v111, %v115
  %v120 = vand.u32 2147483647, %v95
  %vm121 = vcmp.eq.f32.partialorder %v120, 8.507059e+37
  %v122 = vand.u32 %v95, 2147483648
  %v123 = vor.u32 1.1754944e-38, %v122
  %v124 = vsel %vm121, %v123, %v119
  %v125 = vmul.f32 %v69, %v124
  %v127 = vperm.slane %v29, 0
  %v129 = vadd.f32 %v110, %v127
  %v130 = vadd.f32 %v125, %v127
  %v131 = vld [vmem:[%s3] sm:$0xff]
  %v132 = vld [vmem:[%s3 + $0x8] sm:$0xff]
  %v133 = vld [vmem:[%s3 + $0x10] sm:$0xff]
  %v134 = vld [vmem:[%s3 + $0x18] sm:$0xff]
  %v135 = vld [vmem:[%s4] sm:$0x1]
  %v137 = vperm.slane %v135, 0
  %v140 = vsel %vm30, %v129, 0
  %v143 = vsel %vm30, %v130, 0
  %145 = vmatpush.msra.mxu0 0.0
  %146 = vmatpush.msra.mxu0 0.0
  %147 = vmatpush.msra.mxu0 0.0
  %148 = vmatpush.msra.mxu0 0.0
  %149 = vmatpush.msra.mxu0 0.0
  %150 = vmatpush.msra.mxu0 0.0
  %151 = vmatpush.msra.mxu0 0.0
  %152 = vmatpush.msra.mxu0 0.0
  %153 = vmatpush.msra.mxu0 0.0
  %154 = vmatpush.msra.mxu0 0.0
  %155 = vmatpush.msra.mxu0 0.0
  %156 = vmatpush.msra.mxu0 0.0
  %157 = vmatpush.msra.mxu0 %v134
  %158 = vmatpush.msra.mxu0 %v133
  %159 = vmatpush.msra.mxu0 %v132
  %160 = vmatpush.msra.mxu0 %v131
  %161 = vmatmul.f32.gmra.mxu0 %v140
  %v162 = vpop.f32.mrf.mxu0
  %v163 = vadd.f32 %v137, %v162
  %164 = vmatmul.f32.gmra.mxu0 %v143
  %v165 = vpop.f32.mrf.mxu0
  %v166 = vadd.f32 %v137, %v165
  %167 = vdwg.mxu0
  %v168 = vmax.f32 %v163, 0.0
  %v169 = vmax.f32 %v166, 0.0
  %v170 = vld [vmem:[%s5] sm:$0xff]
  %v171 = vld [vmem:[%s5 + $0x8] sm:$0xff]
  %v172 = vld [vmem:[%s5 + $0x10] sm:$0xff]
  %v173 = vld [vmem:[%s5 + $0x18] sm:$0xff]
  %v174 = vld [vmem:[%s5 + $0x20] sm:$0xff]
  %v175 = vld [vmem:[%s5 + $0x28] sm:$0xff]
  %v176 = vld [vmem:[%s5 + $0x30] sm:$0xff]
  %v177 = vld [vmem:[%s5 + $0x38] sm:$0xff]
  %v178 = vld [vmem:[%s6] sm:$0x1]
  %v180 = vperm.slane %v178, 0
  %vm182 = vcmask 523264
  %v184 = vsel %vm182, %v168, 0
  %v187 = vsel %vm182, %v169, 0
  %189 = vmatpush.msra.mxu0 0.0
  %190 = vmatpush.msra.mxu0 0.0
  %191 = vmatpush.msra.mxu0 0.0
  %192 = vmatpush.msra.mxu0 0.0
  %193 = vmatpush.msra.mxu0 0.0
  %194 = vmatpush.msra.mxu0 0.0
  %195 = vmatpush.msra.mxu0 0.0
  %196 = vmatpush.msra.mxu0 0.0
  %197 = vmatpush.msra.mxu0 %v177
  %198 = vmatpush.msra.mxu0 %v176
  %199 = vmatpush.msra.mxu0 %v175
  %200 = vmatpush.msra.mxu0 %v174
  %201 = vmatpush.msra.mxu0 %v173
  %202 = vmatpush.msra.mxu0 %v172
  %203 = vmatpush.msra.mxu0 %v171
  %204 = vmatpush.msra.mxu0 %v170
  %205 = vmatmul.f32.gmra.mxu0 %v184
  %v206 = vpop.f32.mrf.mxu0
  %v207 = vadd.f32 %v180, %v206
  %208 = vmatmul.f32.gmra.mxu0 %v187
  %v209 = vpop.f32.mrf.mxu0
  %v210 = vadd.f32 %v180, %v209
  %211 = vdwg.mxu0
  %v212 = vadd.f32 %v26, %v207
  %v213 = vadd.f32 %v27, %v210
  %214 = vst.msk [vmem:[%s7] sm:$0xff] %vm30, %v212
  %215 = vst.msk [vmem:[%s7 + $0x8] sm:$0xff] %vm30, %v213
  // Predicated region
  $region30: #{decoder_forward.9} parent=0 // pred_check
    _
  $region31: #{decoder_forward.9} parent=0 // pred_check_branch
    %217 = sbr.rel (0) target = $region33
  $region32: #{decoder_forward.9} parent=0 // pred_region
    _
  $region33: #{decoder_forward.9} parent=0 // pred_fallthru
    _
  // Predicated region
  $region34: #{decoder_forward.9} parent=0 // pred_check
    _
  $region35: #{decoder_forward.9} parent=0 // pred_check_branch
    %219 = sbr.rel (0) target = $region37
  $region36: #{decoder_forward.9} parent=0 // pred_region
    _
  $region37: #{decoder_forward.9} parent=0 // pred_fallthru
    _

// kernel: decoder_forward.8
$region0: #{decoder_forward.8}
  #allocation0 [shape = 'u32[]', space=smem, size = 0x4, offset = 0x4, fixed_abs, tag = 'smem constant byte address 0x4 - core index']
  #allocation1 [shape = 'u32[72,128]{1,0:T(1,128)}', space=vmem, size = 0x9000, scoped, tag = 'internal scratch']
  %s0 = inlined_call_operand.vmem [shape: f32[2,8,32], index: 0, kind: input, shape index: {}]
  %s1 = inlined_call_operand.vmem [shape: f32[2,8,32], index: 1, kind: input, shape index: {}]
  %s2 = inlined_call_operand.vmem [shape: f32[2,1,8], index: 2, kind: input, shape index: {}]
  %s3 = inlined_call_operand.vmem [shape: f32[1,32], index: 3, kind: input, shape index: {}]
  %s4 = inlined_call_operand.vmem [shape: f32[1,32], index: 4, kind: input, shape index: {}]
  %s5 = inlined_call_operand.hbm [shape: f32[32,32], index: 5, kind: input, shape index: {}]
  %s6 = inlined_call_operand.vmem [shape: f32[1,32], index: 6, kind: input, shape index: {}]
  %s7 = inlined_call_operand.hbm [shape: f32[32,32], index: 7, kind: input, shape index: {}]
  %s8 = inlined_call_operand.vmem [shape: f32[1,32], index: 8, kind: input, shape index: {}]
  %s9 = inlined_call_operand.hbm [shape: f32[32,32], index: 9, kind: input, shape index: {}]
  %s10 = inlined_call_operand.vmem [shape: f32[1,32], index: 10, kind: input, shape index: {}]
  %s11 = inlined_call_operand.hbm [shape: f32[32,32], index: 11, kind: input, shape index: {}]
  %s12 = inlined_call_operand.vmem [shape: f32[1,32], index: 12, kind: input, shape index: {}]
  %s13 = inlined_call_operand.vmem [shape: f32[2,8,32], index: 13, kind: output, shape index: {}]
  %s14 = sld [smem:[#allocation0]]
  $region101: #{decoder_forward.8} parent=0
    _
  %s16 = ssub.s32 1, %s14
  %s17 = scalar_select 0, %s16, %s14
  $region1: #{decoder_forward.8} parent=0
    #allocation2 [shape = 'u8[16384]{0}', space=vmem, size = 0x4000, scoped, tag = 'input window, operand 5, single buffered']
    #allocation3 [shape = 's32[2]{0}', space=sflag, size = 0x8, scoped, tag = 'scoped memory for decoder_forward.8']
    #allocation4 [shape = 'u8[16384]{0}', space=vmem, size = 0x4000, scoped, tag = 'input window, operand 7, single buffered']
    #allocation5 [shape = 's32[1]{0}', space=sflag, size = 0x4, scoped, tag = 'scoped memory for decoder_forward.8']
    #allocation6 [shape = 'u8[16384]{0}', space=vmem, size = 0x4000, scoped, tag = 'input window, operand 9, single buffered']
    #allocation7 [shape = 'u8[16384]{0}', space=vmem, size = 0x4000, scoped, tag = 'input window, operand 11, single buffered']
    #allocation8 [shape = 's32[1]{0}', space=sflag, size = 0x4, scoped, tag = 'scoped memory for decoder_forward.8']
    %18 = vsyncpa [#allocation3], 0
    %19 = vsyncpa [#allocation5], 0
    %20 = vsyncpa [#allocation8], 0
    loop: start=0, step=1, limit=4
    $region2: #{decoder_forward.8} parent=1 // loop_pre_header
      _
    $region3: #{decoder_forward.8} parent=1 // loop_header
      %s22 = sphi 0, %s26
      %p23 = scmp.ge.s32.totalorder %s22, 4
      %s32 = sphi 0, %s34
      %s35 = sphi 0, %s32
      %s36 = sphi 0, %s35
      %s52 = sphi 0, %s36
      %s58 = sphi 0, %s60
      %s61 = sphi 0, %s58
      %s62 = sphi 0, %s61
      %s78 = sphi 0, %s62
      %s84 = sphi 0, %s86
      %s87 = sphi 0, %s84
      %s88 = sphi 0, %s87
      %s104 = sphi 0, %s88
      %s108 = sphi 0, %s108
      %s110 = sphi 0, %s108
      %s111 = sphi 0, %s110
      %s125 = sphi 0, %s111
      %s129 = sphi 0, %s129
      %s131 = sphi 0, %s129
      %s132 = sphi 0, %s131
      %s146 = sphi 0, %s132
      %s150 = sphi 0, %s150
      %s152 = sphi 0, %s150
      %s153 = sphi 0, %s152
      %s167 = sphi 0, %s153
      %s171 = sphi 0, %s171
      %s173 = sphi 0, %s171
      %s174 = sphi 0, %s173
      %s188 = sphi 0, %s174
      %s192 = sphi 0, %s192
      %s194 = sphi 0, %s192
      %s195 = sphi 0, %s194
      %s209 = sphi 0, %s195
      %s213 = sphi 0, %s213
      %s215 = sphi 0, %s213
      %s216 = sphi 0, %s215
      %s230 = sphi 0, %s216
      %s234 = sphi 0, %s234
      %s236 = sphi 0, %s234
      %s237 = sphi 0, %s236
      %s251 = sphi 0, %s237
      %s255 = sphi 0, %s255
      %s257 = sphi 0, %s255
      %s258 = sphi 0, %s257
      %s272 = sphi 0, %s258
      %s276 = sphi 0, %s276
      %s278 = sphi 0, %s276
      %s279 = sphi 0, %s278
      %s293 = sphi 0, %s279
      %s297 = sphi 0, %s297
      %s299 = sphi 0, %s297
      %s300 = sphi 0, %s299
      %s314 = sphi 0, %s300
      %s320 = sphi 0, %s322
      %s323 = sphi 0, %s320
      %s324 = sphi 0, %s323
      %s340 = sphi 0, %s324
    $region4: #{decoder_forward.8} parent=1 // loop_header_branch
      %25 = sbr.rel (%p23) target = $region8
    $region5: #{decoder_forward.8} parent=1 // loop_body
      %s27 = ssub.s32 %s22, 1
      %s28 = ssub.s32 %s22, 2
      %s29 = sadd.s32 %s22, 1
      %s30 = ssub.s32 %s22, %s29
      %p31 = scmp.eq.s32.totalorder %s30, 0
      %s33 = sadd.s32 %s32, 1
      %s34 = scalar_select %p31, %s32, %s33
      %p37 = pneg %p31
      %p38 = scmp.eq.s32.totalorder %s22, 1
      %p39 = por %p37, %p38
      %p40 = scmp.ne.s32.totalorder %s32, %s35
      %p41 = scmp.eq.s32.totalorder %s22, 0
      %p42 = por %p40, %p41
      %p43 = scmp.ne.s32.totalorder %s32, %s35
      %p44 = scmp.eq.s32.totalorder %s27, 1
      %p45 = por %p43, %p44
      %p46 = scmp.ne.s32.totalorder %s35, %s36
      %p47 = scmp.eq.s32.totalorder %s27, 0
      %p48 = por %p46, %p47
      %p49 = scmp.ne.s32.totalorder %s35, %s36
      %p50 = scmp.eq.s32.totalorder %s28, 1
      %p51 = por %p49, %p50
      %p53 = scmp.ne.s32.totalorder %s36, %s52
      %p54 = scmp.eq.s32.totalorder %s28, 0
      %p55 = por %p53, %p54
      %s56 = ssub.s32 %s22, %s29
      %p57 = scmp.eq.s32.totalorder %s56, 0
      %s59 = sadd.s32 %s58, 1
      %s60 = scalar_select %p57, %s58, %s59
      %p63 = pneg %p57
      %p64 = scmp.eq.s32.totalorder %s22, 1
      %p65 = por %p63, %p64
      %p66 = scmp.ne.s32.totalorder %s58, %s61
      %p67 = scmp.eq.s32.totalorder %s22, 0
      %p68 = por %p66, %p67
      %p69 = scmp.ne.s32.totalorder %s58, %s61
      %p70 = scmp.eq.s32.totalorder %s27, 1
      %p71 = por %p69, %p70
      %p72 = scmp.ne.s32.totalorder %s61, %s62
      %p73 = scmp.eq.s32.totalorder %s27, 0
      %p74 = por %p72, %p73
      %p75 = scmp.ne.s32.totalorder %s61, %s62
      %p76 = scmp.eq.s32.totalorder %s28, 1
      %p77 = por %p75, %p76
      %p79 = scmp.ne.s32.totalorder %s62, %s78
      %p80 = scmp.eq.s32.totalorder %s28, 0
      %p81 = por %p79, %p80
      %s82 = ssub.s32 %s22, %s29
      %p83 = scmp.eq.s32.totalorder %s82, 0
      %s85 = sadd.s32 %s84, 1
      %s86 = scalar_select %p83, %s84, %s85
      %p89 = pneg %p83
      %p90 = scmp.eq.s32.totalorder %s22, 1
      %p91 = por %p89, %p90
      %p92 = scmp.ne.s32.totalorder %s84, %s87
      %p93 = scmp.eq.s32.totalorder %s22, 0
      %p94 = por %p92, %p93
      %p95 = scmp.ne.s32.totalorder %s84, %s87
      %p96 = scmp.eq.s32.totalorder %s27, 1
      %p97 = por %p95, %p96
      %p98 = scmp.ne.s32.totalorder %s87, %s88
      %p99 = scmp.eq.s32.totalorder %s27, 0
      %p100 = por %p98, %p99
      %p101 = scmp.ne.s32.totalorder %s87, %s88
      %p102 = scmp.eq.s32.totalorder %s28, 1
      %p103 = por %p101, %p102
      %p105 = scmp.ne.s32.totalorder %s88, %s104
      %p106 = scmp.eq.s32.totalorder %s28, 0
      %p107 = por %p105, %p106
      %s109 = sadd.s32 %s108, 1
      %p112 = scmp.eq.s32.totalorder %s22, 1
      %p113 = scmp.ne.s32.totalorder %s108, %s110
      %p114 = scmp.eq.s32.totalorder %s22, 0
      %p115 = por %p113, %p114
      %p116 = scmp.ne.s32.totalorder %s108, %s110
      %p117 = scmp.eq.s32.totalorder %s27, 1
      %p118 = por %p116, %p117
      %p119 = scmp.ne.s32.totalorder %s110, %s111
      %p120 = scmp.eq.s32.totalorder %s27, 0
      %p121 = por %p119, %p120
      %p122 = scmp.ne.s32.totalorder %s110, %s111
      %p123 = scmp.eq.s32.totalorder %s28, 1
      %p124 = por %p122, %p123
      %p126 = scmp.ne.s32.totalorder %s111, %s125
      %p127 = scmp.eq.s32.totalorder %s28, 0
      %p128 = por %p126, %p127
      %s130 = sadd.s32 %s129, 1
      %p133 = scmp.eq.s32.totalorder %s22, 1
      %p134 = scmp.ne.s32.totalorder %s129, %s131
      %p135 = scmp.eq.s32.totalorder %s22, 0
      %p136 = por %p134, %p135
      %p137 = scmp.ne.s32.totalorder %s129, %s131
      %p138 = scmp.eq.s32.totalorder %s27, 1
      %p139 = por %p137, %p138
      %p140 = scmp.ne.s32.totalorder %s131, %s132
      %p141 = scmp.eq.s32.totalorder %s27, 0
      %p142 = por %p140, %p141
      %p143 = scmp.ne.s32.totalorder %s131, %s132
      %p144 = scmp.eq.s32.totalorder %s28, 1
      %p145 = por %p143, %p144
      %p147 = scmp.ne.s32.totalorder %s132, %s146
      %p148 = scmp.eq.s32.totalorder %s28, 0
      %p149 = por %p147, %p148
      %s151 = sadd.s32 %s150, 1
      %p154 = scmp.eq.s32.totalorder %s22, 1
      %p155 = scmp.ne.s32.totalorder %s150, %s152
      %p156 = scmp.eq.s32.totalorder %s22, 0
      %p157 = por %p155, %p156
      %p158 = scmp.ne.s32.totalorder %s150, %s152
      %p159 = scmp.eq.s32.totalorder %s27, 1
      %p160 = por %p158, %p159
      %p161 = scmp.ne.s32.totalorder %s152, %s153
      %p162 = scmp.eq.s32.totalorder %s27, 0
      %p163 = por %p161, %p162
      %p164 = scmp.ne.s32.totalorder %s152, %s153
      %p165 = scmp.eq.s32.totalorder %s28, 1
      %p166 = por %p164, %p165
      %p168 = scmp.ne.s32.totalorder %s153, %s167
      %p169 = scmp.eq.s32.totalorder %s28, 0
      %p170 = por %p168, %p169
      %s172 = sadd.s32 %s171, 1
      %p175 = scmp.eq.s32.totalorder %s22, 1
      %p176 = scmp.ne.s32.totalorder %s171, %s173
      %p177 = scmp.eq.s32.totalorder %s22, 0
      %p178 = por %p176, %p177
      %p179 = scmp.ne.s32.totalorder %s171, %s173
      %p180 = scmp.eq.s32.totalorder %s27, 1
      %p181 = por %p179, %p180
      %p182 = scmp.ne.s32.totalorder %s173, %s174
      %p183 = scmp.eq.s32.totalorder %s27, 0
      %p184 = por %p182, %p183
      %p185 = scmp.ne.s32.totalorder %s173, %s174
      %p186 = scmp.eq.s32.totalorder %s28, 1
      %p187 = por %p185, %p186
      %p189 = scmp.ne.s32.totalorder %s174, %s188
      %p190 = scmp.eq.s32.totalorder %s28, 0
      %p191 = por %p189, %p190
      %s193 = sadd.s32 %s192, 1
      %p196 = scmp.eq.s32.totalorder %s22, 1
      %p197 = scmp.ne.s32.totalorder %s192, %s194
      %p198 = scmp.eq.s32.totalorder %s22, 0
      %p199 = por %p197, %p198
      %p200 = scmp.ne.s32.totalorder %s192, %s194
      %p201 = scmp.eq.s32.totalorder %s27, 1
      %p202 = por %p200, %p201
      %p203 = scmp.ne.s32.totalorder %s194, %s195
      %p204 = scmp.eq.s32.totalorder %s27, 0
      %p205 = por %p203, %p204
      %p206 = scmp.ne.s32.totalorder %s194, %s195
      %p207 = scmp.eq.s32.totalorder %s28, 1
      %p208 = por %p206, %p207
      %p210 = scmp.ne.s32.totalorder %s195, %s209
      %p211 = scmp.eq.s32.totalorder %s28, 0
      %p212 = por %p210, %p211
      %s214 = sadd.s32 %s213, 1
      %p217 = scmp.eq.s32.totalorder %s22, 1
      %p218 = scmp.ne.s32.totalorder %s213, %s215
      %p219 = scmp.eq.s32.totalorder %s22, 0
      %p220 = por %p218, %p219
      %p221 = scmp.ne.s32.totalorder %s213, %s215
      %p222 = scmp.eq.s32.totalorder %s27, 1
      %p223 = por %p221, %p222
      %p224 = scmp.ne.s32.totalorder %s215, %s216
      %p225 = scmp.eq.s32.totalorder %s27, 0
      %p226 = por %p224, %p225
      %p227 = scmp.ne.s32.totalorder %s215, %s216
      %p228 = scmp.eq.s32.totalorder %s28, 1
      %p229 = por %p227, %p228
      %p231 = scmp.ne.s32.totalorder %s216, %s230
      %p232 = scmp.eq.s32.totalorder %s28, 0
      %p233 = por %p231, %p232
      %s235 = sadd.s32 %s234, 1
      %p238 = scmp.eq.s32.totalorder %s22, 1
      %p239 = scmp.ne.s32.totalorder %s234, %s236
      %p240 = scmp.eq.s32.totalorder %s22, 0
      %p241 = por %p239, %p240
      %p242 = scmp.ne.s32.totalorder %s234, %s236
      %p243 = scmp.eq.s32.totalorder %s27, 1
      %p244 = por %p242, %p243
      %p245 = scmp.ne.s32.totalorder %s236, %s237
      %p246 = scmp.eq.s32.totalorder %s27, 0
      %p247 = por %p245, %p246
      %p248 = scmp.ne.s32.totalorder %s236, %s237
      %p249 = scmp.eq.s32.totalorder %s28, 1
      %p250 = por %p248, %p249
      %p252 = scmp.ne.s32.totalorder %s237, %s251
      %p253 = scmp.eq.s32.totalorder %s28, 0
      %p254 = por %p252, %p253
      %s256 = sadd.s32 %s255, 1
      %p259 = scmp.eq.s32.totalorder %s22, 1
      %p260 = scmp.ne.s32.totalorder %s255, %s257
      %p261 = scmp.eq.s32.totalorder %s22, 0
      %p262 = por %p260, %p261
      %p263 = scmp.ne.s32.totalorder %s255, %s257
      %p264 = scmp.eq.s32.totalorder %s27, 1
      %p265 = por %p263, %p264
      %p266 = scmp.ne.s32.totalorder %s257, %s258
      %p267 = scmp.eq.s32.totalorder %s27, 0
      %p268 = por %p266, %p267
      %p269 = scmp.ne.s32.totalorder %s257, %s258
      %p270 = scmp.eq.s32.totalorder %s28, 1
      %p271 = por %p269, %p270
      %p273 = scmp.ne.s32.totalorder %s258, %s272
      %p274 = scmp.eq.s32.totalorder %s28, 0
      %p275 = por %p273, %p274
      %s277 = sadd.s32 %s276, 1
      %p280 = scmp.eq.s32.totalorder %s22, 1
      %p281 = scmp.ne.s32.totalorder %s276, %s278
      %p282 = scmp.eq.s32.totalorder %s22, 0
      %p283 = por %p281, %p282
      %p284 = scmp.ne.s32.totalorder %s276, %s278
      %p285 = scmp.eq.s32.totalorder %s27, 1
      %p286 = por %p284, %p285
      %p287 = scmp.ne.s32.totalorder %s278, %s279
      %p288 = scmp.eq.s32.totalorder %s27, 0
      %p289 = por %p287, %p288
      %p290 = scmp.ne.s32.totalorder %s278, %s279
      %p291 = scmp.eq.s32.totalorder %s28, 1
      %p292 = por %p290, %p291
      %p294 = scmp.ne.s32.totalorder %s279, %s293
      %p295 = scmp.eq.s32.totalorder %s28, 0
      %p296 = por %p294, %p295
      %s298 = sadd.s32 %s297, 1
      %p301 = scmp.eq.s32.totalorder %s22, 1
      %p302 = scmp.ne.s32.totalorder %s297, %s299
      %p303 = scmp.eq.s32.totalorder %s22, 0
      %p304 = por %p302, %p303
      %p305 = scmp.ne.s32.totalorder %s297, %s299
      %p306 = scmp.eq.s32.totalorder %s27, 1
      %p307 = por %p305, %p306
      %p308 = scmp.ne.s32.totalorder %s299, %s300
      %p309 = scmp.eq.s32.totalorder %s27, 0
      %p310 = por %p308, %p309
      %p311 = scmp.ne.s32.totalorder %s299, %s300
      %p312 = scmp.eq.s32.totalorder %s28, 1
      %p313 = por %p311, %p312
      %p315 = scmp.ne.s32.totalorder %s300, %s314
      %p316 = scmp.eq.s32.totalorder %s28, 0
      %p317 = por %p315, %p316
      %s318 = ssub.s32 %s22, %s29
      %p319 = scmp.eq.s32.totalorder %s318, 0
      %s321 = sadd.s32 %s320, 1
      %s322 = scalar_select %p319, %s320, %s321
      %p325 = pneg %p319
      %p326 = scmp.eq.s32.totalorder %s22, 1
      %p327 = por %p325, %p326
      %p328 = scmp.ne.s32.totalorder %s320, %s323
      %p329 = scmp.eq.s32.totalorder %s22, 0
      %p330 = por %p328, %p329
      %p331 = scmp.ne.s32.totalorder %s320, %s323
      %p332 = scmp.eq.s32.totalorder %s27, 1
      %p333 = por %p331, %p332
      %p334 = scmp.ne.s32.totalorder %s323, %s324
      %p335 = scmp.eq.s32.totalorder %s27, 0
      %p336 = por %p334, %p335
      %p337 = scmp.ne.s32.totalorder %s323, %s324
      %p338 = scmp.eq.s32.totalorder %s28, 1
      %p339 = por %p337, %p338
      %p341 = scmp.ne.s32.totalorder %s324, %s340
      %p342 = scmp.eq.s32.totalorder %s28, 0
      %p343 = por %p341, %p342
      %p344 = scmp.le.s32.totalorder 1, %s22
      %p345 = scmp.lt.s32.totalorder %s22, 3
      %p346 = pnand %p344, %p345
      %p347 = pneg %p346
      // Predicated region
      $region9: #{decoder_forward.8} parent=5 // pred_check
        _
      $region10: #{decoder_forward.8} parent=5 // pred_check_branch
        %349 = sbr.rel (%p346) target = $region12
      $region11: #{decoder_forward.8} parent=5 // pred_region
        %s350 = ssub.s32 %s22, 1
        // Predicated region
        $region13: #{decoder_forward.8} parent=11 // pred_check
          %p351 = pneg %p121
        $region14: #{decoder_forward.8} parent=11 // pred_check_branch
          %353 = sbr.rel (%p351) target = $region16
        $region15: #{decoder_forward.8} parent=11 // pred_region
          _
        $region16: #{decoder_forward.8} parent=11 // pred_fallthru
          _
        // Predicated region
        $region17: #{decoder_forward.8} parent=11 // pred_check
          %p354 = pneg %p142
        $region18: #{decoder_forward.8} parent=11 // pred_check_branch
          %356 = sbr.rel (%p354) target = $region20
        $region19: #{decoder_forward.8} parent=11 // pred_region
          _
        $region20: #{decoder_forward.8} parent=11 // pred_fallthru
          _
        // Predicated region
        $region21: #{decoder_forward.8} parent=11 // pred_check
          %p357 = pneg %p163
        $region22: #{decoder_forward.8} parent=11 // pred_check_branch
          %359 = sbr.rel (%p357) target = $region24
        $region23: #{decoder_forward.8} parent=11 // pred_region
          %361 = vsyncadd [#allocation3], 0
          %s362 = sshll.u32 %s5, 4
          %s363 = int_to_ptr.hbm [resolvable:$true] %s362
          %s364 = sshll.u32 [#allocation2], 4
          %s365 = int_to_ptr.vmem [resolvable:$true] %s364
          %370 = dma.hbm_to_vmem [thread:$0]  %s363, 512, %s365, [#allocation3], 128, 128, 8
        $region24: #{decoder_forward.8} parent=11 // pred_fallthru
          _
        // Predicated region
        $region25: #{decoder_forward.8} parent=11 // pred_check
          %p371 = pneg %p184
        $region26: #{decoder_forward.8} parent=11 // pred_check_branch
          %373 = sbr.rel (%p371) target = $region28
        $region27: #{decoder_forward.8} parent=11 // pred_region
          _
        $region28: #{decoder_forward.8} parent=11 // pred_fallthru
          _
        // Predicated region
        $region29: #{decoder_forward.8} parent=11 // pred_check
          %p374 = pneg %p205
        $region30: #{decoder_forward.8} parent=11 // pred_check_branch
          %376 = sbr.rel (%p374) target = $region32
        $region31: #{decoder_forward.8} parent=11 // pred_region
          %378 = vsyncadd [#allocation5], 0
          %s379 = sshll.u32 %s7, 4
          %s380 = int_to_ptr.hbm [resolvable:$true] %s379
          %s381 = sshll.u32 [#allocation4], 4
          %s382 = int_to_ptr.vmem [resolvable:$true] %s381
          %387 = dma.hbm_to_vmem [thread:$0]  %s380, 512, %s382, [#allocation5], 128, 128, 8
        $region32: #{decoder_forward.8} parent=11 // pred_fallthru
          _
        // Predicated region
        $region33: #{decoder_forward.8} parent=11 // pred_check
          %p388 = pneg %p226
        $region34: #{decoder_forward.8} parent=11 // pred_check_branch
          %390 = sbr.rel (%p388) target = $region36
        $region35: #{decoder_forward.8} parent=11 // pred_region
          _
        $region36: #{decoder_forward.8} parent=11 // pred_fallthru
          _
        // Predicated region
        $region37: #{decoder_forward.8} parent=11 // pred_check
          %p391 = pneg %p247
        $region38: #{decoder_forward.8} parent=11 // pred_check_branch
          %393 = sbr.rel (%p391) target = $region40
        $region39: #{decoder_forward.8} parent=11 // pred_region
          %395 = vsyncadd [#allocation5], 0
          %s396 = sshll.u32 %s9, 4
          %s397 = int_to_ptr.hbm [resolvable:$true] %s396
          %s398 = sshll.u32 [#allocation6], 4
          %s399 = int_to_ptr.vmem [resolvable:$true] %s398
          %404 = dma.hbm_to_vmem [thread:$0]  %s397, 512, %s399, [#allocation5], 128, 128, 8
        $region40: #{decoder_forward.8} parent=11 // pred_fallthru
          _
        // Predicated region
        $region41: #{decoder_forward.8} parent=11 // pred_check
          %p405 = pneg %p268
        $region42: #{decoder_forward.8} parent=11 // pred_check_branch
          %407 = sbr.rel (%p405) target = $region44
        $region43: #{decoder_forward.8} parent=11 // pred_region
          _
        $region44: #{decoder_forward.8} parent=11 // pred_fallthru
          _
        // Predicated region
        $region45: #{decoder_forward.8} parent=11 // pred_check
          %p408 = pneg %p289
        $region46: #{decoder_forward.8} parent=11 // pred_check_branch
          %410 = sbr.rel (%p408) target = $region48
        $region47: #{decoder_forward.8} parent=11 // pred_region
          %412 = vsyncadd [#allocation8], 0
          %s413 = sshll.u32 %s11, 4
          %s414 = int_to_ptr.hbm [resolvable:$true] %s413
          %s415 = sshll.u32 [#allocation7], 4
          %s416 = int_to_ptr.vmem [resolvable:$true] %s415
          %421 = dma.hbm_to_vmem [thread:$0]  %s414, 512, %s416, [#allocation8], 128, 128, 8
        $region48: #{decoder_forward.8} parent=11 // pred_fallthru
          _
        // Predicated region
        $region49: #{decoder_forward.8} parent=11 // pred_check
          %p422 = pneg %p310
        $region50: #{decoder_forward.8} parent=11 // pred_check_branch
          %424 = sbr.rel (%p422) target = $region52
        $region51: #{decoder_forward.8} parent=11 // pred_region
          _
        $region52: #{decoder_forward.8} parent=11 // pred_fallthru
          _
      $region12: #{decoder_forward.8} parent=5 // pred_fallthru
        _
      %p425 = scmp.lt.s32.totalorder %s22, 2
      // Predicated region
      $region53: #{decoder_forward.8} parent=5 // pred_check
        %p426 = pneg %p425
      $region54: #{decoder_forward.8} parent=5 // pred_check_branch
        %428 = sbr.rel (%p426) target = $region56
      $region55: #{decoder_forward.8} parent=5 // pred_region
        // Predicated region
        $region57: #{decoder_forward.8} parent=55 // pred_check
          %p429 = pneg %p42
        $region58: #{decoder_forward.8} parent=55 // pred_check_branch
          %431 = sbr.rel (%p429) target = $region60
        $region59: #{decoder_forward.8} parent=55 // pred_region
          %p432 = scmp.lt.s32.totalorder %s22, 1
          %s433 = scalar_select %p432, %s22, 1
          %s434 = smul.addr %s433, 8
          %s435 = scalar_lea.vmem %s0, %s434
        $region60: #{decoder_forward.8} parent=55 // pred_fallthru
          _
        // Predicated region
        $region61: #{decoder_forward.8} parent=55 // pred_check
          %p436 = pneg %p68
        $region62: #{decoder_forward.8} parent=55 // pred_check_branch
          %438 = sbr.rel (%p436) target = $region64
        $region63: #{decoder_forward.8} parent=55 // pred_region
          %p439 = scmp.lt.s32.totalorder %s22, 1
          %s440 = scalar_select %p439, %s22, 1
          %s441 = smul.addr %s440, 8
          %s442 = scalar_lea.vmem %s1, %s441
        $region64: #{decoder_forward.8} parent=55 // pred_fallthru
          _
        // Predicated region
        $region65: #{decoder_forward.8} parent=55 // pred_check
          %p443 = pneg %p94
        $region66: #{decoder_forward.8} parent=55 // pred_check_branch
          %445 = sbr.rel (%p443) target = $region68
        $region67: #{decoder_forward.8} parent=55 // pred_region
          %p446 = scmp.lt.s32.totalorder %s22, 1
          %s447 = scalar_select %p446, %s22, 1
          %s448 = scalar_lea.vmem %s2, %s447
        $region68: #{decoder_forward.8} parent=55 // pred_fallthru
          _
      $region56: #{decoder_forward.8} parent=5 // pred_fallthru
        _
      %p449 = scmp.le.s32.totalorder 1, %s22
      %p450 = scmp.lt.s32.totalorder %s22, 3
      %p451 = pnand %p449, %p450
      %p452 = pneg %p451
      // Predicated region
      $region69: #{decoder_forward.8} parent=5 // pred_check
        _
      $region70: #{decoder_forward.8} parent=5 // pred_check_branch
        %454 = sbr.rel (%p451) target = $region72
      $region71: #{decoder_forward.8} parent=5 // pred_region
        %s455 = ssub.s32 %s22, 1
        // Predicated region
        $region73: #{decoder_forward.8} parent=71 // pred_check
          %p456 = pneg %p163
        $region74: #{decoder_forward.8} parent=71 // pred_check_branch
          %458 = sbr.rel (%p456) target = $region76
        $region75: #{decoder_forward.8} parent=71 // pred_region
          %460 = dma.done [#allocation3], 512
        $region76: #{decoder_forward.8} parent=71 // pred_fallthru
          _
        // Predicated region
        $region77: #{decoder_forward.8} parent=71 // pred_check
          %p461 = pneg %p205
        $region78: #{decoder_forward.8} parent=71 // pred_check_branch
          %463 = sbr.rel (%p461) target = $region80
        $region79: #{decoder_forward.8} parent=71 // pred_region
          %465 = dma.done [#allocation5], 512
        $region80: #{decoder_forward.8} parent=71 // pred_fallthru
          _
        // Predicated region
        $region81: #{decoder_forward.8} parent=71 // pred_check
          %p466 = pneg %p247
        $region82: #{decoder_forward.8} parent=71 // pred_check_branch
          %468 = sbr.rel (%p466) target = $region84
        $region83: #{decoder_forward.8} parent=71 // pred_region
          %470 = dma.done [#allocation5], 512
        $region84: #{decoder_forward.8} parent=71 // pred_fallthru
          _
        // Predicated region
        $region85: #{decoder_forward.8} parent=71 // pred_check
          %p471 = pneg %p289
        $region86: #{decoder_forward.8} parent=71 // pred_check_branch
          %473 = sbr.rel (%p471) target = $region88
        $region87: #{decoder_forward.8} parent=71 // pred_region
          %475 = dma.done [#allocation8], 512
        $region88: #{decoder_forward.8} parent=71 // pred_fallthru
          _
        %p476 = scmp.lt.s32.totalorder %s27, 1
        %s477 = scalar_select %p476, %s27, 1
        %s478 = smul.addr %s477, 8
        %s479 = scalar_lea.vmem %s0, %s478
        %p480 = pneg %p48
        %p481 = pneg %p45
        %p482 = scmp.lt.s32.totalorder %s27, 1
        %s483 = scalar_select %p482, %s27, 1
        %s484 = smul.addr %s483, 8
        %s485 = scalar_lea.vmem %s1, %s484
        %p486 = pneg %p74
        %p487 = pneg %p71
        %p488 = scmp.lt.s32.totalorder %s27, 1
        %s489 = scalar_select %p488, %s27, 1
        %s490 = scalar_lea.vmem %s2, %s489
        %p491 = pneg %p100
        %p492 = pneg %p97
        %p493 = pneg %p121
        %p494 = pneg %p118
        %p495 = pneg %p142
        %p496 = pneg %p139
        %p497 = pneg %p163
        %p498 = pneg %p160
        %p499 = pneg %p184
        %p500 = pneg %p181
        %p501 = pneg %p205
        %p502 = pneg %p202
        %p503 = pneg %p226
        %p504 = pneg %p223
        %p505 = pneg %p247
        %p506 = pneg %p244
        %p507 = pneg %p268
        %p508 = pneg %p265
        %p509 = pneg %p289
        %p510 = pneg %p286
        %p511 = pneg %p310
        %p512 = pneg %p307
        %p513 = pneg %p336
        %p514 = pneg %p333
        %p515 = scmp.lt.s32.totalorder %s27, 1
        %s516 = scalar_select %p515, %s27, 1
        %s517 = smul.addr %s516, 8
        %s518 = scalar_lea.vmem %s13, %s517
        %p519 = scmp.lt.s32.totalorder %s27, 1
        %s520 = scalar_select %p519, %s27, 1
        %s521 = smul.addr %s520, 8
        %s522 = scalar_lea.vmem %s0, %s521
        %p523 = scmp.lt.s32.totalorder %s27, 1
        %s524 = scalar_select %p523, %s27, 1
        %s525 = smul.addr %s524, 8
        %s526 = scalar_lea.vmem %s1, %s525
        %p527 = scmp.lt.s32.totalorder %s27, 1
        %s528 = scalar_select %p527, %s27, 1
        %s529 = scalar_lea.vmem %s2, %s528
        %p530 = scmp.lt.s32.totalorder %s27, 1
        %s531 = scalar_select %p530, %s27, 1
        %s532 = smul.addr %s531, 8
        %s533 = scalar_lea.vmem %s13, %s532
        %v534 = vld [vmem:[%s522] sm:$0xff]
        %v535 = vld [vmem:[%s3] sm:$0x1]
        %v536 = vld [vmem:[%s4] sm:$0x1]
        %vm537 = vcmask 261120
        %v538 = vsel %vm537, %v534, 0.0
        %539 = vadd.xlane.f32.xlu0 %v538
        %v540 = vpop.xlane.xlu0 %539
        %v541 = vrcp.pop 32.0
        %v542 = vmul.f32 32.0, %v541
        %v543 = vsub.f32 1.0, %v542
        %v544 = vmul.f32 %v541, %v543
        %v545 = vadd.f32 %v541, %v544
        %vm546 = vweird.f32 %v541
        %v547 = vsel %vm546, %v541, %v545
        %v548 = vmul.f32 %v540, %v547
        %v549 = vsub.f32 %v534, %v548
        %v550 = vmul.f32 %v549, %v549
        %v551 = vsel %vm537, %v550, 0.0
        %552 = vadd.xlane.f32.xlu0 %v551
        %v553 = vpop.xlane.xlu0 %552
        %v554 = vrcp.pop 31.0
        %v555 = vmul.f32 31.0, %v554
        %v556 = vsub.f32 1.0, %v555
        %v557 = vmul.f32 %v554, %v556
        %v558 = vadd.f32 %v554, %v557
        %vm559 = vweird.f32 %v554
        %v560 = vsel %vm559, %v554, %v558
        %v561 = vmul.f32 %v553, %v560
        %v563 = vperm.slane %v535, 0
        %v565 = vmul.f32 %v563, %v549
        %v566 = vrsqrt.pop %v561
        %v567 = vmul.f32 %v566, %v561
        %v568 = vmul.f32 %v567, %v566
        %v569 = vmul.f32 0.5, %v568
        %v570 = vsub.f32 1.5, %v569
        %v571 = vmul.f32 %v566, %v570
        %v572 = vmul.f32 %v561, %v571
        %vm573 = vcmp.eq.f32.partialorder %v561, inf
        %v574 = vsel %vm573, %v561, %v572
        %vm575 = vcmp.eq.f32.partialorder %v561, 0.0
        %v576 = vand.u32 %v561, 2147483648
        %v577 = vsel %vm575, %v576, %v574
        %v578 = vadd.f32 %v577, 1e-06
        %v579 = vrcp.pop %v578
        %v580 = vmul.f32 %v578, %v579
        %v581 = vsub.f32 1.0, %v580
        %v582 = vmul.f32 %v579, %v581
        %v583 = vadd.f32 %v579, %v582
        %vm584 = vweird.f32 %v578
        %vm585 = vweird.f32 %v579
        %vm586 = vmor %vm584, %vm585
        %v587 = vsel %vm586, %v579, %v583
        %v588 = vand.u32 2147483647, %v578
        %vm589 = vcmp.eq.f32.partialorder %v588, 8.507059e+37
        %v590 = vand.u32 %v578, 2147483648
        %v591 = vor.u32 1.1754944e-38, %v590
        %v592 = vsel %vm589, %v591, %v587
        %v593 = vmul.f32 %v565, %v592
        %v595 = vperm.slane %v536, 0
        %v597 = vadd.f32 %v593, %v595
        %v598 = vld [vmem:[%s526] sm:$0xff]
        %v599 = vld [vmem:[%s529] sm:$0x1]
        %v600 = vld [vmem:[#allocation2] sm:$0xff]
        %v601 = vld [vmem:[#allocation2 + $0x8] sm:$0xff]
        %v602 = vld [vmem:[#allocation2 + $0x10] sm:$0xff]
        %v603 = vld [vmem:[#allocation2 + $0x18] sm:$0xff]
        %v604 = vld [vmem:[%s6] sm:$0x1]
        %v605 = vld [vmem:[#allocation4] sm:$0xff]
        %v606 = vld [vmem:[#allocation4 + $0x8] sm:$0xff]
        %v607 = vld [vmem:[#allocation4 + $0x10] sm:$0xff]
        %v608 = vld [vmem:[#allocation4 + $0x18] sm:$0xff]
        %v609 = vld [vmem:[%s8] sm:$0x1]
        %v610 = vld [vmem:[#allocation6] sm:$0xff]
        %v611 = vld [vmem:[#allocation6 + $0x8] sm:$0xff]
        %v612 = vld [vmem:[#allocation6 + $0x10] sm:$0xff]
        %v613 = vld [vmem:[#allocation6 + $0x18] sm:$0xff]
        %v614 = vld [vmem:[%s10] sm:$0x1]
        %v615 = vld [vmem:[#allocation7] sm:$0xff]
        %v616 = vld [vmem:[#allocation7 + $0x8] sm:$0xff]
        %v617 = vld [vmem:[#allocation7 + $0x10] sm:$0xff]
        %v618 = vld [vmem:[#allocation7 + $0x18] sm:$0xff]
        %v619 = vld [vmem:[%s12] sm:$0x1]
        %v621 = vperm.slane %v604, 0
        %v624 = vsel %vm537, %v597, 0
        %626 = vmatpush.msra.mxu0 0.0
        %627 = vmatpush.msra.mxu0 0.0
        %628 = vmatpush.msra.mxu0 0.0
        %629 = vmatpush.msra.mxu0 0.0
        %630 = vmatpush.msra.mxu0 0.0
        %631 = vmatpush.msra.mxu0 0.0
        %632 = vmatpush.msra.mxu0 0.0
        %633 = vmatpush.msra.mxu0 0.0
        %634 = vmatpush.msra.mxu0 0.0
        %635 = vmatpush.msra.mxu0 0.0
        %636 = vmatpush.msra.mxu0 0.0
        %637 = vmatpush.msra.mxu0 0.0
        %638 = vmatpush.msra.mxu0 %v603
        %639 = vmatpush.msra.mxu0 %v602
        %640 = vmatpush.msra.mxu0 %v601
        %641 = vmatpush.msra.mxu0 %v600
        %642 = vmatmul.f32.gmra.mxu0 %v624
        %v643 = vpop.f32.mrf.mxu0
        %v644 = vadd.f32 %v621, %v643
        %645 = vdwg.mxu0
        %v646 = vmul.f32 %v644, 0.35355338
        %v648 = vperm.slane %v609, 0
        %v651 = vsel %vm537, %v598, 0
        %653 = vmatpush.msra.mxu0 0.0
        %654 = vmatpush.msra.mxu0 0.0
        %655 = vmatpush.msra.mxu0 0.0
        %656 = vmatpush.msra.mxu0 0.0
        %657 = vmatpush.msra.mxu0 0.0
        %658 = vmatpush.msra.mxu0 0.0
        %659 = vmatpush.msra.mxu0 0.0
        %660 = vmatpush.msra.mxu0 0.0
        %661 = vmatpush.msra.mxu0 0.0
        %662 = vmatpush.msra.mxu0 0.0
        %663 = vmatpush.msra.mxu0 0.0
        %664 = vmatpush.msra.mxu0 0.0
        %665 = vmatpush.msra.mxu0 %v608
        %666 = vmatpush.msra.mxu0 %v607
        %667 = vmatpush.msra.mxu0 %v606
        %668 = vmatpush.msra.mxu0 %v605
        %669 = vmatmul.f32.gmra.mxu0 %v651
        %v670 = vpop.f32.mrf.mxu0
        %v671 = vadd.f32 %v648, %v670
        %672 = vdwg.mxu0
        %v674 = vperm.slane %v614, 0
        %676 = vmatpush.msra.mxu0 0.0
        %677 = vmatpush.msra.mxu0 0.0
        %678 = vmatpush.msra.mxu0 0.0
        %679 = vmatpush.msra.mxu0 0.0
        %680 = vmatpush.msra.mxu0 0.0
        %681 = vmatpush.msra.mxu0 0.0
        %682 = vmatpush.msra.mxu0 0.0
        %683 = vmatpush.msra.mxu0 0.0
        %684 = vmatpush.msra.mxu0 0.0
        %685 = vmatpush.msra.mxu0 0.0
        %686 = vmatpush.msra.mxu0 0.0
        %687 = vmatpush.msra.mxu0 0.0
        %688 = vmatpush.msra.mxu0 %v613
        %689 = vmatpush.msra.mxu0 %v612
        %690 = vmatpush.msra.mxu0 %v611
        %691 = vmatpush.msra.mxu0 %v610
        %692 = vmatmul.f32.gmra.mxu0 %v651
        %v693 = vpop.f32.mrf.mxu0
        %v694 = vadd.f32 %v674, %v693
        %695 = vdwg.mxu0
        %vm696 = vcmask 64512
        %v698 = vsel %vm696, %v646, 0
        %v701 = vsel %vm696, %v671, 0
        %703 = vmatpush.xpose.msra.mxu0 0.0
        %704 = vmatpush.xpose.msra.mxu0 0.0
        %705 = vmatpush.xpose.msra.mxu0 0.0
        %706 = vmatpush.xpose.msra.mxu0 0.0
        %707 = vmatpush.xpose.msra.mxu0 0.0
        %708 = vmatpush.xpose.msra.mxu0 0.0
        %709 = vmatpush.xpose.msra.mxu0 0.0
        %710 = vmatpush.xpose.msra.mxu0 0.0
        %711 = vmatpush.xpose.msra.mxu0 0.0
        %712 = vmatpush.xpose.msra.mxu0 0.0
        %713 = vmatpush.xpose.msra.mxu0 0.0
        %714 = vmatpush.xpose.msra.mxu0 0.0
        %715 = vmatpush.xpose.msra.mxu0 0.0
        %716 = vmatpush.xpose.msra.mxu0 0.0
        %717 = vmatpush.xpose.msra.mxu0 0.0
        %718 = vmatpush.xpose.msra.mxu0 %v701
        %719 = vmatmul.f32.gmra.mxu0 %v698
        %v720 = vpop.f32.mrf.mxu0
        %v721 = vadd.f32 0.0, %v720
        %722 = vdwg.mxu0
        %vm723 = vcmp.ne.f32.partialorder %v599, 0.0
        %v724 = vsel %vm723, 1, 0
        %v725 = vperm.slane %v724, 0
        %vm726 = vcmp.eq.s32.totalorder %v725, 1
        %v727 = vsel %vm726, %v721, -1e+09
        %v728 = vsel %vm696, %v727, -inf
        %729 = vmax.xlane.f32.xlu0 %v728
        %v730 = vpop.xlane.xlu0 %729
        %v731 = vsub.f32 %v727, %v730
        %v732 = vmul.f32 %v731, 1.442695
        %v733 = vpow.pop %v732
        %v734 = vsel %vm696, %v733, 0.0
        %735 = vadd.xlane.f32.xlu0 %v734
        %v736 = vpop.xlane.xlu0 %735
        %v737 = vrcp.pop %v736
        %v738 = vmul.f32 %v733, %v737
        %v740 = vsel %vm696, %v738, 0
        %742 = vmatpush.msra.mxu0 0.0
        %743 = vmatpush.msra.mxu0 0.0
        %744 = vmatpush.msra.mxu0 0.0
        %745 = vmatpush.msra.mxu0 0.0
        %746 = vmatpush.msra.mxu0 0.0
        %747 = vmatpush.msra.mxu0 0.0
        %748 = vmatpush.msra.mxu0 0.0
        %749 = vmatpush.msra.mxu0 0.0
        %750 = vmatpush.msra.mxu0 0.0
        %751 = vmatpush.msra.mxu0 0.0
        %752 = vmatpush.msra.mxu0 0.0
        %753 = vmatpush.msra.mxu0 0.0
        %754 = vmatpush.msra.mxu0 0.0
        %755 = vmatpush.msra.mxu0 0.0
        %756 = vmatpush.msra.mxu0 0.0
        %757 = vmatpush.msra.mxu0 %v694
        %758 = vmatmul.f32.gmra.mxu0 %v740
        %v759 = vpop.f32.mrf.mxu0
        %v760 = vadd.f32 0.0, %v759
        %761 = vdwg.mxu0
        %762 = vrot.lane.b32.xlu0 %v646, 120
        %v763 = vpop.permute.xlu0 %762
        %764 = vrot.lane.b32.xlu0 %v671, 120
        %v765 = vpop.permute.xlu0 %764
        %v766 = vsel %vm696, %v763, 0
        %v768 = vsel %vm696, %v765, 0
        %770 = vmatpush.xpose.msra.mxu0 0.0
        %771 = vmatpush.xpose.msra.mxu0 0.0
        %772 = vmatpush.xpose.msra.mxu0 0.0
        %773 = vmatpush.xpose.msra.mxu0 0.0
        %774 = vmatpush.xpose.msra.mxu0 0.0
        %775 = vmatpush.xpose.msra.mxu0 0.0
        %776 = vmatpush.xpose.msra.mxu0 0.0
        %777 = vmatpush.xpose.msra.mxu0 0.0
        %778 = vmatpush.xpose.msra.mxu0 0.0
        %779 = vmatpush.xpose.msra.mxu0 0.0
        %780 = vmatpush.xpose.msra.mxu0 0.0
        %781 = vmatpush.xpose.msra.mxu0 0.0
        %782 = vmatpush.xpose.msra.mxu0 0.0
        %783 = vmatpush.xpose.msra.mxu0 0.0
        %784 = vmatpush.xpose.msra.mxu0 0.0
        %785 = vmatpush.xpose.msra.mxu0 %v768
        %786 = vmatmul.f32.gmra.mxu0 %v766
        %v787 = vpop.f32.mrf.mxu0
        %v788 = vadd.f32 0.0, %v787
        %789 = vdwg.mxu0
        %v790 = vsel %vm726, %v788, -1e+09
        %v791 = vsel %vm696, %v790, -inf
        %792 = vmax.xlane.f32.xlu0 %v791
        %v793 = vpop.xlane.xlu0 %792
        %v794 = vsub.f32 %v790, %v793
        %v795 = vmul.f32 %v794, 1.442695
        %v796 = vpow.pop %v795
        %v797 = vsel %vm696, %v796, 0.0
        %798 = vadd.xlane.f32.xlu0 %v797
        %v799 = vpop.xlane.xlu0 %798
        %v800 = vrcp.pop %v799
        %v801 = vmul.f32 %v796, %v800
        %803 = vrot.lane.b32.xlu0 %v694, 120
        %v804 = vpop.permute.xlu0 %803
        %v807 = vsel %vm696, %v801, 0
        %809 = vmatpush.msra.mxu0 0.0
        %810 = vmatpush.msra.mxu0 0.0
        %811 = vmatpush.msra.mxu0 0.0
        %812 = vmatpush.msra.mxu0 0.0
        %813 = vmatpush.msra.mxu0 0.0
        %814 = vmatpush.msra.mxu0 0.0
        %815 = vmatpush.msra.mxu0 0.0
        %816 = vmatpush.msra.mxu0 0.0
        %817 = vmatpush.msra.mxu0 0.0
        %818 = vmatpush.msra.mxu0 0.0
        %819 = vmatpush.msra.mxu0 0.0
        %820 = vmatpush.msra.mxu0 0.0
        %821 = vmatpush.msra.mxu0 0.0
        %822 = vmatpush.msra.mxu0 0.0
        %823 = vmatpush.msra.mxu0 0.0
        %824 = vmatpush.msra.mxu0 %v804
        %825 = vmatmul.f32.gmra.mxu0 %v807
        %v826 = vpop.f32.mrf.mxu0
        %v827 = vadd.f32 0.0, %v826
        %828 = vdwg.mxu0
        %v830 = vsel %vm696, %v827, 0
        %832 = vmatpush.msra.mxu0 0.0
        %833 = vmatpush.msra.mxu0 0.0
        %834 = vmatpush.msra.mxu0 0.0
        %835 = vmatpush.msra.mxu0 0.0
        %836 = vmatpush.msra.mxu0 0.0
        %837 = vmatpush.msra.mxu0 0.0
        %838 = vmatpush.msra.mxu0 0.0
        %839 = vmatpush.msra.mxu0 0.0
        %840 = vmatpush.msra.mxu0 0.0
        %841 = vmatpush.msra.mxu0 0.0
        %842 = vmatpush.msra.mxu0 0.0
        %843 = vmatpush.msra.mxu0 0.0
        %844 = vmatpush.msra.mxu0 0.0
        %845 = vmatpush.msra.mxu0 0.0
        %846 = vmatpush.msra.mxu0 0.0
        %847 = vmatpush.msra.mxu0 %v616
        %848 = vmatmul.f32.gmra.mxu0 %v830
        %v849 = vpop.f32.mrf.mxu0
        %v850 = vadd.f32 0.0, %v849
        %851 = vdwg.mxu0
        %v853 = vsel %vm696, %v760, 0
        %855 = vmatpush.msra.mxu0 0.0
        %856 = vmatpush.msra.mxu0 0.0
        %857 = vmatpush.msra.mxu0 0.0
        %858 = vmatpush.msra.mxu0 0.0
        %859 = vmatpush.msra.mxu0 0.0
        %860 = vmatpush.msra.mxu0 0.0
        %861 = vmatpush.msra.mxu0 0.0
        %862 = vmatpush.msra.mxu0 0.0
        %863 = vmatpush.msra.mxu0 0.0
        %864 = vmatpush.msra.mxu0 0.0
        %865 = vmatpush.msra.mxu0 0.0
        %866 = vmatpush.msra.mxu0 0.0
        %867 = vmatpush.msra.mxu0 0.0
        %868 = vmatpush.msra.mxu0 0.0
        %869 = vmatpush.msra.mxu0 0.0
        %870 = vmatpush.msra.mxu0 %v615
        %871 = vmatmul.f32.gmra.mxu0 %v853
        %v872 = vpop.f32.mrf.mxu0
        %v873 = vadd.f32 %v850, %v872
        %874 = vdwg.mxu0
        %875 = vrot.lane.b32.xlu0 %v646, 112
        %v876 = vpop.permute.xlu0 %875
        %877 = vrot.lane.b32.xlu0 %v671, 112
        %v878 = vpop.permute.xlu0 %877
        %v879 = vsel %vm696, %v876, 0
        %v881 = vsel %vm696, %v878, 0
        %883 = vmatpush.xpose.msra.mxu0 0.0
        %884 = vmatpush.xpose.msra.mxu0 0.0
        %885 = vmatpush.xpose.msra.mxu0 0.0
        %886 = vmatpush.xpose.msra.mxu0 0.0
        %887 = vmatpush.xpose.msra.mxu0 0.0
        %888 = vmatpush.xpose.msra.mxu0 0.0
        %889 = vmatpush.xpose.msra.mxu0 0.0
        %890 = vmatpush.xpose.msra.mxu0 0.0
        %891 = vmatpush.xpose.msra.mxu0 0.0
        %892 = vmatpush.xpose.msra.mxu0 0.0
        %893 = vmatpush.xpose.msra.mxu0 0.0
        %894 = vmatpush.xpose.msra.mxu0 0.0
        %895 = vmatpush.xpose.msra.mxu0 0.0
        %896 = vmatpush.xpose.msra.mxu0 0.0
        %897 = vmatpush.xpose.msra.mxu0 0.0
        %898 = vmatpush.xpose.msra.mxu0 %v881
        %899 = vmatmul.f32.gmra.mxu0 %v879
        %v900 = vpop.f32.mrf.mxu0
        %v901 = vadd.f32 0.0, %v900
        %902 = vdwg.mxu0
        %v903 = vsel %vm726, %v901, -1e+09
        %v904 = vsel %vm696, %v903, -inf
        %905 = vmax.xlane.f32.xlu0 %v904
        %v906 = vpop.xlane.xlu0 %905
        %v907 = vsub.f32 %v903, %v906
        %v908 = vmul.f32 %v907, 1.442695
        %v909 = vpow.pop %v908
        %v910 = vsel %vm696, %v909, 0.0
        %911 = vadd.xlane.f32.xlu0 %v910
        %v912 = vpop.xlane.xlu0 %911
        %v913 = vrcp.pop %v912
        %v914 = vmul.f32 %v909, %v913
        %915 = vrot.lane.b32.xlu0 %v694, 112
        %v916 = vpop.permute.xlu0 %915
        %v919 = vsel %vm696, %v914, 0
        %921 = vmatpush.msra.mxu0 0.0
        %922 = vmatpush.msra.mxu0 0.0
        %923 = vmatpush.msra.mxu0 0.0
        %924 = vmatpush.msra.mxu0 0.0
        %925 = vmatpush.msra.mxu0 0.0
        %926 = vmatpush.msra.mxu0 0.0
        %927 = vmatpush.msra.mxu0 0.0
        %928 = vmatpush.msra.mxu0 0.0
        %929 = vmatpush.msra.mxu0 0.0
        %930 = vmatpush.msra.mxu0 0.0
        %931 = vmatpush.msra.mxu0 0.0
        %932 = vmatpush.msra.mxu0 0.0
        %933 = vmatpush.msra.mxu0 0.0
        %934 = vmatpush.msra.mxu0 0.0
        %935 = vmatpush.msra.mxu0 0.0
        %936 = vmatpush.msra.mxu0 %v916
        %937 = vmatmul.f32.gmra.mxu0 %v919
        %v938 = vpop.f32.mrf.mxu0
        %v939 = vadd.f32 0.0, %v938
        %940 = vdwg.mxu0
        %v942 = vsel %vm696, %v939, 0
        %944 = vmatpush.msra.mxu0 0.0
        %945 = vmatpush.msra.mxu0 0.0
        %946 = vmatpush.msra.mxu0 0.0
        %947 = vmatpush.msra.mxu0 0.0
        %948 = vmatpush.msra.mxu0 0.0
        %949 = vmatpush.msra.mxu0 0.0
        %950 = vmatpush.msra.mxu0 0.0
        %951 = vmatpush.msra.mxu0 0.0
        %952 = vmatpush.msra.mxu0 0.0
        %953 = vmatpush.msra.mxu0 0.0
        %954 = vmatpush.msra.mxu0 0.0
        %955 = vmatpush.msra.mxu0 0.0
        %956 = vmatpush.msra.mxu0 0.0
        %957 = vmatpush.msra.mxu0 0.0
        %958 = vmatpush.msra.mxu0 0.0
        %959 = vmatpush.msra.mxu0 %v617
        %960 = vmatmul.f32.gmra.mxu0 %v942
        %v961 = vpop.f32.mrf.mxu0
        %v962 = vadd.f32 0.0, %v961
        %963 = vdwg.mxu0
        %v964 = vadd.f32 %v873, %v962
        %965 = vrot.lane.b32.xlu0 %v646, 104
        %v966 = vpop.permute.xlu0 %965
        %967 = vrot.lane.b32.xlu0 %v671, 104
        %v968 = vpop.permute.xlu0 %967
        %v969 = vsel %vm696, %v966, 0
        %v971 = vsel %vm696, %v968, 0
        %973 = vmatpush.xpose.msra.mxu0 0.0
        %974 = vmatpush.xpose.msra.mxu0 0.0
        %975 = vmatpush.xpose.msra.mxu0 0.0
        %976 = vmatpush.xpose.msra.mxu0 0.0
        %977 = vmatpush.xpose.msra.mxu0 0.0
        %978 = vmatpush.xpose.msra.mxu0 0.0
        %979 = vmatpush.xpose.msra.mxu0 0.0
        %980 = vmatpush.xpose.msra.mxu0 0.0
        %981 = vmatpush.xpose.msra.mxu0 0.0
        %982 = vmatpush.xpose.msra.mxu0 0.0
        %983 = vmatpush.xpose.msra.mxu0 0.0
        %984 = vmatpush.xpose.msra.mxu0 0.0
        %985 = vmatpush.xpose.msra.mxu0 0.0
        %986 = vmatpush.xpose.msra.mxu0 0.0
        %987 = vmatpush.xpose.msra.mxu0 0.0
        %988 = vmatpush.xpose.msra.mxu0 %v971
        %989 = vmatmul.f32.gmra.mxu0 %v969
        %v990 = vpop.f32.mrf.mxu0
        %v991 = vadd.f32 0.0, %v990
        %992 = vdwg.mxu0
        %v993 = vsel %vm726, %v991, -1e+09
        %v994 = vsel %vm696, %v993, -inf
        %995 = vmax.xlane.f32.xlu0 %v994
        %v996 = vpop.xlane.xlu0 %995
        %v997 = vsub.f32 %v993, %v996
        %v998 = vmul.f32 %v997, 1.442695
        %v999 = vpow.pop %v998
        %v1000 = vsel %vm696, %v999, 0.0
        %1001 = vadd.xlane.f32.xlu0 %v1000
        %v1002 = vpop.xlane.xlu0 %1001
        %v1003 = vrcp.pop %v1002
        %v1004 = vmul.f32 %v999, %v1003
        %1005 = vrot.lane.b32.xlu0 %v694, 104
        %v1006 = vpop.permute.xlu0 %1005
        %v1009 = vsel %vm696, %v1004, 0
        %1011 = vmatpush.msra.mxu0 0.0
        %1012 = vmatpush.msra.mxu0 0.0
        %1013 = vmatpush.msra.mxu0 0.0
        %1014 = vmatpush.msra.mxu0 0.0
        %1015 = vmatpush.msra.mxu0 0.0
        %1016 = vmatpush.msra.mxu0 0.0
        %1017 = vmatpush.msra.mxu0 0.0
        %1018 = vmatpush.msra.mxu0 0.0
        %1019 = vmatpush.msra.mxu0 0.0
        %1020 = vmatpush.msra.mxu0 0.0
        %1021 = vmatpush.msra.mxu0 0.0
        %1022 = vmatpush.msra.mxu0 0.0
        %1023 = vmatpush.msra.mxu0 0.0
        %1024 = vmatpush.msra.mxu0 0.0
        %1025 = vmatpush.msra.mxu0 0.0
        %1026 = vmatpush.msra.mxu0 %v1006
        %1027 = vmatmul.f32.gmra.mxu0 %v1009
        %v1028 = vpop.f32.mrf.mxu0
        %v1029 = vadd.f32 0.0, %v1028
        %1030 = vdwg.mxu0
        %v1032 = vsel %vm696, %v1029, 0
        %1034 = vmatpush.msra.mxu0 0.0
        %1035 = vmatpush.msra.mxu0 0.0
        %1036 = vmatpush.msra.mxu0 0.0
        %1037 = vmatpush.msra.mxu0 0.0
        %1038 = vmatpush.msra.mxu0 0.0
        %1039 = vmatpush.msra.mxu0 0.0
        %1040 = vmatpush.msra.mxu0 0.0
        %1041 = vmatpush.msra.mxu0 0.0
        %1042 = vmatpush.msra.mxu0 0.0
        %1043 = vmatpush.msra.mxu0 0.0
        %1044 = vmatpush.msra.mxu0 0.0
        %1045 = vmatpush.msra.mxu0 0.0
        %1046 = vmatpush.msra.mxu0 0.0
        %1047 = vmatpush.msra.mxu0 0.0
        %1048 = vmatpush.msra.mxu0 0.0
        %1049 = vmatpush.msra.mxu0 %v618
        %1050 = vmatmul.f32.gmra.mxu0 %v1032
        %v1051 = vpop.f32.mrf.mxu0
        %v1052 = vadd.f32 0.0, %v1051
        %1053 = vdwg.mxu0
        %v1054 = vadd.f32 %v964, %v1052
        %v1056 = vperm.slane %v619, 0
        %v1058 = vadd.f32 %v1054, %v1056
        %v1059 = vadd.f32 %v534, %v1058
        %1060 = vst.msk [vmem:[%s533] sm:$0xff] %vm537, %v1059
        %p1061 = scmp.lt.s32.totalorder %s27, 1
        %s1062 = scalar_select %p1061, %s27, 1
        %s1063 = smul.addr %s1062, 8
        %s1064 = scalar_lea.vmem %s13, %s1063
        // Predicated region
        $region89: #{decoder_forward.8} parent=71 // pred_check
          %p1065 = pneg %p333
        $region90: #{decoder_forward.8} parent=71 // pred_check_branch
          %1067 = sbr.rel (%p1065) target = $region92
        $region91: #{decoder_forward.8} parent=71 // pred_region
          _
        $region92: #{decoder_forward.8} parent=71 // pred_fallthru
          _
      $region72: #{decoder_forward.8} parent=5 // pred_fallthru
        _
      %p1068 = scmp.le.s32.totalorder 2, %s22
      // Predicated region
      $region93: #{decoder_forward.8} parent=5 // pred_check
        %p1069 = pneg %p1068
      $region94: #{decoder_forward.8} parent=5 // pred_check_branch
        %1071 = sbr.rel (%p1069) target = $region96
      $region95: #{decoder_forward.8} parent=5 // pred_region
        %s1072 = ssub.s32 %s22, 2
        // Predicated region
        $region97: #{decoder_forward.8} parent=95 // pred_check
          %p1073 = pneg %p339
        $region98: #{decoder_forward.8} parent=95 // pred_check_branch
          %1075 = sbr.rel (%p1073) target = $region100
        $region99: #{decoder_forward.8} parent=95 // pred_region
          %p1076 = scmp.lt.s32.totalorder %s28, 1
          %s1077 = scalar_select %p1076, %s28, 1
          %s1078 = smul.addr %s1077, 8
          %s1079 = scalar_lea.vmem %s13, %s1078
        $region100: #{decoder_forward.8} parent=95 // pred_fallthru
          _
      $region96: #{decoder_forward.8} parent=5 // pred_fallthru
        _
    $region6: #{decoder_forward.8} parent=1 // loop_footer
      %s26 = sadd.s32 1, %s22
    $region7: #{decoder_forward.8} parent=1 // loop_footer_branch
      %21 = sbr.rel target = $region3
    $region8: #{decoder_forward.8} parent=1 // loop_exit
      _
    %1080 = vsyncpa [#allocation3], 1
    %s1081 = scalar_lea.sflag [#allocation3], 1
    %1082 = vsyncpa %s1081, 1
    %1083 = vsyncpa [#allocation5], 1
    %1084 = vsyncpa [#allocation8], 1

// kernel: decoder_forward.10
$region0: #{decoder_forward.10}
  #allocation0 [shape = 'u32[]', space=smem, size = 0x4, offset = 0x4, fixed_abs, tag = 'smem constant byte address 0x4 - core index']
  #allocation1 [shape = 'u32[72,128]{1,0:T(1,128)}', space=vmem, size = 0x9000, scoped, tag = 'internal scratch']
  %s0 = inlined_call_operand.vmem [shape: f32[2,8,32], index: 0, kind: input, shape index: {}]
  %s1 = inlined_call_operand.vmem [shape: f32[2,8,8], index: 1, kind: input, shape index: {}]
  %s2 = inlined_call_operand.vmem [shape: f32[1,32], index: 2, kind: input, shape index: {}]
  %s3 = inlined_call_operand.vmem [shape: f32[1,32], index: 3, kind: input, shape index: {}]
  %s4 = inlined_call_operand.vmem [shape: f32[32,32], index: 4, kind: input, shape index: {}]
  %s5 = inlined_call_operand.vmem [shape: f32[1,32], index: 5, kind: input, shape index: {}]
  %s6 = inlined_call_operand.vmem [shape: f32[32,32], index: 6, kind: input, shape index: {}]
  %s7 = inlined_call_operand.vmem [shape: f32[1,32], index: 7, kind: input, shape index: {}]
  %s8 = inlined_call_operand.vmem [shape: f32[32,32], index: 8, kind: input, shape index: {}]
  %s9 = inlined_call_operand.vmem [shape: f32[1,32], index: 9, kind: input, shape index: {}]
  %s10 = inlined_call_operand.vmem [shape: f32[32,32], index: 10, kind: input, shape index: {}]
  %s11 = inlined_call_operand.vmem [shape: f32[1,32], index: 11, kind: input, shape index: {}]
  %s12 = inlined_call_operand.vmem [shape: f32[2,8,32], index: 12, kind: output, shape index: {}]
  %s13 = sld [smem:[#allocation0]]
  $region81: #{decoder_forward.10} parent=0
    _
  %s15 = ssub.s32 1, %s13
  %s16 = scalar_select 0, %s15, %s13
  loop: start=0, step=1, limit=4
  $region2: #{decoder_forward.10} parent=0 // loop_pre_header
    _
  $region3: #{decoder_forward.10} parent=0 // loop_header
    %s18 = sphi 0, %s22
    %p19 = scmp.ge.s32.totalorder %s18, 4
    %s28 = sphi 0, %s30
    %s31 = sphi 0, %s28
    %s32 = sphi 0, %s31
    %s48 = sphi 0, %s32
    %s54 = sphi 0, %s56
    %s57 = sphi 0, %s54
    %s58 = sphi 0, %s57
    %s74 = sphi 0, %s58
    %s78 = sphi 0, %s78
    %s80 = sphi 0, %s78
    %s81 = sphi 0, %s80
    %s95 = sphi 0, %s81
    %s99 = sphi 0, %s99
    %s101 = sphi 0, %s99
    %s102 = sphi 0, %s101
    %s116 = sphi 0, %s102
    %s120 = sphi 0, %s120
    %s122 = sphi 0, %s120
    %s123 = sphi 0, %s122
    %s137 = sphi 0, %s123
    %s141 = sphi 0, %s141
    %s143 = sphi 0, %s141
    %s144 = sphi 0, %s143
    %s158 = sphi 0, %s144
    %s162 = sphi 0, %s162
    %s164 = sphi 0, %s162
    %s165 = sphi 0, %s164
    %s179 = sphi 0, %s165
    %s183 = sphi 0, %s183
    %s185 = sphi 0, %s183
    %s186 = sphi 0, %s185
    %s200 = sphi 0, %s186
    %s204 = sphi 0, %s204
    %s206 = sphi 0, %s204
    %s207 = sphi 0, %s206
    %s221 = sphi 0, %s207
    %s225 = sphi 0, %s225
    %s227 = sphi 0, %s225
    %s228 = sphi 0, %s227
    %s242 = sphi 0, %s228
    %s246 = sphi 0, %s246
    %s248 = sphi 0, %s246
    %s249 = sphi 0, %s248
    %s263 = sphi 0, %s249
    %s267 = sphi 0, %s267
    %s269 = sphi 0, %s267
    %s270 = sphi 0, %s269
    %s284 = sphi 0, %s270
    %s290 = sphi 0, %s292
    %s293 = sphi 0, %s290
    %s294 = sphi 0, %s293
    %s310 = sphi 0, %s294
  $region4: #{decoder_forward.10} parent=0 // loop_header_branch
    %21 = sbr.rel (%p19) target = $region8
  $region5: #{decoder_forward.10} parent=0 // loop_body
    %s23 = ssub.s32 %s18, 1
    %s24 = ssub.s32 %s18, 2
    %s25 = sadd.s32 %s18, 1
    %s26 = ssub.s32 %s18, %s25
    %p27 = scmp.eq.s32.totalorder %s26, 0
    %s29 = sadd.s32 %s28, 1
    %s30 = scalar_select %p27, %s28, %s29
    %p33 = pneg %p27
    %p34 = scmp.eq.s32.totalorder %s18, 1
    %p35 = por %p33, %p34
    %p36 = scmp.ne.s32.totalorder %s28, %s31
    %p37 = scmp.eq.s32.totalorder %s18, 0
    %p38 = por %p36, %p37
    %p39 = scmp.ne.s32.totalorder %s28, %s31
    %p40 = scmp.eq.s32.totalorder %s23, 1
    %p41 = por %p39, %p40
    %p42 = scmp.ne.s32.totalorder %s31, %s32
    %p43 = scmp.eq.s32.totalorder %s23, 0
    %p44 = por %p42, %p43
    %p45 = scmp.ne.s32.totalorder %s31, %s32
    %p46 = scmp.eq.s32.totalorder %s24, 1
    %p47 = por %p45, %p46
    %p49 = scmp.ne.s32.totalorder %s32, %s48
    %p50 = scmp.eq.s32.totalorder %s24, 0
    %p51 = por %p49, %p50
    %s52 = ssub.s32 %s18, %s25
    %p53 = scmp.eq.s32.totalorder %s52, 0
    %s55 = sadd.s32 %s54, 1
    %s56 = scalar_select %p53, %s54, %s55
    %p59 = pneg %p53
    %p60 = scmp.eq.s32.totalorder %s18, 1
    %p61 = por %p59, %p60
    %p62 = scmp.ne.s32.totalorder %s54, %s57
    %p63 = scmp.eq.s32.totalorder %s18, 0
    %p64 = por %p62, %p63
    %p65 = scmp.ne.s32.totalorder %s54, %s57
    %p66 = scmp.eq.s32.totalorder %s23, 1
    %p67 = por %p65, %p66
    %p68 = scmp.ne.s32.totalorder %s57, %s58
    %p69 = scmp.eq.s32.totalorder %s23, 0
    %p70 = por %p68, %p69
    %p71 = scmp.ne.s32.totalorder %s57, %s58
    %p72 = scmp.eq.s32.totalorder %s24, 1
    %p73 = por %p71, %p72
    %p75 = scmp.ne.s32.totalorder %s58, %s74
    %p76 = scmp.eq.s32.totalorder %s24, 0
    %p77 = por %p75, %p76
    %s79 = sadd.s32 %s78, 1
    %p82 = scmp.eq.s32.totalorder %s18, 1
    %p83 = scmp.ne.s32.totalorder %s78, %s80
    %p84 = scmp.eq.s32.totalorder %s18, 0
    %p85 = por %p83, %p84
    %p86 = scmp.ne.s32.totalorder %s78, %s80
    %p87 = scmp.eq.s32.totalorder %s23, 1
    %p88 = por %p86, %p87
    %p89 = scmp.ne.s32.totalorder %s80, %s81
    %p90 = scmp.eq.s32.totalorder %s23, 0
    %p91 = por %p89, %p90
    %p92 = scmp.ne.s32.totalorder %s80, %s81
    %p93 = scmp.eq.s32.totalorder %s24, 1
    %p94 = por %p92, %p93
    %p96 = scmp.ne.s32.totalorder %s81, %s95
    %p97 = scmp.eq.s32.totalorder %s24, 0
    %p98 = por %p96, %p97
    %s100 = sadd.s32 %s99, 1
    %p103 = scmp.eq.s32.totalorder %s18, 1
    %p104 = scmp.ne.s32.totalorder %s99, %s101
    %p105 = scmp.eq.s32.totalorder %s18, 0
    %p106 = por %p104, %p105
    %p107 = scmp.ne.s32.totalorder %s99, %s101
    %p108 = scmp.eq.s32.totalorder %s23, 1
    %p109 = por %p107, %p108
    %p110 = scmp.ne.s32.totalorder %s101, %s102
    %p111 = scmp.eq.s32.totalorder %s23, 0
    %p112 = por %p110, %p111
    %p113 = scmp.ne.s32.totalorder %s101, %s102
    %p114 = scmp.eq.s32.totalorder %s24, 1
    %p115 = por %p113, %p114
    %p117 = scmp.ne.s32.totalorder %s102, %s116
    %p118 = scmp.eq.s32.totalorder %s24, 0
    %p119 = por %p117, %p118
    %s121 = sadd.s32 %s120, 1
    %p124 = scmp.eq.s32.totalorder %s18, 1
    %p125 = scmp.ne.s32.totalorder %s120, %s122
    %p126 = scmp.eq.s32.totalorder %s18, 0
    %p127 = por %p125, %p126
    %p128 = scmp.ne.s32.totalorder %s120, %s122
    %p129 = scmp.eq.s32.totalorder %s23, 1
    %p130 = por %p128, %p129
    %p131 = scmp.ne.s32.totalorder %s122, %s123
    %p132 = scmp.eq.s32.totalorder %s23, 0
    %p133 = por %p131, %p132
    %p134 = scmp.ne.s32.totalorder %s122, %s123
    %p135 = scmp.eq.s32.totalorder %s24, 1
    %p136 = por %p134, %p135
    %p138 = scmp.ne.s32.totalorder %s123, %s137
    %p139 = scmp.eq.s32.totalorder %s24, 0
    %p140 = por %p138, %p139
    %s142 = sadd.s32 %s141, 1
    %p145 = scmp.eq.s32.totalorder %s18, 1
    %p146 = scmp.ne.s32.totalorder %s141, %s143
    %p147 = scmp.eq.s32.totalorder %s18, 0
    %p148 = por %p146, %p147
    %p149 = scmp.ne.s32.totalorder %s141, %s143
    %p150 = scmp.eq.s32.totalorder %s23, 1
    %p151 = por %p149, %p150
    %p152 = scmp.ne.s32.totalorder %s143, %s144
    %p153 = scmp.eq.s32.totalorder %s23, 0
    %p154 = por %p152, %p153
    %p155 = scmp.ne.s32.totalorder %s143, %s144
    %p156 = scmp.eq.s32.totalorder %s24, 1
    %p157 = por %p155, %p156
    %p159 = scmp.ne.s32.totalorder %s144, %s158
    %p160 = scmp.eq.s32.totalorder %s24, 0
    %p161 = por %p159, %p160
    %s163 = sadd.s32 %s162, 1
    %p166 = scmp.eq.s32.totalorder %s18, 1
    %p167 = scmp.ne.s32.totalorder %s162, %s164
    %p168 = scmp.eq.s32.totalorder %s18, 0
    %p169 = por %p167, %p168
    %p170 = scmp.ne.s32.totalorder %s162, %s164
    %p171 = scmp.eq.s32.totalorder %s23, 1
    %p172 = por %p170, %p171
    %p173 = scmp.ne.s32.totalorder %s164, %s165
    %p174 = scmp.eq.s32.totalorder %s23, 0
    %p175 = por %p173, %p174
    %p176 = scmp.ne.s32.totalorder %s164, %s165
    %p177 = scmp.eq.s32.totalorder %s24, 1
    %p178 = por %p176, %p177
    %p180 = scmp.ne.s32.totalorder %s165, %s179
    %p181 = scmp.eq.s32.totalorder %s24, 0
    %p182 = por %p180, %p181
    %s184 = sadd.s32 %s183, 1
    %p187 = scmp.eq.s32.totalorder %s18, 1
    %p188 = scmp.ne.s32.totalorder %s183, %s185
    %p189 = scmp.eq.s32.totalorder %s18, 0
    %p190 = por %p188, %p189
    %p191 = scmp.ne.s32.totalorder %s183, %s185
    %p192 = scmp.eq.s32.totalorder %s23, 1
    %p193 = por %p191, %p192
    %p194 = scmp.ne.s32.totalorder %s185, %s186
    %p195 = scmp.eq.s32.totalorder %s23, 0
    %p196 = por %p194, %p195
    %p197 = scmp.ne.s32.totalorder %s185, %s186
    %p198 = scmp.eq.s32.totalorder %s24, 1
    %p199 = por %p197, %p198
    %p201 = scmp.ne.s32.totalorder %s186, %s200
    %p202 = scmp.eq.s32.totalorder %s24, 0
    %p203 = por %p201, %p202
    %s205 = sadd.s32 %s204, 1
    %p208 = scmp.eq.s32.totalorder %s18, 1
    %p209 = scmp.ne.s32.totalorder %s204, %s206
    %p210 = scmp.eq.s32.totalorder %s18, 0
    %p211 = por %p209, %p210
    %p212 = scmp.ne.s32.totalorder %s204, %s206
    %p213 = scmp.eq.s32.totalorder %s23, 1
    %p214 = por %p212, %p213
    %p215 = scmp.ne.s32.totalorder %s206, %s207
    %p216 = scmp.eq.s32.totalorder %s23, 0
    %p217 = por %p215, %p216
    %p218 = scmp.ne.s32.totalorder %s206, %s207
    %p219 = scmp.eq.s32.totalorder %s24, 1
    %p220 = por %p218, %p219
    %p222 = scmp.ne.s32.totalorder %s207, %s221
    %p223 = scmp.eq.s32.totalorder %s24, 0
    %p224 = por %p222, %p223
    %s226 = sadd.s32 %s225, 1
    %p229 = scmp.eq.s32.totalorder %s18, 1
    %p230 = scmp.ne.s32.totalorder %s225, %s227
    %p231 = scmp.eq.s32.totalorder %s18, 0
    %p232 = por %p230, %p231
    %p233 = scmp.ne.s32.totalorder %s225, %s227
    %p234 = scmp.eq.s32.totalorder %s23, 1
    %p235 = por %p233, %p234
    %p236 = scmp.ne.s32.totalorder %s227, %s228
    %p237 = scmp.eq.s32.totalorder %s23, 0
    %p238 = por %p236, %p237
    %p239 = scmp.ne.s32.totalorder %s227, %s228
    %p240 = scmp.eq.s32.totalorder %s24, 1
    %p241 = por %p239, %p240
    %p243 = scmp.ne.s32.totalorder %s228, %s242
    %p244 = scmp.eq.s32.totalorder %s24, 0
    %p245 = por %p243, %p244
    %s247 = sadd.s32 %s246, 1
    %p250 = scmp.eq.s32.totalorder %s18, 1
    %p251 = scmp.ne.s32.totalorder %s246, %s248
    %p252 = scmp.eq.s32.totalorder %s18, 0
    %p253 = por %p251, %p252
    %p254 = scmp.ne.s32.totalorder %s246, %s248
    %p255 = scmp.eq.s32.totalorder %s23, 1
    %p256 = por %p254, %p255
    %p257 = scmp.ne.s32.totalorder %s248, %s249
    %p258 = scmp.eq.s32.totalorder %s23, 0
    %p259 = por %p257, %p258
    %p260 = scmp.ne.s32.totalorder %s248, %s249
    %p261 = scmp.eq.s32.totalorder %s24, 1
    %p262 = por %p260, %p261
    %p264 = scmp.ne.s32.totalorder %s249, %s263
    %p265 = scmp.eq.s32.totalorder %s24, 0
    %p266 = por %p264, %p265
    %s268 = sadd.s32 %s267, 1
    %p271 = scmp.eq.s32.totalorder %s18, 1
    %p272 = scmp.ne.s32.totalorder %s267, %s269
    %p273 = scmp.eq.s32.totalorder %s18, 0
    %p274 = por %p272, %p273
    %p275 = scmp.ne.s32.totalorder %s267, %s269
    %p276 = scmp.eq.s32.totalorder %s23, 1
    %p277 = por %p275, %p276
    %p278 = scmp.ne.s32.totalorder %s269, %s270
    %p279 = scmp.eq.s32.totalorder %s23, 0
    %p280 = por %p278, %p279
    %p281 = scmp.ne.s32.totalorder %s269, %s270
    %p282 = scmp.eq.s32.totalorder %s24, 1
    %p283 = por %p281, %p282
    %p285 = scmp.ne.s32.totalorder %s270, %s284
    %p286 = scmp.eq.s32.totalorder %s24, 0
    %p287 = por %p285, %p286
    %s288 = ssub.s32 %s18, %s25
    %p289 = scmp.eq.s32.totalorder %s288, 0
    %s291 = sadd.s32 %s290, 1
    %s292 = scalar_select %p289, %s290, %s291
    %p295 = pneg %p289
    %p296 = scmp.eq.s32.totalorder %s18, 1
    %p297 = por %p295, %p296
    %p298 = scmp.ne.s32.totalorder %s290, %s293
    %p299 = scmp.eq.s32.totalorder %s18, 0
    %p300 = por %p298, %p299
    %p301 = scmp.ne.s32.totalorder %s290, %s293
    %p302 = scmp.eq.s32.totalorder %s23, 1
    %p303 = por %p301, %p302
    %p304 = scmp.ne.s32.totalorder %s293, %s294
    %p305 = scmp.eq.s32.totalorder %s23, 0
    %p306 = por %p304, %p305
    %p307 = scmp.ne.s32.totalorder %s293, %s294
    %p308 = scmp.eq.s32.totalorder %s24, 1
    %p309 = por %p307, %p308
    %p311 = scmp.ne.s32.totalorder %s294, %s310
    %p312 = scmp.eq.s32.totalorder %s24, 0
    %p313 = por %p311, %p312
    %p314 = scmp.le.s32.totalorder 1, %s18
    %p315 = scmp.lt.s32.totalorder %s18, 3
    %p316 = pnand %p314, %p315
    %p317 = pneg %p316
    // Predicated region
    $region9: #{decoder_forward.10} parent=5 // pred_check
      _
    $region10: #{decoder_forward.10} parent=5 // pred_check_branch
      %319 = sbr.rel (%p316) target = $region12
    $region11: #{decoder_forward.10} parent=5 // pred_region
      %s320 = ssub.s32 %s18, 1
      // Predicated region
      $region13: #{decoder_forward.10} parent=11 // pred_check
        %p321 = pneg %p91
      $region14: #{decoder_forward.10} parent=11 // pred_check_branch
        %323 = sbr.rel (%p321) target = $region16
      $region15: #{decoder_forward.10} parent=11 // pred_region
        _
      $region16: #{decoder_forward.10} parent=11 // pred_fallthru
        _
      // Predicated region
      $region17: #{decoder_forward.10} parent=11 // pred_check
        %p324 = pneg %p112
      $region18: #{decoder_forward.10} parent=11 // pred_check_branch
        %326 = sbr.rel (%p324) target = $region20
      $region19: #{decoder_forward.10} parent=11 // pred_region
        _
      $region20: #{decoder_forward.10} parent=11 // pred_fallthru
        _
      // Predicated region
      $region21: #{decoder_forward.10} parent=11 // pred_check
        %p327 = pneg %p133
      $region22: #{decoder_forward.10} parent=11 // pred_check_branch
        %329 = sbr.rel (%p327) target = $region24
      $region23: #{decoder_forward.10} parent=11 // pred_region
        _
      $region24: #{decoder_forward.10} parent=11 // pred_fallthru
        _
      // Predicated region
      $region25: #{decoder_forward.10} parent=11 // pred_check
        %p330 = pneg %p154
      $region26: #{decoder_forward.10} parent=11 // pred_check_branch
        %332 = sbr.rel (%p330) target = $region28
      $region27: #{decoder_forward.10} parent=11 // pred_region
        _
      $region28: #{decoder_forward.10} parent=11 // pred_fallthru
        _
      // Predicated region
      $region29: #{decoder_forward.10} parent=11 // pred_check
        %p333 = pneg %p175
      $region30: #{decoder_forward.10} parent=11 // pred_check_branch
        %335 = sbr.rel (%p333) target = $region32
      $region31: #{decoder_forward.10} parent=11 // pred_region
        _
      $region32: #{decoder_forward.10} parent=11 // pred_fallthru
        _
      // Predicated region
      $region33: #{decoder_forward.10} parent=11 // pred_check
        %p336 = pneg %p196
      $region34: #{decoder_forward.10} parent=11 // pred_check_branch
        %338 = sbr.rel (%p336) target = $region36
      $region35: #{decoder_forward.10} parent=11 // pred_region
        _
      $region36: #{decoder_forward.10} parent=11 // pred_fallthru
        _
      // Predicated region
      $region37: #{decoder_forward.10} parent=11 // pred_check
        %p339 = pneg %p217
      $region38: #{decoder_forward.10} parent=11 // pred_check_branch
        %341 = sbr.rel (%p339) target = $region40
      $region39: #{decoder_forward.10} parent=11 // pred_region
        _
      $region40: #{decoder_forward.10} parent=11 // pred_fallthru
        _
      // Predicated region
      $region41: #{decoder_forward.10} parent=11 // pred_check
        %p342 = pneg %p238
      $region42: #{decoder_forward.10} parent=11 // pred_check_branch
        %344 = sbr.rel (%p342) target = $region44
      $region43: #{decoder_forward.10} parent=11 // pred_region
        _
      $region44: #{decoder_forward.10} parent=11 // pred_fallthru
        _
      // Predicated region
      $region45: #{decoder_forward.10} parent=11 // pred_check
        %p345 = pneg %p259
      $region46: #{decoder_forward.10} parent=11 // pred_check_branch
        %347 = sbr.rel (%p345) target = $region48
      $region47: #{decoder_forward.10} parent=11 // pred_region
        _
      $region48: #{decoder_forward.10} parent=11 // pred_fallthru
        _
      // Predicated region
      $region49: #{decoder_forward.10} parent=11 // pred_check
        %p348 = pneg %p280
      $region50: #{decoder_forward.10} parent=11 // pred_check_branch
        %350 = sbr.rel (%p348) target = $region52
      $region51: #{decoder_forward.10} parent=11 // pred_region
        _
      $region52: #{decoder_forward.10} parent=11 // pred_fallthru
        _
    $region12: #{decoder_forward.10} parent=5 // pred_fallthru
      _
    %p351 = scmp.lt.s32.totalorder %s18, 2
    // Predicated region
    $region53: #{decoder_forward.10} parent=5 // pred_check
      %p352 = pneg %p351
    $region54: #{decoder_forward.10} parent=5 // pred_check_branch
      %354 = sbr.rel (%p352) target = $region56
    $region55: #{decoder_forward.10} parent=5 // pred_region
      // Predicated region
      $region57: #{decoder_forward.10} parent=55 // pred_check
        %p355 = pneg %p38
      $region58: #{decoder_forward.10} parent=55 // pred_check_branch
        %357 = sbr.rel (%p355) target = $region60
      $region59: #{decoder_forward.10} parent=55 // pred_region
        %p358 = scmp.lt.s32.totalorder %s18, 1
        %s359 = scalar_select %p358, %s18, 1
        %s360 = smul.addr %s359, 8
        %s361 = scalar_lea.vmem %s0, %s360
      $region60: #{decoder_forward.10} parent=55 // pred_fallthru
        _
      // Predicated region
      $region61: #{decoder_forward.10} parent=55 // pred_check
        %p362 = pneg %p64
      $region62: #{decoder_forward.10} parent=55 // pred_check_branch
        %364 = sbr.rel (%p362) target = $region64
      $region63: #{decoder_forward.10} parent=55 // pred_region
        %p365 = scmp.lt.s32.totalorder %s18, 1
        %s366 = scalar_select %p365, %s18, 1
        %s367 = smul.addr %s366, 8
        %s368 = scalar_lea.vmem %s1, %s367
      $region64: #{decoder_forward.10} parent=55 // pred_fallthru
        _
    $region56: #{decoder_forward.10} parent=5 // pred_fallthru
      _
    %p369 = scmp.le.s32.totalorder 1, %s18
    %p370 = scmp.lt.s32.totalorder %s18, 3
    %p371 = pnand %p369, %p370
    %p372 = pneg %p371
    // Predicated region
    $region65: #{decoder_forward.10} parent=5 // pred_check
      _
    $region66: #{decoder_forward.10} parent=5 // pred_check_branch
      %374 = sbr.rel (%p371) target = $region68
    $region67: #{decoder_forward.10} parent=5 // pred_region
      %s375 = ssub.s32 %s18, 1
      %p376 = scmp.lt.s32.totalorder %s23, 1
      %s377 = scalar_select %p376, %s23, 1
      %s378 = smul.addr %s377, 8
      %s379 = scalar_lea.vmem %s0, %s378
      %p380 = pneg %p44
      %p381 = pneg %p41
      %p382 = scmp.lt.s32.totalorder %s23, 1
      %s383 = scalar_select %p382, %s23, 1
      %s384 = smul.addr %s383, 8
      %s385 = scalar_lea.vmem %s1, %s384
      %p386 = pneg %p70
      %p387 = pneg %p67
      %p388 = pneg %p91
      %p389 = pneg %p88
      %p390 = pneg %p112
      %p391 = pneg %p109
      %p392 = pneg %p133
      %p393 = pneg %p130
      %p394 = pneg %p154
      %p395 = pneg %p151
      %p396 = pneg %p175
      %p397 = pneg %p172
      %p398 = pneg %p196
      %p399 = pneg %p193
      %p400 = pneg %p217
      %p401 = pneg %p214
      %p402 = pneg %p238
      %p403 = pneg %p235
      %p404 = pneg %p259
      %p405 = pneg %p256
      %p406 = pneg %p280
      %p407 = pneg %p277
      %p408 = pneg %p306
      %p409 = pneg %p303
      %p410 = scmp.lt.s32.totalorder %s23, 1
      %s411 = scalar_select %p410, %s23, 1
      %s412 = smul.addr %s411, 8
      %s413 = scalar_lea.vmem %s12, %s412
      %p414 = scmp.lt.s32.totalorder %s23, 1
      %s415 = scalar_select %p414, %s23, 1
      %s416 = smul.addr %s415, 8
      %s417 = scalar_lea.vmem %s0, %s416
      %p418 = scmp.lt.s32.totalorder %s23, 1
      %s419 = scalar_select %p418, %s23, 1
      %s420 = smul.addr %s419, 8
      %s421 = scalar_lea.vmem %s1, %s420
      %p422 = scmp.lt.s32.totalorder %s23, 1
      %s423 = scalar_select %p422, %s23, 1
      %s424 = smul.addr %s423, 8
      %s425 = scalar_lea.vmem %s12, %s424
      %v426 = vld [vmem:[%s417] sm:$0xff]
      %v427 = vld [vmem:[%s2] sm:$0x1]
      %v428 = vld [vmem:[%s3] sm:$0x1]
      %vm429 = vcmask 261120
      %v430 = vsel %vm429, %v426, 0.0
      %431 = vadd.xlane.f32.xlu0 %v430
      %v432 = vpop.xlane.xlu0 %431
      %v433 = vrcp.pop 32.0
      %v434 = vmul.f32 32.0, %v433
      %v435 = vsub.f32 1.0, %v434
      %v436 = vmul.f32 %v433, %v435
      %v437 = vadd.f32 %v433, %v436
      %vm438 = vweird.f32 %v433
      %v439 = vsel %vm438, %v433, %v437
      %v440 = vmul.f32 %v432, %v439
      %v441 = vsub.f32 %v426, %v440
      %v442 = vmul.f32 %v441, %v441
      %v443 = vsel %vm429, %v442, 0.0
      %444 = vadd.xlane.f32.xlu0 %v443
      %v445 = vpop.xlane.xlu0 %444
      %v446 = vrcp.pop 31.0
      %v447 = vmul.f32 31.0, %v446
      %v448 = vsub.f32 1.0, %v447
      %v449 = vmul.f32 %v446, %v448
      %v450 = vadd.f32 %v446, %v449
      %vm451 = vweird.f32 %v446
      %v452 = vsel %vm451, %v446, %v450
      %v453 = vmul.f32 %v445, %v452
      %v455 = vperm.slane %v427, 0
      %v457 = vmul.f32 %v455, %v441
      %v458 = vrsqrt.pop %v453
      %v459 = vmul.f32 %v458, %v453
      %v460 = vmul.f32 %v459, %v458
      %v461 = vmul.f32 0.5, %v460
      %v462 = vsub.f32 1.5, %v461
      %v463 = vmul.f32 %v458, %v462
      %v464 = vmul.f32 %v453, %v463
      %vm465 = vcmp.eq.f32.partialorder %v453, inf
      %v466 = vsel %vm465, %v453, %v464
      %vm467 = vcmp.eq.f32.partialorder %v453, 0.0
      %v468 = vand.u32 %v453, 2147483648
      %v469 = vsel %vm467, %v468, %v466
      %v470 = vadd.f32 %v469, 1e-06
      %v471 = vrcp.pop %v470
      %v472 = vmul.f32 %v470, %v471
      %v473 = vsub.f32 1.0, %v472
      %v474 = vmul.f32 %v471, %v473
      %v475 = vadd.f32 %v471, %v474
      %vm476 = vweird.f32 %v470
      %vm477 = vweird.f32 %v471
      %vm478 = vmor %vm476, %vm477
      %v479 = vsel %vm478, %v471, %v475
      %v480 = vand.u32 2147483647, %v470
      %vm481 = vcmp.eq.f32.partialorder %v480, 8.507059e+37
      %v482 = vand.u32 %v470, 2147483648
      %v483 = vor.u32 1.1754944e-38, %v482
      %v484 = vsel %vm481, %v483, %v479
      %v485 = vmul.f32 %v457, %v484
      %v487 = vperm.slane %v428, 0
      %v489 = vadd.f32 %v485, %v487
      %v490 = vld [vmem:[%s421] sm:$0xff]
      %v491 = vld [vmem:[%s4] sm:$0xff]
      %v492 = vld [vmem:[%s4 + $0x8] sm:$0xff]
      %v493 = vld [vmem:[%s4 + $0x10] sm:$0xff]
      %v494 = vld [vmem:[%s4 + $0x18] sm:$0xff]
      %v495 = vld [vmem:[%s5] sm:$0x1]
      %v496 = vld [vmem:[%s6] sm:$0xff]
      %v497 = vld [vmem:[%s6 + $0x8] sm:$0xff]
      %v498 = vld [vmem:[%s6 + $0x10] sm:$0xff]
      %v499 = vld [vmem:[%s6 + $0x18] sm:$0xff]
      %v500 = vld [vmem:[%s7] sm:$0x1]
      %v501 = vld [vmem:[%s8] sm:$0xff]
      %v502 = vld [vmem:[%s8 + $0x8] sm:$0xff]
      %v503 = vld [vmem:[%s8 + $0x10] sm:$0xff]
      %v504 = vld [vmem:[%s8 + $0x18] sm:$0xff]
      %v505 = vld [vmem:[%s9] sm:$0x1]
      %v506 = vld [vmem:[%s10] sm:$0xff]
      %v507 = vld [vmem:[%s10 + $0x8] sm:$0xff]
      %v508 = vld [vmem:[%s10 + $0x10] sm:$0xff]
      %v509 = vld [vmem:[%s10 + $0x18] sm:$0xff]
      %v510 = vld [vmem:[%s11] sm:$0x1]
      %v512 = vperm.slane %v495, 0
      %v515 = vsel %vm429, %v489, 0
      %517 = vmatpush.msra.mxu0 0.0
      %518 = vmatpush.msra.mxu0 0.0
      %519 = vmatpush.msra.mxu0 0.0
      %520 = vmatpush.msra.mxu0 0.0
      %521 = vmatpush.msra.mxu0 0.0
      %522 = vmatpush.msra.mxu0 0.0
      %523 = vmatpush.msra.mxu0 0.0
      %524 = vmatpush.msra.mxu0 0.0
      %525 = vmatpush.msra.mxu0 0.0
      %526 = vmatpush.msra.mxu0 0.0
      %527 = vmatpush.msra.mxu0 0.0
      %528 = vmatpush.msra.mxu0 0.0
      %529 = vmatpush.msra.mxu0 %v494
      %530 = vmatpush.msra.mxu0 %v493
      %531 = vmatpush.msra.mxu0 %v492
      %532 = vmatpush.msra.mxu0 %v491
      %533 = vmatmul.f32.gmra.mxu0 %v515
      %v534 = vpop.f32.mrf.mxu0
      %v535 = vadd.f32 %v512, %v534
      %536 = vdwg.mxu0
      %v537 = vmul.f32 %v535, 0.35355338
      %v539 = vperm.slane %v500, 0
      %541 = vmatpush.msra.mxu0 0.0
      %542 = vmatpush.msra.mxu0 0.0
      %543 = vmatpush.msra.mxu0 0.0
      %544 = vmatpush.msra.mxu0 0.0
      %545 = vmatpush.msra.mxu0 0.0
      %546 = vmatpush.msra.mxu0 0.0
      %547 = vmatpush.msra.mxu0 0.0
      %548 = vmatpush.msra.mxu0 0.0
      %549 = vmatpush.msra.mxu0 0.0
      %550 = vmatpush.msra.mxu0 0.0
      %551 = vmatpush.msra.mxu0 0.0
      %552 = vmatpush.msra.mxu0 0.0
      %553 = vmatpush.msra.mxu0 %v499
      %554 = vmatpush.msra.mxu0 %v498
      %555 = vmatpush.msra.mxu0 %v497
      %556 = vmatpush.msra.mxu0 %v496
      %557 = vmatmul.f32.gmra.mxu0 %v515
      %v558 = vpop.f32.mrf.mxu0
      %v559 = vadd.f32 %v539, %v558
      %560 = vdwg.mxu0
      %v562 = vperm.slane %v505, 0
      %564 = vmatpush.msra.mxu0 0.0
      %565 = vmatpush.msra.mxu0 0.0
      %566 = vmatpush.msra.mxu0 0.0
      %567 = vmatpush.msra.mxu0 0.0
      %568 = vmatpush.msra.mxu0 0.0
      %569 = vmatpush.msra.mxu0 0.0
      %570 = vmatpush.msra.mxu0 0.0
      %571 = vmatpush.msra.mxu0 0.0
      %572 = vmatpush.msra.mxu0 0.0
      %573 = vmatpush.msra.mxu0 0.0
      %574 = vmatpush.msra.mxu0 0.0
      %575 = vmatpush.msra.mxu0 0.0
      %576 = vmatpush.msra.mxu0 %v504
      %577 = vmatpush.msra.mxu0 %v503
      %578 = vmatpush.msra.mxu0 %v502
      %579 = vmatpush.msra.mxu0 %v501
      %580 = vmatmul.f32.gmra.mxu0 %v515
      %v581 = vpop.f32.mrf.mxu0
      %v582 = vadd.f32 %v562, %v581
      %583 = vdwg.mxu0
      %vm584 = vcmask 64512
      %v586 = vsel %vm584, %v537, 0
      %v589 = vsel %vm584, %v559, 0
      %591 = vmatpush.xpose.msra.mxu0 0.0
      %592 = vmatpush.xpose.msra.mxu0 0.0
      %593 = vmatpush.xpose.msra.mxu0 0.0
      %594 = vmatpush.xpose.msra.mxu0 0.0
      %595 = vmatpush.xpose.msra.mxu0 0.0
      %596 = vmatpush.xpose.msra.mxu0 0.0
      %597 = vmatpush.xpose.msra.mxu0 0.0
      %598 = vmatpush.xpose.msra.mxu0 0.0
      %599 = vmatpush.xpose.msra.mxu0 0.0
      %600 = vmatpush.xpose.msra.mxu0 0.0
      %601 = vmatpush.xpose.msra.mxu0 0.0
      %602 = vmatpush.xpose.msra.mxu0 0.0
      %603 = vmatpush.xpose.msra.mxu0 0.0
      %604 = vmatpush.xpose.msra.mxu0 0.0
      %605 = vmatpush.xpose.msra.mxu0 0.0
      %606 = vmatpush.xpose.msra.mxu0 %v589
      %607 = vmatmul.f32.gmra.mxu0 %v586
      %v608 = vpop.f32.mrf.mxu0
      %v609 = vadd.f32 0.0, %v608
      %610 = vdwg.mxu0
      %vm611 = vcmp.ne.f32.partialorder %v490, 0.0
      %v612 = vsel %vm611, %v609, -1e+09
      %v613 = vsel %vm584, %v612, -inf
      %614 = vmax.xlane.f32.xlu0 %v613
      %v615 = vpop.xlane.xlu0 %614
      %v616 = vsub.f32 %v612, %v615
      %v617 = vmul.f32 %v616, 1.442695
      %v618 = vpow.pop %v617
      %v619 = vsel %vm584, %v618, 0.0
      %620 = vadd.xlane.f32.xlu0 %v619
      %v621 = vpop.xlane.xlu0 %620
      %v622 = vrcp.pop %v621
      %v623 = vmul.f32 %v618, %v622
      %v625 = vsel %vm584, %v623, 0
      %627 = vmatpush.msra.mxu0 0.0
      %628 = vmatpush.msra.mxu0 0.0
      %629 = vmatpush.msra.mxu0 0.0
      %630 = vmatpush.msra.mxu0 0.0
      %631 = vmatpush.msra.mxu0 0.0
      %632 = vmatpush.msra.mxu0 0.0
      %633 = vmatpush.msra.mxu0 0.0
      %634 = vmatpush.msra.mxu0 0.0
      %635 = vmatpush.msra.mxu0 0.0
      %636 = vmatpush.msra.mxu0 0.0
      %637 = vmatpush.msra.mxu0 0.0
      %638 = vmatpush.msra.mxu0 0.0
      %639 = vmatpush.msra.mxu0 0.0
      %640 = vmatpush.msra.mxu0 0.0
      %641 = vmatpush.msra.mxu0 0.0
      %642 = vmatpush.msra.mxu0 %v582
      %643 = vmatmul.f32.gmra.mxu0 %v625
      %v644 = vpop.f32.mrf.mxu0
      %v645 = vadd.f32 0.0, %v644
      %646 = vdwg.mxu0
      %647 = vrot.lane.b32.xlu0 %v537, 120
      %v648 = vpop.permute.xlu0 %647
      %649 = vrot.lane.b32.xlu0 %v559, 120
      %v650 = vpop.permute.xlu0 %649
      %v651 = vsel %vm584, %v648, 0
      %v653 = vsel %vm584, %v650, 0
      %655 = vmatpush.xpose.msra.mxu0 0.0
      %656 = vmatpush.xpose.msra.mxu0 0.0
      %657 = vmatpush.xpose.msra.mxu0 0.0
      %658 = vmatpush.xpose.msra.mxu0 0.0
      %659 = vmatpush.xpose.msra.mxu0 0.0
      %660 = vmatpush.xpose.msra.mxu0 0.0
      %661 = vmatpush.xpose.msra.mxu0 0.0
      %662 = vmatpush.xpose.msra.mxu0 0.0
      %663 = vmatpush.xpose.msra.mxu0 0.0
      %664 = vmatpush.xpose.msra.mxu0 0.0
      %665 = vmatpush.xpose.msra.mxu0 0.0
      %666 = vmatpush.xpose.msra.mxu0 0.0
      %667 = vmatpush.xpose.msra.mxu0 0.0
      %668 = vmatpush.xpose.msra.mxu0 0.0
      %669 = vmatpush.xpose.msra.mxu0 0.0
      %670 = vmatpush.xpose.msra.mxu0 %v653
      %671 = vmatmul.f32.gmra.mxu0 %v651
      %v672 = vpop.f32.mrf.mxu0
      %v673 = vadd.f32 0.0, %v672
      %674 = vdwg.mxu0
      %v675 = vsel %vm611, %v673, -1e+09
      %v676 = vsel %vm584, %v675, -inf
      %677 = vmax.xlane.f32.xlu0 %v676
      %v678 = vpop.xlane.xlu0 %677
      %v679 = vsub.f32 %v675, %v678
      %v680 = vmul.f32 %v679, 1.442695
      %v681 = vpow.pop %v680
      %v682 = vsel %vm584, %v681, 0.0
      %683 = vadd.xlane.f32.xlu0 %v682
      %v684 = vpop.xlane.xlu0 %683
      %v685 = vrcp.pop %v684
      %v686 = vmul.f32 %v681, %v685
      %688 = vrot.lane.b32.xlu0 %v582, 120
      %v689 = vpop.permute.xlu0 %688
      %v692 = vsel %vm584, %v686, 0
      %694 = vmatpush.msra.mxu0 0.0
      %695 = vmatpush.msra.mxu0 0.0
      %696 = vmatpush.msra.mxu0 0.0
      %697 = vmatpush.msra.mxu0 0.0
      %698 = vmatpush.msra.mxu0 0.0
      %699 = vmatpush.msra.mxu0 0.0
      %700 = vmatpush.msra.mxu0 0.0
      %701 = vmatpush.msra.mxu0 0.0
      %702 = vmatpush.msra.mxu0 0.0
      %703 = vmatpush.msra.mxu0 0.0
      %704 = vmatpush.msra.mxu0 0.0
      %705 = vmatpush.msra.mxu0 0.0
      %706 = vmatpush.msra.mxu0 0.0
      %707 = vmatpush.msra.mxu0 0.0
      %708 = vmatpush.msra.mxu0 0.0
      %709 = vmatpush.msra.mxu0 %v689
      %710 = vmatmul.f32.gmra.mxu0 %v692
      %v711 = vpop.f32.mrf.mxu0
      %v712 = vadd.f32 0.0, %v711
      %713 = vdwg.mxu0
      %v715 = vsel %vm584, %v712, 0
      %717 = vmatpush.msra.mxu0 0.0
      %718 = vmatpush.msra.mxu0 0.0
      %719 = vmatpush.msra.mxu0 0.0
      %720 = vmatpush.msra.mxu0 0.0
      %721 = vmatpush.msra.mxu0 0.0
      %722 = vmatpush.msra.mxu0 0.0
      %723 = vmatpush.msra.mxu0 0.0
      %724 = vmatpush.msra.mxu0 0.0
      %725 = vmatpush.msra.mxu0 0.0
      %726 = vmatpush.msra.mxu0 0.0
      %727 = vmatpush.msra.mxu0 0.0
      %728 = vmatpush.msra.mxu0 0.0
      %729 = vmatpush.msra.mxu0 0.0
      %730 = vmatpush.msra.mxu0 0.0
      %731 = vmatpush.msra.mxu0 0.0
      %732 = vmatpush.msra.mxu0 %v507
      %733 = vmatmul.f32.gmra.mxu0 %v715
      %v734 = vpop.f32.mrf.mxu0
      %v735 = vadd.f32 0.0, %v734
      %736 = vdwg.mxu0
      %v738 = vsel %vm584, %v645, 0
      %740 = vmatpush.msra.mxu0 0.0
      %741 = vmatpush.msra.mxu0 0.0
      %742 = vmatpush.msra.mxu0 0.0
      %743 = vmatpush.msra.mxu0 0.0
      %744 = vmatpush.msra.mxu0 0.0
      %745 = vmatpush.msra.mxu0 0.0
      %746 = vmatpush.msra.mxu0 0.0
      %747 = vmatpush.msra.mxu0 0.0
      %748 = vmatpush.msra.mxu0 0.0
      %749 = vmatpush.msra.mxu0 0.0
      %750 = vmatpush.msra.mxu0 0.0
      %751 = vmatpush.msra.mxu0 0.0
      %752 = vmatpush.msra.mxu0 0.0
      %753 = vmatpush.msra.mxu0 0.0
      %754 = vmatpush.msra.mxu0 0.0
      %755 = vmatpush.msra.mxu0 %v506
      %756 = vmatmul.f32.gmra.mxu0 %v738
      %v757 = vpop.f32.mrf.mxu0
      %v758 = vadd.f32 %v735, %v757
      %759 = vdwg.mxu0
      %760 = vrot.lane.b32.xlu0 %v537, 112
      %v761 = vpop.permute.xlu0 %760
      %762 = vrot.lane.b32.xlu0 %v559, 112
      %v763 = vpop.permute.xlu0 %762
      %v764 = vsel %vm584, %v761, 0
      %v766 = vsel %vm584, %v763, 0
      %768 = vmatpush.xpose.msra.mxu0 0.0
      %769 = vmatpush.xpose.msra.mxu0 0.0
      %770 = vmatpush.xpose.msra.mxu0 0.0
      %771 = vmatpush.xpose.msra.mxu0 0.0
      %772 = vmatpush.xpose.msra.mxu0 0.0
      %773 = vmatpush.xpose.msra.mxu0 0.0
      %774 = vmatpush.xpose.msra.mxu0 0.0
      %775 = vmatpush.xpose.msra.mxu0 0.0
      %776 = vmatpush.xpose.msra.mxu0 0.0
      %777 = vmatpush.xpose.msra.mxu0 0.0
      %778 = vmatpush.xpose.msra.mxu0 0.0
      %779 = vmatpush.xpose.msra.mxu0 0.0
      %780 = vmatpush.xpose.msra.mxu0 0.0
      %781 = vmatpush.xpose.msra.mxu0 0.0
      %782 = vmatpush.xpose.msra.mxu0 0.0
      %783 = vmatpush.xpose.msra.mxu0 %v766
      %784 = vmatmul.f32.gmra.mxu0 %v764
      %v785 = vpop.f32.mrf.mxu0
      %v786 = vadd.f32 0.0, %v785
      %787 = vdwg.mxu0
      %v788 = vsel %vm611, %v786, -1e+09
      %v789 = vsel %vm584, %v788, -inf
      %790 = vmax.xlane.f32.xlu0 %v789
      %v791 = vpop.xlane.xlu0 %790
      %v792 = vsub.f32 %v788, %v791
      %v793 = vmul.f32 %v792, 1.442695
      %v794 = vpow.pop %v793
      %v795 = vsel %vm584, %v794, 0.0
      %796 = vadd.xlane.f32.xlu0 %v795
      %v797 = vpop.xlane.xlu0 %796
      %v798 = vrcp.pop %v797
      %v799 = vmul.f32 %v794, %v798
      %800 = vrot.lane.b32.xlu0 %v582, 112
      %v801 = vpop.permute.xlu0 %800
      %v804 = vsel %vm584, %v799, 0
      %806 = vmatpush.msra.mxu0 0.0
      %807 = vmatpush.msra.mxu0 0.0
      %808 = vmatpush.msra.mxu0 0.0
      %809 = vmatpush.msra.mxu0 0.0
      %810 = vmatpush.msra.mxu0 0.0
      %811 = vmatpush.msra.mxu0 0.0
      %812 = vmatpush.msra.mxu0 0.0
      %813 = vmatpush.msra.mxu0 0.0
      %814 = vmatpush.msra.mxu0 0.0
      %815 = vmatpush.msra.mxu0 0.0
      %816 = vmatpush.msra.mxu0 0.0
      %817 = vmatpush.msra.mxu0 0.0
      %818 = vmatpush.msra.mxu0 0.0
      %819 = vmatpush.msra.mxu0 0.0
      %820 = vmatpush.msra.mxu0 0.0
      %821 = vmatpush.msra.mxu0 %v801
      %822 = vmatmul.f32.gmra.mxu0 %v804
      %v823 = vpop.f32.mrf.mxu0
      %v824 = vadd.f32 0.0, %v823
      %825 = vdwg.mxu0
      %v827 = vsel %vm584, %v824, 0
      %829 = vmatpush.msra.mxu0 0.0
      %830 = vmatpush.msra.mxu0 0.0
      %831 = vmatpush.msra.mxu0 0.0
      %832 = vmatpush.msra.mxu0 0.0
      %833 = vmatpush.msra.mxu0 0.0
      %834 = vmatpush.msra.mxu0 0.0
      %835 = vmatpush.msra.mxu0 0.0
      %836 = vmatpush.msra.mxu0 0.0
      %837 = vmatpush.msra.mxu0 0.0
      %838 = vmatpush.msra.mxu0 0.0
      %839 = vmatpush.msra.mxu0 0.0
      %840 = vmatpush.msra.mxu0 0.0
      %841 = vmatpush.msra.mxu0 0.0
      %842 = vmatpush.msra.mxu0 0.0
      %843 = vmatpush.msra.mxu0 0.0
      %844 = vmatpush.msra.mxu0 %v508
      %845 = vmatmul.f32.gmra.mxu0 %v827
      %v846 = vpop.f32.mrf.mxu0
      %v847 = vadd.f32 0.0, %v846
      %848 = vdwg.mxu0
      %v849 = vadd.f32 %v758, %v847
      %850 = vrot.lane.b32.xlu0 %v537, 104
      %v851 = vpop.permute.xlu0 %850
      %852 = vrot.lane.b32.xlu0 %v559, 104
      %v853 = vpop.permute.xlu0 %852
      %v854 = vsel %vm584, %v851, 0
      %v856 = vsel %vm584, %v853, 0
      %858 = vmatpush.xpose.msra.mxu0 0.0
      %859 = vmatpush.xpose.msra.mxu0 0.0
      %860 = vmatpush.xpose.msra.mxu0 0.0
      %861 = vmatpush.xpose.msra.mxu0 0.0
      %862 = vmatpush.xpose.msra.mxu0 0.0
      %863 = vmatpush.xpose.msra.mxu0 0.0
      %864 = vmatpush.xpose.msra.mxu0 0.0
      %865 = vmatpush.xpose.msra.mxu0 0.0
      %866 = vmatpush.xpose.msra.mxu0 0.0
      %867 = vmatpush.xpose.msra.mxu0 0.0
      %868 = vmatpush.xpose.msra.mxu0 0.0
      %869 = vmatpush.xpose.msra.mxu0 0.0
      %870 = vmatpush.xpose.msra.mxu0 0.0
      %871 = vmatpush.xpose.msra.mxu0 0.0
      %872 = vmatpush.xpose.msra.mxu0 0.0
      %873 = vmatpush.xpose.msra.mxu0 %v856
      %874 = vmatmul.f32.gmra.mxu0 %v854
      %v875 = vpop.f32.mrf.mxu0
      %v876 = vadd.f32 0.0, %v875
      %877 = vdwg.mxu0
      %v878 = vsel %vm611, %v876, -1e+09
      %v879 = vsel %vm584, %v878, -inf
      %880 = vmax.xlane.f32.xlu0 %v879
      %v881 = vpop.xlane.xlu0 %880
      %v882 = vsub.f32 %v878, %v881
      %v883 = vmul.f32 %v882, 1.442695
      %v884 = vpow.pop %v883
      %v885 = vsel %vm584, %v884, 0.0
      %886 = vadd.xlane.f32.xlu0 %v885
      %v887 = vpop.xlane.xlu0 %886
      %v888 = vrcp.pop %v887
      %v889 = vmul.f32 %v884, %v888
      %890 = vrot.lane.b32.xlu0 %v582, 104
      %v891 = vpop.permute.xlu0 %890
      %v894 = vsel %vm584, %v889, 0
      %896 = vmatpush.msra.mxu0 0.0
      %897 = vmatpush.msra.mxu0 0.0
      %898 = vmatpush.msra.mxu0 0.0
      %899 = vmatpush.msra.mxu0 0.0
      %900 = vmatpush.msra.mxu0 0.0
      %901 = vmatpush.msra.mxu0 0.0
      %902 = vmatpush.msra.mxu0 0.0
      %903 = vmatpush.msra.mxu0 0.0
      %904 = vmatpush.msra.mxu0 0.0
      %905 = vmatpush.msra.mxu0 0.0
      %906 = vmatpush.msra.mxu0 0.0
      %907 = vmatpush.msra.mxu0 0.0
      %908 = vmatpush.msra.mxu0 0.0
      %909 = vmatpush.msra.mxu0 0.0
      %910 = vmatpush.msra.mxu0 0.0
      %911 = vmatpush.msra.mxu0 %v891
      %912 = vmatmul.f32.gmra.mxu0 %v894
      %v913 = vpop.f32.mrf.mxu0
      %v914 = vadd.f32 0.0, %v913
      %915 = vdwg.mxu0
      %v917 = vsel %vm584, %v914, 0
      %919 = vmatpush.msra.mxu0 0.0
      %920 = vmatpush.msra.mxu0 0.0
      %921 = vmatpush.msra.mxu0 0.0
      %922 = vmatpush.msra.mxu0 0.0
      %923 = vmatpush.msra.mxu0 0.0
      %924 = vmatpush.msra.mxu0 0.0
      %925 = vmatpush.msra.mxu0 0.0
      %926 = vmatpush.msra.mxu0 0.0
      %927 = vmatpush.msra.mxu0 0.0
      %928 = vmatpush.msra.mxu0 0.0
      %929 = vmatpush.msra.mxu0 0.0
      %930 = vmatpush.msra.mxu0 0.0
      %931 = vmatpush.msra.mxu0 0.0
      %932 = vmatpush.msra.mxu0 0.0
      %933 = vmatpush.msra.mxu0 0.0
      %934 = vmatpush.msra.mxu0 %v509
      %935 = vmatmul.f32.gmra.mxu0 %v917
      %v936 = vpop.f32.mrf.mxu0
      %v937 = vadd.f32 0.0, %v936
      %938 = vdwg.mxu0
      %v939 = vadd.f32 %v849, %v937
      %v941 = vperm.slane %v510, 0
      %v943 = vadd.f32 %v939, %v941
      %v944 = vadd.f32 %v426, %v943
      %945 = vst.msk [vmem:[%s425] sm:$0xff] %vm429, %v944
      %p946 = scmp.lt.s32.totalorder %s23, 1
      %s947 = scalar_select %p946, %s23, 1
      %s948 = smul.addr %s947, 8
      %s949 = scalar_lea.vmem %s12, %s948
      // Predicated region
      $region69: #{decoder_forward.10} parent=67 // pred_check
        %p950 = pneg %p303
      $region70: #{decoder_forward.10} parent=67 // pred_check_branch
        %952 = sbr.rel (%p950) target = $region72
      $region71: #{decoder_forward.10} parent=67 // pred_region
        _
      $region72: #{decoder_forward.10} parent=67 // pred_fallthru
        _
    $region68: #{decoder_forward.10} parent=5 // pred_fallthru
      _
    %p953 = scmp.le.s32.totalorder 2, %s18
    // Predicated region
    $region73: #{decoder_forward.10} parent=5 // pred_check
      %p954 = pneg %p953
    $region74: #{decoder_forward.10} parent=5 // pred_check_branch
      %956 = sbr.rel (%p954) target = $region76
    $region75: #{decoder_forward.10} parent=5 // pred_region
      %s957 = ssub.s32 %s18, 2
      // Predicated region
      $region77: #{decoder_forward.10} parent=75 // pred_check
        %p958 = pneg %p309
      $region78: #{decoder_forward.10} parent=75 // pred_check_branch
        %960 = sbr.rel (%p958) target = $region80
      $region79: #{decoder_forward.10} parent=75 // pred_region
        %p961 = scmp.lt.s32.totalorder %s24, 1
        %s962 = scalar_select %p961, %s24, 1
        %s963 = smul.addr %s962, 8
        %s964 = scalar_lea.vmem %s12, %s963
      $region80: #{decoder_forward.10} parent=75 // pred_fallthru
        _
    $region76: #{decoder_forward.10} parent=5 // pred_fallthru
      _
  $region6: #{decoder_forward.10} parent=0 // loop_footer
    %s22 = sadd.s32 1, %s18
  $region7: #{decoder_forward.10} parent=0 // loop_footer_branch
    %17 = sbr.rel target = $region3
  $region8: #{decoder_forward.10} parent=0 // loop_exit
    _

// kernel: decoder_forward.7
$region0: #{decoder_forward.7}
  #allocation0 [shape = 'u32[]', space=smem, size = 0x4, offset = 0x4, fixed_abs, tag = 'smem constant byte address 0x4 - core index']
  #allocation1 [shape = 'u32[72,128]{1,0:T(1,128)}', space=vmem, size = 0x9000, scoped, tag = 'internal scratch']
  %s0 = inlined_call_operand.hbm [shape: f32[2,8,32], index: 0, kind: input, shape index: {}]
  %s1 = inlined_call_operand.vmem [shape: f32[2,8,8], index: 1, kind: input, shape index: {}]
  %s2 = inlined_call_operand.hbm [shape: f32[1,32], index: 2, kind: input, shape index: {}]
  %s3 = inlined_call_operand.hbm [shape: f32[1,32], index: 3, kind: input, shape index: {}]
  %s4 = inlined_call_operand.vmem [shape: f32[32,32], index: 4, kind: input, shape index: {}]
  %s5 = inlined_call_operand.hbm [shape: f32[1,32], index: 5, kind: input, shape index: {}]
  %s6 = inlined_call_operand.hbm [shape: f32[32,32], index: 6, kind: input, shape index: {}]
  %s7 = inlined_call_operand.hbm [shape: f32[1,32], index: 7, kind: input, shape index: {}]
  %s8 = inlined_call_operand.hbm [shape: f32[32,32], index: 8, kind: input, shape index: {}]
  %s9 = inlined_call_operand.hbm [shape: f32[1,32], index: 9, kind: input, shape index: {}]
  %s10 = inlined_call_operand.hbm [shape: f32[32,32], index: 10, kind: input, shape index: {}]
  %s11 = inlined_call_operand.hbm [shape: f32[1,32], index: 11, kind: input, shape index: {}]
  %s12 = inlined_call_operand.vmem [shape: f32[2,8,32], index: 12, kind: output, shape index: {}]
  %s13 = sld [smem:[#allocation0]]
  $region121: #{decoder_forward.7} parent=0
    _
  %s15 = ssub.s32 1, %s13
  %s16 = scalar_select 0, %s15, %s13
  $region1: #{decoder_forward.7} parent=0
    #allocation2 [shape = 'u8[8192]{0}', space=vmem, size = 0x2000, scoped, tag = 'input window, operand 0']
    #allocation3 [shape = 's32[2]{0}', space=sflag, size = 0x8, scoped, tag = 'scoped memory for decoder_forward.7']
    #allocation4 [shape = 'u8[512]{0}', space=vmem, size = 0x400, scoped, tag = 'input window, operand 2, single buffered']
    #allocation5 [shape = 's32[1]{0}', space=sflag, size = 0x4, scoped, tag = 'scoped memory for decoder_forward.7']
    #allocation6 [shape = 'u8[512]{0}', space=vmem, size = 0x400, scoped, tag = 'input window, operand 3, single buffered']
    #allocation7 [shape = 'u8[512]{0}', space=vmem, size = 0x400, scoped, tag = 'input window, operand 5, single buffered']
    #allocation8 [shape = 's32[1]{0}', space=sflag, size = 0x4, scoped, tag = 'scoped memory for decoder_forward.7']
    #allocation9 [shape = 'u8[16384]{0}', space=vmem, size = 0x4000, scoped, tag = 'input window, operand 6, single buffered']
    #allocation10 [shape = 'u8[512]{0}', space=vmem, size = 0x400, scoped, tag = 'input window, operand 7, single buffered']
    #allocation11 [shape = 's32[1]{0}', space=sflag, size = 0x4, scoped, tag = 'scoped memory for decoder_forward.7']
    #allocation12 [shape = 'u8[16384]{0}', space=vmem, size = 0x4000, scoped, tag = 'input window, operand 8, single buffered']
    #allocation13 [shape = 'u8[512]{0}', space=vmem, size = 0x400, scoped, tag = 'input window, operand 9, single buffered']
    #allocation14 [shape = 's32[1]{0}', space=sflag, size = 0x4, scoped, tag = 'scoped memory for decoder_forward.7']
    #allocation15 [shape = 'u8[16384]{0}', space=vmem, size = 0x4000, scoped, tag = 'input window, operand 10, single buffered']
    #allocation16 [shape = 'u8[512]{0}', space=vmem, size = 0x400, scoped, tag = 'input window, operand 11, single buffered']
    #allocation17 [shape = 's32[1]{0}', space=sflag, size = 0x4, scoped, tag = 'scoped memory for decoder_forward.7']
    %17 = vsyncpa [#allocation3], 0
    %s18 = scalar_lea.sflag [#allocation3], 1
    %19 = vsyncpa %s18, 0
    %20 = vsyncpa [#allocation5], 0
    %21 = vsyncpa [#allocation8], 0
    %22 = vsyncpa [#allocation11], 0
    %23 = vsyncpa [#allocation14], 0
    %24 = vsyncpa [#allocation17], 0
    loop: start=0, step=1, limit=4
    $region2: #{decoder_forward.7} parent=1 // loop_pre_header
      _
    $region3: #{decoder_forward.7} parent=1 // loop_header
      %s26 = sphi 0, %s30
      %p27 = scmp.ge.s32.totalorder %s26, 4
      %s36 = sphi 0, %s38
      %s39 = sphi 0, %s36
      %s40 = sphi 0, %s39
      %s56 = sphi 0, %s40
      %s62 = sphi 0, %s64
      %s65 = sphi 0, %s62
      %s66 = sphi 0, %s65
      %s82 = sphi 0, %s66
      %s86 = sphi 0, %s86
      %s88 = sphi 0, %s86
      %s89 = sphi 0, %s88
      %s103 = sphi 0, %s89
      %s107 = sphi 0, %s107
      %s109 = sphi 0, %s107
      %s110 = sphi 0, %s109
      %s124 = sphi 0, %s110
      %s128 = sphi 0, %s128
      %s130 = sphi 0, %s128
      %s131 = sphi 0, %s130
      %s145 = sphi 0, %s131
      %s149 = sphi 0, %s149
      %s151 = sphi 0, %s149
      %s152 = sphi 0, %s151
      %s166 = sphi 0, %s152
      %s170 = sphi 0, %s170
      %s172 = sphi 0, %s170
      %s173 = sphi 0, %s172
      %s187 = sphi 0, %s173
      %s191 = sphi 0, %s191
      %s193 = sphi 0, %s191
      %s194 = sphi 0, %s193
      %s208 = sphi 0, %s194
      %s212 = sphi 0, %s212
      %s214 = sphi 0, %s212
      %s215 = sphi 0, %s214
      %s229 = sphi 0, %s215
      %s233 = sphi 0, %s233
      %s235 = sphi 0, %s233
      %s236 = sphi 0, %s235
      %s250 = sphi 0, %s236
      %s254 = sphi 0, %s254
      %s256 = sphi 0, %s254
      %s257 = sphi 0, %s256
      %s271 = sphi 0, %s257
      %s275 = sphi 0, %s275
      %s277 = sphi 0, %s275
      %s278 = sphi 0, %s277
      %s292 = sphi 0, %s278
      %s298 = sphi 0, %s300
      %s301 = sphi 0, %s298
      %s302 = sphi 0, %s301
      %s318 = sphi 0, %s302
    $region4: #{decoder_forward.7} parent=1 // loop_header_branch
      %29 = sbr.rel (%p27) target = $region8
    $region5: #{decoder_forward.7} parent=1 // loop_body
      %s31 = ssub.s32 %s26, 1
      %s32 = ssub.s32 %s26, 2
      %s33 = sadd.s32 %s26, 1
      %s34 = ssub.s32 %s26, %s33
      %p35 = scmp.eq.s32.totalorder %s34, 0
      %s37 = sadd.s32 %s36, 1
      %s38 = scalar_select %p35, %s36, %s37
      %p41 = pneg %p35
      %p42 = scmp.eq.s32.totalorder %s26, 1
      %p43 = por %p41, %p42
      %p44 = scmp.ne.s32.totalorder %s36, %s39
      %p45 = scmp.eq.s32.totalorder %s26, 0
      %p46 = por %p44, %p45
      %p47 = scmp.ne.s32.totalorder %s36, %s39
      %p48 = scmp.eq.s32.totalorder %s31, 1
      %p49 = por %p47, %p48
      %p50 = scmp.ne.s32.totalorder %s39, %s40
      %p51 = scmp.eq.s32.totalorder %s31, 0
      %p52 = por %p50, %p51
      %p53 = scmp.ne.s32.totalorder %s39, %s40
      %p54 = scmp.eq.s32.totalorder %s32, 1
      %p55 = por %p53, %p54
      %p57 = scmp.ne.s32.totalorder %s40, %s56
      %p58 = scmp.eq.s32.totalorder %s32, 0
      %p59 = por %p57, %p58
      %s60 = ssub.s32 %s26, %s33
      %p61 = scmp.eq.s32.totalorder %s60, 0
      %s63 = sadd.s32 %s62, 1
      %s64 = scalar_select %p61, %s62, %s63
      %p67 = pneg %p61
      %p68 = scmp.eq.s32.totalorder %s26, 1
      %p69 = por %p67, %p68
      %p70 = scmp.ne.s32.totalorder %s62, %s65
      %p71 = scmp.eq.s32.totalorder %s26, 0
      %p72 = por %p70, %p71
      %p73 = scmp.ne.s32.totalorder %s62, %s65
      %p74 = scmp.eq.s32.totalorder %s31, 1
      %p75 = por %p73, %p74
      %p76 = scmp.ne.s32.totalorder %s65, %s66
      %p77 = scmp.eq.s32.totalorder %s31, 0
      %p78 = por %p76, %p77
      %p79 = scmp.ne.s32.totalorder %s65, %s66
      %p80 = scmp.eq.s32.totalorder %s32, 1
      %p81 = por %p79, %p80
      %p83 = scmp.ne.s32.totalorder %s66, %s82
      %p84 = scmp.eq.s32.totalorder %s32, 0
      %p85 = por %p83, %p84
      %s87 = sadd.s32 %s86, 1
      %p90 = scmp.eq.s32.totalorder %s26, 1
      %p91 = scmp.ne.s32.totalorder %s86, %s88
      %p92 = scmp.eq.s32.totalorder %s26, 0
      %p93 = por %p91, %p92
      %p94 = scmp.ne.s32.totalorder %s86, %s88
      %p95 = scmp.eq.s32.totalorder %s31, 1
      %p96 = por %p94, %p95
      %p97 = scmp.ne.s32.totalorder %s88, %s89
      %p98 = scmp.eq.s32.totalorder %s31, 0
      %p99 = por %p97, %p98
      %p100 = scmp.ne.s32.totalorder %s88, %s89
      %p101 = scmp.eq.s32.totalorder %s32, 1
      %p102 = por %p100, %p101
      %p104 = scmp.ne.s32.totalorder %s89, %s103
      %p105 = scmp.eq.s32.totalorder %s32, 0
      %p106 = por %p104, %p105
      %s108 = sadd.s32 %s107, 1
      %p111 = scmp.eq.s32.totalorder %s26, 1
      %p112 = scmp.ne.s32.totalorder %s107, %s109
      %p113 = scmp.eq.s32.totalorder %s26, 0
      %p114 = por %p112, %p113
      %p115 = scmp.ne.s32.totalorder %s107, %s109
      %p116 = scmp.eq.s32.totalorder %s31, 1
      %p117 = por %p115, %p116
      %p118 = scmp.ne.s32.totalorder %s109, %s110
      %p119 = scmp.eq.s32.totalorder %s31, 0
      %p120 = por %p118, %p119
      %p121 = scmp.ne.s32.totalorder %s109, %s110
      %p122 = scmp.eq.s32.totalorder %s32, 1
      %p123 = por %p121, %p122
      %p125 = scmp.ne.s32.totalorder %s110, %s124
      %p126 = scmp.eq.s32.totalorder %s32, 0
      %p127 = por %p125, %p126
      %s129 = sadd.s32 %s128, 1
      %p132 = scmp.eq.s32.totalorder %s26, 1
      %p133 = scmp.ne.s32.totalorder %s128, %s130
      %p134 = scmp.eq.s32.totalorder %s26, 0
      %p135 = por %p133, %p134
      %p136 = scmp.ne.s32.totalorder %s128, %s130
      %p137 = scmp.eq.s32.totalorder %s31, 1
      %p138 = por %p136, %p137
      %p139 = scmp.ne.s32.totalorder %s130, %s131
      %p140 = scmp.eq.s32.totalorder %s31, 0
      %p141 = por %p139, %p140
      %p142 = scmp.ne.s32.totalorder %s130, %s131
      %p143 = scmp.eq.s32.totalorder %s32, 1
      %p144 = por %p142, %p143
      %p146 = scmp.ne.s32.totalorder %s131, %s145
      %p147 = scmp.eq.s32.totalorder %s32, 0
      %p148 = por %p146, %p147
      %s150 = sadd.s32 %s149, 1
      %p153 = scmp.eq.s32.totalorder %s26, 1
      %p154 = scmp.ne.s32.totalorder %s149, %s151
      %p155 = scmp.eq.s32.totalorder %s26, 0
      %p156 = por %p154, %p155
      %p157 = scmp.ne.s32.totalorder %s149, %s151
      %p158 = scmp.eq.s32.totalorder %s31, 1
      %p159 = por %p157, %p158
      %p160 = scmp.ne.s32.totalorder %s151, %s152
      %p161 = scmp.eq.s32.totalorder %s31, 0
      %p162 = por %p160, %p161
      %p163 = scmp.ne.s32.totalorder %s151, %s152
      %p164 = scmp.eq.s32.totalorder %s32, 1
      %p165 = por %p163, %p164
      %p167 = scmp.ne.s32.totalorder %s152, %s166
      %p168 = scmp.eq.s32.totalorder %s32, 0
      %p169 = por %p167, %p168
      %s171 = sadd.s32 %s170, 1
      %p174 = scmp.eq.s32.totalorder %s26, 1
      %p175 = scmp.ne.s32.totalorder %s170, %s172
      %p176 = scmp.eq.s32.totalorder %s26, 0
      %p177 = por %p175, %p176
      %p178 = scmp.ne.s32.totalorder %s170, %s172
      %p179 = scmp.eq.s32.totalorder %s31, 1
      %p180 = por %p178, %p179
      %p181 = scmp.ne.s32.totalorder %s172, %s173
      %p182 = scmp.eq.s32.totalorder %s31, 0
      %p183 = por %p181, %p182
      %p184 = scmp.ne.s32.totalorder %s172, %s173
      %p185 = scmp.eq.s32.totalorder %s32, 1
      %p186 = por %p184, %p185
      %p188 = scmp.ne.s32.totalorder %s173, %s187
      %p189 = scmp.eq.s32.totalorder %s32, 0
      %p190 = por %p188, %p189
      %s192 = sadd.s32 %s191, 1
      %p195 = scmp.eq.s32.totalorder %s26, 1
      %p196 = scmp.ne.s32.totalorder %s191, %s193
      %p197 = scmp.eq.s32.totalorder %s26, 0
      %p198 = por %p196, %p197
      %p199 = scmp.ne.s32.totalorder %s191, %s193
      %p200 = scmp.eq.s32.totalorder %s31, 1
      %p201 = por %p199, %p200
      %p202 = scmp.ne.s32.totalorder %s193, %s194
      %p203 = scmp.eq.s32.totalorder %s31, 0
      %p204 = por %p202, %p203
      %p205 = scmp.ne.s32.totalorder %s193, %s194
      %p206 = scmp.eq.s32.totalorder %s32, 1
      %p207 = por %p205, %p206
      %p209 = scmp.ne.s32.totalorder %s194, %s208
      %p210 = scmp.eq.s32.totalorder %s32, 0
      %p211 = por %p209, %p210
      %s213 = sadd.s32 %s212, 1
      %p216 = scmp.eq.s32.totalorder %s26, 1
      %p217 = scmp.ne.s32.totalorder %s212, %s214
      %p218 = scmp.eq.s32.totalorder %s26, 0
      %p219 = por %p217, %p218
      %p220 = scmp.ne.s32.totalorder %s212, %s214
      %p221 = scmp.eq.s32.totalorder %s31, 1
      %p222 = por %p220, %p221
      %p223 = scmp.ne.s32.totalorder %s214, %s215
      %p224 = scmp.eq.s32.totalorder %s31, 0
      %p225 = por %p223, %p224
      %p226 = scmp.ne.s32.totalorder %s214, %s215
      %p227 = scmp.eq.s32.totalorder %s32, 1
      %p228 = por %p226, %p227
      %p230 = scmp.ne.s32.totalorder %s215, %s229
      %p231 = scmp.eq.s32.totalorder %s32, 0
      %p232 = por %p230, %p231
      %s234 = sadd.s32 %s233, 1
      %p237 = scmp.eq.s32.totalorder %s26, 1
      %p238 = scmp.ne.s32.totalorder %s233, %s235
      %p239 = scmp.eq.s32.totalorder %s26, 0
      %p240 = por %p238, %p239
      %p241 = scmp.ne.s32.totalorder %s233, %s235
      %p242 = scmp.eq.s32.totalorder %s31, 1
      %p243 = por %p241, %p242
      %p244 = scmp.ne.s32.totalorder %s235, %s236
      %p245 = scmp.eq.s32.totalorder %s31, 0
      %p246 = por %p244, %p245
      %p247 = scmp.ne.s32.totalorder %s235, %s236
      %p248 = scmp.eq.s32.totalorder %s32, 1
      %p249 = por %p247, %p248
      %p251 = scmp.ne.s32.totalorder %s236, %s250
      %p252 = scmp.eq.s32.totalorder %s32, 0
      %p253 = por %p251, %p252
      %s255 = sadd.s32 %s254, 1
      %p258 = scmp.eq.s32.totalorder %s26, 1
      %p259 = scmp.ne.s32.totalorder %s254, %s256
      %p260 = scmp.eq.s32.totalorder %s26, 0
      %p261 = por %p259, %p260
      %p262 = scmp.ne.s32.totalorder %s254, %s256
      %p263 = scmp.eq.s32.totalorder %s31, 1
      %p264 = por %p262, %p263
      %p265 = scmp.ne.s32.totalorder %s256, %s257
      %p266 = scmp.eq.s32.totalorder %s31, 0
      %p267 = por %p265, %p266
      %p268 = scmp.ne.s32.totalorder %s256, %s257
      %p269 = scmp.eq.s32.totalorder %s32, 1
      %p270 = por %p268, %p269
      %p272 = scmp.ne.s32.totalorder %s257, %s271
      %p273 = scmp.eq.s32.totalorder %s32, 0
      %p274 = por %p272, %p273
      %s276 = sadd.s32 %s275, 1
      %p279 = scmp.eq.s32.totalorder %s26, 1
      %p280 = scmp.ne.s32.totalorder %s275, %s277
      %p281 = scmp.eq.s32.totalorder %s26, 0
      %p282 = por %p280, %p281
      %p283 = scmp.ne.s32.totalorder %s275, %s277
      %p284 = scmp.eq.s32.totalorder %s31, 1
      %p285 = por %p283, %p284
      %p286 = scmp.ne.s32.totalorder %s277, %s278
      %p287 = scmp.eq.s32.totalorder %s31, 0
      %p288 = por %p286, %p287
      %p289 = scmp.ne.s32.totalorder %s277, %s278
      %p290 = scmp.eq.s32.totalorder %s32, 1
      %p291 = por %p289, %p290
      %p293 = scmp.ne.s32.totalorder %s278, %s292
      %p294 = scmp.eq.s32.totalorder %s32, 0
      %p295 = por %p293, %p294
      %s296 = ssub.s32 %s26, %s33
      %p297 = scmp.eq.s32.totalorder %s296, 0
      %s299 = sadd.s32 %s298, 1
      %s300 = scalar_select %p297, %s298, %s299
      %p303 = pneg %p297
      %p304 = scmp.eq.s32.totalorder %s26, 1
      %p305 = por %p303, %p304
      %p306 = scmp.ne.s32.totalorder %s298, %s301
      %p307 = scmp.eq.s32.totalorder %s26, 0
      %p308 = por %p306, %p307
      %p309 = scmp.ne.s32.totalorder %s298, %s301
      %p310 = scmp.eq.s32.totalorder %s31, 1
      %p311 = por %p309, %p310
      %p312 = scmp.ne.s32.totalorder %s301, %s302
      %p313 = scmp.eq.s32.totalorder %s31, 0
      %p314 = por %p312, %p313
      %p315 = scmp.ne.s32.totalorder %s301, %s302
      %p316 = scmp.eq.s32.totalorder %s32, 1
      %p317 = por %p315, %p316
      %p319 = scmp.ne.s32.totalorder %s302, %s318
      %p320 = scmp.eq.s32.totalorder %s32, 0
      %p321 = por %p319, %p320
      %p322 = scmp.le.s32.totalorder 1, %s26
      %p323 = scmp.lt.s32.totalorder %s26, 3
      %p324 = pnand %p322, %p323
      %p325 = pneg %p324
      // Predicated region
      $region9: #{decoder_forward.7} parent=5 // pred_check
        _
      $region10: #{decoder_forward.7} parent=5 // pred_check_branch
        %327 = sbr.rel (%p324) target = $region12
      $region11: #{decoder_forward.7} parent=5 // pred_region
        %s328 = ssub.s32 %s26, 1
        // Predicated region
        $region13: #{decoder_forward.7} parent=11 // pred_check
          %p329 = pneg %p99
        $region14: #{decoder_forward.7} parent=11 // pred_check_branch
          %331 = sbr.rel (%p329) target = $region16
        $region15: #{decoder_forward.7} parent=11 // pred_region
          %333 = vsyncadd [#allocation5], 0
          %s335 = sshll.u32 %s2, 4
          %s336 = int_to_ptr.hbm [resolvable:$true] %s335
          %s337 = sshll.u32 [#allocation4], 4
          %s338 = int_to_ptr.vmem [resolvable:$true] %s337
          %340 = dma.hbm_to_vmem [thread:$0]  %s336, 16, %s338, [#allocation5]
        $region16: #{decoder_forward.7} parent=11 // pred_fallthru
          _
        // Predicated region
        $region17: #{decoder_forward.7} parent=11 // pred_check
          %p341 = pneg %p120
        $region18: #{decoder_forward.7} parent=11 // pred_check_branch
          %343 = sbr.rel (%p341) target = $region20
        $region19: #{decoder_forward.7} parent=11 // pred_region
          %345 = vsyncadd [#allocation5], 0
          %s347 = sshll.u32 %s3, 4
          %s348 = int_to_ptr.hbm [resolvable:$true] %s347
          %s349 = sshll.u32 [#allocation6], 4
          %s350 = int_to_ptr.vmem [resolvable:$true] %s349
          %352 = dma.hbm_to_vmem [thread:$0]  %s348, 16, %s350, [#allocation5]
        $region20: #{decoder_forward.7} parent=11 // pred_fallthru
          _
        // Predicated region
        $region21: #{decoder_forward.7} parent=11 // pred_check
          %p353 = pneg %p141
        $region22: #{decoder_forward.7} parent=11 // pred_check_branch
          %355 = sbr.rel (%p353) target = $region24
        $region23: #{decoder_forward.7} parent=11 // pred_region
          _
        $region24: #{decoder_forward.7} parent=11 // pred_fallthru
          _
        // Predicated region
        $region25: #{decoder_forward.7} parent=11 // pred_check
          %p356 = pneg %p162
        $region26: #{decoder_forward.7} parent=11 // pred_check_branch
          %358 = sbr.rel (%p356) target = $region28
        $region27: #{decoder_forward.7} parent=11 // pred_region
          %360 = vsyncadd [#allocation8], 0
          %s362 = sshll.u32 %s5, 4
          %s363 = int_to_ptr.hbm [resolvable:$true] %s362
          %s364 = sshll.u32 [#allocation7], 4
          %s365 = int_to_ptr.vmem [resolvable:$true] %s364
          %367 = dma.hbm_to_vmem [thread:$0]  %s363, 16, %s365, [#allocation8]
        $region28: #{decoder_forward.7} parent=11 // pred_fallthru
          _
        // Predicated region
        $region29: #{decoder_forward.7} parent=11 // pred_check
          %p368 = pneg %p183
        $region30: #{decoder_forward.7} parent=11 // pred_check_branch
          %370 = sbr.rel (%p368) target = $region32
        $region31: #{decoder_forward.7} parent=11 // pred_region
          %372 = vsyncadd [#allocation8], 0
          %s373 = sshll.u32 %s6, 4
          %s374 = int_to_ptr.hbm [resolvable:$true] %s373
          %s375 = sshll.u32 [#allocation9], 4
          %s376 = int_to_ptr.vmem [resolvable:$true] %s375
          %381 = dma.hbm_to_vmem [thread:$0]  %s374, 512, %s376, [#allocation8], 128, 128, 8
        $region32: #{decoder_forward.7} parent=11 // pred_fallthru
          _
        // Predicated region
        $region33: #{decoder_forward.7} parent=11 // pred_check
          %p382 = pneg %p204
        $region34: #{decoder_forward.7} parent=11 // pred_check_branch
          %384 = sbr.rel (%p382) target = $region36
        $region35: #{decoder_forward.7} parent=11 // pred_region
          %386 = vsyncadd [#allocation11], 0
          %s388 = sshll.u32 %s7, 4
          %s389 = int_to_ptr.hbm [resolvable:$true] %s388
          %s390 = sshll.u32 [#allocation10], 4
          %s391 = int_to_ptr.vmem [resolvable:$true] %s390
          %393 = dma.hbm_to_vmem [thread:$0]  %s389, 16, %s391, [#allocation11]
        $region36: #{decoder_forward.7} parent=11 // pred_fallthru
          _
        // Predicated region
        $region37: #{decoder_forward.7} parent=11 // pred_check
          %p394 = pneg %p225
        $region38: #{decoder_forward.7} parent=11 // pred_check_branch
          %396 = sbr.rel (%p394) target = $region40
        $region39: #{decoder_forward.7} parent=11 // pred_region
          %398 = vsyncadd [#allocation11], 0
          %s399 = sshll.u32 %s8, 4
          %s400 = int_to_ptr.hbm [resolvable:$true] %s399
          %s401 = sshll.u32 [#allocation12], 4
          %s402 = int_to_ptr.vmem [resolvable:$true] %s401
          %407 = dma.hbm_to_vmem [thread:$0]  %s400, 512, %s402, [#allocation11], 128, 128, 8
        $region40: #{decoder_forward.7} parent=11 // pred_fallthru
          _
        // Predicated region
        $region41: #{decoder_forward.7} parent=11 // pred_check
          %p408 = pneg %p246
        $region42: #{decoder_forward.7} parent=11 // pred_check_branch
          %410 = sbr.rel (%p408) target = $region44
        $region43: #{decoder_forward.7} parent=11 // pred_region
          %412 = vsyncadd [#allocation14], 0
          %s414 = sshll.u32 %s9, 4
          %s415 = int_to_ptr.hbm [resolvable:$true] %s414
          %s416 = sshll.u32 [#allocation13], 4
          %s417 = int_to_ptr.vmem [resolvable:$true] %s416
          %419 = dma.hbm_to_vmem [thread:$0]  %s415, 16, %s417, [#allocation14]
        $region44: #{decoder_forward.7} parent=11 // pred_fallthru
          _
        // Predicated region
        $region45: #{decoder_forward.7} parent=11 // pred_check
          %p420 = pneg %p267
        $region46: #{decoder_forward.7} parent=11 // pred_check_branch
          %422 = sbr.rel (%p420) target = $region48
        $region47: #{decoder_forward.7} parent=11 // pred_region
          %424 = vsyncadd [#allocation14], 0
          %s425 = sshll.u32 %s10, 4
          %s426 = int_to_ptr.hbm [resolvable:$true] %s425
          %s427 = sshll.u32 [#allocation15], 4
          %s428 = int_to_ptr.vmem [resolvable:$true] %s427
          %433 = dma.hbm_to_vmem [thread:$0]  %s426, 512, %s428, [#allocation14], 128, 128, 8
        $region48: #{decoder_forward.7} parent=11 // pred_fallthru
          _
        // Predicated region
        $region49: #{decoder_forward.7} parent=11 // pred_check
          %p434 = pneg %p288
        $region50: #{decoder_forward.7} parent=11 // pred_check_branch
          %436 = sbr.rel (%p434) target = $region52
        $region51: #{decoder_forward.7} parent=11 // pred_region
          %438 = vsyncadd [#allocation17], 0
          %s440 = sshll.u32 %s11, 4
          %s441 = int_to_ptr.hbm [resolvable:$true] %s440
          %s442 = sshll.u32 [#allocation16], 4
          %s443 = int_to_ptr.vmem [resolvable:$true] %s442
          %445 = dma.hbm_to_vmem [thread:$0]  %s441, 16, %s443, [#allocation17]
        $region52: #{decoder_forward.7} parent=11 // pred_fallthru
          _
      $region12: #{decoder_forward.7} parent=5 // pred_fallthru
        _
      %p446 = scmp.lt.s32.totalorder %s26, 2
      // Predicated region
      $region53: #{decoder_forward.7} parent=5 // pred_check
        %p447 = pneg %p446
      $region54: #{decoder_forward.7} parent=5 // pred_check_branch
        %449 = sbr.rel (%p447) target = $region56
      $region55: #{decoder_forward.7} parent=5 // pred_region
        // Predicated region
        $region57: #{decoder_forward.7} parent=55 // pred_check
          %p450 = pneg %p46
        $region58: #{decoder_forward.7} parent=55 // pred_check_branch
          %452 = sbr.rel (%p450) target = $region60
        $region59: #{decoder_forward.7} parent=55 // pred_region
          %s453 = sand.u32 %s36, 1
          %s454 = scalar_lea.sflag [#allocation3], %s453
          %s455 = sand.u32 %s36, 1
          %s456 = smul.addr %s455, 8
          %s457 = scalar_lea.vmem [#allocation2], %s456
          %459 = vsyncadd %s454, 0
          %s460 = smul.addr %s26, 8
          %s461 = scalar_lea.hbm %s0, %s460
          %s463 = sshll.u32 %s461, 4
          %s464 = int_to_ptr.hbm [resolvable:$true] %s463
          %s465 = sshll.u32 %s457, 4
          %s466 = int_to_ptr.vmem [resolvable:$true] %s465
          %468 = dma.hbm_to_vmem [thread:$0]  %s464, 128, %s466, %s454
        $region60: #{decoder_forward.7} parent=55 // pred_fallthru
          _
        // Predicated region
        $region61: #{decoder_forward.7} parent=55 // pred_check
          %p469 = pneg %p72
        $region62: #{decoder_forward.7} parent=55 // pred_check_branch
          %471 = sbr.rel (%p469) target = $region64
        $region63: #{decoder_forward.7} parent=55 // pred_region
          %p472 = scmp.lt.s32.totalorder %s26, 1
          %s473 = scalar_select %p472, %s26, 1
          %s474 = smul.addr %s473, 8
          %s475 = scalar_lea.vmem %s1, %s474
        $region64: #{decoder_forward.7} parent=55 // pred_fallthru
          _
      $region56: #{decoder_forward.7} parent=5 // pred_fallthru
        _
      %p476 = scmp.le.s32.totalorder 1, %s26
      %p477 = scmp.lt.s32.totalorder %s26, 3
      %p478 = pnand %p476, %p477
      %p479 = pneg %p478
      // Predicated region
      $region65: #{decoder_forward.7} parent=5 // pred_check
        _
      $region66: #{decoder_forward.7} parent=5 // pred_check_branch
        %481 = sbr.rel (%p478) target = $region68
      $region67: #{decoder_forward.7} parent=5 // pred_region
        %s482 = ssub.s32 %s26, 1
        %s483 = sand.u32 %s39, 1
        %s484 = scalar_lea.sflag [#allocation3], %s483
        %s485 = sand.u32 %s39, 1
        %s486 = smul.addr %s485, 8
        %s487 = scalar_lea.vmem [#allocation2], %s486
        // Predicated region
        $region69: #{decoder_forward.7} parent=67 // pred_check
          %p488 = pneg %p52
        $region70: #{decoder_forward.7} parent=67 // pred_check_branch
          %490 = sbr.rel (%p488) target = $region72
        $region71: #{decoder_forward.7} parent=67 // pred_region
          %492 = dma.done %s484, 128
        $region72: #{decoder_forward.7} parent=67 // pred_fallthru
          _
        // Predicated region
        $region73: #{decoder_forward.7} parent=67 // pred_check
          %p493 = pneg %p99
        $region74: #{decoder_forward.7} parent=67 // pred_check_branch
          %495 = sbr.rel (%p493) target = $region76
        $region75: #{decoder_forward.7} parent=67 // pred_region
          %497 = dma.done [#allocation5], 16
        $region76: #{decoder_forward.7} parent=67 // pred_fallthru
          _
        // Predicated region
        $region77: #{decoder_forward.7} parent=67 // pred_check
          %p498 = pneg %p120
        $region78: #{decoder_forward.7} parent=67 // pred_check_branch
          %500 = sbr.rel (%p498) target = $region80
        $region79: #{decoder_forward.7} parent=67 // pred_region
          %502 = dma.done [#allocation5], 16
        $region80: #{decoder_forward.7} parent=67 // pred_fallthru
          _
        // Predicated region
        $region81: #{decoder_forward.7} parent=67 // pred_check
          %p503 = pneg %p162
        $region82: #{decoder_forward.7} parent=67 // pred_check_branch
          %505 = sbr.rel (%p503) target = $region84
        $region83: #{decoder_forward.7} parent=67 // pred_region
          %507 = dma.done [#allocation8], 16
        $region84: #{decoder_forward.7} parent=67 // pred_fallthru
          _
        // Predicated region
        $region85: #{decoder_forward.7} parent=67 // pred_check
          %p508 = pneg %p183
        $region86: #{decoder_forward.7} parent=67 // pred_check_branch
          %510 = sbr.rel (%p508) target = $region88
        $region87: #{decoder_forward.7} parent=67 // pred_region
          %512 = dma.done [#allocation8], 512
        $region88: #{decoder_forward.7} parent=67 // pred_fallthru
          _
        // Predicated region
        $region89: #{decoder_forward.7} parent=67 // pred_check
          %p513 = pneg %p204
        $region90: #{decoder_forward.7} parent=67 // pred_check_branch
          %515 = sbr.rel (%p513) target = $region92
        $region91: #{decoder_forward.7} parent=67 // pred_region
          %517 = dma.done [#allocation11], 16
        $region92: #{decoder_forward.7} parent=67 // pred_fallthru
          _
        // Predicated region
        $region93: #{decoder_forward.7} parent=67 // pred_check
          %p518 = pneg %p225
        $region94: #{decoder_forward.7} parent=67 // pred_check_branch
          %520 = sbr.rel (%p518) target = $region96
        $region95: #{decoder_forward.7} parent=67 // pred_region
          %522 = dma.done [#allocation11], 512
        $region96: #{decoder_forward.7} parent=67 // pred_fallthru
          _
        // Predicated region
        $region97: #{decoder_forward.7} parent=67 // pred_check
          %p523 = pneg %p246
        $region98: #{decoder_forward.7} parent=67 // pred_check_branch
          %525 = sbr.rel (%p523) target = $region100
        $region99: #{decoder_forward.7} parent=67 // pred_region
          %527 = dma.done [#allocation14], 16
        $region100: #{decoder_forward.7} parent=67 // pred_fallthru
          _
        // Predicated region
        $region101: #{decoder_forward.7} parent=67 // pred_check
          %p528 = pneg %p267
        $region102: #{decoder_forward.7} parent=67 // pred_check_branch
          %530 = sbr.rel (%p528) target = $region104
        $region103: #{decoder_forward.7} parent=67 // pred_region
          %532 = dma.done [#allocation14], 512
        $region104: #{decoder_forward.7} parent=67 // pred_fallthru
          _
        // Predicated region
        $region105: #{decoder_forward.7} parent=67 // pred_check
          %p533 = pneg %p288
        $region106: #{decoder_forward.7} parent=67 // pred_check_branch
          %535 = sbr.rel (%p533) target = $region108
        $region107: #{decoder_forward.7} parent=67 // pred_region
          %537 = dma.done [#allocation17], 16
        $region108: #{decoder_forward.7} parent=67 // pred_fallthru
          _
        %s538 = sand.u32 %s39, 1
        %s539 = scalar_lea.sflag [#allocation3], %s538
        %s540 = sand.u32 %s39, 1
        %s541 = smul.addr %s540, 8
        %s542 = scalar_lea.vmem [#allocation2], %s541
        %p543 = pneg %p52
        %p544 = pneg %p49
        %p545 = scmp.lt.s32.totalorder %s31, 1
        %s546 = scalar_select %p545, %s31, 1
        %s547 = smul.addr %s546, 8
        %s548 = scalar_lea.vmem %s1, %s547
        %p549 = pneg %p78
        %p550 = pneg %p75
        %p551 = pneg %p99
        %p552 = pneg %p96
        %p553 = pneg %p120
        %p554 = pneg %p117
        %p555 = pneg %p141
        %p556 = pneg %p138
        %p557 = pneg %p162
        %p558 = pneg %p159
        %p559 = pneg %p183
        %p560 = pneg %p180
        %p561 = pneg %p204
        %p562 = pneg %p201
        %p563 = pneg %p225
        %p564 = pneg %p222
        %p565 = pneg %p246
        %p566 = pneg %p243
        %p567 = pneg %p267
        %p568 = pneg %p264
        %p569 = pneg %p288
        %p570 = pneg %p285
        %p571 = pneg %p314
        %p572 = pneg %p311
        %p573 = scmp.lt.s32.totalorder %s31, 1
        %s574 = scalar_select %p573, %s31, 1
        %s575 = smul.addr %s574, 8
        %s576 = scalar_lea.vmem %s12, %s575
        %p577 = scmp.lt.s32.totalorder %s31, 1
        %s578 = scalar_select %p577, %s31, 1
        %s579 = smul.addr %s578, 8
        %s580 = scalar_lea.vmem %s1, %s579
        %p581 = scmp.lt.s32.totalorder %s31, 1
        %s582 = scalar_select %p581, %s31, 1
        %s583 = smul.addr %s582, 8
        %s584 = scalar_lea.vmem %s12, %s583
        %v585 = vld [vmem:[%s487] sm:$0xff]
        %v586 = vld [vmem:[#allocation4] sm:$0x1]
        %v587 = vld [vmem:[#allocation6] sm:$0x1]
        %vm588 = vcmask 261120
        %v589 = vsel %vm588, %v585, 0.0
        %590 = vadd.xlane.f32.xlu0 %v589
        %v591 = vpop.xlane.xlu0 %590
        %v592 = vrcp.pop 32.0
        %v593 = vmul.f32 32.0, %v592
        %v594 = vsub.f32 1.0, %v593
        %v595 = vmul.f32 %v592, %v594
        %v596 = vadd.f32 %v592, %v595
        %vm597 = vweird.f32 %v592
        %v598 = vsel %vm597, %v592, %v596
        %v599 = vmul.f32 %v591, %v598
        %v600 = vsub.f32 %v585, %v599
        %v601 = vmul.f32 %v600, %v600
        %v602 = vsel %vm588, %v601, 0.0
        %603 = vadd.xlane.f32.xlu0 %v602
        %v604 = vpop.xlane.xlu0 %603
        %v605 = vrcp.pop 31.0
        %v606 = vmul.f32 31.0, %v605
        %v607 = vsub.f32 1.0, %v606
        %v608 = vmul.f32 %v605, %v607
        %v609 = vadd.f32 %v605, %v608
        %vm610 = vweird.f32 %v605
        %v611 = vsel %vm610, %v605, %v609
        %v612 = vmul.f32 %v604, %v611
        %v614 = vperm.slane %v586, 0
        %v616 = vmul.f32 %v614, %v600
        %v617 = vrsqrt.pop %v612
        %v618 = vmul.f32 %v617, %v612
        %v619 = vmul.f32 %v618, %v617
        %v620 = vmul.f32 0.5, %v619
        %v621 = vsub.f32 1.5, %v620
        %v622 = vmul.f32 %v617, %v621
        %v623 = vmul.f32 %v612, %v622
        %vm624 = vcmp.eq.f32.partialorder %v612, inf
        %v625 = vsel %vm624, %v612, %v623
        %vm626 = vcmp.eq.f32.partialorder %v612, 0.0
        %v627 = vand.u32 %v612, 2147483648
        %v628 = vsel %vm626, %v627, %v625
        %v629 = vadd.f32 %v628, 1e-06
        %v630 = vrcp.pop %v629
        %v631 = vmul.f32 %v629, %v630
        %v632 = vsub.f32 1.0, %v631
        %v633 = vmul.f32 %v630, %v632
        %v634 = vadd.f32 %v630, %v633
        %vm635 = vweird.f32 %v629
        %vm636 = vweird.f32 %v630
        %vm637 = vmor %vm635, %vm636
        %v638 = vsel %vm637, %v630, %v634
        %v639 = vand.u32 2147483647, %v629
        %vm640 = vcmp.eq.f32.partialorder %v639, 8.507059e+37
        %v641 = vand.u32 %v629, 2147483648
        %v642 = vor.u32 1.1754944e-38, %v641
        %v643 = vsel %vm640, %v642, %v638
        %v644 = vmul.f32 %v616, %v643
        %v646 = vperm.slane %v587, 0
        %v648 = vadd.f32 %v644, %v646
        %v649 = vld [vmem:[%s580] sm:$0xff]
        %v650 = vld [vmem:[%s4] sm:$0xff]
        %v651 = vld [vmem:[%s4 + $0x8] sm:$0xff]
        %v652 = vld [vmem:[%s4 + $0x10] sm:$0xff]
        %v653 = vld [vmem:[%s4 + $0x18] sm:$0xff]
        %v654 = vld [vmem:[#allocation7] sm:$0x1]
        %v655 = vld [vmem:[#allocation9] sm:$0xff]
        %v656 = vld [vmem:[#allocation9 + $0x8] sm:$0xff]
        %v657 = vld [vmem:[#allocation9 + $0x10] sm:$0xff]
        %v658 = vld [vmem:[#allocation9 + $0x18] sm:$0xff]
        %v659 = vld [vmem:[#allocation10] sm:$0x1]
        %v660 = vld [vmem:[#allocation12] sm:$0xff]
        %v661 = vld [vmem:[#allocation12 + $0x8] sm:$0xff]
        %v662 = vld [vmem:[#allocation12 + $0x10] sm:$0xff]
        %v663 = vld [vmem:[#allocation12 + $0x18] sm:$0xff]
        %v664 = vld [vmem:[#allocation13] sm:$0x1]
        %v665 = vld [vmem:[#allocation15] sm:$0xff]
        %v666 = vld [vmem:[#allocation15 + $0x8] sm:$0xff]
        %v667 = vld [vmem:[#allocation15 + $0x10] sm:$0xff]
        %v668 = vld [vmem:[#allocation15 + $0x18] sm:$0xff]
        %v669 = vld [vmem:[#allocation16] sm:$0x1]
        %v671 = vperm.slane %v654, 0
        %v674 = vsel %vm588, %v648, 0
        %676 = vmatpush.msra.mxu0 0.0
        %677 = vmatpush.msra.mxu0 0.0
        %678 = vmatpush.msra.mxu0 0.0
        %679 = vmatpush.msra.mxu0 0.0
        %680 = vmatpush.msra.mxu0 0.0
        %681 = vmatpush.msra.mxu0 0.0
        %682 = vmatpush.msra.mxu0 0.0
        %683 = vmatpush.msra.mxu0 0.0
        %684 = vmatpush.msra.mxu0 0.0
        %685 = vmatpush.msra.mxu0 0.0
        %686 = vmatpush.msra.mxu0 0.0
        %687 = vmatpush.msra.mxu0 0.0
        %688 = vmatpush.msra.mxu0 %v653
        %689 = vmatpush.msra.mxu0 %v652
        %690 = vmatpush.msra.mxu0 %v651
        %691 = vmatpush.msra.mxu0 %v650
        %692 = vmatmul.f32.gmra.mxu0 %v674
        %v693 = vpop.f32.mrf.mxu0
        %v694 = vadd.f32 %v671, %v693
        %695 = vdwg.mxu0
        %v696 = vmul.f32 %v694, 0.35355338
        %v698 = vperm.slane %v659, 0
        %700 = vmatpush.msra.mxu0 0.0
        %701 = vmatpush.msra.mxu0 0.0
        %702 = vmatpush.msra.mxu0 0.0
        %703 = vmatpush.msra.mxu0 0.0
        %704 = vmatpush.msra.mxu0 0.0
        %705 = vmatpush.msra.mxu0 0.0
        %706 = vmatpush.msra.mxu0 0.0
        %707 = vmatpush.msra.mxu0 0.0
        %708 = vmatpush.msra.mxu0 0.0
        %709 = vmatpush.msra.mxu0 0.0
        %710 = vmatpush.msra.mxu0 0.0
        %711 = vmatpush.msra.mxu0 0.0
        %712 = vmatpush.msra.mxu0 %v658
        %713 = vmatpush.msra.mxu0 %v657
        %714 = vmatpush.msra.mxu0 %v656
        %715 = vmatpush.msra.mxu0 %v655
        %716 = vmatmul.f32.gmra.mxu0 %v674
        %v717 = vpop.f32.mrf.mxu0
        %v718 = vadd.f32 %v698, %v717
        %719 = vdwg.mxu0
        %v721 = vperm.slane %v664, 0
        %723 = vmatpush.msra.mxu0 0.0
        %724 = vmatpush.msra.mxu0 0.0
        %725 = vmatpush.msra.mxu0 0.0
        %726 = vmatpush.msra.mxu0 0.0
        %727 = vmatpush.msra.mxu0 0.0
        %728 = vmatpush.msra.mxu0 0.0
        %729 = vmatpush.msra.mxu0 0.0
        %730 = vmatpush.msra.mxu0 0.0
        %731 = vmatpush.msra.mxu0 0.0
        %732 = vmatpush.msra.mxu0 0.0
        %733 = vmatpush.msra.mxu0 0.0
        %734 = vmatpush.msra.mxu0 0.0
        %735 = vmatpush.msra.mxu0 %v663
        %736 = vmatpush.msra.mxu0 %v662
        %737 = vmatpush.msra.mxu0 %v661
        %738 = vmatpush.msra.mxu0 %v660
        %739 = vmatmul.f32.gmra.mxu0 %v674
        %v740 = vpop.f32.mrf.mxu0
        %v741 = vadd.f32 %v721, %v740
        %742 = vdwg.mxu0
        %vm743 = vcmask 64512
        %v745 = vsel %vm743, %v696, 0
        %v748 = vsel %vm743, %v718, 0
        %750 = vmatpush.xpose.msra.mxu0 0.0
        %751 = vmatpush.xpose.msra.mxu0 0.0
        %752 = vmatpush.xpose.msra.mxu0 0.0
        %753 = vmatpush.xpose.msra.mxu0 0.0
        %754 = vmatpush.xpose.msra.mxu0 0.0
        %755 = vmatpush.xpose.msra.mxu0 0.0
        %756 = vmatpush.xpose.msra.mxu0 0.0
        %757 = vmatpush.xpose.msra.mxu0 0.0
        %758 = vmatpush.xpose.msra.mxu0 0.0
        %759 = vmatpush.xpose.msra.mxu0 0.0
        %760 = vmatpush.xpose.msra.mxu0 0.0
        %761 = vmatpush.xpose.msra.mxu0 0.0
        %762 = vmatpush.xpose.msra.mxu0 0.0
        %763 = vmatpush.xpose.msra.mxu0 0.0
        %764 = vmatpush.xpose.msra.mxu0 0.0
        %765 = vmatpush.xpose.msra.mxu0 %v748
        %766 = vmatmul.f32.gmra.mxu0 %v745
        %v767 = vpop.f32.mrf.mxu0
        %v768 = vadd.f32 0.0, %v767
        %769 = vdwg.mxu0
        %vm770 = vcmp.ne.f32.partialorder %v649, 0.0
        %v771 = vsel %vm770, %v768, -1e+09
        %v772 = vsel %vm743, %v771, -inf
        %773 = vmax.xlane.f32.xlu0 %v772
        %v774 = vpop.xlane.xlu0 %773
        %v775 = vsub.f32 %v771, %v774
        %v776 = vmul.f32 %v775, 1.442695
        %v777 = vpow.pop %v776
        %v778 = vsel %vm743, %v777, 0.0
        %779 = vadd.xlane.f32.xlu0 %v778
        %v780 = vpop.xlane.xlu0 %779
        %v781 = vrcp.pop %v780
        %v782 = vmul.f32 %v777, %v781
        %v784 = vsel %vm743, %v782, 0
        %786 = vmatpush.msra.mxu0 0.0
        %787 = vmatpush.msra.mxu0 0.0
        %788 = vmatpush.msra.mxu0 0.0
        %789 = vmatpush.msra.mxu0 0.0
        %790 = vmatpush.msra.mxu0 0.0
        %791 = vmatpush.msra.mxu0 0.0
        %792 = vmatpush.msra.mxu0 0.0
        %793 = vmatpush.msra.mxu0 0.0
        %794 = vmatpush.msra.mxu0 0.0
        %795 = vmatpush.msra.mxu0 0.0
        %796 = vmatpush.msra.mxu0 0.0
        %797 = vmatpush.msra.mxu0 0.0
        %798 = vmatpush.msra.mxu0 0.0
        %799 = vmatpush.msra.mxu0 0.0
        %800 = vmatpush.msra.mxu0 0.0
        %801 = vmatpush.msra.mxu0 %v741
        %802 = vmatmul.f32.gmra.mxu0 %v784
        %v803 = vpop.f32.mrf.mxu0
        %v804 = vadd.f32 0.0, %v803
        %805 = vdwg.mxu0
        %806 = vrot.lane.b32.xlu0 %v696, 120
        %v807 = vpop.permute.xlu0 %806
        %808 = vrot.lane.b32.xlu0 %v718, 120
        %v809 = vpop.permute.xlu0 %808
        %v810 = vsel %vm743, %v807, 0
        %v812 = vsel %vm743, %v809, 0
        %814 = vmatpush.xpose.msra.mxu0 0.0
        %815 = vmatpush.xpose.msra.mxu0 0.0
        %816 = vmatpush.xpose.msra.mxu0 0.0
        %817 = vmatpush.xpose.msra.mxu0 0.0
        %818 = vmatpush.xpose.msra.mxu0 0.0
        %819 = vmatpush.xpose.msra.mxu0 0.0
        %820 = vmatpush.xpose.msra.mxu0 0.0
        %821 = vmatpush.xpose.msra.mxu0 0.0
        %822 = vmatpush.xpose.msra.mxu0 0.0
        %823 = vmatpush.xpose.msra.mxu0 0.0
        %824 = vmatpush.xpose.msra.mxu0 0.0
        %825 = vmatpush.xpose.msra.mxu0 0.0
        %826 = vmatpush.xpose.msra.mxu0 0.0
        %827 = vmatpush.xpose.msra.mxu0 0.0
        %828 = vmatpush.xpose.msra.mxu0 0.0
        %829 = vmatpush.xpose.msra.mxu0 %v812
        %830 = vmatmul.f32.gmra.mxu0 %v810
        %v831 = vpop.f32.mrf.mxu0
        %v832 = vadd.f32 0.0, %v831
        %833 = vdwg.mxu0
        %v834 = vsel %vm770, %v832, -1e+09
        %v835 = vsel %vm743, %v834, -inf
        %836 = vmax.xlane.f32.xlu0 %v835
        %v837 = vpop.xlane.xlu0 %836
        %v838 = vsub.f32 %v834, %v837
        %v839 = vmul.f32 %v838, 1.442695
        %v840 = vpow.pop %v839
        %v841 = vsel %vm743, %v840, 0.0
        %842 = vadd.xlane.f32.xlu0 %v841
        %v843 = vpop.xlane.xlu0 %842
        %v844 = vrcp.pop %v843
        %v845 = vmul.f32 %v840, %v844
        %847 = vrot.lane.b32.xlu0 %v741, 120
        %v848 = vpop.permute.xlu0 %847
        %v851 = vsel %vm743, %v845, 0
        %853 = vmatpush.msra.mxu0 0.0
        %854 = vmatpush.msra.mxu0 0.0
        %855 = vmatpush.msra.mxu0 0.0
        %856 = vmatpush.msra.mxu0 0.0
        %857 = vmatpush.msra.mxu0 0.0
        %858 = vmatpush.msra.mxu0 0.0
        %859 = vmatpush.msra.mxu0 0.0
        %860 = vmatpush.msra.mxu0 0.0
        %861 = vmatpush.msra.mxu0 0.0
        %862 = vmatpush.msra.mxu0 0.0
        %863 = vmatpush.msra.mxu0 0.0
        %864 = vmatpush.msra.mxu0 0.0
        %865 = vmatpush.msra.mxu0 0.0
        %866 = vmatpush.msra.mxu0 0.0
        %867 = vmatpush.msra.mxu0 0.0
        %868 = vmatpush.msra.mxu0 %v848
        %869 = vmatmul.f32.gmra.mxu0 %v851
        %v870 = vpop.f32.mrf.mxu0
        %v871 = vadd.f32 0.0, %v870
        %872 = vdwg.mxu0
        %v874 = vsel %vm743, %v871, 0
        %876 = vmatpush.msra.mxu0 0.0
        %877 = vmatpush.msra.mxu0 0.0
        %878 = vmatpush.msra.mxu0 0.0
        %879 = vmatpush.msra.mxu0 0.0
        %880 = vmatpush.msra.mxu0 0.0
        %881 = vmatpush.msra.mxu0 0.0
        %882 = vmatpush.msra.mxu0 0.0
        %883 = vmatpush.msra.mxu0 0.0
        %884 = vmatpush.msra.mxu0 0.0
        %885 = vmatpush.msra.mxu0 0.0
        %886 = vmatpush.msra.mxu0 0.0
        %887 = vmatpush.msra.mxu0 0.0
        %888 = vmatpush.msra.mxu0 0.0
        %889 = vmatpush.msra.mxu0 0.0
        %890 = vmatpush.msra.mxu0 0.0
        %891 = vmatpush.msra.mxu0 %v666
        %892 = vmatmul.f32.gmra.mxu0 %v874
        %v893 = vpop.f32.mrf.mxu0
        %v894 = vadd.f32 0.0, %v893
        %895 = vdwg.mxu0
        %v897 = vsel %vm743, %v804, 0
        %899 = vmatpush.msra.mxu0 0.0
        %900 = vmatpush.msra.mxu0 0.0
        %901 = vmatpush.msra.mxu0 0.0
        %902 = vmatpush.msra.mxu0 0.0
        %903 = vmatpush.msra.mxu0 0.0
        %904 = vmatpush.msra.mxu0 0.0
        %905 = vmatpush.msra.mxu0 0.0
        %906 = vmatpush.msra.mxu0 0.0
        %907 = vmatpush.msra.mxu0 0.0
        %908 = vmatpush.msra.mxu0 0.0
        %909 = vmatpush.msra.mxu0 0.0
        %910 = vmatpush.msra.mxu0 0.0
        %911 = vmatpush.msra.mxu0 0.0
        %912 = vmatpush.msra.mxu0 0.0
        %913 = vmatpush.msra.mxu0 0.0
        %914 = vmatpush.msra.mxu0 %v665
        %915 = vmatmul.f32.gmra.mxu0 %v897
        %v916 = vpop.f32.mrf.mxu0
        %v917 = vadd.f32 %v894, %v916
        %918 = vdwg.mxu0
        %919 = vrot.lane.b32.xlu0 %v696, 112
        %v920 = vpop.permute.xlu0 %919
        %921 = vrot.lane.b32.xlu0 %v718, 112
        %v922 = vpop.permute.xlu0 %921
        %v923 = vsel %vm743, %v920, 0
        %v925 = vsel %vm743, %v922, 0
        %927 = vmatpush.xpose.msra.mxu0 0.0
        %928 = vmatpush.xpose.msra.mxu0 0.0
        %929 = vmatpush.xpose.msra.mxu0 0.0
        %930 = vmatpush.xpose.msra.mxu0 0.0
        %931 = vmatpush.xpose.msra.mxu0 0.0
        %932 = vmatpush.xpose.msra.mxu0 0.0
        %933 = vmatpush.xpose.msra.mxu0 0.0
        %934 = vmatpush.xpose.msra.mxu0 0.0
        %935 = vmatpush.xpose.msra.mxu0 0.0
        %936 = vmatpush.xpose.msra.mxu0 0.0
        %937 = vmatpush.xpose.msra.mxu0 0.0
        %938 = vmatpush.xpose.msra.mxu0 0.0
        %939 = vmatpush.xpose.msra.mxu0 0.0
        %940 = vmatpush.xpose.msra.mxu0 0.0
        %941 = vmatpush.xpose.msra.mxu0 0.0
        %942 = vmatpush.xpose.msra.mxu0 %v925
        %943 = vmatmul.f32.gmra.mxu0 %v923
        %v944 = vpop.f32.mrf.mxu0
        %v945 = vadd.f32 0.0, %v944
        %946 = vdwg.mxu0
        %v947 = vsel %vm770, %v945, -1e+09
        %v948 = vsel %vm743, %v947, -inf
        %949 = vmax.xlane.f32.xlu0 %v948
        %v950 = vpop.xlane.xlu0 %949
        %v951 = vsub.f32 %v947, %v950
        %v952 = vmul.f32 %v951, 1.442695
        %v953 = vpow.pop %v952
        %v954 = vsel %vm743, %v953, 0.0
        %955 = vadd.xlane.f32.xlu0 %v954
        %v956 = vpop.xlane.xlu0 %955
        %v957 = vrcp.pop %v956
        %v958 = vmul.f32 %v953, %v957
        %959 = vrot.lane.b32.xlu0 %v741, 112
        %v960 = vpop.permute.xlu0 %959
        %v963 = vsel %vm743, %v958, 0
        %965 = vmatpush.msra.mxu0 0.0
        %966 = vmatpush.msra.mxu0 0.0
        %967 = vmatpush.msra.mxu0 0.0
        %968 = vmatpush.msra.mxu0 0.0
        %969 = vmatpush.msra.mxu0 0.0
        %970 = vmatpush.msra.mxu0 0.0
        %971 = vmatpush.msra.mxu0 0.0
        %972 = vmatpush.msra.mxu0 0.0
        %973 = vmatpush.msra.mxu0 0.0
        %974 = vmatpush.msra.mxu0 0.0
        %975 = vmatpush.msra.mxu0 0.0
        %976 = vmatpush.msra.mxu0 0.0
        %977 = vmatpush.msra.mxu0 0.0
        %978 = vmatpush.msra.mxu0 0.0
        %979 = vmatpush.msra.mxu0 0.0
        %980 = vmatpush.msra.mxu0 %v960
        %981 = vmatmul.f32.gmra.mxu0 %v963
        %v982 = vpop.f32.mrf.mxu0
        %v983 = vadd.f32 0.0, %v982
        %984 = vdwg.mxu0
        %v986 = vsel %vm743, %v983, 0
        %988 = vmatpush.msra.mxu0 0.0
        %989 = vmatpush.msra.mxu0 0.0
        %990 = vmatpush.msra.mxu0 0.0
        %991 = vmatpush.msra.mxu0 0.0
        %992 = vmatpush.msra.mxu0 0.0
        %993 = vmatpush.msra.mxu0 0.0
        %994 = vmatpush.msra.mxu0 0.0
        %995 = vmatpush.msra.mxu0 0.0
        %996 = vmatpush.msra.mxu0 0.0
        %997 = vmatpush.msra.mxu0 0.0
        %998 = vmatpush.msra.mxu0 0.0
        %999 = vmatpush.msra.mxu0 0.0
        %1000 = vmatpush.msra.mxu0 0.0
        %1001 = vmatpush.msra.mxu0 0.0
        %1002 = vmatpush.msra.mxu0 0.0
        %1003 = vmatpush.msra.mxu0 %v667
        %1004 = vmatmul.f32.gmra.mxu0 %v986
        %v1005 = vpop.f32.mrf.mxu0
        %v1006 = vadd.f32 0.0, %v1005
        %1007 = vdwg.mxu0
        %v1008 = vadd.f32 %v917, %v1006
        %1009 = vrot.lane.b32.xlu0 %v696, 104
        %v1010 = vpop.permute.xlu0 %1009
        %1011 = vrot.lane.b32.xlu0 %v718, 104
        %v1012 = vpop.permute.xlu0 %1011
        %v1013 = vsel %vm743, %v1010, 0
        %v1015 = vsel %vm743, %v1012, 0
        %1017 = vmatpush.xpose.msra.mxu0 0.0
        %1018 = vmatpush.xpose.msra.mxu0 0.0
        %1019 = vmatpush.xpose.msra.mxu0 0.0
        %1020 = vmatpush.xpose.msra.mxu0 0.0
        %1021 = vmatpush.xpose.msra.mxu0 0.0
        %1022 = vmatpush.xpose.msra.mxu0 0.0
        %1023 = vmatpush.xpose.msra.mxu0 0.0
        %1024 = vmatpush.xpose.msra.mxu0 0.0
        %1025 = vmatpush.xpose.msra.mxu0 0.0
        %1026 = vmatpush.xpose.msra.mxu0 0.0
        %1027 = vmatpush.xpose.msra.mxu0 0.0
        %1028 = vmatpush.xpose.msra.mxu0 0.0
        %1029 = vmatpush.xpose.msra.mxu0 0.0
        %1030 = vmatpush.xpose.msra.mxu0 0.0
        %1031 = vmatpush.xpose.msra.mxu0 0.0
        %1032 = vmatpush.xpose.msra.mxu0 %v1015
        %1033 = vmatmul.f32.gmra.mxu0 %v1013
        %v1034 = vpop.f32.mrf.mxu0
        %v1035 = vadd.f32 0.0, %v1034
        %1036 = vdwg.mxu0
        %v1037 = vsel %vm770, %v1035, -1e+09
        %v1038 = vsel %vm743, %v1037, -inf
        %1039 = vmax.xlane.f32.xlu0 %v1038
        %v1040 = vpop.xlane.xlu0 %1039
        %v1041 = vsub.f32 %v1037, %v1040
        %v1042 = vmul.f32 %v1041, 1.442695
        %v1043 = vpow.pop %v1042
        %v1044 = vsel %vm743, %v1043, 0.0
        %1045 = vadd.xlane.f32.xlu0 %v1044
        %v1046 = vpop.xlane.xlu0 %1045
        %v1047 = vrcp.pop %v1046
        %v1048 = vmul.f32 %v1043, %v1047
        %1049 = vrot.lane.b32.xlu0 %v741, 104
        %v1050 = vpop.permute.xlu0 %1049
        %v1053 = vsel %vm743, %v1048, 0
        %1055 = vmatpush.msra.mxu0 0.0
        %1056 = vmatpush.msra.mxu0 0.0
        %1057 = vmatpush.msra.mxu0 0.0
        %1058 = vmatpush.msra.mxu0 0.0
        %1059 = vmatpush.msra.mxu0 0.0
        %1060 = vmatpush.msra.mxu0 0.0
        %1061 = vmatpush.msra.mxu0 0.0
        %1062 = vmatpush.msra.mxu0 0.0
        %1063 = vmatpush.msra.mxu0 0.0
        %1064 = vmatpush.msra.mxu0 0.0
        %1065 = vmatpush.msra.mxu0 0.0
        %1066 = vmatpush.msra.mxu0 0.0
        %1067 = vmatpush.msra.mxu0 0.0
        %1068 = vmatpush.msra.mxu0 0.0
        %1069 = vmatpush.msra.mxu0 0.0
        %1070 = vmatpush.msra.mxu0 %v1050
        %1071 = vmatmul.f32.gmra.mxu0 %v1053
        %v1072 = vpop.f32.mrf.mxu0
        %v1073 = vadd.f32 0.0, %v1072
        %1074 = vdwg.mxu0
        %v1076 = vsel %vm743, %v1073, 0
        %1078 = vmatpush.msra.mxu0 0.0
        %1079 = vmatpush.msra.mxu0 0.0
        %1080 = vmatpush.msra.mxu0 0.0
        %1081 = vmatpush.msra.mxu0 0.0
        %1082 = vmatpush.msra.mxu0 0.0
        %1083 = vmatpush.msra.mxu0 0.0
        %1084 = vmatpush.msra.mxu0 0.0
        %1085 = vmatpush.msra.mxu0 0.0
        %1086 = vmatpush.msra.mxu0 0.0
        %1087 = vmatpush.msra.mxu0 0.0
        %1088 = vmatpush.msra.mxu0 0.0
        %1089 = vmatpush.msra.mxu0 0.0
        %1090 = vmatpush.msra.mxu0 0.0
        %1091 = vmatpush.msra.mxu0 0.0
        %1092 = vmatpush.msra.mxu0 0.0
        %1093 = vmatpush.msra.mxu0 %v668
        %1094 = vmatmul.f32.gmra.mxu0 %v1076
        %v1095 = vpop.f32.mrf.mxu0
        %v1096 = vadd.f32 0.0, %v1095
        %1097 = vdwg.mxu0
        %v1098 = vadd.f32 %v1008, %v1096
        %v1100 = vperm.slane %v669, 0
        %v1102 = vadd.f32 %v1098, %v1100
        %v1103 = vadd.f32 %v585, %v1102
        %1104 = vst.msk [vmem:[%s584] sm:$0xff] %vm588, %v1103
        %p1105 = scmp.lt.s32.totalorder %s31, 1
        %s1106 = scalar_select %p1105, %s31, 1
        %s1107 = smul.addr %s1106, 8
        %s1108 = scalar_lea.vmem %s12, %s1107
        // Predicated region
        $region109: #{decoder_forward.7} parent=67 // pred_check
          %p1109 = pneg %p311
        $region110: #{decoder_forward.7} parent=67 // pred_check_branch
          %1111 = sbr.rel (%p1109) target = $region112
        $region111: #{decoder_forward.7} parent=67 // pred_region
          _
        $region112: #{decoder_forward.7} parent=67 // pred_fallthru
          _
      $region68: #{decoder_forward.7} parent=5 // pred_fallthru
        _
      %p1112 = scmp.le.s32.totalorder 2, %s26
      // Predicated region
      $region113: #{decoder_forward.7} parent=5 // pred_check
        %p1113 = pneg %p1112
      $region114: #{decoder_forward.7} parent=5 // pred_check_branch
        %1115 = sbr.rel (%p1113) target = $region116
      $region115: #{decoder_forward.7} parent=5 // pred_region
        %s1116 = ssub.s32 %s26, 2
        // Predicated region
        $region117: #{decoder_forward.7} parent=115 // pred_check
          %p1117 = pneg %p317
        $region118: #{decoder_forward.7} parent=115 // pred_check_branch
          %1119 = sbr.rel (%p1117) target = $region120
        $region119: #{decoder_forward.7} parent=115 // pred_region
          %p1120 = scmp.lt.s32.totalorder %s32, 1
          %s1121 = scalar_select %p1120, %s32, 1
          %s1122 = smul.addr %s1121, 8
          %s1123 = scalar_lea.vmem %s12, %s1122
        $region120: #{decoder_forward.7} parent=115 // pred_fallthru
          _
      $region116: #{decoder_forward.7} parent=5 // pred_fallthru
        _
    $region6: #{decoder_forward.7} parent=1 // loop_footer
      %s30 = sadd.s32 1, %s26
    $region7: #{decoder_forward.7} parent=1 // loop_footer_branch
      %25 = sbr.rel target = $region3
    $region8: #{decoder_forward.7} parent=1 // loop_exit
      _
    %1124 = vsyncpa [#allocation3], 1
    %s1125 = scalar_lea.sflag [#allocation3], 1
    %1126 = vsyncpa %s1125, 1
    %1127 = vsyncpa [#allocation5], 1
    %1128 = vsyncpa [#allocation8], 1
    %1129 = vsyncpa [#allocation11], 1
    %1130 = vsyncpa [#allocation14], 1
    %1131 = vsyncpa [#allocation17], 1

// kernel: decoder_forward.13
$region0: #{decoder_forward.13}
  #allocation0 [shape = 'u32[]', space=smem, size = 0x4, offset = 0x4, fixed_abs, tag = 'smem constant byte address 0x4 - core index']
  #allocation1 [shape = 'u32[72,128]{1,0:T(1,128)}', space=vmem, size = 0x9000, scoped, tag = 'internal scratch']
  %s0 = inlined_call_operand.vmem [shape: f32[16,32], index: 0, kind: input, shape index: {}]
  %s1 = inlined_call_operand.vmem [shape: f32[1,32], index: 1, kind: input, shape index: {}]
  %s2 = inlined_call_operand.vmem [shape: f32[1,32], index: 2, kind: input, shape index: {}]
  %s3 = inlined_call_operand.hbm [shape: f32[16,32], index: 3, kind: output, shape index: {}]
  %s4 = sld [smem:[#allocation0]]
  $region22: #{decoder_forward.13} parent=0
    _
  %s6 = ssub.s32 1, %s4
  %s7 = scalar_select 0, %s6, %s4
  $region1: #{decoder_forward.13} parent=0
    #allocation2 [shape = 'u8[8192]{0}', space=vmem, size = 0x2000, scoped, tag = 'output window, operand 0, single buffered']
    #allocation3 [shape = 's32[1]{0}', space=sflag, size = 0x4, scoped, tag = 'scoped memory for decoder_forward.13']
    %8 = vsyncpa [#allocation3], 0
    // Predicated region
    $region2: #{decoder_forward.13} parent=1 // pred_check
      _
    $region3: #{decoder_forward.13} parent=1 // pred_check_branch
      %10 = sbr.rel (0) target = $region5
    $region4: #{decoder_forward.13} parent=1 // pred_region
      _
    $region5: #{decoder_forward.13} parent=1 // pred_fallthru
      _
    // Predicated region
    $region6: #{decoder_forward.13} parent=1 // pred_check
      _
    $region7: #{decoder_forward.13} parent=1 // pred_check_branch
      %12 = sbr.rel (0) target = $region9
    $region8: #{decoder_forward.13} parent=1 // pred_region
      _
    $region9: #{decoder_forward.13} parent=1 // pred_fallthru
      _
    // Predicated region
    $region10: #{decoder_forward.13} parent=1 // pred_check
      _
    $region11: #{decoder_forward.13} parent=1 // pred_check_branch
      %14 = sbr.rel (0) target = $region13
    $region12: #{decoder_forward.13} parent=1 // pred_region
      _
    $region13: #{decoder_forward.13} parent=1 // pred_fallthru
      _
    %v15 = vld [vmem:[%s0] sm:$0xff]
    %v16 = vld [vmem:[%s0 + $0x8] sm:$0xff]
    %v17 = vld [vmem:[%s1] sm:$0x1]
    %v18 = vld [vmem:[%s2] sm:$0x1]
    %vm19 = vcmask 261120
    %v20 = vsel %vm19, %v15, 0.0
    %21 = vadd.xlane.f32.xlu0 %v20
    %v22 = vpop.xlane.xlu0 %21
    %v23 = vsel %vm19, %v16, 0.0
    %24 = vadd.xlane.f32.xlu0 %v23
    %v25 = vpop.xlane.xlu0 %24
    %v26 = vrcp.pop 32.0
    %v27 = vmul.f32 32.0, %v26
    %v28 = vsub.f32 1.0, %v27
    %v29 = vmul.f32 %v26, %v28
    %v30 = vadd.f32 %v26, %v29
    %vm31 = vweird.f32 %v26
    %v32 = vsel %vm31, %v26, %v30
    %v33 = vmul.f32 %v22, %v32
    %v34 = vmul.f32 %v25, %v32
    %v35 = vsub.f32 %v15, %v33
    %v36 = vsub.f32 %v16, %v34
    %v37 = vmul.f32 %v35, %v35
    %v38 = vmul.f32 %v36, %v36
    %v39 = vsel %vm19, %v37, 0.0
    %40 = vadd.xlane.f32.xlu0 %v39
    %v41 = vpop.xlane.xlu0 %40
    %v42 = vsel %vm19, %v38, 0.0
    %43 = vadd.xlane.f32.xlu0 %v42
    %v44 = vpop.xlane.xlu0 %43
    %v45 = vrcp.pop 31.0
    %v46 = vmul.f32 31.0, %v45
    %v47 = vsub.f32 1.0, %v46
    %v48 = vmul.f32 %v45, %v47
    %v49 = vadd.f32 %v45, %v48
    %vm50 = vweird.f32 %v45
    %v51 = vsel %vm50, %v45, %v49
    %v52 = vmul.f32 %v41, %v51
    %v53 = vmul.f32 %v44, %v51
    %v55 = vperm.slane %v17, 0
    %v57 = vmul.f32 %v55, %v35
    %v58 = vmul.f32 %v55, %v36
    %v59 = vrsqrt.pop %v52
    %v60 = vmul.f32 %v59, %v52
    %v61 = vmul.f32 %v60, %v59
    %v62 = vmul.f32 0.5, %v61
    %v63 = vsub.f32 1.5, %v62
    %v64 = vmul.f32 %v59, %v63
    %v65 = vmul.f32 %v52, %v64
    %vm66 = vcmp.eq.f32.partialorder %v52, inf
    %v67 = vsel %vm66, %v52, %v65
    %vm68 = vcmp.eq.f32.partialorder %v52, 0.0
    %v69 = vand.u32 %v52, 2147483648
    %v70 = vsel %vm68, %v69, %v67
    %v71 = vrsqrt.pop %v53
    %v72 = vmul.f32 %v71, %v53
    %v73 = vmul.f32 %v72, %v71
    %v74 = vmul.f32 0.5, %v73
    %v75 = vsub.f32 1.5, %v74
    %v76 = vmul.f32 %v71, %v75
    %v77 = vmul.f32 %v53, %v76
    %vm78 = vcmp.eq.f32.partialorder %v53, inf
    %v79 = vsel %vm78, %v53, %v77
    %vm80 = vcmp.eq.f32.partialorder %v53, 0.0
    %v81 = vand.u32 %v53, 2147483648
    %v82 = vsel %vm80, %v81, %v79
    %v83 = vadd.f32 %v70, 1e-06
    %v84 = vadd.f32 %v82, 1e-06
    %v85 = vrcp.pop %v83
    %v86 = vmul.f32 %v83, %v85
    %v87 = vsub.f32 1.0, %v86
    %v88 = vmul.f32 %v85, %v87
    %v89 = vadd.f32 %v85, %v88
    %vm90 = vweird.f32 %v83
    %vm91 = vweird.f32 %v85
    %vm92 = vmor %vm90, %vm91
    %v93 = vsel %vm92, %v85, %v89
    %v94 = vand.u32 2147483647, %v83
    %vm95 = vcmp.eq.f32.partialorder %v94, 8.507059e+37
    %v96 = vand.u32 %v83, 2147483648
    %v97 = vor.u32 1.1754944e-38, %v96
    %v98 = vsel %vm95, %v97, %v93
    %v99 = vmul.f32 %v57, %v98
    %v100 = vrcp.pop %v84
    %v101 = vmul.f32 %v84, %v100
    %v102 = vsub.f32 1.0, %v101
    %v103 = vmul.f32 %v100, %v102
    %v104 = vadd.f32 %v100, %v103
    %vm105 = vweird.f32 %v84
    %vm106 = vweird.f32 %v100
    %vm107 = vmor %vm105, %vm106
    %v108 = vsel %vm107, %v100, %v104
    %v109 = vand.u32 2147483647, %v84
    %vm110 = vcmp.eq.f32.partialorder %v109, 8.507059e+37
    %v111 = vand.u32 %v84, 2147483648
    %v112 = vor.u32 1.1754944e-38, %v111
    %v113 = vsel %vm110, %v112, %v108
    %v114 = vmul.f32 %v58, %v113
    %v116 = vperm.slane %v18, 0
    %v118 = vadd.f32 %v99, %v116
    %v119 = vadd.f32 %v114, %v116
    %120 = vst.msk [vmem:[#allocation2] sm:$0xff] %vm19, %v118
    %121 = vst.msk [vmem:[#allocation2 + $0x8] sm:$0xff] %vm19, %v119
    // Predicated region
    $region14: #{decoder_forward.13} parent=1 // pred_check
      _
    $region15: #{decoder_forward.13} parent=1 // pred_check_branch
      %123 = sbr.rel (0) target = $region17
    $region16: #{decoder_forward.13} parent=1 // pred_region
      %125 = vsyncadd [#allocation3], 0
      %s126 = sshll.u32 [#allocation2], 4
      %s127 = int_to_ptr.vmem [resolvable:$true] %s126
      %s128 = sshll.u32 %s3, 4
      %s129 = int_to_ptr.hbm [resolvable:$true] %s128
      %134 = dma.vmem_to_hbm [thread:$0]  %s127, 256, %s129, [#allocation3], 128, 128, 8
    $region17: #{decoder_forward.13} parent=1 // pred_fallthru
      _
    // Predicated region
    $region18: #{decoder_forward.13} parent=1 // pred_check
      _
    $region19: #{decoder_forward.13} parent=1 // pred_check_branch
      %136 = sbr.rel (0) target = $region21
    $region20: #{decoder_forward.13} parent=1 // pred_region
      %138 = dma.done [#allocation3], 256
    $region21: #{decoder_forward.13} parent=1 // pred_fallthru
      _
    %139 = vsyncpa [#allocation3], 1

// kernel: decoder_forward.11
$region0: #{decoder_forward.11}
  #allocation0 [shape = 'u32[]', space=smem, size = 0x4, offset = 0x4, fixed_abs, tag = 'smem constant byte address 0x4 - core index']
  #allocation1 [shape = 'u32[72,128]{1,0:T(1,128)}', space=vmem, size = 0x9000, scoped, tag = 'internal scratch']
  %s0 = inlined_call_operand.vmem [shape: f32[2,8,32], index: 0, kind: input, shape index: {}]
  %s1 = inlined_call_operand.vmem [shape: f32[2,8,32], index: 1, kind: input, shape index: {}]
  %s2 = inlined_call_operand.vmem [shape: f32[2,1,8], index: 2, kind: input, shape index: {}]
  %s3 = inlined_call_operand.vmem [shape: f32[1,32], index: 3, kind: input, shape index: {}]
  %s4 = inlined_call_operand.vmem [shape: f32[1,32], index: 4, kind: input, shape index: {}]
  %s5 = inlined_call_operand.vmem [shape: f32[32,32], index: 5, kind: input, shape index: {}]
  %s6 = inlined_call_operand.vmem [shape: f32[1,32], index: 6, kind: input, shape index: {}]
  %s7 = inlined_call_operand.vmem [shape: f32[32,32], index: 7, kind: input, shape index: {}]
  %s8 = inlined_call_operand.vmem [shape: f32[1,32], index: 8, kind: input, shape index: {}]
  %s9 = inlined_call_operand.hbm [shape: f32[32,32], index: 9, kind: input, shape index: {}]
  %s10 = inlined_call_operand.vmem [shape: f32[1,32], index: 10, kind: input, shape index: {}]
  %s11 = inlined_call_operand.hbm [shape: f32[32,32], index: 11, kind: input, shape index: {}]
  %s12 = inlined_call_operand.vmem [shape: f32[1,32], index: 12, kind: input, shape index: {}]
  %s13 = inlined_call_operand.vmem [shape: f32[2,8,32], index: 13, kind: output, shape index: {}]
  %s14 = sld [smem:[#allocation0]]
  $region93: #{decoder_forward.11} parent=0
    _
  %s16 = ssub.s32 1, %s14
  %s17 = scalar_select 0, %s16, %s14
  $region1: #{decoder_forward.11} parent=0
    #allocation2 [shape = 'u8[16384]{0}', space=vmem, size = 0x4000, scoped, tag = 'input window, operand 9, single buffered']
    #allocation3 [shape = 's32[2]{0}', space=sflag, size = 0x8, scoped, tag = 'scoped memory for decoder_forward.11']
    #allocation4 [shape = 'u8[16384]{0}', space=vmem, size = 0x4000, scoped, tag = 'input window, operand 11, single buffered']
    #allocation5 [shape = 's32[1]{0}', space=sflag, size = 0x4, scoped, tag = 'scoped memory for decoder_forward.11']
    %18 = vsyncpa [#allocation3], 0
    %19 = vsyncpa [#allocation5], 0
    loop: start=0, step=1, limit=4
    $region2: #{decoder_forward.11} parent=1 // loop_pre_header
      _
    $region3: #{decoder_forward.11} parent=1 // loop_header
      %s21 = sphi 0, %s25
      %p22 = scmp.ge.s32.totalorder %s21, 4
      %s31 = sphi 0, %s33
      %s34 = sphi 0, %s31
      %s35 = sphi 0, %s34
      %s51 = sphi 0, %s35
      %s57 = sphi 0, %s59
      %s60 = sphi 0, %s57
      %s61 = sphi 0, %s60
      %s77 = sphi 0, %s61
      %s83 = sphi 0, %s85
      %s86 = sphi 0, %s83
      %s87 = sphi 0, %s86
      %s103 = sphi 0, %s87
      %s107 = sphi 0, %s107
      %s109 = sphi 0, %s107
      %s110 = sphi 0, %s109
      %s124 = sphi 0, %s110
      %s128 = sphi 0, %s128
      %s130 = sphi 0, %s128
      %s131 = sphi 0, %s130
      %s145 = sphi 0, %s131
      %s149 = sphi 0, %s149
      %s151 = sphi 0, %s149
      %s152 = sphi 0, %s151
      %s166 = sphi 0, %s152
      %s170 = sphi 0, %s170
      %s172 = sphi 0, %s170
      %s173 = sphi 0, %s172
      %s187 = sphi 0, %s173
      %s191 = sphi 0, %s191
      %s193 = sphi 0, %s191
      %s194 = sphi 0, %s193
      %s208 = sphi 0, %s194
      %s212 = sphi 0, %s212
      %s214 = sphi 0, %s212
      %s215 = sphi 0, %s214
      %s229 = sphi 0, %s215
      %s233 = sphi 0, %s233
      %s235 = sphi 0, %s233
      %s236 = sphi 0, %s235
      %s250 = sphi 0, %s236
      %s254 = sphi 0, %s254
      %s256 = sphi 0, %s254
      %s257 = sphi 0, %s256
      %s271 = sphi 0, %s257
      %s275 = sphi 0, %s275
      %s277 = sphi 0, %s275
      %s278 = sphi 0, %s277
      %s292 = sphi 0, %s278
      %s296 = sphi 0, %s296
      %s298 = sphi 0, %s296
      %s299 = sphi 0, %s298
      %s313 = sphi 0, %s299
      %s319 = sphi 0, %s321
      %s322 = sphi 0, %s319
      %s323 = sphi 0, %s322
      %s339 = sphi 0, %s323
    $region4: #{decoder_forward.11} parent=1 // loop_header_branch
      %24 = sbr.rel (%p22) target = $region8
    $region5: #{decoder_forward.11} parent=1 // loop_body
      %s26 = ssub.s32 %s21, 1
      %s27 = ssub.s32 %s21, 2
      %s28 = sadd.s32 %s21, 1
      %s29 = ssub.s32 %s21, %s28
      %p30 = scmp.eq.s32.totalorder %s29, 0
      %s32 = sadd.s32 %s31, 1
      %s33 = scalar_select %p30, %s31, %s32
      %p36 = pneg %p30
      %p37 = scmp.eq.s32.totalorder %s21, 1
      %p38 = por %p36, %p37
      %p39 = scmp.ne.s32.totalorder %s31, %s34
      %p40 = scmp.eq.s32.totalorder %s21, 0
      %p41 = por %p39, %p40
      %p42 = scmp.ne.s32.totalorder %s31, %s34
      %p43 = scmp.eq.s32.totalorder %s26, 1
      %p44 = por %p42, %p43
      %p45 = scmp.ne.s32.totalorder %s34, %s35
      %p46 = scmp.eq.s32.totalorder %s26, 0
      %p47 = por %p45, %p46
      %p48 = scmp.ne.s32.totalorder %s34, %s35
      %p49 = scmp.eq.s32.totalorder %s27, 1
      %p50 = por %p48, %p49
      %p52 = scmp.ne.s32.totalorder %s35, %s51
      %p53 = scmp.eq.s32.totalorder %s27, 0
      %p54 = por %p52, %p53
      %s55 = ssub.s32 %s21, %s28
      %p56 = scmp.eq.s32.totalorder %s55, 0
      %s58 = sadd.s32 %s57, 1
      %s59 = scalar_select %p56, %s57, %s58
      %p62 = pneg %p56
      %p63 = scmp.eq.s32.totalorder %s21, 1
      %p64 = por %p62, %p63
      %p65 = scmp.ne.s32.totalorder %s57, %s60
      %p66 = scmp.eq.s32.totalorder %s21, 0
      %p67 = por %p65, %p66
      %p68 = scmp.ne.s32.totalorder %s57, %s60
      %p69 = scmp.eq.s32.totalorder %s26, 1
      %p70 = por %p68, %p69
      %p71 = scmp.ne.s32.totalorder %s60, %s61
      %p72 = scmp.eq.s32.totalorder %s26, 0
      %p73 = por %p71, %p72
      %p74 = scmp.ne.s32.totalorder %s60, %s61
      %p75 = scmp.eq.s32.totalorder %s27, 1
      %p76 = por %p74, %p75
      %p78 = scmp.ne.s32.totalorder %s61, %s77
      %p79 = scmp.eq.s32.totalorder %s27, 0
      %p80 = por %p78, %p79
      %s81 = ssub.s32 %s21, %s28
      %p82 = scmp.eq.s32.totalorder %s81, 0
      %s84 = sadd.s32 %s83, 1
      %s85 = scalar_select %p82, %s83, %s84
      %p88 = pneg %p82
      %p89 = scmp.eq.s32.totalorder %s21, 1
      %p90 = por %p88, %p89
      %p91 = scmp.ne.s32.totalorder %s83, %s86
      %p92 = scmp.eq.s32.totalorder %s21, 0
      %p93 = por %p91, %p92
      %p94 = scmp.ne.s32.totalorder %s83, %s86
      %p95 = scmp.eq.s32.totalorder %s26, 1
      %p96 = por %p94, %p95
      %p97 = scmp.ne.s32.totalorder %s86, %s87
      %p98 = scmp.eq.s32.totalorder %s26, 0
      %p99 = por %p97, %p98
      %p100 = scmp.ne.s32.totalorder %s86, %s87
      %p101 = scmp.eq.s32.totalorder %s27, 1
      %p102 = por %p100, %p101
      %p104 = scmp.ne.s32.totalorder %s87, %s103
      %p105 = scmp.eq.s32.totalorder %s27, 0
      %p106 = por %p104, %p105
      %s108 = sadd.s32 %s107, 1
      %p111 = scmp.eq.s32.totalorder %s21, 1
      %p112 = scmp.ne.s32.totalorder %s107, %s109
      %p113 = scmp.eq.s32.totalorder %s21, 0
      %p114 = por %p112, %p113
      %p115 = scmp.ne.s32.totalorder %s107, %s109
      %p116 = scmp.eq.s32.totalorder %s26, 1
      %p117 = por %p115, %p116
      %p118 = scmp.ne.s32.totalorder %s109, %s110
      %p119 = scmp.eq.s32.totalorder %s26, 0
      %p120 = por %p118, %p119
      %p121 = scmp.ne.s32.totalorder %s109, %s110
      %p122 = scmp.eq.s32.totalorder %s27, 1
      %p123 = por %p121, %p122
      %p125 = scmp.ne.s32.totalorder %s110, %s124
      %p126 = scmp.eq.s32.totalorder %s27, 0
      %p127 = por %p125, %p126
      %s129 = sadd.s32 %s128, 1
      %p132 = scmp.eq.s32.totalorder %s21, 1
      %p133 = scmp.ne.s32.totalorder %s128, %s130
      %p134 = scmp.eq.s32.totalorder %s21, 0
      %p135 = por %p133, %p134
      %p136 = scmp.ne.s32.totalorder %s128, %s130
      %p137 = scmp.eq.s32.totalorder %s26, 1
      %p138 = por %p136, %p137
      %p139 = scmp.ne.s32.totalorder %s130, %s131
      %p140 = scmp.eq.s32.totalorder %s26, 0
      %p141 = por %p139, %p140
      %p142 = scmp.ne.s32.totalorder %s130, %s131
      %p143 = scmp.eq.s32.totalorder %s27, 1
      %p144 = por %p142, %p143
      %p146 = scmp.ne.s32.totalorder %s131, %s145
      %p147 = scmp.eq.s32.totalorder %s27, 0
      %p148 = por %p146, %p147
      %s150 = sadd.s32 %s149, 1
      %p153 = scmp.eq.s32.totalorder %s21, 1
      %p154 = scmp.ne.s32.totalorder %s149, %s151
      %p155 = scmp.eq.s32.totalorder %s21, 0
      %p156 = por %p154, %p155
      %p157 = scmp.ne.s32.totalorder %s149, %s151
      %p158 = scmp.eq.s32.totalorder %s26, 1
      %p159 = por %p157, %p158
      %p160 = scmp.ne.s32.totalorder %s151, %s152
      %p161 = scmp.eq.s32.totalorder %s26, 0
      %p162 = por %p160, %p161
      %p163 = scmp.ne.s32.totalorder %s151, %s152
      %p164 = scmp.eq.s32.totalorder %s27, 1
      %p165 = por %p163, %p164
      %p167 = scmp.ne.s32.totalorder %s152, %s166
      %p168 = scmp.eq.s32.totalorder %s27, 0
      %p169 = por %p167, %p168
      %s171 = sadd.s32 %s170, 1
      %p174 = scmp.eq.s32.totalorder %s21, 1
      %p175 = scmp.ne.s32.totalorder %s170, %s172
      %p176 = scmp.eq.s32.totalorder %s21, 0
      %p177 = por %p175, %p176
      %p178 = scmp.ne.s32.totalorder %s170, %s172
      %p179 = scmp.eq.s32.totalorder %s26, 1
      %p180 = por %p178, %p179
      %p181 = scmp.ne.s32.totalorder %s172, %s173
      %p182 = scmp.eq.s32.totalorder %s26, 0
      %p183 = por %p181, %p182
      %p184 = scmp.ne.s32.totalorder %s172, %s173
      %p185 = scmp.eq.s32.totalorder %s27, 1
      %p186 = por %p184, %p185
      %p188 = scmp.ne.s32.totalorder %s173, %s187
      %p189 = scmp.eq.s32.totalorder %s27, 0
      %p190 = por %p188, %p189
      %s192 = sadd.s32 %s191, 1
      %p195 = scmp.eq.s32.totalorder %s21, 1
      %p196 = scmp.ne.s32.totalorder %s191, %s193
      %p197 = scmp.eq.s32.totalorder %s21, 0
      %p198 = por %p196, %p197
      %p199 = scmp.ne.s32.totalorder %s191, %s193
      %p200 = scmp.eq.s32.totalorder %s26, 1
      %p201 = por %p199, %p200
      %p202 = scmp.ne.s32.totalorder %s193, %s194
      %p203 = scmp.eq.s32.totalorder %s26, 0
      %p204 = por %p202, %p203
      %p205 = scmp.ne.s32.totalorder %s193, %s194
      %p206 = scmp.eq.s32.totalorder %s27, 1
      %p207 = por %p205, %p206
      %p209 = scmp.ne.s32.totalorder %s194, %s208
      %p210 = scmp.eq.s32.totalorder %s27, 0
      %p211 = por %p209, %p210
      %s213 = sadd.s32 %s212, 1
      %p216 = scmp.eq.s32.totalorder %s21, 1
      %p217 = scmp.ne.s32.totalorder %s212, %s214
      %p218 = scmp.eq.s32.totalorder %s21, 0
      %p219 = por %p217, %p218
      %p220 = scmp.ne.s32.totalorder %s212, %s214
      %p221 = scmp.eq.s32.totalorder %s26, 1
      %p222 = por %p220, %p221
      %p223 = scmp.ne.s32.totalorder %s214, %s215
      %p224 = scmp.eq.s32.totalorder %s26, 0
      %p225 = por %p223, %p224
      %p226 = scmp.ne.s32.totalorder %s214, %s215
      %p227 = scmp.eq.s32.totalorder %s27, 1
      %p228 = por %p226, %p227
      %p230 = scmp.ne.s32.totalorder %s215, %s229
      %p231 = scmp.eq.s32.totalorder %s27, 0
      %p232 = por %p230, %p231
      %s234 = sadd.s32 %s233, 1
      %p237 = scmp.eq.s32.totalorder %s21, 1
      %p238 = scmp.ne.s32.totalorder %s233, %s235
      %p239 = scmp.eq.s32.totalorder %s21, 0
      %p240 = por %p238, %p239
      %p241 = scmp.ne.s32.totalorder %s233, %s235
      %p242 = scmp.eq.s32.totalorder %s26, 1
      %p243 = por %p241, %p242
      %p244 = scmp.ne.s32.totalorder %s235, %s236
      %p245 = scmp.eq.s32.totalorder %s26, 0
      %p246 = por %p244, %p245
      %p247 = scmp.ne.s32.totalorder %s235, %s236
      %p248 = scmp.eq.s32.totalorder %s27, 1
      %p249 = por %p247, %p248
      %p251 = scmp.ne.s32.totalorder %s236, %s250
      %p252 = scmp.eq.s32.totalorder %s27, 0
      %p253 = por %p251, %p252
      %s255 = sadd.s32 %s254, 1
      %p258 = scmp.eq.s32.totalorder %s21, 1
      %p259 = scmp.ne.s32.totalorder %s254, %s256
      %p260 = scmp.eq.s32.totalorder %s21, 0
      %p261 = por %p259, %p260
      %p262 = scmp.ne.s32.totalorder %s254, %s256
      %p263 = scmp.eq.s32.totalorder %s26, 1
      %p264 = por %p262, %p263
      %p265 = scmp.ne.s32.totalorder %s256, %s257
      %p266 = scmp.eq.s32.totalorder %s26, 0
      %p267 = por %p265, %p266
      %p268 = scmp.ne.s32.totalorder %s256, %s257
      %p269 = scmp.eq.s32.totalorder %s27, 1
      %p270 = por %p268, %p269
      %p272 = scmp.ne.s32.totalorder %s257, %s271
      %p273 = scmp.eq.s32.totalorder %s27, 0
      %p274 = por %p272, %p273
      %s276 = sadd.s32 %s275, 1
      %p279 = scmp.eq.s32.totalorder %s21, 1
      %p280 = scmp.ne.s32.totalorder %s275, %s277
      %p281 = scmp.eq.s32.totalorder %s21, 0
      %p282 = por %p280, %p281
      %p283 = scmp.ne.s32.totalorder %s275, %s277
      %p284 = scmp.eq.s32.totalorder %s26, 1
      %p285 = por %p283, %p284
      %p286 = scmp.ne.s32.totalorder %s277, %s278
      %p287 = scmp.eq.s32.totalorder %s26, 0
      %p288 = por %p286, %p287
      %p289 = scmp.ne.s32.totalorder %s277, %s278
      %p290 = scmp.eq.s32.totalorder %s27, 1
      %p291 = por %p289, %p290
      %p293 = scmp.ne.s32.totalorder %s278, %s292
      %p294 = scmp.eq.s32.totalorder %s27, 0
      %p295 = por %p293, %p294
      %s297 = sadd.s32 %s296, 1
      %p300 = scmp.eq.s32.totalorder %s21, 1
      %p301 = scmp.ne.s32.totalorder %s296, %s298
      %p302 = scmp.eq.s32.totalorder %s21, 0
      %p303 = por %p301, %p302
      %p304 = scmp.ne.s32.totalorder %s296, %s298
      %p305 = scmp.eq.s32.totalorder %s26, 1
      %p306 = por %p304, %p305
      %p307 = scmp.ne.s32.totalorder %s298, %s299
      %p308 = scmp.eq.s32.totalorder %s26, 0
      %p309 = por %p307, %p308
      %p310 = scmp.ne.s32.totalorder %s298, %s299
      %p311 = scmp.eq.s32.totalorder %s27, 1
      %p312 = por %p310, %p311
      %p314 = scmp.ne.s32.totalorder %s299, %s313
      %p315 = scmp.eq.s32.totalorder %s27, 0
      %p316 = por %p314, %p315
      %s317 = ssub.s32 %s21, %s28
      %p318 = scmp.eq.s32.totalorder %s317, 0
      %s320 = sadd.s32 %s319, 1
      %s321 = scalar_select %p318, %s319, %s320
      %p324 = pneg %p318
      %p325 = scmp.eq.s32.totalorder %s21, 1
      %p326 = por %p324, %p325
      %p327 = scmp.ne.s32.totalorder %s319, %s322
      %p328 = scmp.eq.s32.totalorder %s21, 0
      %p329 = por %p327, %p328
      %p330 = scmp.ne.s32.totalorder %s319, %s322
      %p331 = scmp.eq.s32.totalorder %s26, 1
      %p332 = por %p330, %p331
      %p333 = scmp.ne.s32.totalorder %s322, %s323
      %p334 = scmp.eq.s32.totalorder %s26, 0
      %p335 = por %p333, %p334
      %p336 = scmp.ne.s32.totalorder %s322, %s323
      %p337 = scmp.eq.s32.totalorder %s27, 1
      %p338 = por %p336, %p337
      %p340 = scmp.ne.s32.totalorder %s323, %s339
      %p341 = scmp.eq.s32.totalorder %s27, 0
      %p342 = por %p340, %p341
      %p343 = scmp.le.s32.totalorder 1, %s21
      %p344 = scmp.lt.s32.totalorder %s21, 3
      %p345 = pnand %p343, %p344
      %p346 = pneg %p345
      // Predicated region
      $region9: #{decoder_forward.11} parent=5 // pred_check
        _
      $region10: #{decoder_forward.11} parent=5 // pred_check_branch
        %348 = sbr.rel (%p345) target = $region12
      $region11: #{decoder_forward.11} parent=5 // pred_region
        %s349 = ssub.s32 %s21, 1
        // Predicated region
        $region13: #{decoder_forward.11} parent=11 // pred_check
          %p350 = pneg %p120
        $region14: #{decoder_forward.11} parent=11 // pred_check_branch
          %352 = sbr.rel (%p350) target = $region16
        $region15: #{decoder_forward.11} parent=11 // pred_region
          _
        $region16: #{decoder_forward.11} parent=11 // pred_fallthru
          _
        // Predicated region
        $region17: #{decoder_forward.11} parent=11 // pred_check
          %p353 = pneg %p141
        $region18: #{decoder_forward.11} parent=11 // pred_check_branch
          %355 = sbr.rel (%p353) target = $region20
        $region19: #{decoder_forward.11} parent=11 // pred_region
          _
        $region20: #{decoder_forward.11} parent=11 // pred_fallthru
          _
        // Predicated region
        $region21: #{decoder_forward.11} parent=11 // pred_check
          %p356 = pneg %p162
        $region22: #{decoder_forward.11} parent=11 // pred_check_branch
          %358 = sbr.rel (%p356) target = $region24
        $region23: #{decoder_forward.11} parent=11 // pred_region
          _
        $region24: #{decoder_forward.11} parent=11 // pred_fallthru
          _
        // Predicated region
        $region25: #{decoder_forward.11} parent=11 // pred_check
          %p359 = pneg %p183
        $region26: #{decoder_forward.11} parent=11 // pred_check_branch
          %361 = sbr.rel (%p359) target = $region28
        $region27: #{decoder_forward.11} parent=11 // pred_region
          _
        $region28: #{decoder_forward.11} parent=11 // pred_fallthru
          _
        // Predicated region
        $region29: #{decoder_forward.11} parent=11 // pred_check
          %p362 = pneg %p204
        $region30: #{decoder_forward.11} parent=11 // pred_check_branch
          %364 = sbr.rel (%p362) target = $region32
        $region31: #{decoder_forward.11} parent=11 // pred_region
          _
        $region32: #{decoder_forward.11} parent=11 // pred_fallthru
          _
        // Predicated region
        $region33: #{decoder_forward.11} parent=11 // pred_check
          %p365 = pneg %p225
        $region34: #{decoder_forward.11} parent=11 // pred_check_branch
          %367 = sbr.rel (%p365) target = $region36
        $region35: #{decoder_forward.11} parent=11 // pred_region
          _
        $region36: #{decoder_forward.11} parent=11 // pred_fallthru
          _
        // Predicated region
        $region37: #{decoder_forward.11} parent=11 // pred_check
          %p368 = pneg %p246
        $region38: #{decoder_forward.11} parent=11 // pred_check_branch
          %370 = sbr.rel (%p368) target = $region40
        $region39: #{decoder_forward.11} parent=11 // pred_region
          %372 = vsyncadd [#allocation3], 0
          %s373 = sshll.u32 %s9, 4
          %s374 = int_to_ptr.hbm [resolvable:$true] %s373
          %s375 = sshll.u32 [#allocation2], 4
          %s376 = int_to_ptr.vmem [resolvable:$true] %s375
          %381 = dma.hbm_to_vmem [thread:$0]  %s374, 512, %s376, [#allocation3], 128, 128, 8
        $region40: #{decoder_forward.11} parent=11 // pred_fallthru
          _
        // Predicated region
        $region41: #{decoder_forward.11} parent=11 // pred_check
          %p382 = pneg %p267
        $region42: #{decoder_forward.11} parent=11 // pred_check_branch
          %384 = sbr.rel (%p382) target = $region44
        $region43: #{decoder_forward.11} parent=11 // pred_region
          _
        $region44: #{decoder_forward.11} parent=11 // pred_fallthru
          _
        // Predicated region
        $region45: #{decoder_forward.11} parent=11 // pred_check
          %p385 = pneg %p288
        $region46: #{decoder_forward.11} parent=11 // pred_check_branch
          %387 = sbr.rel (%p385) target = $region48
        $region47: #{decoder_forward.11} parent=11 // pred_region
          %389 = vsyncadd [#allocation5], 0
          %s390 = sshll.u32 %s11, 4
          %s391 = int_to_ptr.hbm [resolvable:$true] %s390
          %s392 = sshll.u32 [#allocation4], 4
          %s393 = int_to_ptr.vmem [resolvable:$true] %s392
          %398 = dma.hbm_to_vmem [thread:$0]  %s391, 512, %s393, [#allocation5], 128, 128, 8
        $region48: #{decoder_forward.11} parent=11 // pred_fallthru
          _
        // Predicated region
        $region49: #{decoder_forward.11} parent=11 // pred_check
          %p399 = pneg %p309
        $region50: #{decoder_forward.11} parent=11 // pred_check_branch
          %401 = sbr.rel (%p399) target = $region52
        $region51: #{decoder_forward.11} parent=11 // pred_region
          _
        $region52: #{decoder_forward.11} parent=11 // pred_fallthru
          _
      $region12: #{decoder_forward.11} parent=5 // pred_fallthru
        _
      %p402 = scmp.lt.s32.totalorder %s21, 2
      // Predicated region
      $region53: #{decoder_forward.11} parent=5 // pred_check
        %p403 = pneg %p402
      $region54: #{decoder_forward.11} parent=5 // pred_check_branch
        %405 = sbr.rel (%p403) target = $region56
      $region55: #{decoder_forward.11} parent=5 // pred_region
        // Predicated region
        $region57: #{decoder_forward.11} parent=55 // pred_check
          %p406 = pneg %p41
        $region58: #{decoder_forward.11} parent=55 // pred_check_branch
          %408 = sbr.rel (%p406) target = $region60
        $region59: #{decoder_forward.11} parent=55 // pred_region
          %p409 = scmp.lt.s32.totalorder %s21, 1
          %s410 = scalar_select %p409, %s21, 1
          %s411 = smul.addr %s410, 8
          %s412 = scalar_lea.vmem %s0, %s411
        $region60: #{decoder_forward.11} parent=55 // pred_fallthru
          _
        // Predicated region
        $region61: #{decoder_forward.11} parent=55 // pred_check
          %p413 = pneg %p67
        $region62: #{decoder_forward.11} parent=55 // pred_check_branch
          %415 = sbr.rel (%p413) target = $region64
        $region63: #{decoder_forward.11} parent=55 // pred_region
          %p416 = scmp.lt.s32.totalorder %s21, 1
          %s417 = scalar_select %p416, %s21, 1
          %s418 = smul.addr %s417, 8
          %s419 = scalar_lea.vmem %s1, %s418
        $region64: #{decoder_forward.11} parent=55 // pred_fallthru
          _
        // Predicated region
        $region65: #{decoder_forward.11} parent=55 // pred_check
          %p420 = pneg %p93
        $region66: #{decoder_forward.11} parent=55 // pred_check_branch
          %422 = sbr.rel (%p420) target = $region68
        $region67: #{decoder_forward.11} parent=55 // pred_region
          %p423 = scmp.lt.s32.totalorder %s21, 1
          %s424 = scalar_select %p423, %s21, 1
          %s425 = scalar_lea.vmem %s2, %s424
        $region68: #{decoder_forward.11} parent=55 // pred_fallthru
          _
      $region56: #{decoder_forward.11} parent=5 // pred_fallthru
        _
      %p426 = scmp.le.s32.totalorder 1, %s21
      %p427 = scmp.lt.s32.totalorder %s21, 3
      %p428 = pnand %p426, %p427
      %p429 = pneg %p428
      // Predicated region
      $region69: #{decoder_forward.11} parent=5 // pred_check
        _
      $region70: #{decoder_forward.11} parent=5 // pred_check_branch
        %431 = sbr.rel (%p428) target = $region72
      $region71: #{decoder_forward.11} parent=5 // pred_region
        %s432 = ssub.s32 %s21, 1
        // Predicated region
        $region73: #{decoder_forward.11} parent=71 // pred_check
          %p433 = pneg %p246
        $region74: #{decoder_forward.11} parent=71 // pred_check_branch
          %435 = sbr.rel (%p433) target = $region76
        $region75: #{decoder_forward.11} parent=71 // pred_region
          %437 = dma.done [#allocation3], 512
        $region76: #{decoder_forward.11} parent=71 // pred_fallthru
          _
        // Predicated region
        $region77: #{decoder_forward.11} parent=71 // pred_check
          %p438 = pneg %p288
        $region78: #{decoder_forward.11} parent=71 // pred_check_branch
          %440 = sbr.rel (%p438) target = $region80
        $region79: #{decoder_forward.11} parent=71 // pred_region
          %442 = dma.done [#allocation5], 512
        $region80: #{decoder_forward.11} parent=71 // pred_fallthru
          _
        %p443 = scmp.lt.s32.totalorder %s26, 1
        %s444 = scalar_select %p443, %s26, 1
        %s445 = smul.addr %s444, 8
        %s446 = scalar_lea.vmem %s0, %s445
        %p447 = pneg %p47
        %p448 = pneg %p44
        %p449 = scmp.lt.s32.totalorder %s26, 1
        %s450 = scalar_select %p449, %s26, 1
        %s451 = smul.addr %s450, 8
        %s452 = scalar_lea.vmem %s1, %s451
        %p453 = pneg %p73
        %p454 = pneg %p70
        %p455 = scmp.lt.s32.totalorder %s26, 1
        %s456 = scalar_select %p455, %s26, 1
        %s457 = scalar_lea.vmem %s2, %s456
        %p458 = pneg %p99
        %p459 = pneg %p96
        %p460 = pneg %p120
        %p461 = pneg %p117
        %p462 = pneg %p141
        %p463 = pneg %p138
        %p464 = pneg %p162
        %p465 = pneg %p159
        %p466 = pneg %p183
        %p467 = pneg %p180
        %p468 = pneg %p204
        %p469 = pneg %p201
        %p470 = pneg %p225
        %p471 = pneg %p222
        %p472 = pneg %p246
        %p473 = pneg %p243
        %p474 = pneg %p267
        %p475 = pneg %p264
        %p476 = pneg %p288
        %p477 = pneg %p285
        %p478 = pneg %p309
        %p479 = pneg %p306
        %p480 = pneg %p335
        %p481 = pneg %p332
        %p482 = scmp.lt.s32.totalorder %s26, 1
        %s483 = scalar_select %p482, %s26, 1
        %s484 = smul.addr %s483, 8
        %s485 = scalar_lea.vmem %s13, %s484
        %p486 = scmp.lt.s32.totalorder %s26, 1
        %s487 = scalar_select %p486, %s26, 1
        %s488 = smul.addr %s487, 8
        %s489 = scalar_lea.vmem %s0, %s488
        %p490 = scmp.lt.s32.totalorder %s26, 1
        %s491 = scalar_select %p490, %s26, 1
        %s492 = smul.addr %s491, 8
        %s493 = scalar_lea.vmem %s1, %s492
        %p494 = scmp.lt.s32.totalorder %s26, 1
        %s495 = scalar_select %p494, %s26, 1
        %s496 = scalar_lea.vmem %s2, %s495
        %p497 = scmp.lt.s32.totalorder %s26, 1
        %s498 = scalar_select %p497, %s26, 1
        %s499 = smul.addr %s498, 8
        %s500 = scalar_lea.vmem %s13, %s499
        %v501 = vld [vmem:[%s489] sm:$0xff]
        %v502 = vld [vmem:[%s3] sm:$0x1]
        %v503 = vld [vmem:[%s4] sm:$0x1]
        %vm504 = vcmask 261120
        %v505 = vsel %vm504, %v501, 0.0
        %506 = vadd.xlane.f32.xlu0 %v505
        %v507 = vpop.xlane.xlu0 %506
        %v508 = vrcp.pop 32.0
        %v509 = vmul.f32 32.0, %v508
        %v510 = vsub.f32 1.0, %v509
        %v511 = vmul.f32 %v508, %v510
        %v512 = vadd.f32 %v508, %v511
        %vm513 = vweird.f32 %v508
        %v514 = vsel %vm513, %v508, %v512
        %v515 = vmul.f32 %v507, %v514
        %v516 = vsub.f32 %v501, %v515
        %v517 = vmul.f32 %v516, %v516
        %v518 = vsel %vm504, %v517, 0.0
        %519 = vadd.xlane.f32.xlu0 %v518
        %v520 = vpop.xlane.xlu0 %519
        %v521 = vrcp.pop 31.0
        %v522 = vmul.f32 31.0, %v521
        %v523 = vsub.f32 1.0, %v522
        %v524 = vmul.f32 %v521, %v523
        %v525 = vadd.f32 %v521, %v524
        %vm526 = vweird.f32 %v521
        %v527 = vsel %vm526, %v521, %v525
        %v528 = vmul.f32 %v520, %v527
        %v530 = vperm.slane %v502, 0
        %v532 = vmul.f32 %v530, %v516
        %v533 = vrsqrt.pop %v528
        %v534 = vmul.f32 %v533, %v528
        %v535 = vmul.f32 %v534, %v533
        %v536 = vmul.f32 0.5, %v535
        %v537 = vsub.f32 1.5, %v536
        %v538 = vmul.f32 %v533, %v537
        %v539 = vmul.f32 %v528, %v538
        %vm540 = vcmp.eq.f32.partialorder %v528, inf
        %v541 = vsel %vm540, %v528, %v539
        %vm542 = vcmp.eq.f32.partialorder %v528, 0.0
        %v543 = vand.u32 %v528, 2147483648
        %v544 = vsel %vm542, %v543, %v541
        %v545 = vadd.f32 %v544, 1e-06
        %v546 = vrcp.pop %v545
        %v547 = vmul.f32 %v545, %v546
        %v548 = vsub.f32 1.0, %v547
        %v549 = vmul.f32 %v546, %v548
        %v550 = vadd.f32 %v546, %v549
        %vm551 = vweird.f32 %v545
        %vm552 = vweird.f32 %v546
        %vm553 = vmor %vm551, %vm552
        %v554 = vsel %vm553, %v546, %v550
        %v555 = vand.u32 2147483647, %v545
        %vm556 = vcmp.eq.f32.partialorder %v555, 8.507059e+37
        %v557 = vand.u32 %v545, 2147483648
        %v558 = vor.u32 1.1754944e-38, %v557
        %v559 = vsel %vm556, %v558, %v554
        %v560 = vmul.f32 %v532, %v559
        %v562 = vperm.slane %v503, 0
        %v564 = vadd.f32 %v560, %v562
        %v565 = vld [vmem:[%s493] sm:$0xff]
        %v566 = vld [vmem:[%s496] sm:$0x1]
        %v567 = vld [vmem:[%s5] sm:$0xff]
        %v568 = vld [vmem:[%s5 + $0x8] sm:$0xff]
        %v569 = vld [vmem:[%s5 + $0x10] sm:$0xff]
        %v570 = vld [vmem:[%s5 + $0x18] sm:$0xff]
        %v571 = vld [vmem:[%s6] sm:$0x1]
        %v572 = vld [vmem:[%s7] sm:$0xff]
        %v573 = vld [vmem:[%s7 + $0x8] sm:$0xff]
        %v574 = vld [vmem:[%s7 + $0x10] sm:$0xff]
        %v575 = vld [vmem:[%s7 + $0x18] sm:$0xff]
        %v576 = vld [vmem:[%s8] sm:$0x1]
        %v577 = vld [vmem:[#allocation2] sm:$0xff]
        %v578 = vld [vmem:[#allocation2 + $0x8] sm:$0xff]
        %v579 = vld [vmem:[#allocation2 + $0x10] sm:$0xff]
        %v580 = vld [vmem:[#allocation2 + $0x18] sm:$0xff]
        %v581 = vld [vmem:[%s10] sm:$0x1]
        %v582 = vld [vmem:[#allocation4] sm:$0xff]
        %v583 = vld [vmem:[#allocation4 + $0x8] sm:$0xff]
        %v584 = vld [vmem:[#allocation4 + $0x10] sm:$0xff]
        %v585 = vld [vmem:[#allocation4 + $0x18] sm:$0xff]
        %v586 = vld [vmem:[%s12] sm:$0x1]
        %v588 = vperm.slane %v571, 0
        %v591 = vsel %vm504, %v564, 0
        %593 = vmatpush.msra.mxu0 0.0
        %594 = vmatpush.msra.mxu0 0.0
        %595 = vmatpush.msra.mxu0 0.0
        %596 = vmatpush.msra.mxu0 0.0
        %597 = vmatpush.msra.mxu0 0.0
        %598 = vmatpush.msra.mxu0 0.0
        %599 = vmatpush.msra.mxu0 0.0
        %600 = vmatpush.msra.mxu0 0.0
        %601 = vmatpush.msra.mxu0 0.0
        %602 = vmatpush.msra.mxu0 0.0
        %603 = vmatpush.msra.mxu0 0.0
        %604 = vmatpush.msra.mxu0 0.0
        %605 = vmatpush.msra.mxu0 %v570
        %606 = vmatpush.msra.mxu0 %v569
        %607 = vmatpush.msra.mxu0 %v568
        %608 = vmatpush.msra.mxu0 %v567
        %609 = vmatmul.f32.gmra.mxu0 %v591
        %v610 = vpop.f32.mrf.mxu0
        %v611 = vadd.f32 %v588, %v610
        %612 = vdwg.mxu0
        %v613 = vmul.f32 %v611, 0.35355338
        %v615 = vperm.slane %v576, 0
        %v618 = vsel %vm504, %v565, 0
        %620 = vmatpush.msra.mxu0 0.0
        %621 = vmatpush.msra.mxu0 0.0
        %622 = vmatpush.msra.mxu0 0.0
        %623 = vmatpush.msra.mxu0 0.0
        %624 = vmatpush.msra.mxu0 0.0
        %625 = vmatpush.msra.mxu0 0.0
        %626 = vmatpush.msra.mxu0 0.0
        %627 = vmatpush.msra.mxu0 0.0
        %628 = vmatpush.msra.mxu0 0.0
        %629 = vmatpush.msra.mxu0 0.0
        %630 = vmatpush.msra.mxu0 0.0
        %631 = vmatpush.msra.mxu0 0.0
        %632 = vmatpush.msra.mxu0 %v575
        %633 = vmatpush.msra.mxu0 %v574
        %634 = vmatpush.msra.mxu0 %v573
        %635 = vmatpush.msra.mxu0 %v572
        %636 = vmatmul.f32.gmra.mxu0 %v618
        %v637 = vpop.f32.mrf.mxu0
        %v638 = vadd.f32 %v615, %v637
        %639 = vdwg.mxu0
        %v641 = vperm.slane %v581, 0
        %643 = vmatpush.msra.mxu0 0.0
        %644 = vmatpush.msra.mxu0 0.0
        %645 = vmatpush.msra.mxu0 0.0
        %646 = vmatpush.msra.mxu0 0.0
        %647 = vmatpush.msra.mxu0 0.0
        %648 = vmatpush.msra.mxu0 0.0
        %649 = vmatpush.msra.mxu0 0.0
        %650 = vmatpush.msra.mxu0 0.0
        %651 = vmatpush.msra.mxu0 0.0
        %652 = vmatpush.msra.mxu0 0.0
        %653 = vmatpush.msra.mxu0 0.0
        %654 = vmatpush.msra.mxu0 0.0
        %655 = vmatpush.msra.mxu0 %v580
        %656 = vmatpush.msra.mxu0 %v579
        %657 = vmatpush.msra.mxu0 %v578
        %658 = vmatpush.msra.mxu0 %v577
        %659 = vmatmul.f32.gmra.mxu0 %v618
        %v660 = vpop.f32.mrf.mxu0
        %v661 = vadd.f32 %v641, %v660
        %662 = vdwg.mxu0
        %vm663 = vcmask 64512
        %v665 = vsel %vm663, %v613, 0
        %v668 = vsel %vm663, %v638, 0
        %670 = vmatpush.xpose.msra.mxu0 0.0
        %671 = vmatpush.xpose.msra.mxu0 0.0
        %672 = vmatpush.xpose.msra.mxu0 0.0
        %673 = vmatpush.xpose.msra.mxu0 0.0
        %674 = vmatpush.xpose.msra.mxu0 0.0
        %675 = vmatpush.xpose.msra.mxu0 0.0
        %676 = vmatpush.xpose.msra.mxu0 0.0
        %677 = vmatpush.xpose.msra.mxu0 0.0
        %678 = vmatpush.xpose.msra.mxu0 0.0
        %679 = vmatpush.xpose.msra.mxu0 0.0
        %680 = vmatpush.xpose.msra.mxu0 0.0
        %681 = vmatpush.xpose.msra.mxu0 0.0
        %682 = vmatpush.xpose.msra.mxu0 0.0
        %683 = vmatpush.xpose.msra.mxu0 0.0
        %684 = vmatpush.xpose.msra.mxu0 0.0
        %685 = vmatpush.xpose.msra.mxu0 %v668
        %686 = vmatmul.f32.gmra.mxu0 %v665
        %v687 = vpop.f32.mrf.mxu0
        %v688 = vadd.f32 0.0, %v687
        %689 = vdwg.mxu0
        %vm690 = vcmp.ne.f32.partialorder %v566, 0.0
        %v691 = vsel %vm690, 1, 0
        %v692 = vperm.slane %v691, 0
        %vm693 = vcmp.eq.s32.totalorder %v692, 1
        %v694 = vsel %vm693, %v688, -1e+09
        %v695 = vsel %vm663, %v694, -inf
        %696 = vmax.xlane.f32.xlu0 %v695
        %v697 = vpop.xlane.xlu0 %696
        %v698 = vsub.f32 %v694, %v697
        %v699 = vmul.f32 %v698, 1.442695
        %v700 = vpow.pop %v699
        %v701 = vsel %vm663, %v700, 0.0
        %702 = vadd.xlane.f32.xlu0 %v701
        %v703 = vpop.xlane.xlu0 %702
        %v704 = vrcp.pop %v703
        %v705 = vmul.f32 %v700, %v704
        %v707 = vsel %vm663, %v705, 0
        %709 = vmatpush.msra.mxu0 0.0
        %710 = vmatpush.msra.mxu0 0.0
        %711 = vmatpush.msra.mxu0 0.0
        %712 = vmatpush.msra.mxu0 0.0
        %713 = vmatpush.msra.mxu0 0.0
        %714 = vmatpush.msra.mxu0 0.0
        %715 = vmatpush.msra.mxu0 0.0
        %716 = vmatpush.msra.mxu0 0.0
        %717 = vmatpush.msra.mxu0 0.0
        %718 = vmatpush.msra.mxu0 0.0
        %719 = vmatpush.msra.mxu0 0.0
        %720 = vmatpush.msra.mxu0 0.0
        %721 = vmatpush.msra.mxu0 0.0
        %722 = vmatpush.msra.mxu0 0.0
        %723 = vmatpush.msra.mxu0 0.0
        %724 = vmatpush.msra.mxu0 %v661
        %725 = vmatmul.f32.gmra.mxu0 %v707
        %v726 = vpop.f32.mrf.mxu0
        %v727 = vadd.f32 0.0, %v726
        %728 = vdwg.mxu0
        %729 = vrot.lane.b32.xlu0 %v613, 120
        %v730 = vpop.permute.xlu0 %729
        %731 = vrot.lane.b32.xlu0 %v638, 120
        %v732 = vpop.permute.xlu0 %731
        %v733 = vsel %vm663, %v730, 0
        %v735 = vsel %vm663, %v732, 0
        %737 = vmatpush.xpose.msra.mxu0 0.0
        %738 = vmatpush.xpose.msra.mxu0 0.0
        %739 = vmatpush.xpose.msra.mxu0 0.0
        %740 = vmatpush.xpose.msra.mxu0 0.0
        %741 = vmatpush.xpose.msra.mxu0 0.0
        %742 = vmatpush.xpose.msra.mxu0 0.0
        %743 = vmatpush.xpose.msra.mxu0 0.0
        %744 = vmatpush.xpose.msra.mxu0 0.0
        %745 = vmatpush.xpose.msra.mxu0 0.0
        %746 = vmatpush.xpose.msra.mxu0 0.0
        %747 = vmatpush.xpose.msra.mxu0 0.0
        %748 = vmatpush.xpose.msra.mxu0 0.0
        %749 = vmatpush.xpose.msra.mxu0 0.0
        %750 = vmatpush.xpose.msra.mxu0 0.0
        %751 = vmatpush.xpose.msra.mxu0 0.0
        %752 = vmatpush.xpose.msra.mxu0 %v735
        %753 = vmatmul.f32.gmra.mxu0 %v733
        %v754 = vpop.f32.mrf.mxu0
        %v755 = vadd.f32 0.0, %v754
        %756 = vdwg.mxu0
        %v757 = vsel %vm693, %v755, -1e+09
        %v758 = vsel %vm663, %v757, -inf
        %759 = vmax.xlane.f32.xlu0 %v758
        %v760 = vpop.xlane.xlu0 %759
        %v761 = vsub.f32 %v757, %v760
        %v762 = vmul.f32 %v761, 1.442695
        %v763 = vpow.pop %v762
        %v764 = vsel %vm663, %v763, 0.0
        %765 = vadd.xlane.f32.xlu0 %v764
        %v766 = vpop.xlane.xlu0 %765
        %v767 = vrcp.pop %v766
        %v768 = vmul.f32 %v763, %v767
        %770 = vrot.lane.b32.xlu0 %v661, 120
        %v771 = vpop.permute.xlu0 %770
        %v774 = vsel %vm663, %v768, 0
        %776 = vmatpush.msra.mxu0 0.0
        %777 = vmatpush.msra.mxu0 0.0
        %778 = vmatpush.msra.mxu0 0.0
        %779 = vmatpush.msra.mxu0 0.0
        %780 = vmatpush.msra.mxu0 0.0
        %781 = vmatpush.msra.mxu0 0.0
        %782 = vmatpush.msra.mxu0 0.0
        %783 = vmatpush.msra.mxu0 0.0
        %784 = vmatpush.msra.mxu0 0.0
        %785 = vmatpush.msra.mxu0 0.0
        %786 = vmatpush.msra.mxu0 0.0
        %787 = vmatpush.msra.mxu0 0.0
        %788 = vmatpush.msra.mxu0 0.0
        %789 = vmatpush.msra.mxu0 0.0
        %790 = vmatpush.msra.mxu0 0.0
        %791 = vmatpush.msra.mxu0 %v771
        %792 = vmatmul.f32.gmra.mxu0 %v774
        %v793 = vpop.f32.mrf.mxu0
        %v794 = vadd.f32 0.0, %v793
        %795 = vdwg.mxu0
        %v797 = vsel %vm663, %v794, 0
        %799 = vmatpush.msra.mxu0 0.0
        %800 = vmatpush.msra.mxu0 0.0
        %801 = vmatpush.msra.mxu0 0.0
        %802 = vmatpush.msra.mxu0 0.0
        %803 = vmatpush.msra.mxu0 0.0
        %804 = vmatpush.msra.mxu0 0.0
        %805 = vmatpush.msra.mxu0 0.0
        %806 = vmatpush.msra.mxu0 0.0
        %807 = vmatpush.msra.mxu0 0.0
        %808 = vmatpush.msra.mxu0 0.0
        %809 = vmatpush.msra.mxu0 0.0
        %810 = vmatpush.msra.mxu0 0.0
        %811 = vmatpush.msra.mxu0 0.0
        %812 = vmatpush.msra.mxu0 0.0
        %813 = vmatpush.msra.mxu0 0.0
        %814 = vmatpush.msra.mxu0 %v583
        %815 = vmatmul.f32.gmra.mxu0 %v797
        %v816 = vpop.f32.mrf.mxu0
        %v817 = vadd.f32 0.0, %v816
        %818 = vdwg.mxu0
        %v820 = vsel %vm663, %v727, 0
        %822 = vmatpush.msra.mxu0 0.0
        %823 = vmatpush.msra.mxu0 0.0
        %824 = vmatpush.msra.mxu0 0.0
        %825 = vmatpush.msra.mxu0 0.0
        %826 = vmatpush.msra.mxu0 0.0
        %827 = vmatpush.msra.mxu0 0.0
        %828 = vmatpush.msra.mxu0 0.0
        %829 = vmatpush.msra.mxu0 0.0
        %830 = vmatpush.msra.mxu0 0.0
        %831 = vmatpush.msra.mxu0 0.0
        %832 = vmatpush.msra.mxu0 0.0
        %833 = vmatpush.msra.mxu0 0.0
        %834 = vmatpush.msra.mxu0 0.0
        %835 = vmatpush.msra.mxu0 0.0
        %836 = vmatpush.msra.mxu0 0.0
        %837 = vmatpush.msra.mxu0 %v582
        %838 = vmatmul.f32.gmra.mxu0 %v820
        %v839 = vpop.f32.mrf.mxu0
        %v840 = vadd.f32 %v817, %v839
        %841 = vdwg.mxu0
        %842 = vrot.lane.b32.xlu0 %v613, 112
        %v843 = vpop.permute.xlu0 %842
        %844 = vrot.lane.b32.xlu0 %v638, 112
        %v845 = vpop.permute.xlu0 %844
        %v846 = vsel %vm663, %v843, 0
        %v848 = vsel %vm663, %v845, 0
        %850 = vmatpush.xpose.msra.mxu0 0.0
        %851 = vmatpush.xpose.msra.mxu0 0.0
        %852 = vmatpush.xpose.msra.mxu0 0.0
        %853 = vmatpush.xpose.msra.mxu0 0.0
        %854 = vmatpush.xpose.msra.mxu0 0.0
        %855 = vmatpush.xpose.msra.mxu0 0.0
        %856 = vmatpush.xpose.msra.mxu0 0.0
        %857 = vmatpush.xpose.msra.mxu0 0.0
        %858 = vmatpush.xpose.msra.mxu0 0.0
        %859 = vmatpush.xpose.msra.mxu0 0.0
        %860 = vmatpush.xpose.msra.mxu0 0.0
        %861 = vmatpush.xpose.msra.mxu0 0.0
        %862 = vmatpush.xpose.msra.mxu0 0.0
        %863 = vmatpush.xpose.msra.mxu0 0.0
        %864 = vmatpush.xpose.msra.mxu0 0.0
        %865 = vmatpush.xpose.msra.mxu0 %v848
        %866 = vmatmul.f32.gmra.mxu0 %v846
        %v867 = vpop.f32.mrf.mxu0
        %v868 = vadd.f32 0.0, %v867
        %869 = vdwg.mxu0
        %v870 = vsel %vm693, %v868, -1e+09
        %v871 = vsel %vm663, %v870, -inf
        %872 = vmax.xlane.f32.xlu0 %v871
        %v873 = vpop.xlane.xlu0 %872
        %v874 = vsub.f32 %v870, %v873
        %v875 = vmul.f32 %v874, 1.442695
        %v876 = vpow.pop %v875
        %v877 = vsel %vm663, %v876, 0.0
        %878 = vadd.xlane.f32.xlu0 %v877
        %v879 = vpop.xlane.xlu0 %878
        %v880 = vrcp.pop %v879
        %v881 = vmul.f32 %v876, %v880
        %882 = vrot.lane.b32.xlu0 %v661, 112
        %v883 = vpop.permute.xlu0 %882
        %v886 = vsel %vm663, %v881, 0
        %888 = vmatpush.msra.mxu0 0.0
        %889 = vmatpush.msra.mxu0 0.0
        %890 = vmatpush.msra.mxu0 0.0
        %891 = vmatpush.msra.mxu0 0.0
        %892 = vmatpush.msra.mxu0 0.0
        %893 = vmatpush.msra.mxu0 0.0
        %894 = vmatpush.msra.mxu0 0.0
        %895 = vmatpush.msra.mxu0 0.0
        %896 = vmatpush.msra.mxu0 0.0
        %897 = vmatpush.msra.mxu0 0.0
        %898 = vmatpush.msra.mxu0 0.0
        %899 = vmatpush.msra.mxu0 0.0
        %900 = vmatpush.msra.mxu0 0.0
        %901 = vmatpush.msra.mxu0 0.0
        %902 = vmatpush.msra.mxu0 0.0
        %903 = vmatpush.msra.mxu0 %v883
        %904 = vmatmul.f32.gmra.mxu0 %v886
        %v905 = vpop.f32.mrf.mxu0
        %v906 = vadd.f32 0.0, %v905
        %907 = vdwg.mxu0
        %v909 = vsel %vm663, %v906, 0
        %911 = vmatpush.msra.mxu0 0.0
        %912 = vmatpush.msra.mxu0 0.0
        %913 = vmatpush.msra.mxu0 0.0
        %914 = vmatpush.msra.mxu0 0.0
        %915 = vmatpush.msra.mxu0 0.0
        %916 = vmatpush.msra.mxu0 0.0
        %917 = vmatpush.msra.mxu0 0.0
        %918 = vmatpush.msra.mxu0 0.0
        %919 = vmatpush.msra.mxu0 0.0
        %920 = vmatpush.msra.mxu0 0.0
        %921 = vmatpush.msra.mxu0 0.0
        %922 = vmatpush.msra.mxu0 0.0
        %923 = vmatpush.msra.mxu0 0.0
        %924 = vmatpush.msra.mxu0 0.0
        %925 = vmatpush.msra.mxu0 0.0
        %926 = vmatpush.msra.mxu0 %v584
        %927 = vmatmul.f32.gmra.mxu0 %v909
        %v928 = vpop.f32.mrf.mxu0
        %v929 = vadd.f32 0.0, %v928
        %930 = vdwg.mxu0
        %v931 = vadd.f32 %v840, %v929
        %932 = vrot.lane.b32.xlu0 %v613, 104
        %v933 = vpop.permute.xlu0 %932
        %934 = vrot.lane.b32.xlu0 %v638, 104
        %v935 = vpop.permute.xlu0 %934
        %v936 = vsel %vm663, %v933, 0
        %v938 = vsel %vm663, %v935, 0
        %940 = vmatpush.xpose.msra.mxu0 0.0
        %941 = vmatpush.xpose.msra.mxu0 0.0
        %942 = vmatpush.xpose.msra.mxu0 0.0
        %943 = vmatpush.xpose.msra.mxu0 0.0
        %944 = vmatpush.xpose.msra.mxu0 0.0
        %945 = vmatpush.xpose.msra.mxu0 0.0
        %946 = vmatpush.xpose.msra.mxu0 0.0
        %947 = vmatpush.xpose.msra.mxu0 0.0
        %948 = vmatpush.xpose.msra.mxu0 0.0
        %949 = vmatpush.xpose.msra.mxu0 0.0
        %950 = vmatpush.xpose.msra.mxu0 0.0
        %951 = vmatpush.xpose.msra.mxu0 0.0
        %952 = vmatpush.xpose.msra.mxu0 0.0
        %953 = vmatpush.xpose.msra.mxu0 0.0
        %954 = vmatpush.xpose.msra.mxu0 0.0
        %955 = vmatpush.xpose.msra.mxu0 %v938
        %956 = vmatmul.f32.gmra.mxu0 %v936
        %v957 = vpop.f32.mrf.mxu0
        %v958 = vadd.f32 0.0, %v957
        %959 = vdwg.mxu0
        %v960 = vsel %vm693, %v958, -1e+09
        %v961 = vsel %vm663, %v960, -inf
        %962 = vmax.xlane.f32.xlu0 %v961
        %v963 = vpop.xlane.xlu0 %962
        %v964 = vsub.f32 %v960, %v963
        %v965 = vmul.f32 %v964, 1.442695
        %v966 = vpow.pop %v965
        %v967 = vsel %vm663, %v966, 0.0
        %968 = vadd.xlane.f32.xlu0 %v967
        %v969 = vpop.xlane.xlu0 %968
        %v970 = vrcp.pop %v969
        %v971 = vmul.f32 %v966, %v970
        %972 = vrot.lane.b32.xlu0 %v661, 104
        %v973 = vpop.permute.xlu0 %972
        %v976 = vsel %vm663, %v971, 0
        %978 = vmatpush.msra.mxu0 0.0
        %979 = vmatpush.msra.mxu0 0.0
        %980 = vmatpush.msra.mxu0 0.0
        %981 = vmatpush.msra.mxu0 0.0
        %982 = vmatpush.msra.mxu0 0.0
        %983 = vmatpush.msra.mxu0 0.0
        %984 = vmatpush.msra.mxu0 0.0
        %985 = vmatpush.msra.mxu0 0.0
        %986 = vmatpush.msra.mxu0 0.0
        %987 = vmatpush.msra.mxu0 0.0
        %988 = vmatpush.msra.mxu0 0.0
        %989 = vmatpush.msra.mxu0 0.0
        %990 = vmatpush.msra.mxu0 0.0
        %991 = vmatpush.msra.mxu0 0.0
        %992 = vmatpush.msra.mxu0 0.0
        %993 = vmatpush.msra.mxu0 %v973
        %994 = vmatmul.f32.gmra.mxu0 %v976
        %v995 = vpop.f32.mrf.mxu0
        %v996 = vadd.f32 0.0, %v995
        %997 = vdwg.mxu0
        %v999 = vsel %vm663, %v996, 0
        %1001 = vmatpush.msra.mxu0 0.0
        %1002 = vmatpush.msra.mxu0 0.0
        %1003 = vmatpush.msra.mxu0 0.0
        %1004 = vmatpush.msra.mxu0 0.0
        %1005 = vmatpush.msra.mxu0 0.0
        %1006 = vmatpush.msra.mxu0 0.0
        %1007 = vmatpush.msra.mxu0 0.0
        %1008 = vmatpush.msra.mxu0 0.0
        %1009 = vmatpush.msra.mxu0 0.0
        %1010 = vmatpush.msra.mxu0 0.0
        %1011 = vmatpush.msra.mxu0 0.0
        %1012 = vmatpush.msra.mxu0 0.0
        %1013 = vmatpush.msra.mxu0 0.0
        %1014 = vmatpush.msra.mxu0 0.0
        %1015 = vmatpush.msra.mxu0 0.0
        %1016 = vmatpush.msra.mxu0 %v585
        %1017 = vmatmul.f32.gmra.mxu0 %v999
        %v1018 = vpop.f32.mrf.mxu0
        %v1019 = vadd.f32 0.0, %v1018
        %1020 = vdwg.mxu0
        %v1021 = vadd.f32 %v931, %v1019
        %v1023 = vperm.slane %v586, 0
        %v1025 = vadd.f32 %v1021, %v1023
        %v1026 = vadd.f32 %v501, %v1025
        %1027 = vst.msk [vmem:[%s500] sm:$0xff] %vm504, %v1026
        %p1028 = scmp.lt.s32.totalorder %s26, 1
        %s1029 = scalar_select %p1028, %s26, 1
        %s1030 = smul.addr %s1029, 8
        %s1031 = scalar_lea.vmem %s13, %s1030
        // Predicated region
        $region81: #{decoder_forward.11} parent=71 // pred_check
          %p1032 = pneg %p332
        $region82: #{decoder_forward.11} parent=71 // pred_check_branch
          %1034 = sbr.rel (%p1032) target = $region84
        $region83: #{decoder_forward.11} parent=71 // pred_region
          _
        $region84: #{decoder_forward.11} parent=71 // pred_fallthru
          _
      $region72: #{decoder_forward.11} parent=5 // pred_fallthru
        _
      %p1035 = scmp.le.s32.totalorder 2, %s21
      // Predicated region
      $region85: #{decoder_forward.11} parent=5 // pred_check
        %p1036 = pneg %p1035
      $region86: #{decoder_forward.11} parent=5 // pred_check_branch
        %1038 = sbr.rel (%p1036) target = $region88
      $region87: #{decoder_forward.11} parent=5 // pred_region
        %s1039 = ssub.s32 %s21, 2
        // Predicated region
        $region89: #{decoder_forward.11} parent=87 // pred_check
          %p1040 = pneg %p338
        $region90: #{decoder_forward.11} parent=87 // pred_check_branch
          %1042 = sbr.rel (%p1040) target = $region92
        $region91: #{decoder_forward.11} parent=87 // pred_region
          %p1043 = scmp.lt.s32.totalorder %s27, 1
          %s1044 = scalar_select %p1043, %s27, 1
          %s1045 = smul.addr %s1044, 8
          %s1046 = scalar_lea.vmem %s13, %s1045
        $region92: #{decoder_forward.11} parent=87 // pred_fallthru
          _
      $region88: #{decoder_forward.11} parent=5 // pred_fallthru
        _
    $region6: #{decoder_forward.11} parent=1 // loop_footer
      %s25 = sadd.s32 1, %s21
    $region7: #{decoder_forward.11} parent=1 // loop_footer_branch
      %20 = sbr.rel target = $region3
    $region8: #{decoder_forward.11} parent=1 // loop_exit
      _
    %1047 = vsyncpa [#allocation3], 1
    %s1048 = scalar_lea.sflag [#allocation3], 1
    %1049 = vsyncpa %s1048, 1
    %1050 = vsyncpa [#allocation5], 1

</llo_original>
